<compile_context>
chip_gen: v7x
topology: tpu7x:2x2x1
jax: 0.10.0
libtpu: 0.0.40
codegen_flags: <defaults>
</compile_context>

<pallas_src>
import functools
import math

import jax
import jax.numpy as jnp
from jax import lax
from jax.experimental import pallas as pl
from jax.experimental.pallas import tpu as pltpu


def _round_up(x, m):
    return ((x + m - 1) // m) * m


# ----------------------------------------------------------------------------
# Kernel 1: fused encoder front-end (Linear + 3x Conv/BN/ReLU + hoisted X@W_ih)
# ----------------------------------------------------------------------------
def _frontend_kernel(x_hbm, w_in_ref, b_in_ref, w_conv_ref, bn_scale_ref,
                     bn_shift_ref, w_ih_ref, b_ih_ref, o_ref, win_ref, sem_ref,
                     *, t_true):
    B, TS, G = o_ref.shape
    _, W, idim_p = win_ref.shape
    halo = (W - TS) // 2                      # 8-aligned halo (>= 3 layers * pad 2)
    n_layers, KC, C = w_conv_ref.shape
    K = KC // C
    pad = (K - 1) // 2

    # One small strided DMA pulls the haloed time window for all batches.
    start = pl.multiple_of(pl.program_id(0) * TS, TS)
    cp = pltpu.make_async_copy(x_hbm.at[:, pl.ds(start, W), :], win_ref,
                               sem_ref.at[0])
    cp.start()
    cp.wait()
    # TODO(synk): double-buffer this input DMA (it is <1% of the tile's compute).

    M = B * W                                              # batch folded into M
    base0 = pl.program_id(0) * TS - halo                   # global pos of row 0
    pos = (lax.broadcasted_iota(jnp.int32, (M, 1), 0) % W) + base0
    valid = jnp.logical_and(pos >= 0, pos < t_true)        # in-sequence rows

    # input Linear; masking out-of-sequence rows == the Conv1d zero padding
    h = jnp.dot(win_ref[...].reshape(M, idim_p), w_in_ref[...],
                preferred_element_type=jnp.float32) + b_in_ref[...]
    h = jnp.where(valid, h, 0.0)

    def shift_rows(a, s):
        # Shift rows down by s with zero fill.  Cross-batch / window-edge garbage
        # introduced here stays inside the 8-row halo margin and never reaches
        # the stored center rows (creep is 2 rows per remaining conv layer).
        if s == 0:
            return a
        z = jnp.zeros((abs(s), a.shape[1]), a.dtype)
        if s > 0:
            return jnp.concatenate([z, a[:-s, :]], axis=0)
        return jnp.concatenate([a[-s:, :], z], axis=0)

    for l in range(n_layers):
        # im2col: all K taps in ONE (M, K*C) @ (K*C, C) MXU matmul
        lhs = jnp.concatenate([shift_rows(h, pad - k) for k in range(K)], axis=1)
        y = jnp.dot(lhs, w_conv_ref[l], preferred_element_type=jnp.float32)
        y = y * bn_scale_ref[l:l + 1, :] + bn_shift_ref[l:l + 1, :]   # eval BN
        y = jnp.maximum(y, 0.0)                       # ReLU (Dropout = identity)
        h = jnp.where(valid, y, 0.0)                  # zero padding for next conv

    # hoisted BLSTM input-hidden projection (both directions) on the center rows
    ctr = h.reshape(B, W, C)[:, halo:halo + TS, :].reshape(B * TS, C)
    gx = jnp.dot(ctr, w_ih_ref[...], preferred_element_type=jnp.float32)
    o_ref[...] = (gx + b_ih_ref[...]).reshape(B, TS, G)


def encoder_frontend(x, w_in, b_in, w_conv, bn_scale, bn_shift, w_ih, b_ih,
                     *, ts, t_pad):
    """x: (B, T, idim) -> gx: (B, t_pad, 8*hc) BLSTM gate pre-activations."""
    B, T, idim = x.shape
    n_layers, K, C, _ = w_conv.shape
    G = w_ih.shape[1]
    pad = (K - 1) // 2
    halo = _round_up(n_layers * pad, 8)        # sublane-aligned halo
    W = ts + 2 * halo
    nT = t_pad // ts
    idim_p = _round_up(idim, 128)              # lane-pad input features

    xp = jnp.pad(x, ((0, 0), (halo, t_pad - T + halo), (0, idim_p - idim)))
    w_in_p = jnp.pad(w_in, ((0, idim_p - idim), (0, 0)))
    w_conv_mat = w_conv.reshape(n_layers, K * C, C)   # tap-major im2col weights

    grid_spec = pltpu.PrefetchScalarGridSpec(
        num_scalar_prefetch=0,
        grid=(nT,),
        in_specs=[
            pl.BlockSpec(memory_space=pl.ANY),                 # x stays in HBM
            pl.BlockSpec((idim_p, C), lambda i: (0, 0)),
            pl.BlockSpec((1, C), lambda i: (0, 0)),
            pl.BlockSpec((n_layers, K * C, C), lambda i: (0, 0, 0)),
            pl.BlockSpec((n_layers, C), lambda i: (0, 0)),
            pl.BlockSpec((n_layers, C), lambda i: (0, 0)),
            pl.BlockSpec((C, G), lambda i: (0, 0)),
            pl.BlockSpec((1, G), lambda i: (0, 0)),
        ],
        out_specs=pl.BlockSpec((B, ts, G), lambda i: (0, i, 0)),
        scratch_shapes=[pltpu.VMEM((B, W, idim_p), jnp.float32),
                        pltpu.SemaphoreType.DMA((1,))],
    )
    return pl.pallas_call(
        functools.partial(_frontend_kernel, t_true=T),
        grid_spec=grid_spec,
        out_shape=jax.ShapeDtypeStruct((B, t_pad, G), jnp.float32),
        compiler_params=pltpu.CompilerParams(
            dimension_semantics=("parallel",),
            vmem_limit_bytes=48 * 1024 * 1024),
    )(xp, w_in_p, b_in, w_conv_mat, bn_scale, bn_shift, w_ih, b_ih)


# ----------------------------------------------------------------------------
# Kernel 2: bidirectional LSTM recurrence, time loop inside the kernel
# ----------------------------------------------------------------------------
def _blstm_kernel(gx_ref, whh_ref, o_ref, h_scr, c_scr, *, t_true):
    B, TB, hc = o_ref.shape
    d = pl.program_id(0)
    tbi = pl.program_id(1)
    ntb = pl.num_programs(1)

    # NOTE: relies on the default row-major grid order (all time blocks of one
    # direction before the next); state is reset at the first block of each dir.
    @pl.when(tbi == 0)
    def _():
        h_scr[...] = jnp.zeros_like(h_scr)
        c_scr[...] = jnp.zeros_like(c_scr)

    whh = whh_ref[0]                               # (hc, 4*hc), resident in VMEM
    t_blk = (1 - d) * tbi + d * (ntb - 1 - tbi)    # block order reversed for bwd
    blk0 = t_blk * TB

    def step(s, carry):
        h, c = carry
        row = (1 - d) * s + d * (TB - 1 - s)       # walk fwd/bwd inside the block
        gx_row = gx_ref[:, pl.ds(row, 1), :][:, 0, :]            # (B, 4*hc)
        gates = gx_row + jnp.dot(h, whh, preferred_element_type=jnp.float32)
        i_g = jax.nn.sigmoid(gates[:, 0:hc])       # PyTorch gate order: i, f, g, o
        f_g = jax.nn.sigmoid(gates[:, hc:2 * hc])
        g_g = jnp.tanh(gates[:, 2 * hc:3 * hc])
        o_g = jax.nn.sigmoid(gates[:, 3 * hc:4 * hc])
        c_new = f_g * c + i_g * g_g
        h_new = o_g * jnp.tanh(c_new)
        valid = (blk0 + row) < t_true              # skip zero-padded tail steps
        h_new = jnp.where(valid, h_new, h)
        c_new = jnp.where(valid, c_new, c)
        o_ref[:, pl.ds(row, 1), :] = h_new[:, None, :]
        return h_new, c_new

    h_fin, c_fin = lax.fori_loop(0, TB, step, (h_scr[...], c_scr[...]))
    h_scr[...] = h_fin
    c_scr[...] = c_fin


def blstm(gx, whh, *, t_true, tb):
    """gx: (B, T_pad, 8*hc); whh: (2, hc, 4*hc) -> (B, T_pad, 2*hc) [fwd | bwd]."""
    B, t_pad, _ = gx.shape
    hc = whh.shape[1]
    ntb = t_pad // tb

    def io_map(d, t):
        # direction selects a lane-block; backward visits time blocks in reverse
        return (0, (1 - d) * t + d * (ntb - 1 - t), d)

    return pl.pallas_call(
        functools.partial(_blstm_kernel, t_true=t_true),
        grid_spec=pltpu.PrefetchScalarGridSpec(
            num_scalar_prefetch=0,
            grid=(2, ntb),
            in_specs=[
                pl.BlockSpec((B, tb, 4 * hc), io_map),
                pl.BlockSpec((1, hc, 4 * hc), lambda d, t: (d, 0, 0)),
            ],
            out_specs=pl.BlockSpec((B, tb, hc), io_map),
            scratch_shapes=[pltpu.VMEM((B, hc), jnp.float32),
                            pltpu.VMEM((B, hc), jnp.float32)],
        ),
        out_shape=jax.ShapeDtypeStruct((B, t_pad, 2 * hc), jnp.float32),
        compiler_params=pltpu.CompilerParams(
            dimension_semantics=("parallel", "arbitrary")),
    )(gx, whh)


# ----------------------------------------------------------------------------
# Full Taco2Encoder forward
# ----------------------------------------------------------------------------
def taco2_encoder_forward(params, xs, ilens, *, tile=256):
    """xs: (B, T, idim) -> (enc (B, T, eunits), hlens).

    `tile` is the shared time tile of both kernels (512 is better on v5e/v6e's
    128 MiB VMEM, 256 keeps headroom on v7x's 64 MiB).
    """
    B, T, _ = xs.shape
    ts = min(tile, _round_up(T, 8))
    t_pad = _round_up(T, ts)
    gx = encoder_frontend(xs, params['in_w'], params['in_b'], params['conv_w'],
                          params['bn_scale'], params['bn_shift'],
                          params['wih'], params['bih'], ts=ts, t_pad=t_pad)
    hs = blstm(gx, params['whh'], t_true=T, tb=ts)        # (B, t_pad, 2*hc)
    return hs[:, :T, :], ilens            # pack/pad identity for full-length seqs


# ----------------------------------------------------------------------------
# Deterministic parameter initialization (shapes follow the module __init__)
# ----------------------------------------------------------------------------
def init_params(key, idim, econv_chans=256, econv_layers=3, econv_filts=5, eunits=256):
    hc = eunits // 2
    keys = jax.random.split(key, 8)

    def rnd(k, shape, fan_in):
        return jax.random.normal(k, shape, jnp.float32) / jnp.sqrt(jnp.float32(fan_in))

    p = {}
    p['in_w'] = rnd(keys[0], (idim, econv_chans), idim)                 # Linear W^T
    p['in_b'] = jnp.zeros((1, econv_chans), jnp.float32)
    # Conv1d weights stored as (layer, K, C_in, C_out) == PyTorch (C_out, C_in, K)^T
    p['conv_w'] = rnd(keys[1], (econv_layers, econv_filts, econv_chans, econv_chans),
                      econv_chans * econv_filts)
    bn_eval_scale = 1.0 / math.sqrt(1.0 + 1e-5)      # eval BN with default stats
    p['bn_scale'] = jnp.full((econv_layers, econv_chans), bn_eval_scale, jnp.float32)
    p['bn_shift'] = jnp.zeros((econv_layers, econv_chans), jnp.float32)
    # BLSTM: input-hidden weights of both directions concatenated (C, 8*hc),
    # biases = bias_ih + bias_hh folded, hidden-hidden stacked (2, hc, 4*hc).
    wih_f = rnd(keys[2], (econv_chans, 4 * hc), econv_chans)
    wih_b = rnd(keys[3], (econv_chans, 4 * hc), econv_chans)
    b_f = rnd(keys[4], (4 * hc,), hc)
    b_b = rnd(keys[5], (4 * hc,), hc)
    p['wih'] = jnp.concatenate([wih_f, wih_b], axis=1)
    p['bih'] = jnp.concatenate([b_f, b_b]).reshape(1, 8 * hc)
    p['whh'] = jnp.stack([rnd(keys[6], (hc, 4 * hc), hc),
                          rnd(keys[7], (hc, 4 * hc), hc)])
    return p


# ----------------------------------------------------------------------------
# Pure-JAX reference of the same inference-mode forward (validation only)
# ----------------------------------------------------------------------------
def reference_forward(params, xs):
    hi = jax.lax.Precision.HIGHEST
    B, T, _ = xs.shape
    hc = params['whh'].shape[1]
    n_layers, K = params['conv_w'].shape[0], params['conv_w'].shape[1]
    pad = (K - 1) // 2
    h = jnp.dot(xs, params['in_w'], precision=hi) + params['in_b']
    for l in range(n_layers):
        hp = jnp.pad(h, ((0, 0), (pad, pad), (0, 0)))
        y = 0.0
        for k in range(K):
            y = y + jnp.dot(hp[:, k:k + T, :], params['conv_w'][l, k], precision=hi)
        y = y * params['bn_scale'][l] + params['bn_shift'][l]
        h = jnp.maximum(y, 0.0)
    gx = jnp.dot(h, params['wih'], precision=hi) + params['bih']

    def run_dir(g_btg, whh_d, reverse):
        def step(carry, g):
            hh, cc = carry
            gates = g + jnp.dot(hh, whh_d, precision=hi)
            i = jax.nn.sigmoid(gates[:, 0:hc])
            f = jax.nn.sigmoid(gates[:, hc:2 * hc])
            gg = jnp.tanh(gates[:, 2 * hc:3 * hc])
            o = jax.nn.sigmoid(gates[:, 3 * hc:4 * hc])
            cc = f * cc + i * gg
            hh = o * jnp.tanh(cc)
            return (hh, cc), hh
        init = (jnp.zeros((B, hc), jnp.float32), jnp.zeros((B, hc), jnp.float32))
        _, hs = lax.scan(step, init, jnp.swapaxes(g_btg, 0, 1), reverse=reverse)
        return jnp.swapaxes(hs, 0, 1)

    hf = run_dir(gx[..., :4 * hc], params['whh'][0], False)
    hb = run_dir(gx[..., 4 * hc:], params['whh'][1], True)
    return jnp.concatenate([hf, hb], axis=-1)


if __name__ == "__main__":
    B, T, IDIM = 2, 30, 80          # small mel-like input (T not a tile multiple)
    ECONV, EUNITS = 256, 256        # econv_chans, eunits (hc = 128 per direction)

    key = jax.random.PRNGKey(0)
    k_par, k_x = jax.random.split(key)
    params = init_params(k_par, IDIM, econv_chans=ECONV, eunits=EUNITS)

    xs = jax.random.normal(k_x, (B, T, IDIM), jnp.float32)
    ilens = jnp.full((B,), T, jnp.int32)

    # tile=16 keeps the test tiny while exercising multi-tile conv halos and
    # multi-block BLSTM state carry; use the default (256) for real workloads.
    fwd = jax.jit(functools.partial(taco2_encoder_forward, tile=16))
    enc, hlens = fwd(params, xs, ilens)
    jax.block_until_ready(enc)

    assert enc.shape == (B, T, EUNITS), enc.shape
    assert hlens.shape == (B,)
    assert bool(jnp.all(jnp.isfinite(enc)))

    ref = reference_forward(params, xs)
    err = float(jnp.max(jnp.abs(enc - ref)))
    assert err < 5e-2, f"mismatch vs pure-JAX reference, max abs err = {err}"
    print("KERNEL_OK")
</pallas_src>

<mosaic_0001>
module attributes {stable_mosaic.version = 11 : i64} {
  func.func @_frontend_kernel(%arg0: i32, %arg1: memref<2x48x128xf32, #tpu.memory_space<any>>, %arg2: memref<128x256xf32, #tpu.memory_space<vmem>>, %arg3: memref<1x256xf32, #tpu.memory_space<vmem>>, %arg4: memref<3x1280x256xf32, #tpu.memory_space<vmem>>, %arg5: memref<3x256xf32, #tpu.memory_space<vmem>>, %arg6: memref<3x256xf32, #tpu.memory_space<vmem>>, %arg7: memref<256x1024xf32, #tpu.memory_space<vmem>>, %arg8: memref<1x1024xf32, #tpu.memory_space<vmem>>, %arg9: memref<2x16x1024xf32, #tpu.memory_space<vmem>>, %arg10: memref<2x32x128xf32, #tpu.memory_space<vmem>>, %arg11: memref<1x!tpu.dma_semaphore, #tpu.memory_space<semaphore_mem>>) attributes {dimension_semantics = [#tpu.dimension_semantics<parallel>], iteration_bounds = array<i64: 2>, scalar_prefetch = 0 : i64, scratch_operands = 2 : i64, tpu.core_type = #tpu.core_type<tc>, window_params = [{}, {pipeline_mode = #tpu.pipeline_mode<synchronous>, transform_indices = @transform_1, window_bounds = array<i64: 128, 256>}, {pipeline_mode = #tpu.pipeline_mode<synchronous>, transform_indices = @transform_2, window_bounds = array<i64: 1, 256>}, {pipeline_mode = #tpu.pipeline_mode<synchronous>, transform_indices = @transform_3, window_bounds = array<i64: 3, 1280, 256>}, {pipeline_mode = #tpu.pipeline_mode<synchronous>, transform_indices = @transform_4, window_bounds = array<i64: 3, 256>}, {pipeline_mode = #tpu.pipeline_mode<synchronous>, transform_indices = @transform_5, window_bounds = array<i64: 3, 256>}, {pipeline_mode = #tpu.pipeline_mode<synchronous>, transform_indices = @transform_6, window_bounds = array<i64: 256, 1024>}, {pipeline_mode = #tpu.pipeline_mode<synchronous>, transform_indices = @transform_7, window_bounds = array<i64: 1, 1024>}, {transform_indices = @transform_8, window_bounds = array<i64: 2, 16, 1024>}]} {
    %c16_i32 = arith.constant 16 : i32
    %0 = arith.muli %arg0, %c16_i32 : i32
    %1 = tpu.assume_multiple %0, 16 : i32
    %c0_i32 = arith.constant 0 : i32
    %c0_i32_0 = arith.constant 0 : i32
    %c0_i32_1 = arith.constant 0 : i32
    %2 = tpu.memref_slice %arg1[%c0_i32_0, %1, %c0_i32_1] : memref<2x48x128xf32, #tpu.memory_space<any>> -> memref<2x32x128xf32, #tpu.memory_space<any>>
    %3 = tpu.memref_slice %arg11[%c0_i32] : memref<1x!tpu.dma_semaphore, #tpu.memory_space<semaphore_mem>> -> memref<1x!tpu.dma_semaphore, #tpu.memory_space<semaphore_mem>>
    %4 = tpu.memref_squeeze %3 : memref<1x!tpu.dma_semaphore, #tpu.memory_space<semaphore_mem>> -> memref<!tpu.dma_semaphore, #tpu.memory_space<semaphore_mem>>
    tpu.enqueue_dma source(%2 : memref<2x32x128xf32, #tpu.memory_space<any>>) target(%arg10 : memref<2x32x128xf32, #tpu.memory_space<vmem>>) target_semaphore(%4 : memref<!tpu.dma_semaphore, #tpu.memory_space<semaphore_mem>>)
    %c0_i32_2 = arith.constant 0 : i32
    %c0_i32_3 = arith.constant 0 : i32
    %c0_i32_4 = arith.constant 0 : i32
    %5 = tpu.memref_slice %arg1[%c0_i32_3, %1, %c0_i32_4] : memref<2x48x128xf32, #tpu.memory_space<any>> -> memref<2x32x128xf32, #tpu.memory_space<any>>
    %6 = tpu.memref_slice %arg11[%c0_i32_2] : memref<1x!tpu.dma_semaphore, #tpu.memory_space<semaphore_mem>> -> memref<1x!tpu.dma_semaphore, #tpu.memory_space<semaphore_mem>>
    %7 = tpu.memref_squeeze %6 : memref<1x!tpu.dma_semaphore, #tpu.memory_space<semaphore_mem>> -> memref<!tpu.dma_semaphore, #tpu.memory_space<semaphore_mem>>
    tpu.wait_dma2 semaphore(%7 : memref<!tpu.dma_semaphore, #tpu.memory_space<semaphore_mem>>) src(%5 : memref<2x32x128xf32, #tpu.memory_space<any>>) dst(%arg10 : memref<2x32x128xf32, #tpu.memory_space<vmem>>)
    %c16_i32_5 = arith.constant 16 : i32
    %8 = arith.muli %arg0, %c16_i32_5 : i32
    %c8_i32 = arith.constant 8 : i32
    %9 = arith.subi %8, %c8_i32 : i32
    %10 = tpu.iota {dimensions = array<i32: 0>} : vector<64x1xi32>
    %c32_i32 = arith.constant 32 : i32
    %c0_i32_6 = arith.constant 0 : i32
    %11 = arith.cmpi eq, %c32_i32, %c0_i32_6 : i32
    %c1_i32 = arith.constant 1 : i32
    %12 = arith.select %11, %c1_i32, %c32_i32 : i32
    %13 = vector.broadcast %12 : i32 to vector<64x1xi32>
    %14 = arith.remsi %10, %13 : vector<64x1xi32>
    %c0_i32_7 = arith.constant 0 : i32
    %15 = vector.broadcast %c0_i32_7 : i32 to vector<64x1xi32>
    %16 = arith.cmpi ne, %14, %15 : vector<64x1xi32>
    %c0_i32_8 = arith.constant 0 : i32
    %17 = vector.broadcast %c0_i32_8 : i32 to vector<64x1xi32>
    %18 = arith.cmpi slt, %14, %17 : vector<64x1xi32>
    %c0_i32_9 = arith.constant 0 : i32
    %19 = arith.cmpi slt, %12, %c0_i32_9 : i32
    %20 = vector.broadcast %19 : i1 to vector<64x1xi1>
    %21 = vector.broadcast %20 : vector<64x1xi1> to vector<64x1xi1>
    %22 = arith.xori %18, %21 : vector<64x1xi1>
    %23 = arith.andi %22, %16 : vector<64x1xi1>
    %24 = vector.broadcast %12 : i32 to vector<64x1xi32>
    %25 = arith.addi %14, %24 : vector<64x1xi32>
    %26 = arith.select %23, %25, %14 : vector<64x1xi1>, vector<64x1xi32>
    %27 = vector.broadcast %9 : i32 to vector<64x1xi32>
    %28 = arith.addi %26, %27 : vector<64x1xi32>
    %c0_i32_10 = arith.constant 0 : i32
    %29 = vector.broadcast %c0_i32_10 : i32 to vector<64x1xi32>
    %30 = arith.cmpi sge, %28, %29 : vector<64x1xi32>
    %c30_i32 = arith.constant 30 : i32
    %31 = vector.broadcast %c30_i32 : i32 to vector<64x1xi32>
    %32 = arith.cmpi slt, %28, %31 : vector<64x1xi32>
    %33 = arith.andi %30, %32 : vector<64x1xi1>
    %c0 = arith.constant 0 : index
    %c0_11 = arith.constant 0 : index
    %c0_12 = arith.constant 0 : index
    %34 = vector.load %arg10[%c0, %c0_11, %c0_12] : memref<2x32x128xf32, #tpu.memory_space<vmem>>, vector<2x32x128xf32>
    %35 = vector.shape_cast %34 : vector<2x32x128xf32> to vector<64x128xf32>
    %c0_13 = arith.constant 0 : index
    %c0_14 = arith.constant 0 : index
    %36 = vector.load %arg2[%c0_13, %c0_14] : memref<128x256xf32, #tpu.memory_space<vmem>>, vector<128x256xf32>
    %cst = arith.constant dense<0.000000e+00> : vector<64x256xf32>
    %37 = tpu.matmul %35, %36, %cst {dimension_numbers = #tpu.dot_dimension_numbers<[1], [0], [0], [1], [0, 0, 1, 1], [], []>} : vector<64x128xf32>, vector<128x256xf32>, vector<64x256xf32> -> vector<64x256xf32>
    %c0_15 = arith.constant 0 : index
    %c0_16 = arith.constant 0 : index
    %38 = vector.load %arg3[%c0_15, %c0_16] : memref<1x256xf32, #tpu.memory_space<vmem>>, vector<1x256xf32>
    %39 = vector.broadcast %38 : vector<1x256xf32> to vector<64x256xf32>
    %40 = arith.addf %37, %39 : vector<64x256xf32>
    %cst_17 = arith.constant 0.000000e+00 : f32
    %41 = vector.shape_cast %33 : vector<64x1xi1> to vector<64x1xi1>
    %42 = vector.broadcast %41 : vector<64x1xi1> to vector<64x256xi1>
    %43 = vector.broadcast %cst_17 : f32 to vector<64x256xf32>
    %44 = arith.select %42, %40, %43 : vector<64x256xi1>, vector<64x256xf32>
    %cst_18 = arith.constant 0.000000e+00 : f32
    %45 = vector.broadcast %cst_18 : f32 to vector<2x256xf32>
    %46 = vector.extract_strided_slice %44 {offsets = [0, 0], sizes = [62, 256], strides = [1, 1]} : vector<64x256xf32> to vector<62x256xf32>
    %47 = tpu.concatenate %45, %46 in 0 : vector<2x256xf32>, vector<62x256xf32> -> vector<64x256xf32>
    %cst_19 = arith.constant 0.000000e+00 : f32
    %48 = vector.broadcast %cst_19 : f32 to vector<1x256xf32>
    %49 = vector.extract_strided_slice %44 {offsets = [0, 0], sizes = [63, 256], strides = [1, 1]} : vector<64x256xf32> to vector<63x256xf32>
    %50 = tpu.concatenate %48, %49 in 0 : vector<1x256xf32>, vector<63x256xf32> -> vector<64x256xf32>
    %cst_20 = arith.constant 0.000000e+00 : f32
    %51 = vector.broadcast %cst_20 : f32 to vector<1x256xf32>
    %52 = vector.extract_strided_slice %44 {offsets = [1, 0], sizes = [63, 256], strides = [1, 1]} : vector<64x256xf32> to vector<63x256xf32>
    %53 = tpu.concatenate %52, %51 in 0 : vector<63x256xf32>, vector<1x256xf32> -> vector<64x256xf32>
    %cst_21 = arith.constant 0.000000e+00 : f32
    %54 = vector.broadcast %cst_21 : f32 to vector<2x256xf32>
    %55 = vector.extract_strided_slice %44 {offsets = [2, 0], sizes = [62, 256], strides = [1, 1]} : vector<64x256xf32> to vector<62x256xf32>
    %56 = tpu.concatenate %55, %54 in 0 : vector<62x256xf32>, vector<2x256xf32> -> vector<64x256xf32>
    %57 = tpu.concatenate %47, %50, %44, %53, %56 in 1 : vector<64x256xf32>, vector<64x256xf32>, vector<64x256xf32>, vector<64x256xf32>, vector<64x256xf32> -> vector<64x1280xf32>
    %c0_22 = arith.constant 0 : index
    %c0_23 = arith.constant 0 : index
    %c0_24 = arith.constant 0 : index
    %58 = vector.load %arg4[%c0_22, %c0_23, %c0_24] : memref<3x1280x256xf32, #tpu.memory_space<vmem>>, vector<1x1280x256xf32>
    %59 = vector.shape_cast %58 : vector<1x1280x256xf32> to vector<1280x256xf32>
    %cst_25 = arith.constant dense<0.000000e+00> : vector<64x256xf32>
    %60 = tpu.matmul %57, %59, %cst_25 {dimension_numbers = #tpu.dot_dimension_numbers<[1], [0], [0], [1], [0, 0, 1, 1], [], []>} : vector<64x1280xf32>, vector<1280x256xf32>, vector<64x256xf32> -> vector<64x256xf32>
    %c0_26 = arith.constant 0 : index
    %c0_27 = arith.constant 0 : index
    %61 = vector.load %arg5[%c0_26, %c0_27] : memref<3x256xf32, #tpu.memory_space<vmem>>, vector<1x256xf32>
    %62 = vector.broadcast %61 : vector<1x256xf32> to vector<64x256xf32>
    %63 = arith.mulf %60, %62 : vector<64x256xf32>
    %c0_28 = arith.constant 0 : index
    %c0_29 = arith.constant 0 : index
    %64 = vector.load %arg6[%c0_28, %c0_29] : memref<3x256xf32, #tpu.memory_space<vmem>>, vector<1x256xf32>
    %65 = vector.broadcast %64 : vector<1x256xf32> to vector<64x256xf32>
    %66 = arith.addf %63, %65 : vector<64x256xf32>
    %cst_30 = arith.constant 0.000000e+00 : f32
    %67 = vector.broadcast %cst_30 : f32 to vector<64x256xf32>
    %68 = arith.maximumf %66, %67 : vector<64x256xf32>
    %cst_31 = arith.constant 0.000000e+00 : f32
    %69 = vector.shape_cast %33 : vector<64x1xi1> to vector<64x1xi1>
    %70 = vector.broadcast %69 : vector<64x1xi1> to vector<64x256xi1>
    %71 = vector.broadcast %cst_31 : f32 to vector<64x256xf32>
    %72 = arith.select %70, %68, %71 : vector<64x256xi1>, vector<64x256xf32>
    %cst_32 = arith.constant 0.000000e+00 : f32
    %73 = vector.broadcast %cst_32 : f32 to vector<2x256xf32>
    %74 = vector.extract_strided_slice %72 {offsets = [0, 0], sizes = [62, 256], strides = [1, 1]} : vector<64x256xf32> to vector<62x256xf32>
    %75 = tpu.concatenate %73, %74 in 0 : vector<2x256xf32>, vector<62x256xf32> -> vector<64x256xf32>
    %cst_33 = arith.constant 0.000000e+00 : f32
    %76 = vector.broadcast %cst_33 : f32 to vector<1x256xf32>
    %77 = vector.extract_strided_slice %72 {offsets = [0, 0], sizes = [63, 256], strides = [1, 1]} : vector<64x256xf32> to vector<63x256xf32>
    %78 = tpu.concatenate %76, %77 in 0 : vector<1x256xf32>, vector<63x256xf32> -> vector<64x256xf32>
    %cst_34 = arith.constant 0.000000e+00 : f32
    %79 = vector.broadcast %cst_34 : f32 to vector<1x256xf32>
    %80 = vector.extract_strided_slice %72 {offsets = [1, 0], sizes = [63, 256], strides = [1, 1]} : vector<64x256xf32> to vector<63x256xf32>
    %81 = tpu.concatenate %80, %79 in 0 : vector<63x256xf32>, vector<1x256xf32> -> vector<64x256xf32>
    %cst_35 = arith.constant 0.000000e+00 : f32
    %82 = vector.broadcast %cst_35 : f32 to vector<2x256xf32>
    %83 = vector.extract_strided_slice %72 {offsets = [2, 0], sizes = [62, 256], strides = [1, 1]} : vector<64x256xf32> to vector<62x256xf32>
    %84 = tpu.concatenate %83, %82 in 0 : vector<62x256xf32>, vector<2x256xf32> -> vector<64x256xf32>
    %85 = tpu.concatenate %75, %78, %72, %81, %84 in 1 : vector<64x256xf32>, vector<64x256xf32>, vector<64x256xf32>, vector<64x256xf32>, vector<64x256xf32> -> vector<64x1280xf32>
    %c1 = arith.constant 1 : index
    %c0_36 = arith.constant 0 : index
    %c0_37 = arith.constant 0 : index
    %86 = vector.load %arg4[%c1, %c0_36, %c0_37] : memref<3x1280x256xf32, #tpu.memory_space<vmem>>, vector<1x1280x256xf32>
    %87 = vector.shape_cast %86 : vector<1x1280x256xf32> to vector<1280x256xf32>
    %cst_38 = arith.constant dense<0.000000e+00> : vector<64x256xf32>
    %88 = tpu.matmul %85, %87, %cst_38 {dimension_numbers = #tpu.dot_dimension_numbers<[1], [0], [0], [1], [0, 0, 1, 1], [], []>} : vector<64x1280xf32>, vector<1280x256xf32>, vector<64x256xf32> -> vector<64x256xf32>
    %c1_39 = arith.constant 1 : index
    %c0_40 = arith.constant 0 : index
    %89 = vector.load %arg5[%c1_39, %c0_40] : memref<3x256xf32, #tpu.memory_space<vmem>>, vector<1x256xf32>
    %90 = vector.broadcast %89 : vector<1x256xf32> to vector<64x256xf32>
    %91 = arith.mulf %88, %90 : vector<64x256xf32>
    %c1_41 = arith.constant 1 : index
    %c0_42 = arith.constant 0 : index
    %92 = vector.load %arg6[%c1_41, %c0_42] : memref<3x256xf32, #tpu.memory_space<vmem>>, vector<1x256xf32>
    %93 = vector.broadcast %92 : vector<1x256xf32> to vector<64x256xf32>
    %94 = arith.addf %91, %93 : vector<64x256xf32>
    %cst_43 = arith.constant 0.000000e+00 : f32
    %95 = vector.broadcast %cst_43 : f32 to vector<64x256xf32>
    %96 = arith.maximumf %94, %95 : vector<64x256xf32>
    %cst_44 = arith.constant 0.000000e+00 : f32
    %97 = vector.shape_cast %33 : vector<64x1xi1> to vector<64x1xi1>
    %98 = vector.broadcast %97 : vector<64x1xi1> to vector<64x256xi1>
    %99 = vector.broadcast %cst_44 : f32 to vector<64x256xf32>
    %100 = arith.select %98, %96, %99 : vector<64x256xi1>, vector<64x256xf32>
    %cst_45 = arith.constant 0.000000e+00 : f32
    %101 = vector.broadcast %cst_45 : f32 to vector<2x256xf32>
    %102 = vector.extract_strided_slice %100 {offsets = [0, 0], sizes = [62, 256], strides = [1, 1]} : vector<64x256xf32> to vector<62x256xf32>
    %103 = tpu.concatenate %101, %102 in 0 : vector<2x256xf32>, vector<62x256xf32> -> vector<64x256xf32>
    %cst_46 = arith.constant 0.000000e+00 : f32
    %104 = vector.broadcast %cst_46 : f32 to vector<1x256xf32>
    %105 = vector.extract_strided_slice %100 {offsets = [0, 0], sizes = [63, 256], strides = [1, 1]} : vector<64x256xf32> to vector<63x256xf32>
    %106 = tpu.concatenate %104, %105 in 0 : vector<1x256xf32>, vector<63x256xf32> -> vector<64x256xf32>
    %cst_47 = arith.constant 0.000000e+00 : f32
    %107 = vector.broadcast %cst_47 : f32 to vector<1x256xf32>
    %108 = vector.extract_strided_slice %100 {offsets = [1, 0], sizes = [63, 256], strides = [1, 1]} : vector<64x256xf32> to vector<63x256xf32>
    %109 = tpu.concatenate %108, %107 in 0 : vector<63x256xf32>, vector<1x256xf32> -> vector<64x256xf32>
    %cst_48 = arith.constant 0.000000e+00 : f32
    %110 = vector.broadcast %cst_48 : f32 to vector<2x256xf32>
    %111 = vector.extract_strided_slice %100 {offsets = [2, 0], sizes = [62, 256], strides = [1, 1]} : vector<64x256xf32> to vector<62x256xf32>
    %112 = tpu.concatenate %111, %110 in 0 : vector<62x256xf32>, vector<2x256xf32> -> vector<64x256xf32>
    %113 = tpu.concatenate %103, %106, %100, %109, %112 in 1 : vector<64x256xf32>, vector<64x256xf32>, vector<64x256xf32>, vector<64x256xf32>, vector<64x256xf32> -> vector<64x1280xf32>
    %c2 = arith.constant 2 : index
    %c0_49 = arith.constant 0 : index
    %c0_50 = arith.constant 0 : index
    %114 = vector.load %arg4[%c2, %c0_49, %c0_50] : memref<3x1280x256xf32, #tpu.memory_space<vmem>>, vector<1x1280x256xf32>
    %115 = vector.shape_cast %114 : vector<1x1280x256xf32> to vector<1280x256xf32>
    %cst_51 = arith.constant dense<0.000000e+00> : vector<64x256xf32>
    %116 = tpu.matmul %113, %115, %cst_51 {dimension_numbers = #tpu.dot_dimension_numbers<[1], [0], [0], [1], [0, 0, 1, 1], [], []>} : vector<64x1280xf32>, vector<1280x256xf32>, vector<64x256xf32> -> vector<64x256xf32>
    %c2_52 = arith.constant 2 : index
    %c0_53 = arith.constant 0 : index
    %117 = vector.load %arg5[%c2_52, %c0_53] : memref<3x256xf32, #tpu.memory_space<vmem>>, vector<1x256xf32>
    %118 = vector.broadcast %117 : vector<1x256xf32> to vector<64x256xf32>
    %119 = arith.mulf %116, %118 : vector<64x256xf32>
    %c2_54 = arith.constant 2 : index
    %c0_55 = arith.constant 0 : index
    %120 = vector.load %arg6[%c2_54, %c0_55] : memref<3x256xf32, #tpu.memory_space<vmem>>, vector<1x256xf32>
    %121 = vector.broadcast %120 : vector<1x256xf32> to vector<64x256xf32>
    %122 = arith.addf %119, %121 : vector<64x256xf32>
    %cst_56 = arith.constant 0.000000e+00 : f32
    %123 = vector.broadcast %cst_56 : f32 to vector<64x256xf32>
    %124 = arith.maximumf %122, %123 : vector<64x256xf32>
    %cst_57 = arith.constant 0.000000e+00 : f32
    %125 = vector.shape_cast %33 : vector<64x1xi1> to vector<64x1xi1>
    %126 = vector.broadcast %125 : vector<64x1xi1> to vector<64x256xi1>
    %127 = vector.broadcast %cst_57 : f32 to vector<64x256xf32>
    %128 = arith.select %126, %124, %127 : vector<64x256xi1>, vector<64x256xf32>
    %129 = vector.shape_cast %128 : vector<64x256xf32> to vector<2x32x256xf32>
    %130 = vector.extract_strided_slice %129 {offsets = [0, 8, 0], sizes = [2, 16, 256], strides = [1, 1, 1]} : vector<2x32x256xf32> to vector<2x16x256xf32>
    %131 = vector.shape_cast %130 : vector<2x16x256xf32> to vector<32x256xf32>
    %c0_58 = arith.constant 0 : index
    %c0_59 = arith.constant 0 : index
    %132 = vector.load %arg7[%c0_58, %c0_59] : memref<256x1024xf32, #tpu.memory_space<vmem>>, vector<256x1024xf32>
    %cst_60 = arith.constant dense<0.000000e+00> : vector<32x1024xf32>
    %133 = tpu.matmul %131, %132, %cst_60 {dimension_numbers = #tpu.dot_dimension_numbers<[1], [0], [0], [1], [0, 0, 1, 1], [], []>} : vector<32x256xf32>, vector<256x1024xf32>, vector<32x1024xf32> -> vector<32x1024xf32>
    %c0_61 = arith.constant 0 : index
    %c0_62 = arith.constant 0 : index
    %134 = vector.load %arg8[%c0_61, %c0_62] : memref<1x1024xf32, #tpu.memory_space<vmem>>, vector<1x1024xf32>
    %135 = vector.broadcast %134 : vector<1x1024xf32> to vector<32x1024xf32>
    %136 = arith.addf %133, %135 : vector<32x1024xf32>
    %137 = vector.shape_cast %136 : vector<32x1024xf32> to vector<2x16x1024xf32>
    %c0_63 = arith.constant 0 : index
    %c0_64 = arith.constant 0 : index
    %c0_65 = arith.constant 0 : index
    %138 = vector.load %arg9[%c0_63, %c0_64, %c0_65] : memref<2x16x1024xf32, #tpu.memory_space<vmem>>, vector<2x16x1024xf32>
    tpu.vector_store %arg9[%c0_63, %c0_64, %c0_65], %137 {strides = array<i32>} : memref<2x16x1024xf32, #tpu.memory_space<vmem>>, vector<2x16x1024xf32>,
    return
  }
  func.func @transform_1(%arg0: i32) -> (i32, i32) {
    %c0_i32 = arith.constant 0 : i32
    %c0_i32_0 = arith.constant 0 : i32
    %c0_i32_1 = arith.constant 0 : i32
    return %c0_i32, %c0_i32_0 : i32, i32
  }
  func.func @transform_2(%arg0: i32) -> (i32, i32) {
    %c0_i32 = arith.constant 0 : i32
    %c0_i32_0 = arith.constant 0 : i32
    %c0_i32_1 = arith.constant 0 : i32
    return %c0_i32, %c0_i32_0 : i32, i32
  }
  func.func @transform_3(%arg0: i32) -> (i32, i32, i32) {
    %c0_i32 = arith.constant 0 : i32
    %c0_i32_0 = arith.constant 0 : i32
    %c0_i32_1 = arith.constant 0 : i32
    %c0_i32_2 = arith.constant 0 : i32
    return %c0_i32, %c0_i32_0, %c0_i32_1 : i32, i32, i32
  }
  func.func @transform_4(%arg0: i32) -> (i32, i32) {
    %c0_i32 = arith.constant 0 : i32
    %c0_i32_0 = arith.constant 0 : i32
    %c0_i32_1 = arith.constant 0 : i32
    return %c0_i32, %c0_i32_0 : i32, i32
  }
  func.func @transform_5(%arg0: i32) -> (i32, i32) {
    %c0_i32 = arith.constant 0 : i32
    %c0_i32_0 = arith.constant 0 : i32
    %c0_i32_1 = arith.constant 0 : i32
    return %c0_i32, %c0_i32_0 : i32, i32
  }
  func.func @transform_6(%arg0: i32) -> (i32, i32) {
    %c0_i32 = arith.constant 0 : i32
    %c0_i32_0 = arith.constant 0 : i32
    %c0_i32_1 = arith.constant 0 : i32
    return %c0_i32, %c0_i32_0 : i32, i32
  }
  func.func @transform_7(%arg0: i32) -> (i32, i32) {
    %c0_i32 = arith.constant 0 : i32
    %c0_i32_0 = arith.constant 0 : i32
    %c0_i32_1 = arith.constant 0 : i32
    return %c0_i32, %c0_i32_0 : i32, i32
  }
  func.func @transform_8(%arg0: i32) -> (i32, i32, i32) {
    %c0_i32 = arith.constant 0 : i32
    %c0_i32_0 = arith.constant 0 : i32
    %c0_i32_1 = arith.constant 0 : i32
    return %c0_i32, %arg0, %c0_i32_0 : i32, i32, i32
  }
}

module attributes {stable_mosaic.version = 11 : i64} {
  func.func @_blstm_kernel(%arg0: i32, %arg1: i32, %arg2: memref<2x16x512xf32, #tpu.memory_space<vmem>>, %arg3: memref<1x128x512xf32, #tpu.memory_space<vmem>>, %arg4: memref<2x16x128xf32, #tpu.memory_space<vmem>>, %arg5: memref<2x128xf32, #tpu.memory_space<vmem>>, %arg6: memref<2x128xf32, #tpu.memory_space<vmem>>) attributes {dimension_semantics = [#tpu.dimension_semantics<parallel>, #tpu.dimension_semantics<arbitrary>], iteration_bounds = array<i64: 2, 2>, scalar_prefetch = 0 : i64, scratch_operands = 2 : i64, tpu.core_type = #tpu.core_type<tc>, window_params = [{transform_indices = @transform_0, window_bounds = array<i64: 2, 16, 512>}, {transform_indices = @transform_1, window_bounds = array<i64: 1, 128, 512>}, {transform_indices = @transform_2, window_bounds = array<i64: 2, 16, 128>}]} {
    %c0_i32 = arith.constant 0 : i32
    %0 = arith.cmpi eq, %arg1, %c0_i32 : i32
    %1 = arith.extui %0 : i1 to i32
    %c0_i32_0 = arith.constant 0 : i32
    %2 = arith.cmpi ne, %1, %c0_i32_0 : i32
    scf.if %2 {
      %cst = arith.constant 0.000000e+00 : f32
      %17 = vector.broadcast %cst : f32 to vector<2x128xf32>
      %c0_16 = arith.constant 0 : index
      %c0_17 = arith.constant 0 : index
      %18 = vector.load %arg5[%c0_16, %c0_17] : memref<2x128xf32, #tpu.memory_space<vmem>>, vector<2x128xf32>
      tpu.vector_store %arg5[%c0_16, %c0_17], %17 {strides = array<i32>} : memref<2x128xf32, #tpu.memory_space<vmem>>, vector<2x128xf32>,
      %cst_18 = arith.constant 0.000000e+00 : f32
      %19 = vector.broadcast %cst_18 : f32 to vector<2x128xf32>
      %c0_19 = arith.constant 0 : index
      %c0_20 = arith.constant 0 : index
      %20 = vector.load %arg6[%c0_19, %c0_20] : memref<2x128xf32, #tpu.memory_space<vmem>>, vector<2x128xf32>
      tpu.vector_store %arg6[%c0_19, %c0_20], %19 {strides = array<i32>} : memref<2x128xf32, #tpu.memory_space<vmem>>, vector<2x128xf32>,
    } else {
    }
    %c0 = arith.constant 0 : index
    %c0_1 = arith.constant 0 : index
    %c0_2 = arith.constant 0 : index
    %3 = vector.load %arg3[%c0, %c0_1, %c0_2] : memref<1x128x512xf32, #tpu.memory_space<vmem>>, vector<1x128x512xf32>
    %4 = vector.shape_cast %3 : vector<1x128x512xf32> to vector<128x512xf32>
    %c1_i32 = arith.constant 1 : i32
    %5 = arith.subi %c1_i32, %arg0 : i32
    %6 = arith.muli %5, %arg1 : i32
    %c1_i32_3 = arith.constant 1 : i32
    %7 = arith.subi %c1_i32_3, %arg1 : i32
    %8 = arith.muli %arg0, %7 : i32
    %9 = arith.addi %6, %8 : i32
    %c16_i32 = arith.constant 16 : i32
    %10 = arith.muli %9, %c16_i32 : i32
    %c0_4 = arith.constant 0 : index
    %c0_5 = arith.constant 0 : index
    %11 = vector.load %arg5[%c0_4, %c0_5] : memref<2x128xf32, #tpu.memory_space<vmem>>, vector<2x128xf32>
    %c0_6 = arith.constant 0 : index
    %c0_7 = arith.constant 0 : index
    %12 = vector.load %arg6[%c0_6, %c0_7] : memref<2x128xf32, #tpu.memory_space<vmem>>, vector<2x128xf32>
    %c0_i32_8 = arith.constant 0 : i32
    %c16_i32_9 = arith.constant 16 : i32
    %13 = arith.addi %c0_i32_8, %c16_i32_9 : i32
    %c1_i32_10 = arith.constant 1 : i32
    %14:2 = scf.for %arg7 = %c0_i32_8 to %13 step %c1_i32_10 iter_args(%arg8 = %11, %arg9 = %12) -> (vector<2x128xf32>, vector<2x128xf32>)  : i32 {
      %c1_i32_16 = arith.constant 1 : i32
      %17 = arith.subi %c1_i32_16, %arg0 : i32
      %18 = arith.muli %17, %arg7 : i32
      %c15_i32 = arith.constant 15 : i32
      %19 = arith.subi %c15_i32, %arg7 : i32
      %20 = arith.muli %arg0, %19 : i32
      %21 = arith.addi %18, %20 : i32
      %c0_17 = arith.constant 0 : index
      %22 = arith.index_cast %21 : i32 to index
      %c0_18 = arith.constant 0 : index
      %23 = vector.load %arg2[%c0_17, %22, %c0_18] : memref<2x16x512xf32, #tpu.memory_space<vmem>>, vector<2x1x512xf32>
      %24 = vector.shape_cast %23 : vector<2x1x512xf32> to vector<2x512xf32>
      %cst = arith.constant dense<0.000000e+00> : vector<2x512xf32>
      %25 = tpu.matmul %arg8, %4, %cst {dimension_numbers = #tpu.dot_dimension_numbers<[1], [0], [0], [1], [0, 0, 1, 1], [], []>} : vector<2x128xf32>, vector<128x512xf32>, vector<2x512xf32> -> vector<2x512xf32>
      %26 = arith.addf %24, %25 : vector<2x512xf32>
      %27 = vector.extract_strided_slice %26 {offsets = [0, 0], sizes = [2, 128], strides = [1, 1]} : vector<2x512xf32> to vector<2x128xf32>
      %28 = arith.negf %27 : vector<2x128xf32>
      %29 = math.exp %28 : vector<2x128xf32>
      %cst_19 = arith.constant 1.000000e+00 : f32
      %30 = vector.broadcast %cst_19 : f32 to vector<2x128xf32>
      %31 = arith.addf %30, %29 : vector<2x128xf32>
      %32 = arith.divf %30, %31 : vector<2x128xf32>
      %33 = vector.extract_strided_slice %26 {offsets = [0, 128], sizes = [2, 128], strides = [1, 1]} : vector<2x512xf32> to vector<2x128xf32>
      %34 = arith.negf %33 : vector<2x128xf32>
      %35 = math.exp %34 : vector<2x128xf32>
      %cst_20 = arith.constant 1.000000e+00 : f32
      %36 = vector.broadcast %cst_20 : f32 to vector<2x128xf32>
      %37 = arith.addf %36, %35 : vector<2x128xf32>
      %38 = arith.divf %36, %37 : vector<2x128xf32>
      %39 = vector.extract_strided_slice %26 {offsets = [0, 256], sizes = [2, 128], strides = [1, 1]} : vector<2x512xf32> to vector<2x128xf32>
      %40 = math.tanh %39 : vector<2x128xf32>
      %41 = vector.extract_strided_slice %26 {offsets = [0, 384], sizes = [2, 128], strides = [1, 1]} : vector<2x512xf32> to vector<2x128xf32>
      %42 = arith.negf %41 : vector<2x128xf32>
      %43 = math.exp %42 : vector<2x128xf32>
      %cst_21 = arith.constant 1.000000e+00 : f32
      %44 = vector.broadcast %cst_21 : f32 to vector<2x128xf32>
      %45 = arith.addf %44, %43 : vector<2x128xf32>
      %46 = arith.divf %44, %45 : vector<2x128xf32>
      %47 = arith.mulf %38, %arg9 : vector<2x128xf32>
      %48 = arith.mulf %32, %40 : vector<2x128xf32>
      %49 = arith.addf %47, %48 : vector<2x128xf32>
      %50 = math.tanh %49 : vector<2x128xf32>
      %51 = arith.mulf %46, %50 : vector<2x128xf32>
      %52 = arith.addi %10, %21 : i32
      %c30_i32 = arith.constant 30 : i32
      %53 = arith.cmpi slt, %52, %c30_i32 : i32
      %54 = arith.select %53, %51, %arg8 : vector<2x128xf32>
      %55 = arith.select %53, %49, %arg9 : vector<2x128xf32>
      %56 = vector.shape_cast %54 : vector<2x128xf32> to vector<2x1x128xf32>
      %c0_22 = arith.constant 0 : index
      %57 = arith.index_cast %21 : i32 to index
      %c0_23 = arith.constant 0 : index
      %58 = vector.load %arg4[%c0_22, %57, %c0_23] : memref<2x16x128xf32, #tpu.memory_space<vmem>>, vector<2x1x128xf32>
      tpu.vector_store %arg4[%c0_22, %57, %c0_23], %56 {strides = array<i32>} : memref<2x16x128xf32, #tpu.memory_space<vmem>>, vector<2x1x128xf32>,
      scf.yield %54, %55 : vector<2x128xf32>, vector<2x128xf32>
    }
    %c16_i32_11 = arith.constant 16 : i32
    %c0_12 = arith.constant 0 : index
    %c0_13 = arith.constant 0 : index
    %15 = vector.load %arg5[%c0_12, %c0_13] : memref<2x128xf32, #tpu.memory_space<vmem>>, vector<2x128xf32>
    tpu.vector_store %arg5[%c0_12, %c0_13], %14#0 {strides = array<i32>} : memref<2x128xf32, #tpu.memory_space<vmem>>, vector<2x128xf32>,
    %c0_14 = arith.constant 0 : index
    %c0_15 = arith.constant 0 : index
    %16 = vector.load %arg6[%c0_14, %c0_15] : memref<2x128xf32, #tpu.memory_space<vmem>>, vector<2x128xf32>
    tpu.vector_store %arg6[%c0_14, %c0_15], %14#1 {strides = array<i32>} : memref<2x128xf32, #tpu.memory_space<vmem>>, vector<2x128xf32>,
    return
  }
  func.func @transform_0(%arg0: i32, %arg1: i32) -> (i32, i32, i32) {
    %c1_i32 = arith.constant 1 : i32
    %0 = arith.subi %c1_i32, %arg0 : i32
    %1 = arith.muli %0, %arg1 : i32
    %c1_i32_0 = arith.constant 1 : i32
    %2 = arith.subi %c1_i32_0, %arg1 : i32
    %3 = arith.muli %arg0, %2 : i32
    %4 = arith.addi %1, %3 : i32
    %c0_i32 = arith.constant 0 : i32
    %c0_i32_1 = arith.constant 0 : i32
    return %c0_i32, %4, %arg0 : i32, i32, i32
  }
  func.func @transform_1(%arg0: i32, %arg1: i32) -> (i32, i32, i32) {
    %c0_i32 = arith.constant 0 : i32
    %c0_i32_0 = arith.constant 0 : i32
    %c0_i32_1 = arith.constant 0 : i32
    return %arg0, %c0_i32, %c0_i32_0 : i32, i32, i32
  }
  func.func @transform_2(%arg0: i32, %arg1: i32) -> (i32, i32, i32) {
    %c1_i32 = arith.constant 1 : i32
    %0 = arith.subi %c1_i32, %arg0 : i32
    %1 = arith.muli %0, %arg1 : i32
    %c1_i32_0 = arith.constant 1 : i32
    %2 = arith.subi %c1_i32_0, %arg1 : i32
    %3 = arith.muli %arg0, %2 : i32
    %4 = arith.addi %1, %3 : i32
    %c0_i32 = arith.constant 0 : i32
    %c0_i32_1 = arith.constant 0 : i32
    return %c0_i32, %4, %arg0 : i32, i32, i32
  }
}

</mosaic_0001>

<llo_original>
// kernel: taco2_encoder_forward.3
$region0: #{taco2_encoder_forward.3}
  #allocation0 [shape = 'u32[]', space=smem, size = 0x4, offset = 0x4, fixed_abs, tag = 'smem constant byte address 0x4 - core index']
  #allocation1 [shape = 'u32[144,128]{1,0:T(1,128)}', space=vmem, size = 0x12000, scoped, tag = 'internal scratch']
  #allocation2 [shape = 'f32[2,128]{1,0:T(2,128)}', space=vmem, size = 0x400, scoped, tag = 'scratch operand']
  #allocation3 [shape = 'f32[2,128]{1,0:T(2,128)}', space=vmem, size = 0x400, scoped, tag = 'scratch operand']
  %s0 = inlined_call_operand.vmem [shape: f32[2,32,1024], index: 0, kind: input, shape index: {}]
  %s1 = inlined_call_operand.vmem [shape: f32[2,128,512], index: 1, kind: input, shape index: {}]
  %s2 = inlined_call_operand.vmem [shape: f32[2,32,256], index: 2, kind: output, shape index: {}]
  %s3 = sld [smem:[#allocation0]]
  $region109: #{taco2_encoder_forward.3} parent=0
    _
  %s5 = ssub.s32 1, %s3
  %s6 = scalar_select 0, %s5, %s3
  $region1: #{taco2_encoder_forward.3} parent=0
    #allocation4 [shape = 'u8[131072]{0}', space=vmem, size = 0x20000, scoped, tag = 'input window, operand 0']
    #allocation5 [shape = 'u8[32768]{0}', space=vmem, size = 0x8000, scoped, tag = 'output window, operand 0']
    loop: start=0, step=1, limit=6
    $region2: #{taco2_encoder_forward.3} parent=1 // loop_pre_header
      _
    $region3: #{taco2_encoder_forward.3} parent=1 // loop_header
      %s8 = sphi 0, %s12
      %p9 = scmp.ge.s32.totalorder %s8, 6
      %s15 = sphi 0, %s27
      %s16 = sphi 0, %s23
      %s17 = sphi 0, %s15
      %s18 = sphi 0, %s16
      %s19 = sphi 0, %s17
      %s20 = sphi 0, %s18
      %s42 = sphi 0, %s44
      %s45 = sphi 0, %s42
      %s46 = sphi 0, %s45
      %s62 = sphi 0, %s46
      %s68 = sphi 0, %s70
      %s71 = sphi 0, %s68
      %s72 = sphi 0, %s71
      %s88 = sphi 0, %s72
      %s106 = sphi 0, %s108
      %s109 = sphi 0, %s106
      %s110 = sphi 0, %s109
      %s126 = sphi 0, %s110
    $region4: #{taco2_encoder_forward.3} parent=1 // loop_header_branch
      %11 = sbr.rel (%p9) target = $region8
    $region5: #{taco2_encoder_forward.3} parent=1 // loop_body
      %s13 = ssub.s32 %s8, 1
      %s14 = ssub.s32 %s8, 2
      %s21 = sadd.s32 1, %s16
      %p22 = scmp.ge.s32.totalorder %s21, 2
      %s23 = scalar_select %p22, 0, %s21
      %s24 = sadd.s32 1, %s15
      %s25 = scalar_select %p22, %s24, %s15
      %p26 = scmp.ge.s32.totalorder %s25, 2
      %s27 = scalar_select %p26, 0, %s25
      %s28 = ssub.s32 1, %s15
      %s29 = smul.u32 %s28, %s16
      %s30 = ssub.s32 1, %s16
      %s31 = smul.u32 %s15, %s30
      %s32 = sadd.s32 %s29, %s31
      %s33 = ssub.s32 1, %s27
      %s34 = smul.u32 %s33, %s23
      %s35 = ssub.s32 1, %s23
      %s36 = smul.u32 %s27, %s35
      %s37 = sadd.s32 %s34, %s36
      %s38 = ssub.s32 %s32, %s37
      %s39 = ssub.s32 %s15, %s27
      %s40 = sor.u32 %s38, %s39
      %p41 = scmp.eq.s32.totalorder %s40, 0
      %s43 = sadd.s32 %s42, 1
      %s44 = scalar_select %p41, %s42, %s43
      %p47 = pneg %p41
      %p48 = scmp.eq.s32.totalorder %s8, 3
      %p49 = por %p47, %p48
      %p50 = scmp.ne.s32.totalorder %s42, %s45
      %p51 = scmp.eq.s32.totalorder %s8, 0
      %p52 = por %p50, %p51
      %p53 = scmp.ne.s32.totalorder %s42, %s45
      %p54 = scmp.eq.s32.totalorder %s13, 3
      %p55 = por %p53, %p54
      %p56 = scmp.ne.s32.totalorder %s45, %s46
      %p57 = scmp.eq.s32.totalorder %s13, 0
      %p58 = por %p56, %p57
      %p59 = scmp.ne.s32.totalorder %s45, %s46
      %p60 = scmp.eq.s32.totalorder %s14, 3
      %p61 = por %p59, %p60
      %p63 = scmp.ne.s32.totalorder %s46, %s62
      %p64 = scmp.eq.s32.totalorder %s14, 0
      %p65 = por %p63, %p64
      %s66 = ssub.s32 %s15, %s27
      %p67 = scmp.eq.s32.totalorder %s66, 0
      %s69 = sadd.s32 %s68, 1
      %s70 = scalar_select %p67, %s68, %s69
      %p73 = pneg %p67
      %p74 = scmp.eq.s32.totalorder %s8, 3
      %p75 = por %p73, %p74
      %p76 = scmp.ne.s32.totalorder %s68, %s71
      %p77 = scmp.eq.s32.totalorder %s8, 0
      %p78 = por %p76, %p77
      %p79 = scmp.ne.s32.totalorder %s68, %s71
      %p80 = scmp.eq.s32.totalorder %s13, 3
      %p81 = por %p79, %p80
      %p82 = scmp.ne.s32.totalorder %s71, %s72
      %p83 = scmp.eq.s32.totalorder %s13, 0
      %p84 = por %p82, %p83
      %p85 = scmp.ne.s32.totalorder %s71, %s72
      %p86 = scmp.eq.s32.totalorder %s14, 3
      %p87 = por %p85, %p86
      %p89 = scmp.ne.s32.totalorder %s72, %s88
      %p90 = scmp.eq.s32.totalorder %s14, 0
      %p91 = por %p89, %p90
      %s92 = ssub.s32 1, %s15
      %s93 = smul.u32 %s92, %s16
      %s94 = ssub.s32 1, %s16
      %s95 = smul.u32 %s15, %s94
      %s96 = sadd.s32 %s93, %s95
      %s97 = ssub.s32 1, %s27
      %s98 = smul.u32 %s97, %s23
      %s99 = ssub.s32 1, %s23
      %s100 = smul.u32 %s27, %s99
      %s101 = sadd.s32 %s98, %s100
      %s102 = ssub.s32 %s96, %s101
      %s103 = ssub.s32 %s15, %s27
      %s104 = sor.u32 %s102, %s103
      %p105 = scmp.eq.s32.totalorder %s104, 0
      %s107 = sadd.s32 %s106, 1
      %s108 = scalar_select %p105, %s106, %s107
      %p111 = pneg %p105
      %p112 = scmp.eq.s32.totalorder %s8, 3
      %p113 = por %p111, %p112
      %p114 = scmp.ne.s32.totalorder %s106, %s109
      %p115 = scmp.eq.s32.totalorder %s8, 0
      %p116 = por %p114, %p115
      %p117 = scmp.ne.s32.totalorder %s106, %s109
      %p118 = scmp.eq.s32.totalorder %s13, 3
      %p119 = por %p117, %p118
      %p120 = scmp.ne.s32.totalorder %s109, %s110
      %p121 = scmp.eq.s32.totalorder %s13, 0
      %p122 = por %p120, %p121
      %p123 = scmp.ne.s32.totalorder %s109, %s110
      %p124 = scmp.eq.s32.totalorder %s14, 3
      %p125 = por %p123, %p124
      %p127 = scmp.ne.s32.totalorder %s110, %s126
      %p128 = scmp.eq.s32.totalorder %s14, 0
      %p129 = por %p127, %p128
      %p130 = scmp.le.s32.totalorder 1, %s8
      %p131 = scmp.lt.s32.totalorder %s8, 5
      %p132 = pnand %p130, %p131
      %p133 = pneg %p132
      // Predicated region
      $region9: #{taco2_encoder_forward.3} parent=5 // pred_check
        _
      $region10: #{taco2_encoder_forward.3} parent=5 // pred_check_branch
        %135 = sbr.rel (%p132) target = $region12
      $region11: #{taco2_encoder_forward.3} parent=5 // pred_region
        %s136 = ssub.s32 %s8, 1
      $region12: #{taco2_encoder_forward.3} parent=5 // pred_fallthru
        _
      %p137 = scmp.lt.s32.totalorder %s8, 4
      // Predicated region
      $region13: #{taco2_encoder_forward.3} parent=5 // pred_check
        %p138 = pneg %p137
      $region14: #{taco2_encoder_forward.3} parent=5 // pred_check_branch
        %140 = sbr.rel (%p138) target = $region16
      $region15: #{taco2_encoder_forward.3} parent=5 // pred_region
        // Predicated region
        $region17: #{taco2_encoder_forward.3} parent=15 // pred_check
          %p141 = pneg %p52
        $region18: #{taco2_encoder_forward.3} parent=15 // pred_check_branch
          %143 = sbr.rel (%p141) target = $region20
        $region19: #{taco2_encoder_forward.3} parent=15 // pred_region
          %s144 = sand.u32 %s42, 1
          %s145 = sand.u32 %s42, 1
          %s146 = smul.addr %s145, 128
          %s147 = scalar_lea.vmem [#allocation4], %s146
          %s148 = ssub.s32 1, %s15
          %s149 = smul.u32 %s148, %s16
          %s150 = ssub.s32 1, %s16
          %s151 = smul.u32 %s15, %s150
          %s152 = sadd.s32 %s149, %s151
          %s153 = smul.u32 2, %s152
          %s154 = smul.u32 4, %s15
          %s155 = smul.addr %s153, 8
          %s156 = sadd.s32 %s154, %s155
          %s157 = smul.addr %s156, 8
          %s158 = scalar_lea.vmem %s0, %s157
          // Predicated region
          $region21: #{taco2_encoder_forward.3} parent=19 // pred_check
            _
          $region22: #{taco2_encoder_forward.3} parent=19 // pred_check_branch
            %160 = sbr.rel (0) target = $region24
          $region23: #{taco2_encoder_forward.3} parent=19 // pred_region
            // Predicated region
            $region25: #{taco2_encoder_forward.3} parent=23 // pred_check
              _
            $region26: #{taco2_encoder_forward.3} parent=23 // pred_check_branch
              %162 = sbr.rel (0) target = $region28
            $region27: #{taco2_encoder_forward.3} parent=23 // pred_region
              loop: start=0, step=1, limit=1
              $region29: #{taco2_encoder_forward.3} parent=27 // loop_pre_header
                _
              $region30: #{taco2_encoder_forward.3} parent=27 // loop_header
                %s164 = sphi 0, %s168
                %p165 = scmp.ge.s32.totalorder %s164, 1
                %s169 = sphi %s158, %s158
                %s170 = sphi %s147, %s147
              $region31: #{taco2_encoder_forward.3} parent=27 // loop_header_branch
                %167 = sbr.rel (%p165) target = $region35
              $region32: #{taco2_encoder_forward.3} parent=27 // loop_body
                %v171 = vld [vmem:[%s169] sm:$0xff]
                %172 = vst [vmem:[%s170] sm:$0xff] %v171
                %v173 = vld [vmem:[%s169 + $0x8] sm:$0xff]
                %174 = vst [vmem:[%s170 + $0x8] sm:$0xff] %v173
                %v175 = vld [vmem:[%s169 + $0x10] sm:$0xff]
                %176 = vst [vmem:[%s170 + $0x10] sm:$0xff] %v175
                %v177 = vld [vmem:[%s169 + $0x18] sm:$0xff]
                %178 = vst [vmem:[%s170 + $0x18] sm:$0xff] %v177
                %v179 = vld [vmem:[%s169 + $0x40] sm:$0xff]
                %180 = vst [vmem:[%s170 + $0x20] sm:$0xff] %v179
                %v181 = vld [vmem:[%s169 + $0x48] sm:$0xff]
                %182 = vst [vmem:[%s170 + $0x28] sm:$0xff] %v181
                %v183 = vld [vmem:[%s169 + $0x50] sm:$0xff]
                %184 = vst [vmem:[%s170 + $0x30] sm:$0xff] %v183
                %v185 = vld [vmem:[%s169 + $0x58] sm:$0xff]
                %186 = vst [vmem:[%s170 + $0x38] sm:$0xff] %v185
                %v187 = vld [vmem:[%s169 + $0x100] sm:$0xff]
                %188 = vst [vmem:[%s170 + $0x40] sm:$0xff] %v187
                %v189 = vld [vmem:[%s169 + $0x108] sm:$0xff]
                %190 = vst [vmem:[%s170 + $0x48] sm:$0xff] %v189
                %v191 = vld [vmem:[%s169 + $0x110] sm:$0xff]
                %192 = vst [vmem:[%s170 + $0x50] sm:$0xff] %v191
                %v193 = vld [vmem:[%s169 + $0x118] sm:$0xff]
                %194 = vst [vmem:[%s170 + $0x58] sm:$0xff] %v193
                %v195 = vld [vmem:[%s169 + $0x140] sm:$0xff]
                %196 = vst [vmem:[%s170 + $0x60] sm:$0xff] %v195
                %v197 = vld [vmem:[%s169 + $0x148] sm:$0xff]
                %198 = vst [vmem:[%s170 + $0x68] sm:$0xff] %v197
                %v199 = vld [vmem:[%s169 + $0x150] sm:$0xff]
                %200 = vst [vmem:[%s170 + $0x70] sm:$0xff] %v199
                %v201 = vld [vmem:[%s169 + $0x158] sm:$0xff]
                %202 = vst [vmem:[%s170 + $0x78] sm:$0xff] %v201
              $region33: #{taco2_encoder_forward.3} parent=27 // loop_footer
                %s168 = sadd.s32 1, %s164
              $region34: #{taco2_encoder_forward.3} parent=27 // loop_footer_branch
                %163 = sbr.rel target = $region30
              $region35: #{taco2_encoder_forward.3} parent=27 // loop_exit
                _
            $region28: #{taco2_encoder_forward.3} parent=23 // pred_fallthru
              _
            // Predicated region
            $region36: #{taco2_encoder_forward.3} parent=23 // pred_check
              _
            $region37: #{taco2_encoder_forward.3} parent=23 // pred_check_branch
              %204 = sbr.rel target = $region39
            $region38: #{taco2_encoder_forward.3} parent=23 // pred_region
              _
            $region39: #{taco2_encoder_forward.3} parent=23 // pred_fallthru
              _
          $region24: #{taco2_encoder_forward.3} parent=19 // pred_fallthru
            _
          %205 = vnop
        $region20: #{taco2_encoder_forward.3} parent=15 // pred_fallthru
          _
        // Predicated region
        $region40: #{taco2_encoder_forward.3} parent=15 // pred_check
          %p206 = pneg %p78
        $region41: #{taco2_encoder_forward.3} parent=15 // pred_check_branch
          %208 = sbr.rel (%p206) target = $region43
        $region42: #{taco2_encoder_forward.3} parent=15 // pred_region
          %p209 = scmp.lt.s32.totalorder %s15, 1
          %s210 = scalar_select %p209, %s15, 1
          %s211 = smul.addr %s210, 64
          %s212 = smul.addr %s211, 8
          %s213 = scalar_lea.vmem %s1, %s212
        $region43: #{taco2_encoder_forward.3} parent=15 // pred_fallthru
          _
      $region16: #{taco2_encoder_forward.3} parent=5 // pred_fallthru
        _
      %p214 = scmp.le.s32.totalorder 1, %s8
      %p215 = scmp.lt.s32.totalorder %s8, 5
      %p216 = pnand %p214, %p215
      %p217 = pneg %p216
      // Predicated region
      $region44: #{taco2_encoder_forward.3} parent=5 // pred_check
        _
      $region45: #{taco2_encoder_forward.3} parent=5 // pred_check_branch
        %219 = sbr.rel (%p216) target = $region47
      $region46: #{taco2_encoder_forward.3} parent=5 // pred_region
        %s220 = ssub.s32 %s8, 1
        %s221 = sand.u32 %s45, 1
        %s222 = sand.u32 %s45, 1
        %s223 = smul.addr %s222, 128
        %s224 = scalar_lea.vmem [#allocation4], %s223
        // Predicated region
        $region48: #{taco2_encoder_forward.3} parent=46 // pred_check
          %p225 = pneg %p58
        $region49: #{taco2_encoder_forward.3} parent=46 // pred_check_branch
          %227 = sbr.rel (%p225) target = $region51
        $region50: #{taco2_encoder_forward.3} parent=46 // pred_region
          _
        $region51: #{taco2_encoder_forward.3} parent=46 // pred_fallthru
          _
        %s228 = sand.u32 %s45, 1
        %s229 = sand.u32 %s45, 1
        %s230 = smul.addr %s229, 128
        %s231 = scalar_lea.vmem [#allocation4], %s230
        %p232 = pneg %p58
        %p233 = pneg %p55
        %p234 = scmp.lt.s32.totalorder %s17, 1
        %s235 = scalar_select %p234, %s17, 1
        %s236 = smul.addr %s235, 64
        %s237 = smul.addr %s236, 8
        %s238 = scalar_lea.vmem %s1, %s237
        %p239 = pneg %p84
        %p240 = pneg %p81
        %p241 = pneg %p122
        %p242 = pneg %p119
        %s243 = sand.u32 %s109, 1
        %s244 = sand.u32 %s109, 1
        %s245 = smul.addr %s244, 32
        %s246 = scalar_lea.vmem [#allocation5], %s245
        %s247 = ssub.s32 1, %s17
        %s248 = smul.u32 %s247, %s18
        %s249 = ssub.s32 1, %s18
        %s250 = smul.u32 %s17, %s249
        %s251 = sadd.s32 %s248, %s250
        %s252 = smul.u32 2, %s251
        %s253 = smul.u32 4, %s17
        %p254 = scmp.lt.s32.totalorder %s17, 1
        %s255 = scalar_select %p254, %s17, 1
        %s256 = smul.addr %s255, 64
        %s257 = smul.addr %s256, 8
        %s258 = scalar_lea.vmem %s1, %s257
        %s259 = ssub.s32 1, %s17
        %s260 = smul.u32 %s259, %s18
        %s261 = ssub.s32 1, %s18
        %s262 = smul.u32 %s17, %s261
        %s263 = sadd.s32 %s260, %s262
        %s264 = smul.u32 2, %s263
        %p265 = scmp.eq.s32.totalorder %s18, 0
        // Predicated region
        $region52: #{taco2_encoder_forward.3} parent=46 // pred_check
          %p266 = pneg %p265
        $region53: #{taco2_encoder_forward.3} parent=46 // pred_check_branch
          %268 = sbr.rel (%p266) target = $region55
        $region54: #{taco2_encoder_forward.3} parent=46 // pred_region
          %269 = vst [vmem:[#allocation2] sm:$0x3] 0.0
          %270 = vst [vmem:[#allocation3] sm:$0x3] 0.0
        $region55: #{taco2_encoder_forward.3} parent=46 // pred_fallthru
          _
        %v271 = vld [vmem:[%s258] sm:$0xff]
        %v272 = vld [vmem:[%s258 + $0x8] sm:$0xff]
        %v273 = vld [vmem:[%s258 + $0x10] sm:$0xff]
        %v274 = vld [vmem:[%s258 + $0x18] sm:$0xff]
        %v275 = vld [vmem:[%s258 + $0x20] sm:$0xff]
        %v276 = vld [vmem:[%s258 + $0x28] sm:$0xff]
        %v277 = vld [vmem:[%s258 + $0x30] sm:$0xff]
        %v278 = vld [vmem:[%s258 + $0x38] sm:$0xff]
        %v279 = vld [vmem:[%s258 + $0x40] sm:$0xff]
        %v280 = vld [vmem:[%s258 + $0x48] sm:$0xff]
        %v281 = vld [vmem:[%s258 + $0x50] sm:$0xff]
        %v282 = vld [vmem:[%s258 + $0x58] sm:$0xff]
        %v283 = vld [vmem:[%s258 + $0x60] sm:$0xff]
        %v284 = vld [vmem:[%s258 + $0x68] sm:$0xff]
        %v285 = vld [vmem:[%s258 + $0x70] sm:$0xff]
        %v286 = vld [vmem:[%s258 + $0x78] sm:$0xff]
        %v287 = vld [vmem:[%s258 + $0x80] sm:$0xff]
        %v288 = vld [vmem:[%s258 + $0x88] sm:$0xff]
        %v289 = vld [vmem:[%s258 + $0x90] sm:$0xff]
        %v290 = vld [vmem:[%s258 + $0x98] sm:$0xff]
        %v291 = vld [vmem:[%s258 + $0xa0] sm:$0xff]
        %v292 = vld [vmem:[%s258 + $0xa8] sm:$0xff]
        %v293 = vld [vmem:[%s258 + $0xb0] sm:$0xff]
        %v294 = vld [vmem:[%s258 + $0xb8] sm:$0xff]
        %v295 = vld [vmem:[%s258 + $0xc0] sm:$0xff]
        %v296 = vld [vmem:[%s258 + $0xc8] sm:$0xff]
        %v297 = vld [vmem:[%s258 + $0xd0] sm:$0xff]
        %v298 = vld [vmem:[%s258 + $0xd8] sm:$0xff]
        %v299 = vld [vmem:[%s258 + $0xe0] sm:$0xff]
        %v300 = vld [vmem:[%s258 + $0xe8] sm:$0xff]
        %v301 = vld [vmem:[%s258 + $0xf0] sm:$0xff]
        %v302 = vld [vmem:[%s258 + $0xf8] sm:$0xff]
        %v303 = vld [vmem:[%s258 + $0x100] sm:$0xff]
        %v304 = vld [vmem:[%s258 + $0x108] sm:$0xff]
        %v305 = vld [vmem:[%s258 + $0x110] sm:$0xff]
        %v306 = vld [vmem:[%s258 + $0x118] sm:$0xff]
        %v307 = vld [vmem:[%s258 + $0x120] sm:$0xff]
        %v308 = vld [vmem:[%s258 + $0x128] sm:$0xff]
        %v309 = vld [vmem:[%s258 + $0x130] sm:$0xff]
        %v310 = vld [vmem:[%s258 + $0x138] sm:$0xff]
        %v311 = vld [vmem:[%s258 + $0x140] sm:$0xff]
        %v312 = vld [vmem:[%s258 + $0x148] sm:$0xff]
        %v313 = vld [vmem:[%s258 + $0x150] sm:$0xff]
        %v314 = vld [vmem:[%s258 + $0x158] sm:$0xff]
        %v315 = vld [vmem:[%s258 + $0x160] sm:$0xff]
        %v316 = vld [vmem:[%s258 + $0x168] sm:$0xff]
        %v317 = vld [vmem:[%s258 + $0x170] sm:$0xff]
        %v318 = vld [vmem:[%s258 + $0x178] sm:$0xff]
        %v319 = vld [vmem:[%s258 + $0x180] sm:$0xff]
        %v320 = vld [vmem:[%s258 + $0x188] sm:$0xff]
        %v321 = vld [vmem:[%s258 + $0x190] sm:$0xff]
        %v322 = vld [vmem:[%s258 + $0x198] sm:$0xff]
        %v323 = vld [vmem:[%s258 + $0x1a0] sm:$0xff]
        %v324 = vld [vmem:[%s258 + $0x1a8] sm:$0xff]
        %v325 = vld [vmem:[%s258 + $0x1b0] sm:$0xff]
        %v326 = vld [vmem:[%s258 + $0x1b8] sm:$0xff]
        %v327 = vld [vmem:[%s258 + $0x1c0] sm:$0xff]
        %v328 = vld [vmem:[%s258 + $0x1c8] sm:$0xff]
        %v329 = vld [vmem:[%s258 + $0x1d0] sm:$0xff]
        %v330 = vld [vmem:[%s258 + $0x1d8] sm:$0xff]
        %v331 = vld [vmem:[%s258 + $0x1e0] sm:$0xff]
        %v332 = vld [vmem:[%s258 + $0x1e8] sm:$0xff]
        %v333 = vld [vmem:[%s258 + $0x1f0] sm:$0xff]
        %v334 = vld [vmem:[%s258 + $0x1f8] sm:$0xff]
        %s335 = ssub.s32 1, %s17
        %s336 = smul.u32 %s335, %s18
        %s337 = ssub.s32 1, %s18
        %s338 = smul.u32 %s17, %s337
        %s339 = sadd.s32 %s336, %s338
        %s340 = smul.u32 %s339, 16
        %v341 = vld [vmem:[#allocation2] sm:$0x3]
        %v342 = vld [vmem:[#allocation3] sm:$0x3]
        loop: start=0, step=1, limit=16
        $region56: #{taco2_encoder_forward.3} parent=46 // loop_pre_header
          _
        $region57: #{taco2_encoder_forward.3} parent=46 // loop_header
          %s344 = sphi 0, %s348
          %p345 = scmp.ge.s32.totalorder %s344, 16
          %v349 = vphi %v341, %v689
          %v350 = vphi %v342, %v707
        $region58: #{taco2_encoder_forward.3} parent=46 // loop_header_branch
          %347 = sbr.rel (%p345) target = $region62
        $region59: #{taco2_encoder_forward.3} parent=46 // loop_body
          %s351 = smul.u32 %s335, %s344
          %s352 = ssub.s32 15, %s344
          %s353 = smul.u32 %s17, %s352
          %s354 = sadd.s32 %s351, %s353
          %s355 = sshra.s32 %s354, 3
          %s356 = sand.u32 %s354, 7
          %s357 = sshra.s32 %s354, 3
          %s358 = sand.u32 %s354, 7
          %s359 = smul.u32 %s355, 4
          %s360 = smul.u32 %s359, 8
          %s361 = sadd.s32 %s360, %s358
          %s362 = scalar_lea.vmem %s224, %s361 [#allocation4]
          %v363 = vld [vmem:[%s362] ss:$8 sm:$0xf]
          %s364 = sadd.s32 64, %s361
          %s365 = scalar_lea.vmem %s224, %s364 [#allocation4]
          %v366 = vld [vmem:[%s365] ss:$8 sm:$0xf]
          %367 = vmatprep.subr.mxu0 %v272
          %368 = vmatpush1.msra.mxu0 %v271
          %369 = vmatprep.subr.mxu0 %v276
          %370 = vmatpush1.msra.mxu0 %v275
          %371 = vmatprep.subr.mxu0 %v280
          %372 = vmatpush1.msra.mxu0 %v279
          %373 = vmatprep.subr.mxu0 %v284
          %374 = vmatpush1.msra.mxu0 %v283
          %375 = vmatprep.subr.mxu0 %v288
          %376 = vmatpush1.msra.mxu0 %v287
          %377 = vmatprep.subr.mxu0 %v292
          %378 = vmatpush1.msra.mxu0 %v291
          %379 = vmatprep.subr.mxu0 %v296
          %380 = vmatpush1.msra.mxu0 %v295
          %381 = vmatprep.subr.mxu0 %v300
          %382 = vmatpush1.msra.mxu0 %v299
          %383 = vmatprep.subr.mxu0 %v304
          %384 = vmatpush1.msra.mxu0 %v303
          %385 = vmatprep.subr.mxu0 %v308
          %386 = vmatpush1.msra.mxu0 %v307
          %387 = vmatprep.subr.mxu0 %v312
          %388 = vmatpush1.msra.mxu0 %v311
          %389 = vmatprep.subr.mxu0 %v316
          %390 = vmatpush1.msra.mxu0 %v315
          %391 = vmatprep.subr.mxu0 %v320
          %392 = vmatpush1.msra.mxu0 %v319
          %393 = vmatprep.subr.mxu0 %v324
          %394 = vmatpush1.msra.mxu0 %v323
          %395 = vmatprep.subr.mxu0 %v328
          %396 = vmatpush1.msra.mxu0 %v327
          %397 = vmatprep.subr.mxu0 %v332
          %398 = vmatpush1.msra.mxu0 %v331
          %399 = vmatprep.subr.mxu0 0.0
          %400 = vmatpush1.msra.mxu0 0.0
          %401 = vmatprep.subr.mxu0 0.0
          %402 = vmatpush1.msra.mxu0 0.0
          %403 = vmatprep.subr.mxu0 0.0
          %404 = vmatpush1.msra.mxu0 0.0
          %405 = vmatprep.subr.mxu0 0.0
          %406 = vmatpush1.msra.mxu0 0.0
          %407 = vmatprep.subr.mxu0 0.0
          %408 = vmatpush1.msra.mxu0 0.0
          %409 = vmatprep.subr.mxu0 0.0
          %410 = vmatpush1.msra.mxu0 0.0
          %411 = vmatprep.subr.mxu0 0.0
          %412 = vmatpush1.msra.mxu0 0.0
          %413 = vmatprep.subr.mxu0 0.0
          %414 = vmatpush1.msra.mxu0 0.0
          %415 = vmatprep.subr.mxu0 0.0
          %416 = vmatpush1.msra.mxu0 0.0
          %417 = vmatprep.subr.mxu0 0.0
          %418 = vmatpush1.msra.mxu0 0.0
          %419 = vmatprep.subr.mxu0 0.0
          %420 = vmatpush1.msra.mxu0 0.0
          %421 = vmatprep.subr.mxu0 0.0
          %422 = vmatpush1.msra.mxu0 0.0
          %423 = vmatprep.subr.mxu0 0.0
          %424 = vmatpush1.msra.mxu0 0.0
          %425 = vmatprep.subr.mxu0 0.0
          %426 = vmatpush1.msra.mxu0 0.0
          %427 = vmatprep.subr.mxu0 0.0
          %428 = vmatpush1.msra.mxu0 0.0
          %429 = vmatprep.subr.mxu0 0.0
          %430 = vmatpush1.msra.mxu0 0.0
          %431 = vmatprep.mubr.f32.mxu0 0.0
          %432 = vmatmul.mubr.f32.gmra.mrb[0].mxu0 %v349
          %v433 = vpop.f32.mrb[0].mxu0
          %v434 = vadd.f32 0.0, %v433
          %v435 = vpop.f32.mrb[0].mxu0
          %v436 = vadd.f32 0.0, %v435
          %437 = vdwg.mxu0
          %438 = vmatprep.subr.mxu0 %v274
          %439 = vmatpush1.msra.mxu0 %v273
          %440 = vmatprep.subr.mxu0 %v278
          %441 = vmatpush1.msra.mxu0 %v277
          %442 = vmatprep.subr.mxu0 %v282
          %443 = vmatpush1.msra.mxu0 %v281
          %444 = vmatprep.subr.mxu0 %v286
          %445 = vmatpush1.msra.mxu0 %v285
          %446 = vmatprep.subr.mxu0 %v290
          %447 = vmatpush1.msra.mxu0 %v289
          %448 = vmatprep.subr.mxu0 %v294
          %449 = vmatpush1.msra.mxu0 %v293
          %450 = vmatprep.subr.mxu0 %v298
          %451 = vmatpush1.msra.mxu0 %v297
          %452 = vmatprep.subr.mxu0 %v302
          %453 = vmatpush1.msra.mxu0 %v301
          %454 = vmatprep.subr.mxu0 %v306
          %455 = vmatpush1.msra.mxu0 %v305
          %456 = vmatprep.subr.mxu0 %v310
          %457 = vmatpush1.msra.mxu0 %v309
          %458 = vmatprep.subr.mxu0 %v314
          %459 = vmatpush1.msra.mxu0 %v313
          %460 = vmatprep.subr.mxu0 %v318
          %461 = vmatpush1.msra.mxu0 %v317
          %462 = vmatprep.subr.mxu0 %v322
          %463 = vmatpush1.msra.mxu0 %v321
          %464 = vmatprep.subr.mxu0 %v326
          %465 = vmatpush1.msra.mxu0 %v325
          %466 = vmatprep.subr.mxu0 %v330
          %467 = vmatpush1.msra.mxu0 %v329
          %468 = vmatprep.subr.mxu0 %v334
          %469 = vmatpush1.msra.mxu0 %v333
          %470 = vmatprep.subr.mxu0 0.0
          %471 = vmatpush1.msra.mxu0 0.0
          %472 = vmatprep.subr.mxu0 0.0
          %473 = vmatpush1.msra.mxu0 0.0
          %474 = vmatprep.subr.mxu0 0.0
          %475 = vmatpush1.msra.mxu0 0.0
          %476 = vmatprep.subr.mxu0 0.0
          %477 = vmatpush1.msra.mxu0 0.0
          %478 = vmatprep.subr.mxu0 0.0
          %479 = vmatpush1.msra.mxu0 0.0
          %480 = vmatprep.subr.mxu0 0.0
          %481 = vmatpush1.msra.mxu0 0.0
          %482 = vmatprep.subr.mxu0 0.0
          %483 = vmatpush1.msra.mxu0 0.0
          %484 = vmatprep.subr.mxu0 0.0
          %485 = vmatpush1.msra.mxu0 0.0
          %486 = vmatprep.subr.mxu0 0.0
          %487 = vmatpush1.msra.mxu0 0.0
          %488 = vmatprep.subr.mxu0 0.0
          %489 = vmatpush1.msra.mxu0 0.0
          %490 = vmatprep.subr.mxu0 0.0
          %491 = vmatpush1.msra.mxu0 0.0
          %492 = vmatprep.subr.mxu0 0.0
          %493 = vmatpush1.msra.mxu0 0.0
          %494 = vmatprep.subr.mxu0 0.0
          %495 = vmatpush1.msra.mxu0 0.0
          %496 = vmatprep.subr.mxu0 0.0
          %497 = vmatpush1.msra.mxu0 0.0
          %498 = vmatprep.subr.mxu0 0.0
          %499 = vmatpush1.msra.mxu0 0.0
          %500 = vmatprep.subr.mxu0 0.0
          %501 = vmatpush1.msra.mxu0 0.0
          %502 = vmatprep.mubr.f32.mxu0 0.0
          %503 = vmatmul.mubr.f32.gmra.mrb[0].mxu0 %v349
          %v504 = vpop.f32.mrb[0].mxu0
          %v505 = vadd.f32 0.0, %v504
          %v506 = vpop.f32.mrb[0].mxu0
          %v507 = vadd.f32 0.0, %v506
          %508 = vdwg.mxu0
          %v513 = vcombine.low %v434, %v436
          %v514 = vcombine.low %v505, %v507
          %v516 = vunpack.c.l.s4 1966171168
          %v517 = vunpack.c.0.s8 %v516
          %v518 = vlaneseq
          %v519 = vshrl.u32 %v518, 7
          %v520 = vsub.s32 %v517, %v519
          %v521 = vrot.slane %v513, %v520
          %v523 = vunpack.c.l.s4 1966171168
          %v524 = vunpack.c.0.s8 %v523
          %v525 = vlaneseq
          %v526 = vshrl.u32 %v525, 7
          %v527 = vsub.s32 %v524, %v526
          %v528 = vrot.slane %v514, %v527
          %v529 = vcombine.low %v521, %v528
          %v530 = vcombine.high %v521, %v528
          %v532 = vunpack.c.l.s4 1966171168
          %v533 = vunpack.c.0.s8 %v532
          %v534 = vlaneseq
          %v535 = vshrl.u32 %v534, 7
          %v536 = vsub.s32 %v533, %v535
          %v537 = vrot.slane %v529, %v536
          %v539 = vunpack.c.l.s4 1966171168
          %v540 = vunpack.c.0.s8 %v539
          %v541 = vlaneseq
          %v542 = vshrl.u32 %v541, 7
          %v543 = vsub.s32 %v540, %v542
          %v544 = vrot.slane %v530, %v543
          %v547 = vadd.f32 %v363, %v537
          %v548 = vadd.f32 %v366, %v544
          %v549 = vxor.u32 %v547, 2147483648
          %v550 = vxor.u32 %v548, 2147483648
          %v551 = vmul.f32 %v549, 1.442695
          %v552 = vpow.pop %v551
          %v553 = vmul.f32 %v550, 1.442695
          %v554 = vpow.pop %v553
          %v555 = vadd.f32 %v552, 1.0
          %v556 = vadd.f32 %v554, 1.0
          %v557 = vrcp.pop %v555
          %v558 = vmul.f32 1.0, %v557
          %v559 = vrcp.pop %v556
          %v560 = vmul.f32 1.0, %v559
          %v563 = vrot.slane %v547, 1
          %v564 = vrot.slane %v548, 1
          %v567 = vxor.u32 %v563, 2147483648
          %v568 = vxor.u32 %v564, 2147483648
          %v569 = vmul.f32 %v567, 1.442695
          %v570 = vpow.pop %v569
          %v571 = vmul.f32 %v568, 1.442695
          %v572 = vpow.pop %v571
          %v573 = vadd.f32 %v570, 1.0
          %v574 = vadd.f32 %v572, 1.0
          %v575 = vrcp.pop %v573
          %v576 = vmul.f32 1.0, %v575
          %v577 = vrcp.pop %v574
          %v578 = vmul.f32 1.0, %v577
          %v579 = vrot.slane %v547, 2
          %v580 = vrot.slane %v548, 2
          %v583 = vtanh.pop %v579
          %v584 = vtanh.pop %v580
          %v585 = vrot.slane %v547, 3
          %v586 = vrot.slane %v548, 3
          %v589 = vxor.u32 %v585, 2147483648
          %v590 = vxor.u32 %v586, 2147483648
          %v591 = vmul.f32 %v589, 1.442695
          %v592 = vpow.pop %v591
          %v593 = vmul.f32 %v590, 1.442695
          %v594 = vpow.pop %v593
          %v595 = vadd.f32 %v592, 1.0
          %v596 = vadd.f32 %v594, 1.0
          %v597 = vrcp.pop %v595
          %v598 = vmul.f32 1.0, %v597
          %v599 = vrcp.pop %v596
          %v600 = vmul.f32 1.0, %v599
          %v603 = vunpack.c.l.s4 1966171168
          %v604 = vunpack.c.0.s8 %v603
          %v605 = vlaneseq
          %v606 = vshrl.u32 %v605, 7
          %v607 = vsub.s32 %v604, %v606
          %v608 = vrot.slane %v350, %v607
          %v609 = vcombine.high %v608, %v608
          %v611 = vunpack.c.l.s4 1966171168
          %v612 = vunpack.c.0.s8 %v611
          %v613 = vlaneseq
          %v614 = vshrl.u32 %v613, 7
          %v615 = vsub.s32 %v612, %v614
          %v616 = vrot.slane %v608, %v615
          %v618 = vunpack.c.l.s4 1966171168
          %v619 = vunpack.c.0.s8 %v618
          %v620 = vlaneseq
          %v621 = vshrl.u32 %v620, 7
          %v622 = vsub.s32 %v619, %v621
          %v623 = vrot.slane %v609, %v622
          %v626 = vmul.f32 %v576, %v616
          %v627 = vmul.f32 %v578, %v623
          %v628 = vmul.f32 %v558, %v583
          %v629 = vmul.f32 %v560, %v584
          %v630 = vadd.f32 %v626, %v628
          %v631 = vadd.f32 %v627, %v629
          %v632 = vtanh.pop %v630
          %v633 = vtanh.pop %v631
          %v634 = vmul.f32 %v598, %v632
          %v635 = vmul.f32 %v600, %v633
          %s636 = sadd.s32 %s340, %s354
          %p637 = scmp.lt.s32.totalorder %s636, 30
          %s638 = scalar_select %p637, 1, 0
          %v639 = vstv %s638
          %vm640 = vcmp.eq.s32.totalorder %v639, 1
          %v643 = vunpack.c.l.s4 1966171168
          %v644 = vunpack.c.0.s8 %v643
          %v645 = vlaneseq
          %v646 = vshrl.u32 %v645, 7
          %v647 = vsub.s32 %v644, %v646
          %v648 = vrot.slane %v349, %v647
          %v649 = vcombine.high %v648, %v648
          %v651 = vunpack.c.l.s4 1966171168
          %v652 = vunpack.c.0.s8 %v651
          %v653 = vlaneseq
          %v654 = vshrl.u32 %v653, 7
          %v655 = vsub.s32 %v652, %v654
          %v656 = vrot.slane %v648, %v655
          %v658 = vunpack.c.l.s4 1966171168
          %v659 = vunpack.c.0.s8 %v658
          %v660 = vlaneseq
          %v661 = vshrl.u32 %v660, 7
          %v662 = vsub.s32 %v659, %v661
          %v663 = vrot.slane %v649, %v662
          %v666 = vsel %vm640, %v634, %v656
          %v667 = vsel %vm640, %v635, %v663
          %v668 = vsel %vm640, %v630, %v616
          %v669 = vsel %vm640, %v631, %v623
          %s670 = scalar_lea.vmem %s246, %s354 [#allocation5]
          %671 = vst [vmem:[%s670] sm:$0x1] %v666
          %672 = vst [vmem:[%s670 + $0x10] sm:$0x1] %v667
          %v675 = vcombine.low %v666, %v667
          %v677 = vunpack.c.l.s4 1966171168
          %v678 = vunpack.c.0.s8 %v677
          %v679 = vlaneseq
          %v680 = vshrl.u32 %v679, 7
          %v681 = vsub.s32 %v678, %v680
          %v682 = vrot.slane %v675, %v681
          %v684 = vunpack.c.l.s4 1966171168
          %v685 = vunpack.c.0.s8 %v684
          %v686 = vlaneseq
          %v687 = vshrl.u32 %v686, 7
          %v688 = vsub.s32 %v685, %v687
          %v689 = vrot.slane %v682, %v688
          %v693 = vcombine.low %v668, %v669
          %v695 = vunpack.c.l.s4 1966171168
          %v696 = vunpack.c.0.s8 %v695
          %v697 = vlaneseq
          %v698 = vshrl.u32 %v697, 7
          %v699 = vsub.s32 %v696, %v698
          %v700 = vrot.slane %v693, %v699
          %v702 = vunpack.c.l.s4 1966171168
          %v703 = vunpack.c.0.s8 %v702
          %v704 = vlaneseq
          %v705 = vshrl.u32 %v704, 7
          %v706 = vsub.s32 %v703, %v705
          %v707 = vrot.slane %v700, %v706
        $region60: #{taco2_encoder_forward.3} parent=46 // loop_footer
          %s348 = sadd.s32 1, %s344
        $region61: #{taco2_encoder_forward.3} parent=46 // loop_footer_branch
          %343 = sbr.rel target = $region57
        $region62: #{taco2_encoder_forward.3} parent=46 // loop_exit
          _
        %709 = vst [vmem:[#allocation2] sm:$0x3] %v349
        %710 = vst [vmem:[#allocation3] sm:$0x3] %v350
        %s711 = sand.u32 %s109, 1
        %s712 = sand.u32 %s109, 1
        %s713 = smul.addr %s712, 32
        %s714 = scalar_lea.vmem [#allocation5], %s713
        // Predicated region
        $region63: #{taco2_encoder_forward.3} parent=46 // pred_check
          %p715 = pneg %p119
        $region64: #{taco2_encoder_forward.3} parent=46 // pred_check_branch
          %717 = sbr.rel (%p715) target = $region66
        $region65: #{taco2_encoder_forward.3} parent=46 // pred_region
          %s718 = ssub.s32 1, %s17
          %s719 = smul.u32 %s718, %s18
          %s720 = ssub.s32 1, %s18
          %s721 = smul.u32 %s17, %s720
          %s722 = sadd.s32 %s719, %s721
          %s723 = smul.u32 2, %s722
          %s724 = smul.addr %s723, 2
          %s725 = sadd.s32 %s17, %s724
          %s726 = smul.addr %s725, 8
          %s727 = scalar_lea.vmem %s2, %s726
          // Predicated region
          $region67: #{taco2_encoder_forward.3} parent=65 // pred_check
            _
          $region68: #{taco2_encoder_forward.3} parent=65 // pred_check_branch
            %729 = sbr.rel (0) target = $region70
          $region69: #{taco2_encoder_forward.3} parent=65 // pred_region
            // Predicated region
            $region71: #{taco2_encoder_forward.3} parent=69 // pred_check
              _
            $region72: #{taco2_encoder_forward.3} parent=69 // pred_check_branch
              %731 = sbr.rel (0) target = $region74
            $region73: #{taco2_encoder_forward.3} parent=69 // pred_region
              // Predicated region
              $region86: #{taco2_encoder_forward.3} parent=73 // pred_check
                _
              $region87: #{taco2_encoder_forward.3} parent=73 // pred_check_branch
                %752 = sbr.rel (0) target = $region89
              $region88: #{taco2_encoder_forward.3} parent=73 // pred_region
                loop: start=0, step=1, limit=1
                $region90: #{taco2_encoder_forward.3} parent=88 // loop_pre_header
                  _
                $region91: #{taco2_encoder_forward.3} parent=88 // loop_header
                  %s754 = sphi 0, %s758
                  %p755 = scmp.ge.s32.totalorder %s754, 1
                  %s759 = sphi %s714, %s714
                  %s760 = sphi %s727, %s727
                $region92: #{taco2_encoder_forward.3} parent=88 // loop_header_branch
                  %757 = sbr.rel (%p755) target = $region96
                $region93: #{taco2_encoder_forward.3} parent=88 // loop_body
                  %v761 = vld [vmem:[%s759] sm:$0xff]
                  %762 = vst [vmem:[%s760] sm:$0xff] %v761
                  %v763 = vld [vmem:[%s759 + $0x8] sm:$0xff]
                  %764 = vst [vmem:[%s760 + $0x10] sm:$0xff] %v763
                  %v765 = vld [vmem:[%s759 + $0x10] sm:$0xff]
                  %766 = vst [vmem:[%s760 + $0x40] sm:$0xff] %v765
                  %v767 = vld [vmem:[%s759 + $0x18] sm:$0xff]
                  %768 = vst [vmem:[%s760 + $0x50] sm:$0xff] %v767
                $region94: #{taco2_encoder_forward.3} parent=88 // loop_footer
                  %s758 = sadd.s32 1, %s754
                $region95: #{taco2_encoder_forward.3} parent=88 // loop_footer_branch
                  %753 = sbr.rel target = $region91
                $region96: #{taco2_encoder_forward.3} parent=88 // loop_exit
                  _
              $region89: #{taco2_encoder_forward.3} parent=73 // pred_fallthru
                _
              // Predicated region
              $region97: #{taco2_encoder_forward.3} parent=73 // pred_check
                _
              $region98: #{taco2_encoder_forward.3} parent=73 // pred_check_branch
                %770 = sbr.rel target = $region100
              $region99: #{taco2_encoder_forward.3} parent=73 // pred_region
                _
              $region100: #{taco2_encoder_forward.3} parent=73 // pred_fallthru
                _
            $region74: #{taco2_encoder_forward.3} parent=69 // pred_fallthru
              _
            // Predicated region
            $region75: #{taco2_encoder_forward.3} parent=69 // pred_check
              _
            $region76: #{taco2_encoder_forward.3} parent=69 // pred_check_branch
              %733 = sbr.rel target = $region78
            $region77: #{taco2_encoder_forward.3} parent=69 // pred_region
              loop: start=0, step=1, limit=1
              $region79: #{taco2_encoder_forward.3} parent=77 // loop_pre_header
                _
              $region80: #{taco2_encoder_forward.3} parent=77 // loop_header
                %s736 = sphi 0, %s740
                %p737 = scmp.ge.s32.totalorder %s736, 1
                %s741 = sphi %s714, %s714
                %s742 = sphi %s727, %s727
              $region81: #{taco2_encoder_forward.3} parent=77 // loop_header_branch
                %739 = sbr.rel (%p737) target = $region85
              $region82: #{taco2_encoder_forward.3} parent=77 // loop_body
                %v743 = vld [vmem:[%s741] sm:$0xff]
                %744 = vst [vmem:[%s742] sm:$0xff] %v743
                %v745 = vld [vmem:[%s741 + $0x8] sm:$0xff]
                %746 = vst [vmem:[%s742 + $0x10] sm:$0xff] %v745
                %v747 = vld [vmem:[%s741 + $0x10] sm:$0xff]
                %748 = vst [vmem:[%s742 + $0x40] sm:$0xff] %v747
                %v749 = vld [vmem:[%s741 + $0x18] sm:$0xff]
                %750 = vst [vmem:[%s742 + $0x50] sm:$0xff] %v749
              $region83: #{taco2_encoder_forward.3} parent=77 // loop_footer
                %s740 = sadd.s32 1, %s736
              $region84: #{taco2_encoder_forward.3} parent=77 // loop_footer_branch
                %735 = sbr.rel target = $region80
              $region85: #{taco2_encoder_forward.3} parent=77 // loop_exit
                _
            $region78: #{taco2_encoder_forward.3} parent=69 // pred_fallthru
              _
          $region70: #{taco2_encoder_forward.3} parent=65 // pred_fallthru
            _
          %771 = vnop
        $region66: #{taco2_encoder_forward.3} parent=46 // pred_fallthru
          _
      $region47: #{taco2_encoder_forward.3} parent=5 // pred_fallthru
        _
      %p772 = scmp.le.s32.totalorder 2, %s8
      // Predicated region
      $region101: #{taco2_encoder_forward.3} parent=5 // pred_check
        %p773 = pneg %p772
      $region102: #{taco2_encoder_forward.3} parent=5 // pred_check_branch
        %775 = sbr.rel (%p773) target = $region104
      $region103: #{taco2_encoder_forward.3} parent=5 // pred_region
        %s776 = ssub.s32 %s8, 2
        // Predicated region
        $region105: #{taco2_encoder_forward.3} parent=103 // pred_check
          %p777 = pneg %p125
        $region106: #{taco2_encoder_forward.3} parent=103 // pred_check_branch
          %779 = sbr.rel (%p777) target = $region108
        $region107: #{taco2_encoder_forward.3} parent=103 // pred_region
          %s780 = sand.u32 %s110, 1
          %s781 = sand.u32 %s110, 1
          %s782 = smul.addr %s781, 32
          %s783 = scalar_lea.vmem [#allocation5], %s782
        $region108: #{taco2_encoder_forward.3} parent=103 // pred_fallthru
          _
      $region104: #{taco2_encoder_forward.3} parent=5 // pred_fallthru
        _
    $region6: #{taco2_encoder_forward.3} parent=1 // loop_footer
      %s12 = sadd.s32 1, %s8
    $region7: #{taco2_encoder_forward.3} parent=1 // loop_footer_branch
      %7 = sbr.rel target = $region3
    $region8: #{taco2_encoder_forward.3} parent=1 // loop_exit
      _

// kernel: taco2_encoder_forward.2
$region0: #{taco2_encoder_forward.2}
  #allocation0 [shape = 'u32[]', space=smem, size = 0x4, offset = 0x4, fixed_abs, tag = 'smem constant byte address 0x4 - core index']
  #allocation1 [shape = 'u32[144,128]{1,0:T(1,128)}', space=vmem, size = 0x12000, scoped, tag = 'internal scratch']
  #allocation2 [shape = 'f32[2,32,128]{2,1,0:T(8,128)}', space=vmem, size = 0x8000, scoped, tag = 'scratch operand']
  #allocation3 [shape = 's32[1]{0}', space=sflag, size = 0x4, scoped, tag = 'scratch operand']
  #allocation15 [shape = 's32[]', space=sflag, size = 0x4, offset = 0, fixed_abs, tag = 'sflag constant byte address 0x0 - dummy sync flag']
  %s0 = inlined_call_operand.vmem [shape: f32[2,48,128], index: 0, kind: input, shape index: {}]
  %s1 = inlined_call_operand.vmem [shape: f32[128,256], index: 1, kind: input, shape index: {}]
  %s2 = inlined_call_operand.hbm [shape: f32[1,256], index: 2, kind: input, shape index: {}]
  %s3 = inlined_call_operand.hbm [shape: f32[3,1280,256], index: 3, kind: input, shape index: {}]
  %s4 = inlined_call_operand.hbm [shape: f32[3,256], index: 4, kind: input, shape index: {}]
  %s5 = inlined_call_operand.hbm [shape: f32[3,256], index: 5, kind: input, shape index: {}]
  %s6 = inlined_call_operand.hbm [shape: f32[256,1024], index: 6, kind: input, shape index: {}]
  %s7 = inlined_call_operand.hbm [shape: f32[1,1024], index: 7, kind: input, shape index: {}]
  %s8 = inlined_call_operand.vmem [shape: f32[2,32,1024], index: 8, kind: output, shape index: {}]
  %s9 = sld [smem:[#allocation0]]
  $region138: #{taco2_encoder_forward.2} parent=0
    _
  %s11 = ssub.s32 1, %s9
  %s12 = scalar_select 0, %s11, %s9
  $region1: #{taco2_encoder_forward.2} parent=0
    #allocation4 [shape = 'u8[1024]{0}', space=vmem, size = 0x400, scoped, tag = 'input window, operand 2, single buffered']
    #allocation5 [shape = 's32[2]{0}', space=sflag, size = 0x8, scoped, tag = 'scoped memory for taco2_encoder_forward.2']
    #allocation6 [shape = 'u8[3932160]{0}', space=vmem, size = 0x3c0000, scoped, tag = 'input window, operand 3, single buffered']
    #allocation7 [shape = 's32[1]{0}', space=sflag, size = 0x4, scoped, tag = 'scoped memory for taco2_encoder_forward.2']
    #allocation8 [shape = 'u8[4096]{0}', space=vmem, size = 0x1000, scoped, tag = 'input window, operand 4, single buffered']
    #allocation9 [shape = 'u8[4096]{0}', space=vmem, size = 0x1000, scoped, tag = 'input window, operand 5, single buffered']
    #allocation10 [shape = 's32[1]{0}', space=sflag, size = 0x4, scoped, tag = 'scoped memory for taco2_encoder_forward.2']
    #allocation11 [shape = 'u8[1048576]{0}', space=vmem, size = 0x100000, scoped, tag = 'input window, operand 6, single buffered']
    #allocation12 [shape = 'u8[4096]{0}', space=vmem, size = 0x1000, scoped, tag = 'input window, operand 7, single buffered']
    #allocation13 [shape = 's32[1]{0}', space=sflag, size = 0x4, scoped, tag = 'scoped memory for taco2_encoder_forward.2']
    #allocation14 [shape = 'u8[262144]{0}', space=vmem, size = 0x40000, scoped, tag = 'output window, operand 0']
    %13 = vsyncpa [#allocation5], 0
    %14 = vsyncpa [#allocation7], 0
    %15 = vsyncpa [#allocation10], 0
    %16 = vsyncpa [#allocation13], 0
    loop: start=0, step=1, limit=4
    $region2: #{taco2_encoder_forward.2} parent=1 // loop_pre_header
      _
    $region3: #{taco2_encoder_forward.2} parent=1 // loop_header
      %s18 = sphi 0, %s22
      %p19 = scmp.ge.s32.totalorder %s18, 4
      %s26 = sphi 0, %s26
      %s28 = sphi 0, %s26
      %s29 = sphi 0, %s28
      %s43 = sphi 0, %s29
      %s47 = sphi 0, %s47
      %s49 = sphi 0, %s47
      %s50 = sphi 0, %s49
      %s64 = sphi 0, %s50
      %s68 = sphi 0, %s68
      %s70 = sphi 0, %s68
      %s71 = sphi 0, %s70
      %s85 = sphi 0, %s71
      %s89 = sphi 0, %s89
      %s91 = sphi 0, %s89
      %s92 = sphi 0, %s91
      %s106 = sphi 0, %s92
      %s110 = sphi 0, %s110
      %s112 = sphi 0, %s110
      %s113 = sphi 0, %s112
      %s127 = sphi 0, %s113
      %s131 = sphi 0, %s131
      %s133 = sphi 0, %s131
      %s134 = sphi 0, %s133
      %s148 = sphi 0, %s134
      %s152 = sphi 0, %s152
      %s154 = sphi 0, %s152
      %s155 = sphi 0, %s154
      %s169 = sphi 0, %s155
      %s175 = sphi 0, %s177
      %s178 = sphi 0, %s175
      %s179 = sphi 0, %s178
      %s195 = sphi 0, %s179
    $region4: #{taco2_encoder_forward.2} parent=1 // loop_header_branch
      %21 = sbr.rel (%p19) target = $region8
    $region5: #{taco2_encoder_forward.2} parent=1 // loop_body
      %s23 = ssub.s32 %s18, 1
      %s24 = ssub.s32 %s18, 2
      %s25 = sadd.s32 %s18, 1
      %s27 = sadd.s32 %s26, 1
      %p30 = scmp.eq.s32.totalorder %s18, 1
      %p31 = scmp.ne.s32.totalorder %s26, %s28
      %p32 = scmp.eq.s32.totalorder %s18, 0
      %p33 = por %p31, %p32
      %p34 = scmp.ne.s32.totalorder %s26, %s28
      %p35 = scmp.eq.s32.totalorder %s23, 1
      %p36 = por %p34, %p35
      %p37 = scmp.ne.s32.totalorder %s28, %s29
      %p38 = scmp.eq.s32.totalorder %s23, 0
      %p39 = por %p37, %p38
      %p40 = scmp.ne.s32.totalorder %s28, %s29
      %p41 = scmp.eq.s32.totalorder %s24, 1
      %p42 = por %p40, %p41
      %p44 = scmp.ne.s32.totalorder %s29, %s43
      %p45 = scmp.eq.s32.totalorder %s24, 0
      %p46 = por %p44, %p45
      %s48 = sadd.s32 %s47, 1
      %p51 = scmp.eq.s32.totalorder %s18, 1
      %p52 = scmp.ne.s32.totalorder %s47, %s49
      %p53 = scmp.eq.s32.totalorder %s18, 0
      %p54 = por %p52, %p53
      %p55 = scmp.ne.s32.totalorder %s47, %s49
      %p56 = scmp.eq.s32.totalorder %s23, 1
      %p57 = por %p55, %p56
      %p58 = scmp.ne.s32.totalorder %s49, %s50
      %p59 = scmp.eq.s32.totalorder %s23, 0
      %p60 = por %p58, %p59
      %p61 = scmp.ne.s32.totalorder %s49, %s50
      %p62 = scmp.eq.s32.totalorder %s24, 1
      %p63 = por %p61, %p62
      %p65 = scmp.ne.s32.totalorder %s50, %s64
      %p66 = scmp.eq.s32.totalorder %s24, 0
      %p67 = por %p65, %p66
      %s69 = sadd.s32 %s68, 1
      %p72 = scmp.eq.s32.totalorder %s18, 1
      %p73 = scmp.ne.s32.totalorder %s68, %s70
      %p74 = scmp.eq.s32.totalorder %s18, 0
      %p75 = por %p73, %p74
      %p76 = scmp.ne.s32.totalorder %s68, %s70
      %p77 = scmp.eq.s32.totalorder %s23, 1
      %p78 = por %p76, %p77
      %p79 = scmp.ne.s32.totalorder %s70, %s71
      %p80 = scmp.eq.s32.totalorder %s23, 0
      %p81 = por %p79, %p80
      %p82 = scmp.ne.s32.totalorder %s70, %s71
      %p83 = scmp.eq.s32.totalorder %s24, 1
      %p84 = por %p82, %p83
      %p86 = scmp.ne.s32.totalorder %s71, %s85
      %p87 = scmp.eq.s32.totalorder %s24, 0
      %p88 = por %p86, %p87
      %s90 = sadd.s32 %s89, 1
      %p93 = scmp.eq.s32.totalorder %s18, 1
      %p94 = scmp.ne.s32.totalorder %s89, %s91
      %p95 = scmp.eq.s32.totalorder %s18, 0
      %p96 = por %p94, %p95
      %p97 = scmp.ne.s32.totalorder %s89, %s91
      %p98 = scmp.eq.s32.totalorder %s23, 1
      %p99 = por %p97, %p98
      %p100 = scmp.ne.s32.totalorder %s91, %s92
      %p101 = scmp.eq.s32.totalorder %s23, 0
      %p102 = por %p100, %p101
      %p103 = scmp.ne.s32.totalorder %s91, %s92
      %p104 = scmp.eq.s32.totalorder %s24, 1
      %p105 = por %p103, %p104
      %p107 = scmp.ne.s32.totalorder %s92, %s106
      %p108 = scmp.eq.s32.totalorder %s24, 0
      %p109 = por %p107, %p108
      %s111 = sadd.s32 %s110, 1
      %p114 = scmp.eq.s32.totalorder %s18, 1
      %p115 = scmp.ne.s32.totalorder %s110, %s112
      %p116 = scmp.eq.s32.totalorder %s18, 0
      %p117 = por %p115, %p116
      %p118 = scmp.ne.s32.totalorder %s110, %s112
      %p119 = scmp.eq.s32.totalorder %s23, 1
      %p120 = por %p118, %p119
      %p121 = scmp.ne.s32.totalorder %s112, %s113
      %p122 = scmp.eq.s32.totalorder %s23, 0
      %p123 = por %p121, %p122
      %p124 = scmp.ne.s32.totalorder %s112, %s113
      %p125 = scmp.eq.s32.totalorder %s24, 1
      %p126 = por %p124, %p125
      %p128 = scmp.ne.s32.totalorder %s113, %s127
      %p129 = scmp.eq.s32.totalorder %s24, 0
      %p130 = por %p128, %p129
      %s132 = sadd.s32 %s131, 1
      %p135 = scmp.eq.s32.totalorder %s18, 1
      %p136 = scmp.ne.s32.totalorder %s131, %s133
      %p137 = scmp.eq.s32.totalorder %s18, 0
      %p138 = por %p136, %p137
      %p139 = scmp.ne.s32.totalorder %s131, %s133
      %p140 = scmp.eq.s32.totalorder %s23, 1
      %p141 = por %p139, %p140
      %p142 = scmp.ne.s32.totalorder %s133, %s134
      %p143 = scmp.eq.s32.totalorder %s23, 0
      %p144 = por %p142, %p143
      %p145 = scmp.ne.s32.totalorder %s133, %s134
      %p146 = scmp.eq.s32.totalorder %s24, 1
      %p147 = por %p145, %p146
      %p149 = scmp.ne.s32.totalorder %s134, %s148
      %p150 = scmp.eq.s32.totalorder %s24, 0
      %p151 = por %p149, %p150
      %s153 = sadd.s32 %s152, 1
      %p156 = scmp.eq.s32.totalorder %s18, 1
      %p157 = scmp.ne.s32.totalorder %s152, %s154
      %p158 = scmp.eq.s32.totalorder %s18, 0
      %p159 = por %p157, %p158
      %p160 = scmp.ne.s32.totalorder %s152, %s154
      %p161 = scmp.eq.s32.totalorder %s23, 1
      %p162 = por %p160, %p161
      %p163 = scmp.ne.s32.totalorder %s154, %s155
      %p164 = scmp.eq.s32.totalorder %s23, 0
      %p165 = por %p163, %p164
      %p166 = scmp.ne.s32.totalorder %s154, %s155
      %p167 = scmp.eq.s32.totalorder %s24, 1
      %p168 = por %p166, %p167
      %p170 = scmp.ne.s32.totalorder %s155, %s169
      %p171 = scmp.eq.s32.totalorder %s24, 0
      %p172 = por %p170, %p171
      %s173 = ssub.s32 %s18, %s25
      %p174 = scmp.eq.s32.totalorder %s173, 0
      %s176 = sadd.s32 %s175, 1
      %s177 = scalar_select %p174, %s175, %s176
      %p180 = pneg %p174
      %p181 = scmp.eq.s32.totalorder %s18, 1
      %p182 = por %p180, %p181
      %p183 = scmp.ne.s32.totalorder %s175, %s178
      %p184 = scmp.eq.s32.totalorder %s18, 0
      %p185 = por %p183, %p184
      %p186 = scmp.ne.s32.totalorder %s175, %s178
      %p187 = scmp.eq.s32.totalorder %s23, 1
      %p188 = por %p186, %p187
      %p189 = scmp.ne.s32.totalorder %s178, %s179
      %p190 = scmp.eq.s32.totalorder %s23, 0
      %p191 = por %p189, %p190
      %p192 = scmp.ne.s32.totalorder %s178, %s179
      %p193 = scmp.eq.s32.totalorder %s24, 1
      %p194 = por %p192, %p193
      %p196 = scmp.ne.s32.totalorder %s179, %s195
      %p197 = scmp.eq.s32.totalorder %s24, 0
      %p198 = por %p196, %p197
      %p199 = scmp.le.s32.totalorder 1, %s18
      %p200 = scmp.lt.s32.totalorder %s18, 3
      %p201 = pnand %p199, %p200
      %p202 = pneg %p201
      // Predicated region
      $region9: #{taco2_encoder_forward.2} parent=5 // pred_check
        _
      $region10: #{taco2_encoder_forward.2} parent=5 // pred_check_branch
        %204 = sbr.rel (%p201) target = $region12
      $region11: #{taco2_encoder_forward.2} parent=5 // pred_region
        %s205 = ssub.s32 %s18, 1
        // Predicated region
        $region13: #{taco2_encoder_forward.2} parent=11 // pred_check
          %p206 = pneg %p39
        $region14: #{taco2_encoder_forward.2} parent=11 // pred_check_branch
          %208 = sbr.rel (%p206) target = $region16
        $region15: #{taco2_encoder_forward.2} parent=11 // pred_region
          _
        $region16: #{taco2_encoder_forward.2} parent=11 // pred_fallthru
          _
        // Predicated region
        $region17: #{taco2_encoder_forward.2} parent=11 // pred_check
          %p209 = pneg %p60
        $region18: #{taco2_encoder_forward.2} parent=11 // pred_check_branch
          %211 = sbr.rel (%p209) target = $region20
        $region19: #{taco2_encoder_forward.2} parent=11 // pred_region
          %s213 = ssub.s32 32, 32
          %214 = vsyncadd [#allocation5], %s213
          %s216 = sshll.u32 [#allocation4], 4
          %s217 = int_to_ptr.vmem [resolvable:$true] %s216
          %219 = dma.hbm_to_vmem [thread:$0]  %s2, 32, %s217, [#allocation5]
        $region20: #{taco2_encoder_forward.2} parent=11 // pred_fallthru
          _
        // Predicated region
        $region21: #{taco2_encoder_forward.2} parent=11 // pred_check
          %p220 = pneg %p81
        $region22: #{taco2_encoder_forward.2} parent=11 // pred_check_branch
          %222 = sbr.rel (%p220) target = $region24
        $region23: #{taco2_encoder_forward.2} parent=11 // pred_region
          %s224 = ssub.s32 122880, 122880
          %225 = vsyncadd [#allocation7], %s224
          %s226 = sshll.u32 [#allocation6], 4
          %s227 = int_to_ptr.vmem [resolvable:$true] %s226
          %232 = dma.hbm_to_vmem [thread:$0]  %s3, 122880, %s227, [#allocation7], 256, 256, 16
        $region24: #{taco2_encoder_forward.2} parent=11 // pred_fallthru
          _
        // Predicated region
        $region25: #{taco2_encoder_forward.2} parent=11 // pred_check
          %p233 = pneg %p102
        $region26: #{taco2_encoder_forward.2} parent=11 // pred_check_branch
          %235 = sbr.rel (%p233) target = $region28
        $region27: #{taco2_encoder_forward.2} parent=11 // pred_region
          %s237 = ssub.s32 128, 128
          %238 = vsyncadd [#allocation7], %s237
          %s240 = sshll.u32 [#allocation8], 4
          %s241 = int_to_ptr.vmem [resolvable:$true] %s240
          %243 = dma.hbm_to_vmem [thread:$0]  %s4, 128, %s241, [#allocation7]
        $region28: #{taco2_encoder_forward.2} parent=11 // pred_fallthru
          _
        // Predicated region
        $region29: #{taco2_encoder_forward.2} parent=11 // pred_check
          %p244 = pneg %p123
        $region30: #{taco2_encoder_forward.2} parent=11 // pred_check_branch
          %246 = sbr.rel (%p244) target = $region32
        $region31: #{taco2_encoder_forward.2} parent=11 // pred_region
          %s248 = ssub.s32 128, 128
          %249 = vsyncadd [#allocation10], %s248
          %s251 = sshll.u32 [#allocation9], 4
          %s252 = int_to_ptr.vmem [resolvable:$true] %s251
          %254 = dma.hbm_to_vmem [thread:$0]  %s5, 128, %s252, [#allocation10]
        $region32: #{taco2_encoder_forward.2} parent=11 // pred_fallthru
          _
        // Predicated region
        $region33: #{taco2_encoder_forward.2} parent=11 // pred_check
          %p255 = pneg %p144
        $region34: #{taco2_encoder_forward.2} parent=11 // pred_check_branch
          %257 = sbr.rel (%p255) target = $region36
        $region35: #{taco2_encoder_forward.2} parent=11 // pred_region
          %s259 = ssub.s32 32768, 32768
          %260 = vsyncadd [#allocation10], %s259
          %s261 = sshll.u32 [#allocation11], 4
          %s262 = int_to_ptr.vmem [resolvable:$true] %s261
          %267 = dma.hbm_to_vmem [thread:$0]  %s6, 32768, %s262, [#allocation10], 1024, 1024, 64
        $region36: #{taco2_encoder_forward.2} parent=11 // pred_fallthru
          _
        // Predicated region
        $region37: #{taco2_encoder_forward.2} parent=11 // pred_check
          %p268 = pneg %p165
        $region38: #{taco2_encoder_forward.2} parent=11 // pred_check_branch
          %270 = sbr.rel (%p268) target = $region40
        $region39: #{taco2_encoder_forward.2} parent=11 // pred_region
          %s272 = ssub.s32 128, 128
          %273 = vsyncadd [#allocation13], %s272
          %s275 = sshll.u32 [#allocation12], 4
          %s276 = int_to_ptr.vmem [resolvable:$true] %s275
          %278 = dma.hbm_to_vmem [thread:$0]  %s7, 128, %s276, [#allocation13]
        $region40: #{taco2_encoder_forward.2} parent=11 // pred_fallthru
          _
      $region12: #{taco2_encoder_forward.2} parent=5 // pred_fallthru
        _
      %p279 = scmp.lt.s32.totalorder %s18, 2
      // Predicated region
      $region41: #{taco2_encoder_forward.2} parent=5 // pred_check
        %p280 = pneg %p279
      $region42: #{taco2_encoder_forward.2} parent=5 // pred_check_branch
        %282 = sbr.rel (%p280) target = $region44
      $region43: #{taco2_encoder_forward.2} parent=5 // pred_region
        _
      $region44: #{taco2_encoder_forward.2} parent=5 // pred_fallthru
        _
      %p283 = scmp.le.s32.totalorder 1, %s18
      %p284 = scmp.lt.s32.totalorder %s18, 3
      %p285 = pnand %p283, %p284
      %p286 = pneg %p285
      // Predicated region
      $region45: #{taco2_encoder_forward.2} parent=5 // pred_check
        _
      $region46: #{taco2_encoder_forward.2} parent=5 // pred_check_branch
        %288 = sbr.rel (%p285) target = $region48
      $region47: #{taco2_encoder_forward.2} parent=5 // pred_region
        %s289 = ssub.s32 %s18, 1
        // Predicated region
        $region49: #{taco2_encoder_forward.2} parent=47 // pred_check
          %p290 = pneg %p60
        $region50: #{taco2_encoder_forward.2} parent=47 // pred_check_branch
          %292 = sbr.rel (%p290) target = $region52
        $region51: #{taco2_encoder_forward.2} parent=47 // pred_region
          %293 = dma.done [#allocation5], 32
        $region52: #{taco2_encoder_forward.2} parent=47 // pred_fallthru
          _
        // Predicated region
        $region53: #{taco2_encoder_forward.2} parent=47 // pred_check
          %p294 = pneg %p81
        $region54: #{taco2_encoder_forward.2} parent=47 // pred_check_branch
          %296 = sbr.rel (%p294) target = $region56
        $region55: #{taco2_encoder_forward.2} parent=47 // pred_region
          %297 = dma.done [#allocation7], 122880
        $region56: #{taco2_encoder_forward.2} parent=47 // pred_fallthru
          _
        // Predicated region
        $region57: #{taco2_encoder_forward.2} parent=47 // pred_check
          %p298 = pneg %p102
        $region58: #{taco2_encoder_forward.2} parent=47 // pred_check_branch
          %300 = sbr.rel (%p298) target = $region60
        $region59: #{taco2_encoder_forward.2} parent=47 // pred_region
          %301 = dma.done [#allocation7], 128
        $region60: #{taco2_encoder_forward.2} parent=47 // pred_fallthru
          _
        // Predicated region
        $region61: #{taco2_encoder_forward.2} parent=47 // pred_check
          %p302 = pneg %p123
        $region62: #{taco2_encoder_forward.2} parent=47 // pred_check_branch
          %304 = sbr.rel (%p302) target = $region64
        $region63: #{taco2_encoder_forward.2} parent=47 // pred_region
          %305 = dma.done [#allocation10], 128
        $region64: #{taco2_encoder_forward.2} parent=47 // pred_fallthru
          _
        // Predicated region
        $region65: #{taco2_encoder_forward.2} parent=47 // pred_check
          %p306 = pneg %p144
        $region66: #{taco2_encoder_forward.2} parent=47 // pred_check_branch
          %308 = sbr.rel (%p306) target = $region68
        $region67: #{taco2_encoder_forward.2} parent=47 // pred_region
          %309 = dma.done [#allocation10], 32768
        $region68: #{taco2_encoder_forward.2} parent=47 // pred_fallthru
          _
        // Predicated region
        $region69: #{taco2_encoder_forward.2} parent=47 // pred_check
          %p310 = pneg %p165
        $region70: #{taco2_encoder_forward.2} parent=47 // pred_check_branch
          %312 = sbr.rel (%p310) target = $region72
        $region71: #{taco2_encoder_forward.2} parent=47 // pred_region
          %313 = dma.done [#allocation13], 128
        $region72: #{taco2_encoder_forward.2} parent=47 // pred_fallthru
          _
        %p314 = pneg %p39
        %p315 = pneg %p36
        %p316 = pneg %p60
        %p317 = pneg %p57
        %p318 = pneg %p81
        %p319 = pneg %p78
        %p320 = pneg %p102
        %p321 = pneg %p99
        %p322 = pneg %p123
        %p323 = pneg %p120
        %p324 = pneg %p144
        %p325 = pneg %p141
        %p326 = pneg %p165
        %p327 = pneg %p162
        %p328 = pneg %p191
        %p329 = pneg %p188
        %s330 = sand.u32 %s178, 1
        %s331 = sand.u32 %s178, 1
        %s332 = smul.addr %s331, 256
        %s333 = scalar_lea.vmem [#allocation14], %s332
        %s334 = smul.u32 2, %s23
        %s335 = smul.u32 %s23, 16
        %s336 = scalar_lea.vmem %s0, %s335
        %p338 = scmp.lt.u32.totalorder 32, 8
        %p339 = pneg %p338
        // Predicated region
        $region73: #{taco2_encoder_forward.2} parent=47 // pred_check
          _
        $region74: #{taco2_encoder_forward.2} parent=47 // pred_check_branch
          %341 = sbr.rel (%p338) target = $region76
        $region75: #{taco2_encoder_forward.2} parent=47 // pred_region
          %s358 = sand.u32 32, 7
          %p359 = scmp.eq.s32.totalorder %s358, 0
          // Predicated region
          $region88: #{taco2_encoder_forward.2} parent=75 // pred_check
            %p360 = pneg %p359
          $region89: #{taco2_encoder_forward.2} parent=75 // pred_check_branch
            %362 = sbr.rel (%p360) target = $region91
          $region90: #{taco2_encoder_forward.2} parent=75 // pred_region
            loop: start=0, step=1, limit=1
            $region92: #{taco2_encoder_forward.2} parent=90 // loop_pre_header
              _
            $region93: #{taco2_encoder_forward.2} parent=90 // loop_header
              %s364 = sphi 0, %s368
              %p365 = scmp.ge.s32.totalorder %s364, 1
              %s369 = sphi %s336, %s336
              %s370 = sphi [#allocation2], [#allocation2]
            $region94: #{taco2_encoder_forward.2} parent=90 // loop_header_branch
              %367 = sbr.rel (%p365) target = $region98
            $region95: #{taco2_encoder_forward.2} parent=90 // loop_body
              %v371 = vld [vmem:[%s369] sm:$0xff]
              %372 = vst [vmem:[%s370] sm:$0xff] %v371
              %v373 = vld [vmem:[%s369 + $0x8] sm:$0xff]
              %374 = vst [vmem:[%s370 + $0x8] sm:$0xff] %v373
              %v375 = vld [vmem:[%s369 + $0x10] sm:$0xff]
              %376 = vst [vmem:[%s370 + $0x10] sm:$0xff] %v375
              %v377 = vld [vmem:[%s369 + $0x18] sm:$0xff]
              %378 = vst [vmem:[%s370 + $0x18] sm:$0xff] %v377
              %v379 = vld [vmem:[%s369 + $0x30] sm:$0xff]
              %380 = vst [vmem:[%s370 + $0x20] sm:$0xff] %v379
              %v381 = vld [vmem:[%s369 + $0x38] sm:$0xff]
              %382 = vst [vmem:[%s370 + $0x28] sm:$0xff] %v381
              %v383 = vld [vmem:[%s369 + $0x40] sm:$0xff]
              %384 = vst [vmem:[%s370 + $0x30] sm:$0xff] %v383
              %v385 = vld [vmem:[%s369 + $0x48] sm:$0xff]
              %386 = vst [vmem:[%s370 + $0x38] sm:$0xff] %v385
            $region96: #{taco2_encoder_forward.2} parent=90 // loop_footer
              %s368 = sadd.s32 1, %s364
            $region97: #{taco2_encoder_forward.2} parent=90 // loop_footer_branch
              %363 = sbr.rel target = $region93
            $region98: #{taco2_encoder_forward.2} parent=90 // loop_exit
              _
          $region91: #{taco2_encoder_forward.2} parent=75 // pred_fallthru
            _
          %p387 = pneg %p359
          // Predicated region
          $region99: #{taco2_encoder_forward.2} parent=75 // pred_check
            _
          $region100: #{taco2_encoder_forward.2} parent=75 // pred_check_branch
            %389 = sbr.rel (%p359) target = $region102
          $region101: #{taco2_encoder_forward.2} parent=75 // pred_region
            %s390 = sand.u32 32, 7
          $region102: #{taco2_encoder_forward.2} parent=75 // pred_fallthru
            _
        $region76: #{taco2_encoder_forward.2} parent=47 // pred_fallthru
          _
        // Predicated region
        $region77: #{taco2_encoder_forward.2} parent=47 // pred_check
          %p342 = pneg %p338
        $region78: #{taco2_encoder_forward.2} parent=47 // pred_check_branch
          %344 = sbr.rel (%p342) target = $region80
        $region79: #{taco2_encoder_forward.2} parent=47 // pred_region
          %s345 = sshllo.u32 0, 32
          loop: start=0, step=1, limit=1
          $region81: #{taco2_encoder_forward.2} parent=79 // loop_pre_header
            _
          $region82: #{taco2_encoder_forward.2} parent=79 // loop_header
            %s347 = sphi 0, %s351
            %p348 = scmp.ge.s32.totalorder %s347, 1
            %s352 = sphi %s336, %s336
            %s353 = sphi [#allocation2], [#allocation2]
          $region83: #{taco2_encoder_forward.2} parent=79 // loop_header_branch
            %350 = sbr.rel (%p348) target = $region87
          $region84: #{taco2_encoder_forward.2} parent=79 // loop_body
            %v354 = vld [vmem:[%s352] sm:%s345]
            %355 = vst [vmem:[%s353] sm:%s345] %v354
            %v356 = vld [vmem:[%s352 + $0x30] sm:%s345]
            %357 = vst [vmem:[%s353 + $0x20] sm:%s345] %v356
          $region85: #{taco2_encoder_forward.2} parent=79 // loop_footer
            %s351 = sadd.s32 1, %s347
          $region86: #{taco2_encoder_forward.2} parent=79 // loop_footer_branch
            %346 = sbr.rel target = $region82
          $region87: #{taco2_encoder_forward.2} parent=79 // loop_exit
            _
        $region80: #{taco2_encoder_forward.2} parent=47 // pred_fallthru
          _
        // Predicated region
        $region103: #{taco2_encoder_forward.2} parent=47 // pred_check
          _
        $region104: #{taco2_encoder_forward.2} parent=47 // pred_check_branch
          %393 = sbr.rel (0) target = $region106
        $region105: #{taco2_encoder_forward.2} parent=47 // pred_region
          %394 = vsyncadd [#allocation3], 1024
        $region106: #{taco2_encoder_forward.2} parent=47 // pred_fallthru
          _
        %s395 = smul.u32 2, 32
        %s396 = smul.u32 %s395, 1
        %s397 = sshll.u32 %s396, 4
        %398 = dma.done [#allocation3], %s397
        %s399 = ssub.s32 %s335, 8
        %v400 = vlaneseq
        %v401 = vshrl.u32 %v400, 7
        %v402 = vadd.s32 %v401, 8
        %v403 = vadd.s32 %v401, 16
        %v404 = vadd.s32 %v401, 24
        %v405 = vadd.s32 %v401, 32
        %v406 = vadd.s32 %v401, 40
        %v407 = vadd.s32 %v401, 48
        %v408 = vadd.s32 %v401, 56
        %vm409 = vcmp.lt.s32.totalorder %v401, 0
        %v410 = vsub.s32 0, %v401
        %v411 = vsel %vm409, %v410, %v401
        %v412 = vshrl.u32 %v411, 5
        %v413 = vand.u32 %v411, 31
        %v414 = vsub.s32 0, %v413
        %v415 = vsel %vm409, %v414, %v413
        %vm416 = vcmp.lt.s32.totalorder %v402, 0
        %v417 = vsub.s32 0, %v402
        %v418 = vsel %vm416, %v417, %v402
        %v419 = vshrl.u32 %v418, 5
        %v420 = vand.u32 %v418, 31
        %v421 = vsub.s32 0, %v420
        %v422 = vsel %vm416, %v421, %v420
        %vm423 = vcmp.lt.s32.totalorder %v403, 0
        %v424 = vsub.s32 0, %v403
        %v425 = vsel %vm423, %v424, %v403
        %v426 = vshrl.u32 %v425, 5
        %v427 = vand.u32 %v425, 31
        %v428 = vsub.s32 0, %v427
        %v429 = vsel %vm423, %v428, %v427
        %vm430 = vcmp.lt.s32.totalorder %v404, 0
        %v431 = vsub.s32 0, %v404
        %v432 = vsel %vm430, %v431, %v404
        %v433 = vshrl.u32 %v432, 5
        %v434 = vand.u32 %v432, 31
        %v435 = vsub.s32 0, %v434
        %v436 = vsel %vm430, %v435, %v434
        %vm437 = vcmp.lt.s32.totalorder %v405, 0
        %v438 = vsub.s32 0, %v405
        %v439 = vsel %vm437, %v438, %v405
        %v440 = vshrl.u32 %v439, 5
        %v441 = vand.u32 %v439, 31
        %v442 = vsub.s32 0, %v441
        %v443 = vsel %vm437, %v442, %v441
        %vm444 = vcmp.lt.s32.totalorder %v406, 0
        %v445 = vsub.s32 0, %v406
        %v446 = vsel %vm444, %v445, %v406
        %v447 = vshrl.u32 %v446, 5
        %v448 = vand.u32 %v446, 31
        %v449 = vsub.s32 0, %v448
        %v450 = vsel %vm444, %v449, %v448
        %vm451 = vcmp.lt.s32.totalorder %v407, 0
        %v452 = vsub.s32 0, %v407
        %v453 = vsel %vm451, %v452, %v407
        %v454 = vshrl.u32 %v453, 5
        %v455 = vand.u32 %v453, 31
        %v456 = vsub.s32 0, %v455
        %v457 = vsel %vm451, %v456, %v455
        %vm458 = vcmp.lt.s32.totalorder %v408, 0
        %v459 = vsub.s32 0, %v408
        %v460 = vsel %vm458, %v459, %v408
        %v461 = vshrl.u32 %v460, 5
        %v462 = vand.u32 %v460, 31
        %v463 = vsub.s32 0, %v462
        %v464 = vsel %vm458, %v463, %v462
        %vm465 = vcmp.ne.s32.totalorder %v415, 0
        %vm466 = vcmp.ne.s32.totalorder %v422, 0
        %vm467 = vcmp.ne.s32.totalorder %v429, 0
        %vm468 = vcmp.ne.s32.totalorder %v436, 0
        %vm469 = vcmp.ne.s32.totalorder %v443, 0
        %vm470 = vcmp.ne.s32.totalorder %v450, 0
        %vm471 = vcmp.ne.s32.totalorder %v457, 0
        %vm472 = vcmp.ne.s32.totalorder %v464, 0
        %vm473 = vcmp.lt.s32.totalorder %v415, 0
        %vm474 = vcmp.lt.s32.totalorder %v422, 0
        %vm475 = vcmp.lt.s32.totalorder %v429, 0
        %vm476 = vcmp.lt.s32.totalorder %v436, 0
        %vm477 = vcmp.lt.s32.totalorder %v443, 0
        %vm478 = vcmp.lt.s32.totalorder %v450, 0
        %vm479 = vcmp.lt.s32.totalorder %v457, 0
        %vm480 = vcmp.lt.s32.totalorder %v464, 0
        %vm481 = vmand %vm473, %vm465
        %vm482 = vmand %vm474, %vm466
        %vm483 = vmand %vm475, %vm467
        %vm484 = vmand %vm476, %vm468
        %vm485 = vmand %vm477, %vm469
        %vm486 = vmand %vm478, %vm470
        %vm487 = vmand %vm479, %vm471
        %vm488 = vmand %vm480, %vm472
        %v489 = vadd.s32 %v415, 32
        %v490 = vadd.s32 %v422, 32
        %v491 = vadd.s32 %v429, 32
        %v492 = vadd.s32 %v436, 32
        %v493 = vadd.s32 %v443, 32
        %v494 = vadd.s32 %v450, 32
        %v495 = vadd.s32 %v457, 32
        %v496 = vadd.s32 %v464, 32
        %v497 = vsel %vm481, %v489, %v415
        %v498 = vsel %vm482, %v490, %v422
        %v499 = vsel %vm483, %v491, %v429
        %v500 = vsel %vm484, %v492, %v436
        %v501 = vsel %vm485, %v493, %v443
        %v502 = vsel %vm486, %v494, %v450
        %v503 = vsel %vm487, %v495, %v457
        %v504 = vsel %vm488, %v496, %v464
        %v505 = vstv %s399
        %v506 = vadd.s32 %v497, %v505
        %v507 = vadd.s32 %v498, %v505
        %v508 = vadd.s32 %v499, %v505
        %v509 = vadd.s32 %v500, %v505
        %v510 = vadd.s32 %v501, %v505
        %v511 = vadd.s32 %v502, %v505
        %v512 = vadd.s32 %v503, %v505
        %v513 = vadd.s32 %v504, %v505
        %vm514 = vcmp.ge.s32.totalorder %v506, 0
        %vm515 = vcmp.ge.s32.totalorder %v507, 0
        %vm516 = vcmp.ge.s32.totalorder %v508, 0
        %vm517 = vcmp.ge.s32.totalorder %v509, 0
        %vm518 = vcmp.ge.s32.totalorder %v510, 0
        %vm519 = vcmp.ge.s32.totalorder %v511, 0
        %vm520 = vcmp.ge.s32.totalorder %v512, 0
        %vm521 = vcmp.ge.s32.totalorder %v513, 0
        %vm522 = vcmp.lt.s32.totalorder %v506, 30
        %vm523 = vcmp.lt.s32.totalorder %v507, 30
        %vm524 = vcmp.lt.s32.totalorder %v508, 30
        %vm525 = vcmp.lt.s32.totalorder %v509, 30
        %vm526 = vcmp.lt.s32.totalorder %v510, 30
        %vm527 = vcmp.lt.s32.totalorder %v511, 30
        %vm528 = vcmp.lt.s32.totalorder %v512, 30
        %vm529 = vcmp.lt.s32.totalorder %v513, 30
        %vm530 = vmand %vm514, %vm522
        %vm531 = vmand %vm515, %vm523
        %vm532 = vmand %vm516, %vm524
        %vm533 = vmand %vm517, %vm525
        %vm534 = vmand %vm518, %vm526
        %vm535 = vmand %vm519, %vm527
        %vm536 = vmand %vm520, %vm528
        %vm537 = vmand %vm521, %vm529
        %v538 = vld [vmem:[#allocation2] sm:$0xff]
        %v539 = vld [vmem:[#allocation2 + $0x8] sm:$0xff]
        %v540 = vld [vmem:[#allocation2 + $0x10] sm:$0xff]
        %v541 = vld [vmem:[#allocation2 + $0x18] sm:$0xff]
        %v542 = vld [vmem:[#allocation2 + $0x20] sm:$0xff]
        %v543 = vld [vmem:[#allocation2 + $0x28] sm:$0xff]
        %v544 = vld [vmem:[#allocation2 + $0x30] sm:$0xff]
        %v545 = vld [vmem:[#allocation2 + $0x38] sm:$0xff]
        %v546 = vld [vmem:[%s1] sm:$0xff]
        %v547 = vld [vmem:[%s1 + $0x8] sm:$0xff]
        %v548 = vld [vmem:[%s1 + $0x10] sm:$0xff]
        %v549 = vld [vmem:[%s1 + $0x18] sm:$0xff]
        %v550 = vld [vmem:[%s1 + $0x20] sm:$0xff]
        %v551 = vld [vmem:[%s1 + $0x28] sm:$0xff]
        %v552 = vld [vmem:[%s1 + $0x30] sm:$0xff]
        %v553 = vld [vmem:[%s1 + $0x38] sm:$0xff]
        %v554 = vld [vmem:[%s1 + $0x40] sm:$0xff]
        %v555 = vld [vmem:[%s1 + $0x48] sm:$0xff]
        %v556 = vld [vmem:[%s1 + $0x50] sm:$0xff]
        %v557 = vld [vmem:[%s1 + $0x58] sm:$0xff]
        %v558 = vld [vmem:[%s1 + $0x60] sm:$0xff]
        %v559 = vld [vmem:[%s1 + $0x68] sm:$0xff]
        %v560 = vld [vmem:[%s1 + $0x70] sm:$0xff]
        %v561 = vld [vmem:[%s1 + $0x78] sm:$0xff]
        %v562 = vld [vmem:[%s1 + $0x80] sm:$0xff]
        %v563 = vld [vmem:[%s1 + $0x88] sm:$0xff]
        %v564 = vld [vmem:[%s1 + $0x90] sm:$0xff]
        %v565 = vld [vmem:[%s1 + $0x98] sm:$0xff]
        %v566 = vld [vmem:[%s1 + $0xa0] sm:$0xff]
        %v567 = vld [vmem:[%s1 + $0xa8] sm:$0xff]
        %v568 = vld [vmem:[%s1 + $0xb0] sm:$0xff]
        %v569 = vld [vmem:[%s1 + $0xb8] sm:$0xff]
        %v570 = vld [vmem:[%s1 + $0xc0] sm:$0xff]
        %v571 = vld [vmem:[%s1 + $0xc8] sm:$0xff]
        %v572 = vld [vmem:[%s1 + $0xd0] sm:$0xff]
        %v573 = vld [vmem:[%s1 + $0xd8] sm:$0xff]
        %v574 = vld [vmem:[%s1 + $0xe0] sm:$0xff]
        %v575 = vld [vmem:[%s1 + $0xe8] sm:$0xff]
        %v576 = vld [vmem:[%s1 + $0xf0] sm:$0xff]
        %v577 = vld [vmem:[%s1 + $0xf8] sm:$0xff]
        %v578 = vld [vmem:[#allocation4] sm:$0x3]
        %v580 = vlaneseq
        %v581 = vshrl.u32 %v580, 7
        %v582 = vsub.s32 0, %v581
        %v583 = vrot.slane %v578, %v582
        %v584 = vlaneseq
        %v585 = vshrl.u32 %v584, 7
        %v586 = vsub.s32 1, %v585
        %v587 = vrot.slane %v578, %v586
        %590 = vmatprep.subr.mxu0 %v547
        %591 = vmatpush1.msra.mxu0 %v546
        %592 = vmatprep.subr.mxu0 %v549
        %593 = vmatpush1.msra.mxu0 %v548
        %594 = vmatprep.subr.mxu0 %v551
        %595 = vmatpush1.msra.mxu0 %v550
        %596 = vmatprep.subr.mxu0 %v553
        %597 = vmatpush1.msra.mxu0 %v552
        %598 = vmatprep.subr.mxu0 %v555
        %599 = vmatpush1.msra.mxu0 %v554
        %600 = vmatprep.subr.mxu0 %v557
        %601 = vmatpush1.msra.mxu0 %v556
        %602 = vmatprep.subr.mxu0 %v559
        %603 = vmatpush1.msra.mxu0 %v558
        %604 = vmatprep.subr.mxu0 %v561
        %605 = vmatpush1.msra.mxu0 %v560
        %606 = vmatprep.subr.mxu0 %v563
        %607 = vmatpush1.msra.mxu0 %v562
        %608 = vmatprep.subr.mxu0 %v565
        %609 = vmatpush1.msra.mxu0 %v564
        %610 = vmatprep.subr.mxu0 %v567
        %611 = vmatpush1.msra.mxu0 %v566
        %612 = vmatprep.subr.mxu0 %v569
        %613 = vmatpush1.msra.mxu0 %v568
        %614 = vmatprep.subr.mxu0 %v571
        %615 = vmatpush1.msra.mxu0 %v570
        %616 = vmatprep.subr.mxu0 %v573
        %617 = vmatpush1.msra.mxu0 %v572
        %618 = vmatprep.subr.mxu0 %v575
        %619 = vmatpush1.msra.mxu0 %v574
        %620 = vmatprep.subr.mxu0 %v577
        %621 = vmatpush1.msra.mxu0 %v576
        %622 = vmatprep.subr.mxu0 0.0
        %623 = vmatpush1.msra.mxu0 0.0
        %624 = vmatprep.subr.mxu0 0.0
        %625 = vmatpush1.msra.mxu0 0.0
        %626 = vmatprep.subr.mxu0 0.0
        %627 = vmatpush1.msra.mxu0 0.0
        %628 = vmatprep.subr.mxu0 0.0
        %629 = vmatpush1.msra.mxu0 0.0
        %630 = vmatprep.subr.mxu0 0.0
        %631 = vmatpush1.msra.mxu0 0.0
        %632 = vmatprep.subr.mxu0 0.0
        %633 = vmatpush1.msra.mxu0 0.0
        %634 = vmatprep.subr.mxu0 0.0
        %635 = vmatpush1.msra.mxu0 0.0
        %636 = vmatprep.subr.mxu0 0.0
        %637 = vmatpush1.msra.mxu0 0.0
        %638 = vmatprep.subr.mxu0 0.0
        %639 = vmatpush1.msra.mxu0 0.0
        %640 = vmatprep.subr.mxu0 0.0
        %641 = vmatpush1.msra.mxu0 0.0
        %642 = vmatprep.subr.mxu0 0.0
        %643 = vmatpush1.msra.mxu0 0.0
        %644 = vmatprep.subr.mxu0 0.0
        %645 = vmatpush1.msra.mxu0 0.0
        %646 = vmatprep.subr.mxu0 0.0
        %647 = vmatpush1.msra.mxu0 0.0
        %648 = vmatprep.subr.mxu0 0.0
        %649 = vmatpush1.msra.mxu0 0.0
        %650 = vmatprep.subr.mxu0 0.0
        %651 = vmatpush1.msra.mxu0 0.0
        %652 = vmatprep.subr.mxu0 0.0
        %653 = vmatpush1.msra.mxu0 0.0
        %654 = vmatprep.mubr.f32.mxu0 0.0
        %655 = vmatmul.mubr.f32.gmra.mrb[0].mxu0 %v538
        %v656 = vpop.f32.mrb[0].mxu0
        %v657 = vadd.f32 %v583, %v656
        %v658 = vpop.f32.mrb[0].mxu0
        %v659 = vadd.f32 %v587, %v658
        %660 = vmatprep.mubr.f32.mxu0 0.0
        %661 = vmatmul.mubr.f32.gmra.mrb[0].mxu0 %v539
        %v662 = vpop.f32.mrb[0].mxu0
        %v663 = vadd.f32 %v583, %v662
        %v664 = vpop.f32.mrb[0].mxu0
        %v665 = vadd.f32 %v587, %v664
        %666 = vmatprep.mubr.f32.mxu0 0.0
        %667 = vmatmul.mubr.f32.gmra.mrb[0].mxu0 %v540
        %v668 = vpop.f32.mrb[0].mxu0
        %v669 = vadd.f32 %v583, %v668
        %v670 = vpop.f32.mrb[0].mxu0
        %v671 = vadd.f32 %v587, %v670
        %672 = vmatprep.mubr.f32.mxu0 0.0
        %673 = vmatmul.mubr.f32.gmra.mrb[0].mxu0 %v541
        %v674 = vpop.f32.mrb[0].mxu0
        %v675 = vadd.f32 %v583, %v674
        %v676 = vpop.f32.mrb[0].mxu0
        %v677 = vadd.f32 %v587, %v676
        %678 = vmatprep.mubr.f32.mxu0 0.0
        %679 = vmatmul.mubr.f32.gmra.mrb[0].mxu0 %v542
        %v680 = vpop.f32.mrb[0].mxu0
        %v681 = vadd.f32 %v583, %v680
        %v682 = vpop.f32.mrb[0].mxu0
        %v683 = vadd.f32 %v587, %v682
        %684 = vmatprep.mubr.f32.mxu0 0.0
        %685 = vmatmul.mubr.f32.gmra.mrb[0].mxu0 %v543
        %v686 = vpop.f32.mrb[0].mxu0
        %v687 = vadd.f32 %v583, %v686
        %v688 = vpop.f32.mrb[0].mxu0
        %v689 = vadd.f32 %v587, %v688
        %690 = vmatprep.mubr.f32.mxu0 0.0
        %691 = vmatmul.mubr.f32.gmra.mrb[0].mxu0 %v544
        %v692 = vpop.f32.mrb[0].mxu0
        %v693 = vadd.f32 %v583, %v692
        %v694 = vpop.f32.mrb[0].mxu0
        %v695 = vadd.f32 %v587, %v694
        %696 = vmatprep.mubr.f32.mxu0 0.0
        %697 = vmatmul.mubr.f32.gmra.mrb[0].mxu0 %v545
        %v698 = vpop.f32.mrb[0].mxu0
        %v699 = vadd.f32 %v583, %v698
        %v700 = vpop.f32.mrb[0].mxu0
        %v701 = vadd.f32 %v587, %v700
        %702 = vdwg.mxu0
        %v703 = vsel %vm530, 1, 0
        %v704 = vsel %vm531, 1, 0
        %v705 = vsel %vm532, 1, 0
        %v706 = vsel %vm533, 1, 0
        %v707 = vsel %vm534, 1, 0
        %v708 = vsel %vm535, 1, 0
        %v709 = vsel %vm536, 1, 0
        %v710 = vsel %vm537, 1, 0
        %vm711 = vcmp.eq.s32.totalorder %v703, 1
        %vm712 = vcmp.eq.s32.totalorder %v704, 1
        %vm713 = vcmp.eq.s32.totalorder %v705, 1
        %vm714 = vcmp.eq.s32.totalorder %v706, 1
        %vm715 = vcmp.eq.s32.totalorder %v707, 1
        %vm716 = vcmp.eq.s32.totalorder %v708, 1
        %vm717 = vcmp.eq.s32.totalorder %v709, 1
        %vm718 = vcmp.eq.s32.totalorder %v710, 1
        %v719 = vsel %vm711, %v657, 0.0
        %v720 = vsel %vm711, %v659, 0.0
        %v721 = vsel %vm712, %v663, 0.0
        %v722 = vsel %vm712, %v665, 0.0
        %v723 = vsel %vm713, %v669, 0.0
        %v724 = vsel %vm713, %v671, 0.0
        %v725 = vsel %vm714, %v675, 0.0
        %v726 = vsel %vm714, %v677, 0.0
        %v727 = vsel %vm715, %v681, 0.0
        %v728 = vsel %vm715, %v683, 0.0
        %v729 = vsel %vm716, %v687, 0.0
        %v730 = vsel %vm716, %v689, 0.0
        %v731 = vsel %vm717, %v693, 0.0
        %v732 = vsel %vm717, %v695, 0.0
        %v733 = vsel %vm718, %v699, 0.0
        %v734 = vsel %vm718, %v701, 0.0
        %vm751 = vcmask 1041408
        %v752 = vrot.slane %v719, 6
        %v753 = vrot.slane %v720, 6
        %v754 = vrot.slane %v721, 6
        %v755 = vsel %vm751, %v752, %v754
        %v756 = vrot.slane %v722, 6
        %v757 = vsel %vm751, %v753, %v756
        %v758 = vrot.slane %v723, 6
        %v759 = vsel %vm751, %v754, %v758
        %v760 = vrot.slane %v724, 6
        %v761 = vsel %vm751, %v756, %v760
        %v762 = vrot.slane %v725, 6
        %v763 = vsel %vm751, %v758, %v762
        %v764 = vrot.slane %v726, 6
        %v765 = vsel %vm751, %v760, %v764
        %v766 = vrot.slane %v727, 6
        %v767 = vsel %vm751, %v762, %v766
        %v768 = vrot.slane %v728, 6
        %v769 = vsel %vm751, %v764, %v768
        %v770 = vrot.slane %v729, 6
        %v771 = vsel %vm751, %v766, %v770
        %v772 = vrot.slane %v730, 6
        %v773 = vsel %vm751, %v768, %v772
        %v774 = vrot.slane %v731, 6
        %v775 = vsel %vm751, %v770, %v774
        %v776 = vrot.slane %v732, 6
        %v777 = vsel %vm751, %v772, %v776
        %v778 = vrot.slane %v733, 6
        %v779 = vsel %vm751, %v774, %v778
        %v780 = vrot.slane %v734, 6
        %v781 = vsel %vm751, %v776, %v780
        %v798 = vsel %vm751, 0.0, %v752
        %v799 = vsel %vm751, 0.0, %v753
        %vm800 = vcmask 1040384
        %v801 = vrot.slane %v719, 7
        %v802 = vrot.slane %v720, 7
        %v803 = vrot.slane %v721, 7
        %v804 = vsel %vm800, %v801, %v803
        %v805 = vrot.slane %v722, 7
        %v806 = vsel %vm800, %v802, %v805
        %v807 = vrot.slane %v723, 7
        %v808 = vsel %vm800, %v803, %v807
        %v809 = vrot.slane %v724, 7
        %v810 = vsel %vm800, %v805, %v809
        %v811 = vrot.slane %v725, 7
        %v812 = vsel %vm800, %v807, %v811
        %v813 = vrot.slane %v726, 7
        %v814 = vsel %vm800, %v809, %v813
        %v815 = vrot.slane %v727, 7
        %v816 = vsel %vm800, %v811, %v815
        %v817 = vrot.slane %v728, 7
        %v818 = vsel %vm800, %v813, %v817
        %v819 = vrot.slane %v729, 7
        %v820 = vsel %vm800, %v815, %v819
        %v821 = vrot.slane %v730, 7
        %v822 = vsel %vm800, %v817, %v821
        %v823 = vrot.slane %v731, 7
        %v824 = vsel %vm800, %v819, %v823
        %v825 = vrot.slane %v732, 7
        %v826 = vsel %vm800, %v821, %v825
        %v827 = vrot.slane %v733, 7
        %v828 = vsel %vm800, %v823, %v827
        %v829 = vrot.slane %v734, 7
        %v830 = vsel %vm800, %v825, %v829
        %v847 = vsel %vm800, 0.0, %v801
        %v848 = vsel %vm800, 0.0, %v802
        %vm849 = vcmask 1046528
        %v850 = vrot.slane %v719, 1
        %v851 = vrot.slane %v721, 1
        %v852 = vsel %vm849, %v850, %v851
        %v853 = vrot.slane %v720, 1
        %v854 = vrot.slane %v722, 1
        %v855 = vsel %vm849, %v853, %v854
        %v856 = vrot.slane %v723, 1
        %v857 = vsel %vm849, %v851, %v856
        %v858 = vrot.slane %v724, 1
        %v859 = vsel %vm849, %v854, %v858
        %v860 = vrot.slane %v725, 1
        %v861 = vsel %vm849, %v856, %v860
        %v862 = vrot.slane %v726, 1
        %v863 = vsel %vm849, %v858, %v862
        %v864 = vrot.slane %v727, 1
        %v865 = vsel %vm849, %v860, %v864
        %v866 = vrot.slane %v728, 1
        %v867 = vsel %vm849, %v862, %v866
        %v868 = vrot.slane %v729, 1
        %v869 = vsel %vm849, %v864, %v868
        %v870 = vrot.slane %v730, 1
        %v871 = vsel %vm849, %v866, %v870
        %v872 = vrot.slane %v731, 1
        %v873 = vsel %vm849, %v868, %v872
        %v874 = vrot.slane %v732, 1
        %v875 = vsel %vm849, %v870, %v874
        %v876 = vrot.slane %v733, 1
        %v877 = vsel %vm849, %v872, %v876
        %v878 = vrot.slane %v734, 1
        %v879 = vsel %vm849, %v874, %v878
        %v896 = vsel %vm849, %v876, 0.0
        %v897 = vsel %vm849, %v878, 0.0
        %vm898 = vcmask 1045504
        %v899 = vrot.slane %v719, 2
        %v900 = vrot.slane %v721, 2
        %v901 = vsel %vm898, %v899, %v900
        %v902 = vrot.slane %v720, 2
        %v903 = vrot.slane %v722, 2
        %v904 = vsel %vm898, %v902, %v903
        %v905 = vrot.slane %v723, 2
        %v906 = vsel %vm898, %v900, %v905
        %v907 = vrot.slane %v724, 2
        %v908 = vsel %vm898, %v903, %v907
        %v909 = vrot.slane %v725, 2
        %v910 = vsel %vm898, %v905, %v909
        %v911 = vrot.slane %v726, 2
        %v912 = vsel %vm898, %v907, %v911
        %v913 = vrot.slane %v727, 2
        %v914 = vsel %vm898, %v909, %v913
        %v915 = vrot.slane %v728, 2
        %v916 = vsel %vm898, %v911, %v915
        %v917 = vrot.slane %v729, 2
        %v918 = vsel %vm898, %v913, %v917
        %v919 = vrot.slane %v730, 2
        %v920 = vsel %vm898, %v915, %v919
        %v921 = vrot.slane %v731, 2
        %v922 = vsel %vm898, %v917, %v921
        %v923 = vrot.slane %v732, 2
        %v924 = vsel %vm898, %v919, %v923
        %v925 = vrot.slane %v733, 2
        %v926 = vsel %vm898, %v921, %v925
        %v927 = vrot.slane %v734, 2
        %v928 = vsel %vm898, %v923, %v927
        %v945 = vsel %vm898, %v925, 0.0
        %v946 = vsel %vm898, %v927, 0.0
        %v947 = vld [vmem:[#allocation6] sm:$0xff]
        %v948 = vld [vmem:[#allocation6 + $0x8] sm:$0xff]
        %v949 = vld [vmem:[#allocation6 + $0x10] sm:$0xff]
        %v950 = vld [vmem:[#allocation6 + $0x18] sm:$0xff]
        %v951 = vld [vmem:[#allocation6 + $0x20] sm:$0xff]
        %v952 = vld [vmem:[#allocation6 + $0x28] sm:$0xff]
        %v953 = vld [vmem:[#allocation6 + $0x30] sm:$0xff]
        %v954 = vld [vmem:[#allocation6 + $0x38] sm:$0xff]
        %v955 = vld [vmem:[#allocation6 + $0x40] sm:$0xff]
        %v956 = vld [vmem:[#allocation6 + $0x48] sm:$0xff]
        %v957 = vld [vmem:[#allocation6 + $0x50] sm:$0xff]
        %v958 = vld [vmem:[#allocation6 + $0x58] sm:$0xff]
        %v959 = vld [vmem:[#allocation6 + $0x60] sm:$0xff]
        %v960 = vld [vmem:[#allocation6 + $0x68] sm:$0xff]
        %v961 = vld [vmem:[#allocation6 + $0x70] sm:$0xff]
        %v962 = vld [vmem:[#allocation6 + $0x78] sm:$0xff]
        %v963 = vld [vmem:[#allocation6 + $0x80] sm:$0xff]
        %v964 = vld [vmem:[#allocation6 + $0x88] sm:$0xff]
        %v965 = vld [vmem:[#allocation6 + $0x90] sm:$0xff]
        %v966 = vld [vmem:[#allocation6 + $0x98] sm:$0xff]
        %v967 = vld [vmem:[#allocation6 + $0xa0] sm:$0xff]
        %v968 = vld [vmem:[#allocation6 + $0xa8] sm:$0xff]
        %v969 = vld [vmem:[#allocation6 + $0xb0] sm:$0xff]
        %v970 = vld [vmem:[#allocation6 + $0xb8] sm:$0xff]
        %v971 = vld [vmem:[#allocation6 + $0xc0] sm:$0xff]
        %v972 = vld [vmem:[#allocation6 + $0xc8] sm:$0xff]
        %v973 = vld [vmem:[#allocation6 + $0xd0] sm:$0xff]
        %v974 = vld [vmem:[#allocation6 + $0xd8] sm:$0xff]
        %v975 = vld [vmem:[#allocation6 + $0xe0] sm:$0xff]
        %v976 = vld [vmem:[#allocation6 + $0xe8] sm:$0xff]
        %v977 = vld [vmem:[#allocation6 + $0xf0] sm:$0xff]
        %v978 = vld [vmem:[#allocation6 + $0xf8] sm:$0xff]
        %v979 = vld [vmem:[#allocation6 + $0x100] sm:$0xff]
        %v980 = vld [vmem:[#allocation6 + $0x108] sm:$0xff]
        %v981 = vld [vmem:[#allocation6 + $0x110] sm:$0xff]
        %v982 = vld [vmem:[#allocation6 + $0x118] sm:$0xff]
        %v983 = vld [vmem:[#allocation6 + $0x120] sm:$0xff]
        %v984 = vld [vmem:[#allocation6 + $0x128] sm:$0xff]
        %v985 = vld [vmem:[#allocation6 + $0x130] sm:$0xff]
        %v986 = vld [vmem:[#allocation6 + $0x138] sm:$0xff]
        %v987 = vld [vmem:[#allocation6 + $0x140] sm:$0xff]
        %v988 = vld [vmem:[#allocation6 + $0x148] sm:$0xff]
        %v989 = vld [vmem:[#allocation6 + $0x150] sm:$0xff]
        %v990 = vld [vmem:[#allocation6 + $0x158] sm:$0xff]
        %v991 = vld [vmem:[#allocation6 + $0x160] sm:$0xff]
        %v992 = vld [vmem:[#allocation6 + $0x168] sm:$0xff]
        %v993 = vld [vmem:[#allocation6 + $0x170] sm:$0xff]
        %v994 = vld [vmem:[#allocation6 + $0x178] sm:$0xff]
        %v995 = vld [vmem:[#allocation6 + $0x180] sm:$0xff]
        %v996 = vld [vmem:[#allocation6 + $0x188] sm:$0xff]
        %v997 = vld [vmem:[#allocation6 + $0x190] sm:$0xff]
        %v998 = vld [vmem:[#allocation6 + $0x198] sm:$0xff]
        %v999 = vld [vmem:[#allocation6 + $0x1a0] sm:$0xff]
        %v1000 = vld [vmem:[#allocation6 + $0x1a8] sm:$0xff]
        %v1001 = vld [vmem:[#allocation6 + $0x1b0] sm:$0xff]
        %v1002 = vld [vmem:[#allocation6 + $0x1b8] sm:$0xff]
        %v1003 = vld [vmem:[#allocation6 + $0x1c0] sm:$0xff]
        %v1004 = vld [vmem:[#allocation6 + $0x1c8] sm:$0xff]
        %v1005 = vld [vmem:[#allocation6 + $0x1d0] sm:$0xff]
        %v1006 = vld [vmem:[#allocation6 + $0x1d8] sm:$0xff]
        %v1007 = vld [vmem:[#allocation6 + $0x1e0] sm:$0xff]
        %v1008 = vld [vmem:[#allocation6 + $0x1e8] sm:$0xff]
        %v1009 = vld [vmem:[#allocation6 + $0x1f0] sm:$0xff]
        %v1010 = vld [vmem:[#allocation6 + $0x1f8] sm:$0xff]
        %v1011 = vld [vmem:[#allocation6 + $0x200] sm:$0xff]
        %v1012 = vld [vmem:[#allocation6 + $0x208] sm:$0xff]
        %v1013 = vld [vmem:[#allocation6 + $0x210] sm:$0xff]
        %v1014 = vld [vmem:[#allocation6 + $0x218] sm:$0xff]
        %v1015 = vld [vmem:[#allocation6 + $0x220] sm:$0xff]
        %v1016 = vld [vmem:[#allocation6 + $0x228] sm:$0xff]
        %v1017 = vld [vmem:[#allocation6 + $0x230] sm:$0xff]
        %v1018 = vld [vmem:[#allocation6 + $0x238] sm:$0xff]
        %v1019 = vld [vmem:[#allocation6 + $0x240] sm:$0xff]
        %v1020 = vld [vmem:[#allocation6 + $0x248] sm:$0xff]
        %v1021 = vld [vmem:[#allocation6 + $0x250] sm:$0xff]
        %v1022 = vld [vmem:[#allocation6 + $0x258] sm:$0xff]
        %v1023 = vld [vmem:[#allocation6 + $0x260] sm:$0xff]
        %v1024 = vld [vmem:[#allocation6 + $0x268] sm:$0xff]
        %v1025 = vld [vmem:[#allocation6 + $0x270] sm:$0xff]
        %v1026 = vld [vmem:[#allocation6 + $0x278] sm:$0xff]
        %v1027 = vld [vmem:[#allocation6 + $0x280] sm:$0xff]
        %v1028 = vld [vmem:[#allocation6 + $0x288] sm:$0xff]
        %v1029 = vld [vmem:[#allocation6 + $0x290] sm:$0xff]
        %v1030 = vld [vmem:[#allocation6 + $0x298] sm:$0xff]
        %v1031 = vld [vmem:[#allocation6 + $0x2a0] sm:$0xff]
        %v1032 = vld [vmem:[#allocation6 + $0x2a8] sm:$0xff]
        %v1033 = vld [vmem:[#allocation6 + $0x2b0] sm:$0xff]
        %v1034 = vld [vmem:[#allocation6 + $0x2b8] sm:$0xff]
        %v1035 = vld [vmem:[#allocation6 + $0x2c0] sm:$0xff]
        %v1036 = vld [vmem:[#allocation6 + $0x2c8] sm:$0xff]
        %v1037 = vld [vmem:[#allocation6 + $0x2d0] sm:$0xff]
        %v1038 = vld [vmem:[#allocation6 + $0x2d8] sm:$0xff]
        %v1039 = vld [vmem:[#allocation6 + $0x2e0] sm:$0xff]
        %v1040 = vld [vmem:[#allocation6 + $0x2e8] sm:$0xff]
        %v1041 = vld [vmem:[#allocation6 + $0x2f0] sm:$0xff]
        %v1042 = vld [vmem:[#allocation6 + $0x2f8] sm:$0xff]
        %v1043 = vld [vmem:[#allocation6 + $0x300] sm:$0xff]
        %v1044 = vld [vmem:[#allocation6 + $0x308] sm:$0xff]
        %v1045 = vld [vmem:[#allocation6 + $0x310] sm:$0xff]
        %v1046 = vld [vmem:[#allocation6 + $0x318] sm:$0xff]
        %v1047 = vld [vmem:[#allocation6 + $0x320] sm:$0xff]
        %v1048 = vld [vmem:[#allocation6 + $0x328] sm:$0xff]
        %v1049 = vld [vmem:[#allocation6 + $0x330] sm:$0xff]
        %v1050 = vld [vmem:[#allocation6 + $0x338] sm:$0xff]
        %v1051 = vld [vmem:[#allocation6 + $0x340] sm:$0xff]
        %v1052 = vld [vmem:[#allocation6 + $0x348] sm:$0xff]
        %v1053 = vld [vmem:[#allocation6 + $0x350] sm:$0xff]
        %v1054 = vld [vmem:[#allocation6 + $0x358] sm:$0xff]
        %v1055 = vld [vmem:[#allocation6 + $0x360] sm:$0xff]
        %v1056 = vld [vmem:[#allocation6 + $0x368] sm:$0xff]
        %v1057 = vld [vmem:[#allocation6 + $0x370] sm:$0xff]
        %v1058 = vld [vmem:[#allocation6 + $0x378] sm:$0xff]
        %v1059 = vld [vmem:[#allocation6 + $0x380] sm:$0xff]
        %v1060 = vld [vmem:[#allocation6 + $0x388] sm:$0xff]
        %v1061 = vld [vmem:[#allocation6 + $0x390] sm:$0xff]
        %v1062 = vld [vmem:[#allocation6 + $0x398] sm:$0xff]
        %v1063 = vld [vmem:[#allocation6 + $0x3a0] sm:$0xff]
        %v1064 = vld [vmem:[#allocation6 + $0x3a8] sm:$0xff]
        %v1065 = vld [vmem:[#allocation6 + $0x3b0] sm:$0xff]
        %v1066 = vld [vmem:[#allocation6 + $0x3b8] sm:$0xff]
        %v1067 = vld [vmem:[#allocation6 + $0x3c0] sm:$0xff]
        %v1068 = vld [vmem:[#allocation6 + $0x3c8] sm:$0xff]
        %v1069 = vld [vmem:[#allocation6 + $0x3d0] sm:$0xff]
        %v1070 = vld [vmem:[#allocation6 + $0x3d8] sm:$0xff]
        %v1071 = vld [vmem:[#allocation6 + $0x3e0] sm:$0xff]
        %v1072 = vld [vmem:[#allocation6 + $0x3e8] sm:$0xff]
        %v1073 = vld [vmem:[#allocation6 + $0x3f0] sm:$0xff]
        %v1074 = vld [vmem:[#allocation6 + $0x3f8] sm:$0xff]
        %v1075 = vld [vmem:[#allocation6 + $0x400] sm:$0xff]
        %v1076 = vld [vmem:[#allocation6 + $0x408] sm:$0xff]
        %v1077 = vld [vmem:[#allocation6 + $0x410] sm:$0xff]
        %v1078 = vld [vmem:[#allocation6 + $0x418] sm:$0xff]
        %v1079 = vld [vmem:[#allocation6 + $0x420] sm:$0xff]
        %v1080 = vld [vmem:[#allocation6 + $0x428] sm:$0xff]
        %v1081 = vld [vmem:[#allocation6 + $0x430] sm:$0xff]
        %v1082 = vld [vmem:[#allocation6 + $0x438] sm:$0xff]
        %v1083 = vld [vmem:[#allocation6 + $0x440] sm:$0xff]
        %v1084 = vld [vmem:[#allocation6 + $0x448] sm:$0xff]
        %v1085 = vld [vmem:[#allocation6 + $0x450] sm:$0xff]
        %v1086 = vld [vmem:[#allocation6 + $0x458] sm:$0xff]
        %v1087 = vld [vmem:[#allocation6 + $0x460] sm:$0xff]
        %v1088 = vld [vmem:[#allocation6 + $0x468] sm:$0xff]
        %v1089 = vld [vmem:[#allocation6 + $0x470] sm:$0xff]
        %v1090 = vld [vmem:[#allocation6 + $0x478] sm:$0xff]
        %v1091 = vld [vmem:[#allocation6 + $0x480] sm:$0xff]
        %v1092 = vld [vmem:[#allocation6 + $0x488] sm:$0xff]
        %v1093 = vld [vmem:[#allocation6 + $0x490] sm:$0xff]
        %v1094 = vld [vmem:[#allocation6 + $0x498] sm:$0xff]
        %v1095 = vld [vmem:[#allocation6 + $0x4a0] sm:$0xff]
        %v1096 = vld [vmem:[#allocation6 + $0x4a8] sm:$0xff]
        %v1097 = vld [vmem:[#allocation6 + $0x4b0] sm:$0xff]
        %v1098 = vld [vmem:[#allocation6 + $0x4b8] sm:$0xff]
        %v1099 = vld [vmem:[#allocation6 + $0x4c0] sm:$0xff]
        %v1100 = vld [vmem:[#allocation6 + $0x4c8] sm:$0xff]
        %v1101 = vld [vmem:[#allocation6 + $0x4d0] sm:$0xff]
        %v1102 = vld [vmem:[#allocation6 + $0x4d8] sm:$0xff]
        %v1103 = vld [vmem:[#allocation6 + $0x4e0] sm:$0xff]
        %v1104 = vld [vmem:[#allocation6 + $0x4e8] sm:$0xff]
        %v1105 = vld [vmem:[#allocation6 + $0x4f0] sm:$0xff]
        %v1106 = vld [vmem:[#allocation6 + $0x4f8] sm:$0xff]
        %v1107 = vld [vmem:[#allocation6 + $0x500] sm:$0xff]
        %v1108 = vld [vmem:[#allocation6 + $0x508] sm:$0xff]
        %v1109 = vld [vmem:[#allocation6 + $0x510] sm:$0xff]
        %v1110 = vld [vmem:[#allocation6 + $0x518] sm:$0xff]
        %v1111 = vld [vmem:[#allocation6 + $0x520] sm:$0xff]
        %v1112 = vld [vmem:[#allocation6 + $0x528] sm:$0xff]
        %v1113 = vld [vmem:[#allocation6 + $0x530] sm:$0xff]
        %v1114 = vld [vmem:[#allocation6 + $0x538] sm:$0xff]
        %v1115 = vld [vmem:[#allocation6 + $0x540] sm:$0xff]
        %v1116 = vld [vmem:[#allocation6 + $0x548] sm:$0xff]
        %v1117 = vld [vmem:[#allocation6 + $0x550] sm:$0xff]
        %v1118 = vld [vmem:[#allocation6 + $0x558] sm:$0xff]
        %v1119 = vld [vmem:[#allocation6 + $0x560] sm:$0xff]
        %v1120 = vld [vmem:[#allocation6 + $0x568] sm:$0xff]
        %v1121 = vld [vmem:[#allocation6 + $0x570] sm:$0xff]
        %v1122 = vld [vmem:[#allocation6 + $0x578] sm:$0xff]
        %v1123 = vld [vmem:[#allocation6 + $0x580] sm:$0xff]
        %v1124 = vld [vmem:[#allocation6 + $0x588] sm:$0xff]
        %v1125 = vld [vmem:[#allocation6 + $0x590] sm:$0xff]
        %v1126 = vld [vmem:[#allocation6 + $0x598] sm:$0xff]
        %v1127 = vld [vmem:[#allocation6 + $0x5a0] sm:$0xff]
        %v1128 = vld [vmem:[#allocation6 + $0x5a8] sm:$0xff]
        %v1129 = vld [vmem:[#allocation6 + $0x5b0] sm:$0xff]
        %v1130 = vld [vmem:[#allocation6 + $0x5b8] sm:$0xff]
        %v1131 = vld [vmem:[#allocation6 + $0x5c0] sm:$0xff]
        %v1132 = vld [vmem:[#allocation6 + $0x5c8] sm:$0xff]
        %v1133 = vld [vmem:[#allocation6 + $0x5d0] sm:$0xff]
        %v1134 = vld [vmem:[#allocation6 + $0x5d8] sm:$0xff]
        %v1135 = vld [vmem:[#allocation6 + $0x5e0] sm:$0xff]
        %v1136 = vld [vmem:[#allocation6 + $0x5e8] sm:$0xff]
        %v1137 = vld [vmem:[#allocation6 + $0x5f0] sm:$0xff]
        %v1138 = vld [vmem:[#allocation6 + $0x5f8] sm:$0xff]
        %v1139 = vld [vmem:[#allocation6 + $0x600] sm:$0xff]
        %v1140 = vld [vmem:[#allocation6 + $0x608] sm:$0xff]
        %v1141 = vld [vmem:[#allocation6 + $0x610] sm:$0xff]
        %v1142 = vld [vmem:[#allocation6 + $0x618] sm:$0xff]
        %v1143 = vld [vmem:[#allocation6 + $0x620] sm:$0xff]
        %v1144 = vld [vmem:[#allocation6 + $0x628] sm:$0xff]
        %v1145 = vld [vmem:[#allocation6 + $0x630] sm:$0xff]
        %v1146 = vld [vmem:[#allocation6 + $0x638] sm:$0xff]
        %v1147 = vld [vmem:[#allocation6 + $0x640] sm:$0xff]
        %v1148 = vld [vmem:[#allocation6 + $0x648] sm:$0xff]
        %v1149 = vld [vmem:[#allocation6 + $0x650] sm:$0xff]
        %v1150 = vld [vmem:[#allocation6 + $0x658] sm:$0xff]
        %v1151 = vld [vmem:[#allocation6 + $0x660] sm:$0xff]
        %v1152 = vld [vmem:[#allocation6 + $0x668] sm:$0xff]
        %v1153 = vld [vmem:[#allocation6 + $0x670] sm:$0xff]
        %v1154 = vld [vmem:[#allocation6 + $0x678] sm:$0xff]
        %v1155 = vld [vmem:[#allocation6 + $0x680] sm:$0xff]
        %v1156 = vld [vmem:[#allocation6 + $0x688] sm:$0xff]
        %v1157 = vld [vmem:[#allocation6 + $0x690] sm:$0xff]
        %v1158 = vld [vmem:[#allocation6 + $0x698] sm:$0xff]
        %v1159 = vld [vmem:[#allocation6 + $0x6a0] sm:$0xff]
        %v1160 = vld [vmem:[#allocation6 + $0x6a8] sm:$0xff]
        %v1161 = vld [vmem:[#allocation6 + $0x6b0] sm:$0xff]
        %v1162 = vld [vmem:[#allocation6 + $0x6b8] sm:$0xff]
        %v1163 = vld [vmem:[#allocation6 + $0x6c0] sm:$0xff]
        %v1164 = vld [vmem:[#allocation6 + $0x6c8] sm:$0xff]
        %v1165 = vld [vmem:[#allocation6 + $0x6d0] sm:$0xff]
        %v1166 = vld [vmem:[#allocation6 + $0x6d8] sm:$0xff]
        %v1167 = vld [vmem:[#allocation6 + $0x6e0] sm:$0xff]
        %v1168 = vld [vmem:[#allocation6 + $0x6e8] sm:$0xff]
        %v1169 = vld [vmem:[#allocation6 + $0x6f0] sm:$0xff]
        %v1170 = vld [vmem:[#allocation6 + $0x6f8] sm:$0xff]
        %v1171 = vld [vmem:[#allocation6 + $0x700] sm:$0xff]
        %v1172 = vld [vmem:[#allocation6 + $0x708] sm:$0xff]
        %v1173 = vld [vmem:[#allocation6 + $0x710] sm:$0xff]
        %v1174 = vld [vmem:[#allocation6 + $0x718] sm:$0xff]
        %v1175 = vld [vmem:[#allocation6 + $0x720] sm:$0xff]
        %v1176 = vld [vmem:[#allocation6 + $0x728] sm:$0xff]
        %v1177 = vld [vmem:[#allocation6 + $0x730] sm:$0xff]
        %v1178 = vld [vmem:[#allocation6 + $0x738] sm:$0xff]
        %v1179 = vld [vmem:[#allocation6 + $0x740] sm:$0xff]
        %v1180 = vld [vmem:[#allocation6 + $0x748] sm:$0xff]
        %v1181 = vld [vmem:[#allocation6 + $0x750] sm:$0xff]
        %v1182 = vld [vmem:[#allocation6 + $0x758] sm:$0xff]
        %v1183 = vld [vmem:[#allocation6 + $0x760] sm:$0xff]
        %v1184 = vld [vmem:[#allocation6 + $0x768] sm:$0xff]
        %v1185 = vld [vmem:[#allocation6 + $0x770] sm:$0xff]
        %v1186 = vld [vmem:[#allocation6 + $0x778] sm:$0xff]
        %v1187 = vld [vmem:[#allocation6 + $0x780] sm:$0xff]
        %v1188 = vld [vmem:[#allocation6 + $0x788] sm:$0xff]
        %v1189 = vld [vmem:[#allocation6 + $0x790] sm:$0xff]
        %v1190 = vld [vmem:[#allocation6 + $0x798] sm:$0xff]
        %v1191 = vld [vmem:[#allocation6 + $0x7a0] sm:$0xff]
        %v1192 = vld [vmem:[#allocation6 + $0x7a8] sm:$0xff]
        %v1193 = vld [vmem:[#allocation6 + $0x7b0] sm:$0xff]
        %v1194 = vld [vmem:[#allocation6 + $0x7b8] sm:$0xff]
        %v1195 = vld [vmem:[#allocation6 + $0x7c0] sm:$0xff]
        %v1196 = vld [vmem:[#allocation6 + $0x7c8] sm:$0xff]
        %v1197 = vld [vmem:[#allocation6 + $0x7d0] sm:$0xff]
        %v1198 = vld [vmem:[#allocation6 + $0x7d8] sm:$0xff]
        %v1199 = vld [vmem:[#allocation6 + $0x7e0] sm:$0xff]
        %v1200 = vld [vmem:[#allocation6 + $0x7e8] sm:$0xff]
        %v1201 = vld [vmem:[#allocation6 + $0x7f0] sm:$0xff]
        %v1202 = vld [vmem:[#allocation6 + $0x7f8] sm:$0xff]
        %v1203 = vld [vmem:[#allocation6 + $0x800] sm:$0xff]
        %v1204 = vld [vmem:[#allocation6 + $0x808] sm:$0xff]
        %v1205 = vld [vmem:[#allocation6 + $0x810] sm:$0xff]
        %v1206 = vld [vmem:[#allocation6 + $0x818] sm:$0xff]
        %v1207 = vld [vmem:[#allocation6 + $0x820] sm:$0xff]
        %v1208 = vld [vmem:[#allocation6 + $0x828] sm:$0xff]
        %v1209 = vld [vmem:[#allocation6 + $0x830] sm:$0xff]
        %v1210 = vld [vmem:[#allocation6 + $0x838] sm:$0xff]
        %v1211 = vld [vmem:[#allocation6 + $0x840] sm:$0xff]
        %v1212 = vld [vmem:[#allocation6 + $0x848] sm:$0xff]
        %v1213 = vld [vmem:[#allocation6 + $0x850] sm:$0xff]
        %v1214 = vld [vmem:[#allocation6 + $0x858] sm:$0xff]
        %v1215 = vld [vmem:[#allocation6 + $0x860] sm:$0xff]
        %v1216 = vld [vmem:[#allocation6 + $0x868] sm:$0xff]
        %v1217 = vld [vmem:[#allocation6 + $0x870] sm:$0xff]
        %v1218 = vld [vmem:[#allocation6 + $0x878] sm:$0xff]
        %v1219 = vld [vmem:[#allocation6 + $0x880] sm:$0xff]
        %v1220 = vld [vmem:[#allocation6 + $0x888] sm:$0xff]
        %v1221 = vld [vmem:[#allocation6 + $0x890] sm:$0xff]
        %v1222 = vld [vmem:[#allocation6 + $0x898] sm:$0xff]
        %v1223 = vld [vmem:[#allocation6 + $0x8a0] sm:$0xff]
        %v1224 = vld [vmem:[#allocation6 + $0x8a8] sm:$0xff]
        %v1225 = vld [vmem:[#allocation6 + $0x8b0] sm:$0xff]
        %v1226 = vld [vmem:[#allocation6 + $0x8b8] sm:$0xff]
        %v1227 = vld [vmem:[#allocation6 + $0x8c0] sm:$0xff]
        %v1228 = vld [vmem:[#allocation6 + $0x8c8] sm:$0xff]
        %v1229 = vld [vmem:[#allocation6 + $0x8d0] sm:$0xff]
        %v1230 = vld [vmem:[#allocation6 + $0x8d8] sm:$0xff]
        %v1231 = vld [vmem:[#allocation6 + $0x8e0] sm:$0xff]
        %v1232 = vld [vmem:[#allocation6 + $0x8e8] sm:$0xff]
        %v1233 = vld [vmem:[#allocation6 + $0x8f0] sm:$0xff]
        %v1234 = vld [vmem:[#allocation6 + $0x8f8] sm:$0xff]
        %v1235 = vld [vmem:[#allocation6 + $0x900] sm:$0xff]
        %v1236 = vld [vmem:[#allocation6 + $0x908] sm:$0xff]
        %v1237 = vld [vmem:[#allocation6 + $0x910] sm:$0xff]
        %v1238 = vld [vmem:[#allocation6 + $0x918] sm:$0xff]
        %v1239 = vld [vmem:[#allocation6 + $0x920] sm:$0xff]
        %v1240 = vld [vmem:[#allocation6 + $0x928] sm:$0xff]
        %v1241 = vld [vmem:[#allocation6 + $0x930] sm:$0xff]
        %v1242 = vld [vmem:[#allocation6 + $0x938] sm:$0xff]
        %v1243 = vld [vmem:[#allocation6 + $0x940] sm:$0xff]
        %v1244 = vld [vmem:[#allocation6 + $0x948] sm:$0xff]
        %v1245 = vld [vmem:[#allocation6 + $0x950] sm:$0xff]
        %v1246 = vld [vmem:[#allocation6 + $0x958] sm:$0xff]
        %v1247 = vld [vmem:[#allocation6 + $0x960] sm:$0xff]
        %v1248 = vld [vmem:[#allocation6 + $0x968] sm:$0xff]
        %v1249 = vld [vmem:[#allocation6 + $0x970] sm:$0xff]
        %v1250 = vld [vmem:[#allocation6 + $0x978] sm:$0xff]
        %v1251 = vld [vmem:[#allocation6 + $0x980] sm:$0xff]
        %v1252 = vld [vmem:[#allocation6 + $0x988] sm:$0xff]
        %v1253 = vld [vmem:[#allocation6 + $0x990] sm:$0xff]
        %v1254 = vld [vmem:[#allocation6 + $0x998] sm:$0xff]
        %v1255 = vld [vmem:[#allocation6 + $0x9a0] sm:$0xff]
        %v1256 = vld [vmem:[#allocation6 + $0x9a8] sm:$0xff]
        %v1257 = vld [vmem:[#allocation6 + $0x9b0] sm:$0xff]
        %v1258 = vld [vmem:[#allocation6 + $0x9b8] sm:$0xff]
        %v1259 = vld [vmem:[#allocation6 + $0x9c0] sm:$0xff]
        %v1260 = vld [vmem:[#allocation6 + $0x9c8] sm:$0xff]
        %v1261 = vld [vmem:[#allocation6 + $0x9d0] sm:$0xff]
        %v1262 = vld [vmem:[#allocation6 + $0x9d8] sm:$0xff]
        %v1263 = vld [vmem:[#allocation6 + $0x9e0] sm:$0xff]
        %v1264 = vld [vmem:[#allocation6 + $0x9e8] sm:$0xff]
        %v1265 = vld [vmem:[#allocation6 + $0x9f0] sm:$0xff]
        %v1266 = vld [vmem:[#allocation6 + $0x9f8] sm:$0xff]
        %1267 = vmatprep.subr.mxu0 %v948
        %1268 = vmatpush1.msra.mxu0 %v947
        %1269 = vmatprep.subr.mxu0 %v950
        %1270 = vmatpush1.msra.mxu0 %v949
        %1271 = vmatprep.subr.mxu0 %v952
        %1272 = vmatpush1.msra.mxu0 %v951
        %1273 = vmatprep.subr.mxu0 %v954
        %1274 = vmatpush1.msra.mxu0 %v953
        %1275 = vmatprep.subr.mxu0 %v956
        %1276 = vmatpush1.msra.mxu0 %v955
        %1277 = vmatprep.subr.mxu0 %v958
        %1278 = vmatpush1.msra.mxu0 %v957
        %1279 = vmatprep.subr.mxu0 %v960
        %1280 = vmatpush1.msra.mxu0 %v959
        %1281 = vmatprep.subr.mxu0 %v962
        %1282 = vmatpush1.msra.mxu0 %v961
        %1283 = vmatprep.subr.mxu0 %v964
        %1284 = vmatpush1.msra.mxu0 %v963
        %1285 = vmatprep.subr.mxu0 %v966
        %1286 = vmatpush1.msra.mxu0 %v965
        %1287 = vmatprep.subr.mxu0 %v968
        %1288 = vmatpush1.msra.mxu0 %v967
        %1289 = vmatprep.subr.mxu0 %v970
        %1290 = vmatpush1.msra.mxu0 %v969
        %1291 = vmatprep.subr.mxu0 %v972
        %1292 = vmatpush1.msra.mxu0 %v971
        %1293 = vmatprep.subr.mxu0 %v974
        %1294 = vmatpush1.msra.mxu0 %v973
        %1295 = vmatprep.subr.mxu0 %v976
        %1296 = vmatpush1.msra.mxu0 %v975
        %1297 = vmatprep.subr.mxu0 %v978
        %1298 = vmatpush1.msra.mxu0 %v977
        %1299 = vmatprep.subr.mxu0 %v980
        %1300 = vmatpush1.msra.mxu0 %v979
        %1301 = vmatprep.subr.mxu0 %v982
        %1302 = vmatpush1.msra.mxu0 %v981
        %1303 = vmatprep.subr.mxu0 %v984
        %1304 = vmatpush1.msra.mxu0 %v983
        %1305 = vmatprep.subr.mxu0 %v986
        %1306 = vmatpush1.msra.mxu0 %v985
        %1307 = vmatprep.subr.mxu0 %v988
        %1308 = vmatpush1.msra.mxu0 %v987
        %1309 = vmatprep.subr.mxu0 %v990
        %1310 = vmatpush1.msra.mxu0 %v989
        %1311 = vmatprep.subr.mxu0 %v992
        %1312 = vmatpush1.msra.mxu0 %v991
        %1313 = vmatprep.subr.mxu0 %v994
        %1314 = vmatpush1.msra.mxu0 %v993
        %1315 = vmatprep.subr.mxu0 %v996
        %1316 = vmatpush1.msra.mxu0 %v995
        %1317 = vmatprep.subr.mxu0 %v998
        %1318 = vmatpush1.msra.mxu0 %v997
        %1319 = vmatprep.subr.mxu0 %v1000
        %1320 = vmatpush1.msra.mxu0 %v999
        %1321 = vmatprep.subr.mxu0 %v1002
        %1322 = vmatpush1.msra.mxu0 %v1001
        %1323 = vmatprep.subr.mxu0 %v1004
        %1324 = vmatpush1.msra.mxu0 %v1003
        %1325 = vmatprep.subr.mxu0 %v1006
        %1326 = vmatpush1.msra.mxu0 %v1005
        %1327 = vmatprep.subr.mxu0 %v1008
        %1328 = vmatpush1.msra.mxu0 %v1007
        %1329 = vmatprep.subr.mxu0 %v1010
        %1330 = vmatpush1.msra.mxu0 %v1009
        %1331 = vmatprep.mubr.f32.mxu0 %v799
        %1332 = vmatmul.mubr.f32.gmra.mrb[0].mxu0 %v798
        %v1333 = vpop.f32.mrb[0].mxu0
        %v1334 = vadd.f32 0.0, %v1333
        %v1335 = vpop.f32.mrb[0].mxu0
        %v1336 = vadd.f32 0.0, %v1335
        %1337 = vmatprep.mubr.f32.mxu0 %v757
        %1338 = vmatmul.mubr.f32.gmra.mrb[0].mxu0 %v755
        %v1339 = vpop.f32.mrb[0].mxu0
        %v1340 = vadd.f32 0.0, %v1339
        %v1341 = vpop.f32.mrb[0].mxu0
        %v1342 = vadd.f32 0.0, %v1341
        %1343 = vmatprep.mubr.f32.mxu0 %v761
        %1344 = vmatmul.mubr.f32.gmra.mrb[0].mxu0 %v759
        %v1345 = vpop.f32.mrb[0].mxu0
        %v1346 = vadd.f32 0.0, %v1345
        %v1347 = vpop.f32.mrb[0].mxu0
        %v1348 = vadd.f32 0.0, %v1347
        %1349 = vmatprep.mubr.f32.mxu0 %v765
        %1350 = vmatmul.mubr.f32.gmra.mrb[0].mxu0 %v763
        %v1351 = vpop.f32.mrb[0].mxu0
        %v1352 = vadd.f32 0.0, %v1351
        %v1353 = vpop.f32.mrb[0].mxu0
        %v1354 = vadd.f32 0.0, %v1353
        %1355 = vmatprep.mubr.f32.mxu0 %v769
        %1356 = vmatmul.mubr.f32.gmra.mrb[0].mxu0 %v767
        %v1357 = vpop.f32.mrb[0].mxu0
        %v1358 = vadd.f32 0.0, %v1357
        %v1359 = vpop.f32.mrb[0].mxu0
        %v1360 = vadd.f32 0.0, %v1359
        %1361 = vmatprep.mubr.f32.mxu0 %v773
        %1362 = vmatmul.mubr.f32.gmra.mrb[0].mxu0 %v771
        %v1363 = vpop.f32.mrb[0].mxu0
        %v1364 = vadd.f32 0.0, %v1363
        %v1365 = vpop.f32.mrb[0].mxu0
        %v1366 = vadd.f32 0.0, %v1365
        %1367 = vmatprep.mubr.f32.mxu0 %v777
        %1368 = vmatmul.mubr.f32.gmra.mrb[0].mxu0 %v775
        %v1369 = vpop.f32.mrb[0].mxu0
        %v1370 = vadd.f32 0.0, %v1369
        %v1371 = vpop.f32.mrb[0].mxu0
        %v1372 = vadd.f32 0.0, %v1371
        %1373 = vmatprep.mubr.f32.mxu0 %v781
        %1374 = vmatmul.mubr.f32.gmra.mrb[0].mxu0 %v779
        %v1375 = vpop.f32.mrb[0].mxu0
        %v1376 = vadd.f32 0.0, %v1375
        %v1377 = vpop.f32.mrb[0].mxu0
        %v1378 = vadd.f32 0.0, %v1377
        %1379 = vdwg.mxu0
        %1380 = vmatprep.subr.mxu0 %v1012
        %1381 = vmatpush1.msra.mxu0 %v1011
        %1382 = vmatprep.subr.mxu0 %v1014
        %1383 = vmatpush1.msra.mxu0 %v1013
        %1384 = vmatprep.subr.mxu0 %v1016
        %1385 = vmatpush1.msra.mxu0 %v1015
        %1386 = vmatprep.subr.mxu0 %v1018
        %1387 = vmatpush1.msra.mxu0 %v1017
        %1388 = vmatprep.subr.mxu0 %v1020
        %1389 = vmatpush1.msra.mxu0 %v1019
        %1390 = vmatprep.subr.mxu0 %v1022
        %1391 = vmatpush1.msra.mxu0 %v1021
        %1392 = vmatprep.subr.mxu0 %v1024
        %1393 = vmatpush1.msra.mxu0 %v1023
        %1394 = vmatprep.subr.mxu0 %v1026
        %1395 = vmatpush1.msra.mxu0 %v1025
        %1396 = vmatprep.subr.mxu0 %v1028
        %1397 = vmatpush1.msra.mxu0 %v1027
        %1398 = vmatprep.subr.mxu0 %v1030
        %1399 = vmatpush1.msra.mxu0 %v1029
        %1400 = vmatprep.subr.mxu0 %v1032
        %1401 = vmatpush1.msra.mxu0 %v1031
        %1402 = vmatprep.subr.mxu0 %v1034
        %1403 = vmatpush1.msra.mxu0 %v1033
        %1404 = vmatprep.subr.mxu0 %v1036
        %1405 = vmatpush1.msra.mxu0 %v1035
        %1406 = vmatprep.subr.mxu0 %v1038
        %1407 = vmatpush1.msra.mxu0 %v1037
        %1408 = vmatprep.subr.mxu0 %v1040
        %1409 = vmatpush1.msra.mxu0 %v1039
        %1410 = vmatprep.subr.mxu0 %v1042
        %1411 = vmatpush1.msra.mxu0 %v1041
        %1412 = vmatprep.subr.mxu0 %v1044
        %1413 = vmatpush1.msra.mxu0 %v1043
        %1414 = vmatprep.subr.mxu0 %v1046
        %1415 = vmatpush1.msra.mxu0 %v1045
        %1416 = vmatprep.subr.mxu0 %v1048
        %1417 = vmatpush1.msra.mxu0 %v1047
        %1418 = vmatprep.subr.mxu0 %v1050
        %1419 = vmatpush1.msra.mxu0 %v1049
        %1420 = vmatprep.subr.mxu0 %v1052
        %1421 = vmatpush1.msra.mxu0 %v1051
        %1422 = vmatprep.subr.mxu0 %v1054
        %1423 = vmatpush1.msra.mxu0 %v1053
        %1424 = vmatprep.subr.mxu0 %v1056
        %1425 = vmatpush1.msra.mxu0 %v1055
        %1426 = vmatprep.subr.mxu0 %v1058
        %1427 = vmatpush1.msra.mxu0 %v1057
        %1428 = vmatprep.subr.mxu0 %v1060
        %1429 = vmatpush1.msra.mxu0 %v1059
        %1430 = vmatprep.subr.mxu0 %v1062
        %1431 = vmatpush1.msra.mxu0 %v1061
        %1432 = vmatprep.subr.mxu0 %v1064
        %1433 = vmatpush1.msra.mxu0 %v1063
        %1434 = vmatprep.subr.mxu0 %v1066
        %1435 = vmatpush1.msra.mxu0 %v1065
        %1436 = vmatprep.subr.mxu0 %v1068
        %1437 = vmatpush1.msra.mxu0 %v1067
        %1438 = vmatprep.subr.mxu0 %v1070
        %1439 = vmatpush1.msra.mxu0 %v1069
        %1440 = vmatprep.subr.mxu0 %v1072
        %1441 = vmatpush1.msra.mxu0 %v1071
        %1442 = vmatprep.subr.mxu0 %v1074
        %1443 = vmatpush1.msra.mxu0 %v1073
        %1444 = vmatprep.mubr.f32.mxu0 %v848
        %1445 = vmatmul.mubr.f32.gmra.mrb[0].mxu0 %v847
        %v1446 = vpop.f32.mrb[0].mxu0
        %v1447 = vadd.f32 %v1334, %v1446
        %v1448 = vpop.f32.mrb[0].mxu0
        %v1449 = vadd.f32 %v1336, %v1448
        %1450 = vmatprep.mubr.f32.mxu0 %v806
        %1451 = vmatmul.mubr.f32.gmra.mrb[0].mxu0 %v804
        %v1452 = vpop.f32.mrb[0].mxu0
        %v1453 = vadd.f32 %v1340, %v1452
        %v1454 = vpop.f32.mrb[0].mxu0
        %v1455 = vadd.f32 %v1342, %v1454
        %1456 = vmatprep.mubr.f32.mxu0 %v810
        %1457 = vmatmul.mubr.f32.gmra.mrb[0].mxu0 %v808
        %v1458 = vpop.f32.mrb[0].mxu0
        %v1459 = vadd.f32 %v1346, %v1458
        %v1460 = vpop.f32.mrb[0].mxu0
        %v1461 = vadd.f32 %v1348, %v1460
        %1462 = vmatprep.mubr.f32.mxu0 %v814
        %1463 = vmatmul.mubr.f32.gmra.mrb[0].mxu0 %v812
        %v1464 = vpop.f32.mrb[0].mxu0
        %v1465 = vadd.f32 %v1352, %v1464
        %v1466 = vpop.f32.mrb[0].mxu0
        %v1467 = vadd.f32 %v1354, %v1466
        %1468 = vmatprep.mubr.f32.mxu0 %v818
        %1469 = vmatmul.mubr.f32.gmra.mrb[0].mxu0 %v816
        %v1470 = vpop.f32.mrb[0].mxu0
        %v1471 = vadd.f32 %v1358, %v1470
        %v1472 = vpop.f32.mrb[0].mxu0
        %v1473 = vadd.f32 %v1360, %v1472
        %1474 = vmatprep.mubr.f32.mxu0 %v822
        %1475 = vmatmul.mubr.f32.gmra.mrb[0].mxu0 %v820
        %v1476 = vpop.f32.mrb[0].mxu0
        %v1477 = vadd.f32 %v1364, %v1476
        %v1478 = vpop.f32.mrb[0].mxu0
        %v1479 = vadd.f32 %v1366, %v1478
        %1480 = vmatprep.mubr.f32.mxu0 %v826
        %1481 = vmatmul.mubr.f32.gmra.mrb[0].mxu0 %v824
        %v1482 = vpop.f32.mrb[0].mxu0
        %v1483 = vadd.f32 %v1370, %v1482
        %v1484 = vpop.f32.mrb[0].mxu0
        %v1485 = vadd.f32 %v1372, %v1484
        %1486 = vmatprep.mubr.f32.mxu0 %v830
        %1487 = vmatmul.mubr.f32.gmra.mrb[0].mxu0 %v828
        %v1488 = vpop.f32.mrb[0].mxu0
        %v1489 = vadd.f32 %v1376, %v1488
        %v1490 = vpop.f32.mrb[0].mxu0
        %v1491 = vadd.f32 %v1378, %v1490
        %1492 = vdwg.mxu0
        %1493 = vmatprep.subr.mxu0 %v1076
        %1494 = vmatpush1.msra.mxu0 %v1075
        %1495 = vmatprep.subr.mxu0 %v1078
        %1496 = vmatpush1.msra.mxu0 %v1077
        %1497 = vmatprep.subr.mxu0 %v1080
        %1498 = vmatpush1.msra.mxu0 %v1079
        %1499 = vmatprep.subr.mxu0 %v1082
        %1500 = vmatpush1.msra.mxu0 %v1081
        %1501 = vmatprep.subr.mxu0 %v1084
        %1502 = vmatpush1.msra.mxu0 %v1083
        %1503 = vmatprep.subr.mxu0 %v1086
        %1504 = vmatpush1.msra.mxu0 %v1085
        %1505 = vmatprep.subr.mxu0 %v1088
        %1506 = vmatpush1.msra.mxu0 %v1087
        %1507 = vmatprep.subr.mxu0 %v1090
        %1508 = vmatpush1.msra.mxu0 %v1089
        %1509 = vmatprep.subr.mxu0 %v1092
        %1510 = vmatpush1.msra.mxu0 %v1091
        %1511 = vmatprep.subr.mxu0 %v1094
        %1512 = vmatpush1.msra.mxu0 %v1093
        %1513 = vmatprep.subr.mxu0 %v1096
        %1514 = vmatpush1.msra.mxu0 %v1095
        %1515 = vmatprep.subr.mxu0 %v1098
        %1516 = vmatpush1.msra.mxu0 %v1097
        %1517 = vmatprep.subr.mxu0 %v1100
        %1518 = vmatpush1.msra.mxu0 %v1099
        %1519 = vmatprep.subr.mxu0 %v1102
        %1520 = vmatpush1.msra.mxu0 %v1101
        %1521 = vmatprep.subr.mxu0 %v1104
        %1522 = vmatpush1.msra.mxu0 %v1103
        %1523 = vmatprep.subr.mxu0 %v1106
        %1524 = vmatpush1.msra.mxu0 %v1105
        %1525 = vmatprep.subr.mxu0 %v1108
        %1526 = vmatpush1.msra.mxu0 %v1107
        %1527 = vmatprep.subr.mxu0 %v1110
        %1528 = vmatpush1.msra.mxu0 %v1109
        %1529 = vmatprep.subr.mxu0 %v1112
        %1530 = vmatpush1.msra.mxu0 %v1111
        %1531 = vmatprep.subr.mxu0 %v1114
        %1532 = vmatpush1.msra.mxu0 %v1113
        %1533 = vmatprep.subr.mxu0 %v1116
        %1534 = vmatpush1.msra.mxu0 %v1115
        %1535 = vmatprep.subr.mxu0 %v1118
        %1536 = vmatpush1.msra.mxu0 %v1117
        %1537 = vmatprep.subr.mxu0 %v1120
        %1538 = vmatpush1.msra.mxu0 %v1119
        %1539 = vmatprep.subr.mxu0 %v1122
        %1540 = vmatpush1.msra.mxu0 %v1121
        %1541 = vmatprep.subr.mxu0 %v1124
        %1542 = vmatpush1.msra.mxu0 %v1123
        %1543 = vmatprep.subr.mxu0 %v1126
        %1544 = vmatpush1.msra.mxu0 %v1125
        %1545 = vmatprep.subr.mxu0 %v1128
        %1546 = vmatpush1.msra.mxu0 %v1127
        %1547 = vmatprep.subr.mxu0 %v1130
        %1548 = vmatpush1.msra.mxu0 %v1129
        %1549 = vmatprep.subr.mxu0 %v1132
        %1550 = vmatpush1.msra.mxu0 %v1131
        %1551 = vmatprep.subr.mxu0 %v1134
        %1552 = vmatpush1.msra.mxu0 %v1133
        %1553 = vmatprep.subr.mxu0 %v1136
        %1554 = vmatpush1.msra.mxu0 %v1135
        %1555 = vmatprep.subr.mxu0 %v1138
        %1556 = vmatpush1.msra.mxu0 %v1137
        %1557 = vmatprep.mubr.f32.mxu0 %v720
        %1558 = vmatmul.mubr.f32.gmra.mrb[0].mxu0 %v719
        %v1559 = vpop.f32.mrb[0].mxu0
        %v1560 = vadd.f32 %v1447, %v1559
        %v1561 = vpop.f32.mrb[0].mxu0
        %v1562 = vadd.f32 %v1449, %v1561
        %1563 = vmatprep.mubr.f32.mxu0 %v722
        %1564 = vmatmul.mubr.f32.gmra.mrb[0].mxu0 %v721
        %v1565 = vpop.f32.mrb[0].mxu0
        %v1566 = vadd.f32 %v1453, %v1565
        %v1567 = vpop.f32.mrb[0].mxu0
        %v1568 = vadd.f32 %v1455, %v1567
        %1569 = vmatprep.mubr.f32.mxu0 %v724
        %1570 = vmatmul.mubr.f32.gmra.mrb[0].mxu0 %v723
        %v1571 = vpop.f32.mrb[0].mxu0
        %v1572 = vadd.f32 %v1459, %v1571
        %v1573 = vpop.f32.mrb[0].mxu0
        %v1574 = vadd.f32 %v1461, %v1573
        %1575 = vmatprep.mubr.f32.mxu0 %v726
        %1576 = vmatmul.mubr.f32.gmra.mrb[0].mxu0 %v725
        %v1577 = vpop.f32.mrb[0].mxu0
        %v1578 = vadd.f32 %v1465, %v1577
        %v1579 = vpop.f32.mrb[0].mxu0
        %v1580 = vadd.f32 %v1467, %v1579
        %1581 = vmatprep.mubr.f32.mxu0 %v728
        %1582 = vmatmul.mubr.f32.gmra.mrb[0].mxu0 %v727
        %v1583 = vpop.f32.mrb[0].mxu0
        %v1584 = vadd.f32 %v1471, %v1583
        %v1585 = vpop.f32.mrb[0].mxu0
        %v1586 = vadd.f32 %v1473, %v1585
        %1587 = vmatprep.mubr.f32.mxu0 %v730
        %1588 = vmatmul.mubr.f32.gmra.mrb[0].mxu0 %v729
        %v1589 = vpop.f32.mrb[0].mxu0
        %v1590 = vadd.f32 %v1477, %v1589
        %v1591 = vpop.f32.mrb[0].mxu0
        %v1592 = vadd.f32 %v1479, %v1591
        %1593 = vmatprep.mubr.f32.mxu0 %v732
        %1594 = vmatmul.mubr.f32.gmra.mrb[0].mxu0 %v731
        %v1595 = vpop.f32.mrb[0].mxu0
        %v1596 = vadd.f32 %v1483, %v1595
        %v1597 = vpop.f32.mrb[0].mxu0
        %v1598 = vadd.f32 %v1485, %v1597
        %1599 = vmatprep.mubr.f32.mxu0 %v734
        %1600 = vmatmul.mubr.f32.gmra.mrb[0].mxu0 %v733
        %v1601 = vpop.f32.mrb[0].mxu0
        %v1602 = vadd.f32 %v1489, %v1601
        %v1603 = vpop.f32.mrb[0].mxu0
        %v1604 = vadd.f32 %v1491, %v1603
        %1605 = vdwg.mxu0
        %1606 = vmatprep.subr.mxu0 %v1140
        %1607 = vmatpush1.msra.mxu0 %v1139
        %1608 = vmatprep.subr.mxu0 %v1142
        %1609 = vmatpush1.msra.mxu0 %v1141
        %1610 = vmatprep.subr.mxu0 %v1144
        %1611 = vmatpush1.msra.mxu0 %v1143
        %1612 = vmatprep.subr.mxu0 %v1146
        %1613 = vmatpush1.msra.mxu0 %v1145
        %1614 = vmatprep.subr.mxu0 %v1148
        %1615 = vmatpush1.msra.mxu0 %v1147
        %1616 = vmatprep.subr.mxu0 %v1150
        %1617 = vmatpush1.msra.mxu0 %v1149
        %1618 = vmatprep.subr.mxu0 %v1152
        %1619 = vmatpush1.msra.mxu0 %v1151
        %1620 = vmatprep.subr.mxu0 %v1154
        %1621 = vmatpush1.msra.mxu0 %v1153
        %1622 = vmatprep.subr.mxu0 %v1156
        %1623 = vmatpush1.msra.mxu0 %v1155
        %1624 = vmatprep.subr.mxu0 %v1158
        %1625 = vmatpush1.msra.mxu0 %v1157
        %1626 = vmatprep.subr.mxu0 %v1160
        %1627 = vmatpush1.msra.mxu0 %v1159
        %1628 = vmatprep.subr.mxu0 %v1162
        %1629 = vmatpush1.msra.mxu0 %v1161
        %1630 = vmatprep.subr.mxu0 %v1164
        %1631 = vmatpush1.msra.mxu0 %v1163
        %1632 = vmatprep.subr.mxu0 %v1166
        %1633 = vmatpush1.msra.mxu0 %v1165
        %1634 = vmatprep.subr.mxu0 %v1168
        %1635 = vmatpush1.msra.mxu0 %v1167
        %1636 = vmatprep.subr.mxu0 %v1170
        %1637 = vmatpush1.msra.mxu0 %v1169
        %1638 = vmatprep.subr.mxu0 %v1172
        %1639 = vmatpush1.msra.mxu0 %v1171
        %1640 = vmatprep.subr.mxu0 %v1174
        %1641 = vmatpush1.msra.mxu0 %v1173
        %1642 = vmatprep.subr.mxu0 %v1176
        %1643 = vmatpush1.msra.mxu0 %v1175
        %1644 = vmatprep.subr.mxu0 %v1178
        %1645 = vmatpush1.msra.mxu0 %v1177
        %1646 = vmatprep.subr.mxu0 %v1180
        %1647 = vmatpush1.msra.mxu0 %v1179
        %1648 = vmatprep.subr.mxu0 %v1182
        %1649 = vmatpush1.msra.mxu0 %v1181
        %1650 = vmatprep.subr.mxu0 %v1184
        %1651 = vmatpush1.msra.mxu0 %v1183
        %1652 = vmatprep.subr.mxu0 %v1186
        %1653 = vmatpush1.msra.mxu0 %v1185
        %1654 = vmatprep.subr.mxu0 %v1188
        %1655 = vmatpush1.msra.mxu0 %v1187
        %1656 = vmatprep.subr.mxu0 %v1190
        %1657 = vmatpush1.msra.mxu0 %v1189
        %1658 = vmatprep.subr.mxu0 %v1192
        %1659 = vmatpush1.msra.mxu0 %v1191
        %1660 = vmatprep.subr.mxu0 %v1194
        %1661 = vmatpush1.msra.mxu0 %v1193
        %1662 = vmatprep.subr.mxu0 %v1196
        %1663 = vmatpush1.msra.mxu0 %v1195
        %1664 = vmatprep.subr.mxu0 %v1198
        %1665 = vmatpush1.msra.mxu0 %v1197
        %1666 = vmatprep.subr.mxu0 %v1200
        %1667 = vmatpush1.msra.mxu0 %v1199
        %1668 = vmatprep.subr.mxu0 %v1202
        %1669 = vmatpush1.msra.mxu0 %v1201
        %1670 = vmatprep.mubr.f32.mxu0 %v855
        %1671 = vmatmul.mubr.f32.gmra.mrb[0].mxu0 %v852
        %v1672 = vpop.f32.mrb[0].mxu0
        %v1673 = vadd.f32 %v1560, %v1672
        %v1674 = vpop.f32.mrb[0].mxu0
        %v1675 = vadd.f32 %v1562, %v1674
        %1676 = vmatprep.mubr.f32.mxu0 %v859
        %1677 = vmatmul.mubr.f32.gmra.mrb[0].mxu0 %v857
        %v1678 = vpop.f32.mrb[0].mxu0
        %v1679 = vadd.f32 %v1566, %v1678
        %v1680 = vpop.f32.mrb[0].mxu0
        %v1681 = vadd.f32 %v1568, %v1680
        %1682 = vmatprep.mubr.f32.mxu0 %v863
        %1683 = vmatmul.mubr.f32.gmra.mrb[0].mxu0 %v861
        %v1684 = vpop.f32.mrb[0].mxu0
        %v1685 = vadd.f32 %v1572, %v1684
        %v1686 = vpop.f32.mrb[0].mxu0
        %v1687 = vadd.f32 %v1574, %v1686
        %1688 = vmatprep.mubr.f32.mxu0 %v867
        %1689 = vmatmul.mubr.f32.gmra.mrb[0].mxu0 %v865
        %v1690 = vpop.f32.mrb[0].mxu0
        %v1691 = vadd.f32 %v1578, %v1690
        %v1692 = vpop.f32.mrb[0].mxu0
        %v1693 = vadd.f32 %v1580, %v1692
        %1694 = vmatprep.mubr.f32.mxu0 %v871
        %1695 = vmatmul.mubr.f32.gmra.mrb[0].mxu0 %v869
        %v1696 = vpop.f32.mrb[0].mxu0
        %v1697 = vadd.f32 %v1584, %v1696
        %v1698 = vpop.f32.mrb[0].mxu0
        %v1699 = vadd.f32 %v1586, %v1698
        %1700 = vmatprep.mubr.f32.mxu0 %v875
        %1701 = vmatmul.mubr.f32.gmra.mrb[0].mxu0 %v873
        %v1702 = vpop.f32.mrb[0].mxu0
        %v1703 = vadd.f32 %v1590, %v1702
        %v1704 = vpop.f32.mrb[0].mxu0
        %v1705 = vadd.f32 %v1592, %v1704
        %1706 = vmatprep.mubr.f32.mxu0 %v879
        %1707 = vmatmul.mubr.f32.gmra.mrb[0].mxu0 %v877
        %v1708 = vpop.f32.mrb[0].mxu0
        %v1709 = vadd.f32 %v1596, %v1708
        %v1710 = vpop.f32.mrb[0].mxu0
        %v1711 = vadd.f32 %v1598, %v1710
        %1712 = vmatprep.mubr.f32.mxu0 %v897
        %1713 = vmatmul.mubr.f32.gmra.mrb[0].mxu0 %v896
        %v1714 = vpop.f32.mrb[0].mxu0
        %v1715 = vadd.f32 %v1602, %v1714
        %v1716 = vpop.f32.mrb[0].mxu0
        %v1717 = vadd.f32 %v1604, %v1716
        %1718 = vdwg.mxu0
        %1719 = vmatprep.subr.mxu0 %v1204
        %1720 = vmatpush1.msra.mxu0 %v1203
        %1721 = vmatprep.subr.mxu0 %v1206
        %1722 = vmatpush1.msra.mxu0 %v1205
        %1723 = vmatprep.subr.mxu0 %v1208
        %1724 = vmatpush1.msra.mxu0 %v1207
        %1725 = vmatprep.subr.mxu0 %v1210
        %1726 = vmatpush1.msra.mxu0 %v1209
        %1727 = vmatprep.subr.mxu0 %v1212
        %1728 = vmatpush1.msra.mxu0 %v1211
        %1729 = vmatprep.subr.mxu0 %v1214
        %1730 = vmatpush1.msra.mxu0 %v1213
        %1731 = vmatprep.subr.mxu0 %v1216
        %1732 = vmatpush1.msra.mxu0 %v1215
        %1733 = vmatprep.subr.mxu0 %v1218
        %1734 = vmatpush1.msra.mxu0 %v1217
        %1735 = vmatprep.subr.mxu0 %v1220
        %1736 = vmatpush1.msra.mxu0 %v1219
        %1737 = vmatprep.subr.mxu0 %v1222
        %1738 = vmatpush1.msra.mxu0 %v1221
        %1739 = vmatprep.subr.mxu0 %v1224
        %1740 = vmatpush1.msra.mxu0 %v1223
        %1741 = vmatprep.subr.mxu0 %v1226
        %1742 = vmatpush1.msra.mxu0 %v1225
        %1743 = vmatprep.subr.mxu0 %v1228
        %1744 = vmatpush1.msra.mxu0 %v1227
        %1745 = vmatprep.subr.mxu0 %v1230
        %1746 = vmatpush1.msra.mxu0 %v1229
        %1747 = vmatprep.subr.mxu0 %v1232
        %1748 = vmatpush1.msra.mxu0 %v1231
        %1749 = vmatprep.subr.mxu0 %v1234
        %1750 = vmatpush1.msra.mxu0 %v1233
        %1751 = vmatprep.subr.mxu0 %v1236
        %1752 = vmatpush1.msra.mxu0 %v1235
        %1753 = vmatprep.subr.mxu0 %v1238
        %1754 = vmatpush1.msra.mxu0 %v1237
        %1755 = vmatprep.subr.mxu0 %v1240
        %1756 = vmatpush1.msra.mxu0 %v1239
        %1757 = vmatprep.subr.mxu0 %v1242
        %1758 = vmatpush1.msra.mxu0 %v1241
        %1759 = vmatprep.subr.mxu0 %v1244
        %1760 = vmatpush1.msra.mxu0 %v1243
        %1761 = vmatprep.subr.mxu0 %v1246
        %1762 = vmatpush1.msra.mxu0 %v1245
        %1763 = vmatprep.subr.mxu0 %v1248
        %1764 = vmatpush1.msra.mxu0 %v1247
        %1765 = vmatprep.subr.mxu0 %v1250
        %1766 = vmatpush1.msra.mxu0 %v1249
        %1767 = vmatprep.subr.mxu0 %v1252
        %1768 = vmatpush1.msra.mxu0 %v1251
        %1769 = vmatprep.subr.mxu0 %v1254
        %1770 = vmatpush1.msra.mxu0 %v1253
        %1771 = vmatprep.subr.mxu0 %v1256
        %1772 = vmatpush1.msra.mxu0 %v1255
        %1773 = vmatprep.subr.mxu0 %v1258
        %1774 = vmatpush1.msra.mxu0 %v1257
        %1775 = vmatprep.subr.mxu0 %v1260
        %1776 = vmatpush1.msra.mxu0 %v1259
        %1777 = vmatprep.subr.mxu0 %v1262
        %1778 = vmatpush1.msra.mxu0 %v1261
        %1779 = vmatprep.subr.mxu0 %v1264
        %1780 = vmatpush1.msra.mxu0 %v1263
        %1781 = vmatprep.subr.mxu0 %v1266
        %1782 = vmatpush1.msra.mxu0 %v1265
        %1783 = vmatprep.mubr.f32.mxu0 %v904
        %1784 = vmatmul.mubr.f32.gmra.mrb[0].mxu0 %v901
        %v1785 = vpop.f32.mrb[0].mxu0
        %v1786 = vadd.f32 %v1673, %v1785
        %v1787 = vpop.f32.mrb[0].mxu0
        %v1788 = vadd.f32 %v1675, %v1787
        %1789 = vmatprep.mubr.f32.mxu0 %v908
        %1790 = vmatmul.mubr.f32.gmra.mrb[0].mxu0 %v906
        %v1791 = vpop.f32.mrb[0].mxu0
        %v1792 = vadd.f32 %v1679, %v1791
        %v1793 = vpop.f32.mrb[0].mxu0
        %v1794 = vadd.f32 %v1681, %v1793
        %1795 = vmatprep.mubr.f32.mxu0 %v912
        %1796 = vmatmul.mubr.f32.gmra.mrb[0].mxu0 %v910
        %v1797 = vpop.f32.mrb[0].mxu0
        %v1798 = vadd.f32 %v1685, %v1797
        %v1799 = vpop.f32.mrb[0].mxu0
        %v1800 = vadd.f32 %v1687, %v1799
        %1801 = vmatprep.mubr.f32.mxu0 %v916
        %1802 = vmatmul.mubr.f32.gmra.mrb[0].mxu0 %v914
        %v1803 = vpop.f32.mrb[0].mxu0
        %v1804 = vadd.f32 %v1691, %v1803
        %v1805 = vpop.f32.mrb[0].mxu0
        %v1806 = vadd.f32 %v1693, %v1805
        %1807 = vmatprep.mubr.f32.mxu0 %v920
        %1808 = vmatmul.mubr.f32.gmra.mrb[0].mxu0 %v918
        %v1809 = vpop.f32.mrb[0].mxu0
        %v1810 = vadd.f32 %v1697, %v1809
        %v1811 = vpop.f32.mrb[0].mxu0
        %v1812 = vadd.f32 %v1699, %v1811
        %1813 = vmatprep.mubr.f32.mxu0 %v924
        %1814 = vmatmul.mubr.f32.gmra.mrb[0].mxu0 %v922
        %v1815 = vpop.f32.mrb[0].mxu0
        %v1816 = vadd.f32 %v1703, %v1815
        %v1817 = vpop.f32.mrb[0].mxu0
        %v1818 = vadd.f32 %v1705, %v1817
        %1819 = vmatprep.mubr.f32.mxu0 %v928
        %1820 = vmatmul.mubr.f32.gmra.mrb[0].mxu0 %v926
        %v1821 = vpop.f32.mrb[0].mxu0
        %v1822 = vadd.f32 %v1709, %v1821
        %v1823 = vpop.f32.mrb[0].mxu0
        %v1824 = vadd.f32 %v1711, %v1823
        %1825 = vmatprep.mubr.f32.mxu0 %v946
        %1826 = vmatmul.mubr.f32.gmra.mrb[0].mxu0 %v945
        %v1827 = vpop.f32.mrb[0].mxu0
        %v1828 = vadd.f32 %v1715, %v1827
        %v1829 = vpop.f32.mrb[0].mxu0
        %v1830 = vadd.f32 %v1717, %v1829
        %1831 = vdwg.mxu0
        %v1832 = vld [vmem:[#allocation8] ss:$4 sm:$0x3]
        %v1834 = vlaneseq
        %v1835 = vshrl.u32 %v1834, 7
        %v1836 = vsub.s32 0, %v1835
        %v1837 = vrot.slane %v1832, %v1836
        %v1838 = vlaneseq
        %v1839 = vshrl.u32 %v1838, 7
        %v1840 = vsub.s32 1, %v1839
        %v1841 = vrot.slane %v1832, %v1840
        %v1844 = vmul.f32 %v1786, %v1837
        %v1845 = vmul.f32 %v1788, %v1841
        %v1846 = vmul.f32 %v1792, %v1837
        %v1847 = vmul.f32 %v1794, %v1841
        %v1848 = vmul.f32 %v1798, %v1837
        %v1849 = vmul.f32 %v1800, %v1841
        %v1850 = vmul.f32 %v1804, %v1837
        %v1851 = vmul.f32 %v1806, %v1841
        %v1852 = vmul.f32 %v1810, %v1837
        %v1853 = vmul.f32 %v1812, %v1841
        %v1854 = vmul.f32 %v1816, %v1837
        %v1855 = vmul.f32 %v1818, %v1841
        %v1856 = vmul.f32 %v1822, %v1837
        %v1857 = vmul.f32 %v1824, %v1841
        %v1858 = vmul.f32 %v1828, %v1837
        %v1859 = vmul.f32 %v1830, %v1841
        %v1860 = vld [vmem:[#allocation9] ss:$4 sm:$0x3]
        %v1862 = vlaneseq
        %v1863 = vshrl.u32 %v1862, 7
        %v1864 = vsub.s32 0, %v1863
        %v1865 = vrot.slane %v1860, %v1864
        %v1866 = vlaneseq
        %v1867 = vshrl.u32 %v1866, 7
        %v1868 = vsub.s32 1, %v1867
        %v1869 = vrot.slane %v1860, %v1868
        %v1872 = vadd.f32 %v1844, %v1865
        %v1873 = vadd.f32 %v1845, %v1869
        %v1874 = vadd.f32 %v1846, %v1865
        %v1875 = vadd.f32 %v1847, %v1869
        %v1876 = vadd.f32 %v1848, %v1865
        %v1877 = vadd.f32 %v1849, %v1869
        %v1878 = vadd.f32 %v1850, %v1865
        %v1879 = vadd.f32 %v1851, %v1869
        %v1880 = vadd.f32 %v1852, %v1865
        %v1881 = vadd.f32 %v1853, %v1869
        %v1882 = vadd.f32 %v1854, %v1865
        %v1883 = vadd.f32 %v1855, %v1869
        %v1884 = vadd.f32 %v1856, %v1865
        %v1885 = vadd.f32 %v1857, %v1869
        %v1886 = vadd.f32 %v1858, %v1865
        %v1887 = vadd.f32 %v1859, %v1869
        %v1888 = vmax.f32 %v1872, 0.0
        %v1889 = vmax.f32 %v1873, 0.0
        %v1890 = vmax.f32 %v1874, 0.0
        %v1891 = vmax.f32 %v1875, 0.0
        %v1892 = vmax.f32 %v1876, 0.0
        %v1893 = vmax.f32 %v1877, 0.0
        %v1894 = vmax.f32 %v1878, 0.0
        %v1895 = vmax.f32 %v1879, 0.0
        %v1896 = vmax.f32 %v1880, 0.0
        %v1897 = vmax.f32 %v1881, 0.0
        %v1898 = vmax.f32 %v1882, 0.0
        %v1899 = vmax.f32 %v1883, 0.0
        %v1900 = vmax.f32 %v1884, 0.0
        %v1901 = vmax.f32 %v1885, 0.0
        %v1902 = vmax.f32 %v1886, 0.0
        %v1903 = vmax.f32 %v1887, 0.0
        %v1904 = vsel %vm711, %v1888, 0.0
        %v1905 = vsel %vm711, %v1889, 0.0
        %v1906 = vsel %vm712, %v1890, 0.0
        %v1907 = vsel %vm712, %v1891, 0.0
        %v1908 = vsel %vm713, %v1892, 0.0
        %v1909 = vsel %vm713, %v1893, 0.0
        %v1910 = vsel %vm714, %v1894, 0.0
        %v1911 = vsel %vm714, %v1895, 0.0
        %v1912 = vsel %vm715, %v1896, 0.0
        %v1913 = vsel %vm715, %v1897, 0.0
        %v1914 = vsel %vm716, %v1898, 0.0
        %v1915 = vsel %vm716, %v1899, 0.0
        %v1916 = vsel %vm717, %v1900, 0.0
        %v1917 = vsel %vm717, %v1901, 0.0
        %v1918 = vsel %vm718, %v1902, 0.0
        %v1919 = vsel %vm718, %v1903, 0.0
        %v1936 = vrot.slane %v1904, 6
        %v1937 = vrot.slane %v1905, 6
        %v1938 = vrot.slane %v1906, 6
        %v1939 = vsel %vm751, %v1936, %v1938
        %v1940 = vrot.slane %v1907, 6
        %v1941 = vsel %vm751, %v1937, %v1940
        %v1942 = vrot.slane %v1908, 6
        %v1943 = vsel %vm751, %v1938, %v1942
        %v1944 = vrot.slane %v1909, 6
        %v1945 = vsel %vm751, %v1940, %v1944
        %v1946 = vrot.slane %v1910, 6
        %v1947 = vsel %vm751, %v1942, %v1946
        %v1948 = vrot.slane %v1911, 6
        %v1949 = vsel %vm751, %v1944, %v1948
        %v1950 = vrot.slane %v1912, 6
        %v1951 = vsel %vm751, %v1946, %v1950
        %v1952 = vrot.slane %v1913, 6
        %v1953 = vsel %vm751, %v1948, %v1952
        %v1954 = vrot.slane %v1914, 6
        %v1955 = vsel %vm751, %v1950, %v1954
        %v1956 = vrot.slane %v1915, 6
        %v1957 = vsel %vm751, %v1952, %v1956
        %v1958 = vrot.slane %v1916, 6
        %v1959 = vsel %vm751, %v1954, %v1958
        %v1960 = vrot.slane %v1917, 6
        %v1961 = vsel %vm751, %v1956, %v1960
        %v1962 = vrot.slane %v1918, 6
        %v1963 = vsel %vm751, %v1958, %v1962
        %v1964 = vrot.slane %v1919, 6
        %v1965 = vsel %vm751, %v1960, %v1964
        %v1982 = vsel %vm751, 0.0, %v1936
        %v1983 = vsel %vm751, 0.0, %v1937
        %v1984 = vrot.slane %v1904, 7
        %v1985 = vrot.slane %v1905, 7
        %v1986 = vrot.slane %v1906, 7
        %v1987 = vsel %vm800, %v1984, %v1986
        %v1988 = vrot.slane %v1907, 7
        %v1989 = vsel %vm800, %v1985, %v1988
        %v1990 = vrot.slane %v1908, 7
        %v1991 = vsel %vm800, %v1986, %v1990
        %v1992 = vrot.slane %v1909, 7
        %v1993 = vsel %vm800, %v1988, %v1992
        %v1994 = vrot.slane %v1910, 7
        %v1995 = vsel %vm800, %v1990, %v1994
        %v1996 = vrot.slane %v1911, 7
        %v1997 = vsel %vm800, %v1992, %v1996
        %v1998 = vrot.slane %v1912, 7
        %v1999 = vsel %vm800, %v1994, %v1998
        %v2000 = vrot.slane %v1913, 7
        %v2001 = vsel %vm800, %v1996, %v2000
        %v2002 = vrot.slane %v1914, 7
        %v2003 = vsel %vm800, %v1998, %v2002
        %v2004 = vrot.slane %v1915, 7
        %v2005 = vsel %vm800, %v2000, %v2004
        %v2006 = vrot.slane %v1916, 7
        %v2007 = vsel %vm800, %v2002, %v2006
        %v2008 = vrot.slane %v1917, 7
        %v2009 = vsel %vm800, %v2004, %v2008
        %v2010 = vrot.slane %v1918, 7
        %v2011 = vsel %vm800, %v2006, %v2010
        %v2012 = vrot.slane %v1919, 7
        %v2013 = vsel %vm800, %v2008, %v2012
        %v2030 = vsel %vm800, 0.0, %v1984
        %v2031 = vsel %vm800, 0.0, %v1985
        %v2032 = vrot.slane %v1904, 1
        %v2033 = vrot.slane %v1906, 1
        %v2034 = vsel %vm849, %v2032, %v2033
        %v2035 = vrot.slane %v1905, 1
        %v2036 = vrot.slane %v1907, 1
        %v2037 = vsel %vm849, %v2035, %v2036
        %v2038 = vrot.slane %v1908, 1
        %v2039 = vsel %vm849, %v2033, %v2038
        %v2040 = vrot.slane %v1909, 1
        %v2041 = vsel %vm849, %v2036, %v2040
        %v2042 = vrot.slane %v1910, 1
        %v2043 = vsel %vm849, %v2038, %v2042
        %v2044 = vrot.slane %v1911, 1
        %v2045 = vsel %vm849, %v2040, %v2044
        %v2046 = vrot.slane %v1912, 1
        %v2047 = vsel %vm849, %v2042, %v2046
        %v2048 = vrot.slane %v1913, 1
        %v2049 = vsel %vm849, %v2044, %v2048
        %v2050 = vrot.slane %v1914, 1
        %v2051 = vsel %vm849, %v2046, %v2050
        %v2052 = vrot.slane %v1915, 1
        %v2053 = vsel %vm849, %v2048, %v2052
        %v2054 = vrot.slane %v1916, 1
        %v2055 = vsel %vm849, %v2050, %v2054
        %v2056 = vrot.slane %v1917, 1
        %v2057 = vsel %vm849, %v2052, %v2056
        %v2058 = vrot.slane %v1918, 1
        %v2059 = vsel %vm849, %v2054, %v2058
        %v2060 = vrot.slane %v1919, 1
        %v2061 = vsel %vm849, %v2056, %v2060
        %v2078 = vsel %vm849, %v2058, 0.0
        %v2079 = vsel %vm849, %v2060, 0.0
        %v2080 = vrot.slane %v1904, 2
        %v2081 = vrot.slane %v1906, 2
        %v2082 = vsel %vm898, %v2080, %v2081
        %v2083 = vrot.slane %v1905, 2
        %v2084 = vrot.slane %v1907, 2
        %v2085 = vsel %vm898, %v2083, %v2084
        %v2086 = vrot.slane %v1908, 2
        %v2087 = vsel %vm898, %v2081, %v2086
        %v2088 = vrot.slane %v1909, 2
        %v2089 = vsel %vm898, %v2084, %v2088
        %v2090 = vrot.slane %v1910, 2
        %v2091 = vsel %vm898, %v2086, %v2090
        %v2092 = vrot.slane %v1911, 2
        %v2093 = vsel %vm898, %v2088, %v2092
        %v2094 = vrot.slane %v1912, 2
        %v2095 = vsel %vm898, %v2090, %v2094
        %v2096 = vrot.slane %v1913, 2
        %v2097 = vsel %vm898, %v2092, %v2096
        %v2098 = vrot.slane %v1914, 2
        %v2099 = vsel %vm898, %v2094, %v2098
        %v2100 = vrot.slane %v1915, 2
        %v2101 = vsel %vm898, %v2096, %v2100
        %v2102 = vrot.slane %v1916, 2
        %v2103 = vsel %vm898, %v2098, %v2102
        %v2104 = vrot.slane %v1917, 2
        %v2105 = vsel %vm898, %v2100, %v2104
        %v2106 = vrot.slane %v1918, 2
        %v2107 = vsel %vm898, %v2102, %v2106
        %v2108 = vrot.slane %v1919, 2
        %v2109 = vsel %vm898, %v2104, %v2108
        %v2126 = vsel %vm898, %v2106, 0.0
        %v2127 = vsel %vm898, %v2108, 0.0
        %s2128 = scalar_lea.vmem [#allocation6], 2560
        %v2129 = vld [vmem:[%s2128] sm:$0xff]
        %v2130 = vld [vmem:[%s2128 + $0x8] sm:$0xff]
        %v2131 = vld [vmem:[%s2128 + $0x10] sm:$0xff]
        %v2132 = vld [vmem:[%s2128 + $0x18] sm:$0xff]
        %v2133 = vld [vmem:[%s2128 + $0x20] sm:$0xff]
        %v2134 = vld [vmem:[%s2128 + $0x28] sm:$0xff]
        %v2135 = vld [vmem:[%s2128 + $0x30] sm:$0xff]
        %v2136 = vld [vmem:[%s2128 + $0x38] sm:$0xff]
        %v2137 = vld [vmem:[%s2128 + $0x40] sm:$0xff]
        %v2138 = vld [vmem:[%s2128 + $0x48] sm:$0xff]
        %v2139 = vld [vmem:[%s2128 + $0x50] sm:$0xff]
        %v2140 = vld [vmem:[%s2128 + $0x58] sm:$0xff]
        %v2141 = vld [vmem:[%s2128 + $0x60] sm:$0xff]
        %v2142 = vld [vmem:[%s2128 + $0x68] sm:$0xff]
        %v2143 = vld [vmem:[%s2128 + $0x70] sm:$0xff]
        %v2144 = vld [vmem:[%s2128 + $0x78] sm:$0xff]
        %v2145 = vld [vmem:[%s2128 + $0x80] sm:$0xff]
        %v2146 = vld [vmem:[%s2128 + $0x88] sm:$0xff]
        %v2147 = vld [vmem:[%s2128 + $0x90] sm:$0xff]
        %v2148 = vld [vmem:[%s2128 + $0x98] sm:$0xff]
        %v2149 = vld [vmem:[%s2128 + $0xa0] sm:$0xff]
        %v2150 = vld [vmem:[%s2128 + $0xa8] sm:$0xff]
        %v2151 = vld [vmem:[%s2128 + $0xb0] sm:$0xff]
        %v2152 = vld [vmem:[%s2128 + $0xb8] sm:$0xff]
        %v2153 = vld [vmem:[%s2128 + $0xc0] sm:$0xff]
        %v2154 = vld [vmem:[%s2128 + $0xc8] sm:$0xff]
        %v2155 = vld [vmem:[%s2128 + $0xd0] sm:$0xff]
        %v2156 = vld [vmem:[%s2128 + $0xd8] sm:$0xff]
        %v2157 = vld [vmem:[%s2128 + $0xe0] sm:$0xff]
        %v2158 = vld [vmem:[%s2128 + $0xe8] sm:$0xff]
        %v2159 = vld [vmem:[%s2128 + $0xf0] sm:$0xff]
        %v2160 = vld [vmem:[%s2128 + $0xf8] sm:$0xff]
        %v2161 = vld [vmem:[%s2128 + $0x100] sm:$0xff]
        %v2162 = vld [vmem:[%s2128 + $0x108] sm:$0xff]
        %v2163 = vld [vmem:[%s2128 + $0x110] sm:$0xff]
        %v2164 = vld [vmem:[%s2128 + $0x118] sm:$0xff]
        %v2165 = vld [vmem:[%s2128 + $0x120] sm:$0xff]
        %v2166 = vld [vmem:[%s2128 + $0x128] sm:$0xff]
        %v2167 = vld [vmem:[%s2128 + $0x130] sm:$0xff]
        %v2168 = vld [vmem:[%s2128 + $0x138] sm:$0xff]
        %v2169 = vld [vmem:[%s2128 + $0x140] sm:$0xff]
        %v2170 = vld [vmem:[%s2128 + $0x148] sm:$0xff]
        %v2171 = vld [vmem:[%s2128 + $0x150] sm:$0xff]
        %v2172 = vld [vmem:[%s2128 + $0x158] sm:$0xff]
        %v2173 = vld [vmem:[%s2128 + $0x160] sm:$0xff]
        %v2174 = vld [vmem:[%s2128 + $0x168] sm:$0xff]
        %v2175 = vld [vmem:[%s2128 + $0x170] sm:$0xff]
        %v2176 = vld [vmem:[%s2128 + $0x178] sm:$0xff]
        %v2177 = vld [vmem:[%s2128 + $0x180] sm:$0xff]
        %v2178 = vld [vmem:[%s2128 + $0x188] sm:$0xff]
        %v2179 = vld [vmem:[%s2128 + $0x190] sm:$0xff]
        %v2180 = vld [vmem:[%s2128 + $0x198] sm:$0xff]
        %v2181 = vld [vmem:[%s2128 + $0x1a0] sm:$0xff]
        %v2182 = vld [vmem:[%s2128 + $0x1a8] sm:$0xff]
        %v2183 = vld [vmem:[%s2128 + $0x1b0] sm:$0xff]
        %v2184 = vld [vmem:[%s2128 + $0x1b8] sm:$0xff]
        %v2185 = vld [vmem:[%s2128 + $0x1c0] sm:$0xff]
        %v2186 = vld [vmem:[%s2128 + $0x1c8] sm:$0xff]
        %v2187 = vld [vmem:[%s2128 + $0x1d0] sm:$0xff]
        %v2188 = vld [vmem:[%s2128 + $0x1d8] sm:$0xff]
        %v2189 = vld [vmem:[%s2128 + $0x1e0] sm:$0xff]
        %v2190 = vld [vmem:[%s2128 + $0x1e8] sm:$0xff]
        %v2191 = vld [vmem:[%s2128 + $0x1f0] sm:$0xff]
        %v2192 = vld [vmem:[%s2128 + $0x1f8] sm:$0xff]
        %v2193 = vld [vmem:[%s2128 + $0x200] sm:$0xff]
        %v2194 = vld [vmem:[%s2128 + $0x208] sm:$0xff]
        %v2195 = vld [vmem:[%s2128 + $0x210] sm:$0xff]
        %v2196 = vld [vmem:[%s2128 + $0x218] sm:$0xff]
        %v2197 = vld [vmem:[%s2128 + $0x220] sm:$0xff]
        %v2198 = vld [vmem:[%s2128 + $0x228] sm:$0xff]
        %v2199 = vld [vmem:[%s2128 + $0x230] sm:$0xff]
        %v2200 = vld [vmem:[%s2128 + $0x238] sm:$0xff]
        %v2201 = vld [vmem:[%s2128 + $0x240] sm:$0xff]
        %v2202 = vld [vmem:[%s2128 + $0x248] sm:$0xff]
        %v2203 = vld [vmem:[%s2128 + $0x250] sm:$0xff]
        %v2204 = vld [vmem:[%s2128 + $0x258] sm:$0xff]
        %v2205 = vld [vmem:[%s2128 + $0x260] sm:$0xff]
        %v2206 = vld [vmem:[%s2128 + $0x268] sm:$0xff]
        %v2207 = vld [vmem:[%s2128 + $0x270] sm:$0xff]
        %v2208 = vld [vmem:[%s2128 + $0x278] sm:$0xff]
        %v2209 = vld [vmem:[%s2128 + $0x280] sm:$0xff]
        %v2210 = vld [vmem:[%s2128 + $0x288] sm:$0xff]
        %v2211 = vld [vmem:[%s2128 + $0x290] sm:$0xff]
        %v2212 = vld [vmem:[%s2128 + $0x298] sm:$0xff]
        %v2213 = vld [vmem:[%s2128 + $0x2a0] sm:$0xff]
        %v2214 = vld [vmem:[%s2128 + $0x2a8] sm:$0xff]
        %v2215 = vld [vmem:[%s2128 + $0x2b0] sm:$0xff]
        %v2216 = vld [vmem:[%s2128 + $0x2b8] sm:$0xff]
        %v2217 = vld [vmem:[%s2128 + $0x2c0] sm:$0xff]
        %v2218 = vld [vmem:[%s2128 + $0x2c8] sm:$0xff]
        %v2219 = vld [vmem:[%s2128 + $0x2d0] sm:$0xff]
        %v2220 = vld [vmem:[%s2128 + $0x2d8] sm:$0xff]
        %v2221 = vld [vmem:[%s2128 + $0x2e0] sm:$0xff]
        %v2222 = vld [vmem:[%s2128 + $0x2e8] sm:$0xff]
        %v2223 = vld [vmem:[%s2128 + $0x2f0] sm:$0xff]
        %v2224 = vld [vmem:[%s2128 + $0x2f8] sm:$0xff]
        %v2225 = vld [vmem:[%s2128 + $0x300] sm:$0xff]
        %v2226 = vld [vmem:[%s2128 + $0x308] sm:$0xff]
        %v2227 = vld [vmem:[%s2128 + $0x310] sm:$0xff]
        %v2228 = vld [vmem:[%s2128 + $0x318] sm:$0xff]
        %v2229 = vld [vmem:[%s2128 + $0x320] sm:$0xff]
        %v2230 = vld [vmem:[%s2128 + $0x328] sm:$0xff]
        %v2231 = vld [vmem:[%s2128 + $0x330] sm:$0xff]
        %v2232 = vld [vmem:[%s2128 + $0x338] sm:$0xff]
        %v2233 = vld [vmem:[%s2128 + $0x340] sm:$0xff]
        %v2234 = vld [vmem:[%s2128 + $0x348] sm:$0xff]
        %v2235 = vld [vmem:[%s2128 + $0x350] sm:$0xff]
        %v2236 = vld [vmem:[%s2128 + $0x358] sm:$0xff]
        %v2237 = vld [vmem:[%s2128 + $0x360] sm:$0xff]
        %v2238 = vld [vmem:[%s2128 + $0x368] sm:$0xff]
        %v2239 = vld [vmem:[%s2128 + $0x370] sm:$0xff]
        %v2240 = vld [vmem:[%s2128 + $0x378] sm:$0xff]
        %v2241 = vld [vmem:[%s2128 + $0x380] sm:$0xff]
        %v2242 = vld [vmem:[%s2128 + $0x388] sm:$0xff]
        %v2243 = vld [vmem:[%s2128 + $0x390] sm:$0xff]
        %v2244 = vld [vmem:[%s2128 + $0x398] sm:$0xff]
        %v2245 = vld [vmem:[%s2128 + $0x3a0] sm:$0xff]
        %v2246 = vld [vmem:[%s2128 + $0x3a8] sm:$0xff]
        %v2247 = vld [vmem:[%s2128 + $0x3b0] sm:$0xff]
        %v2248 = vld [vmem:[%s2128 + $0x3b8] sm:$0xff]
        %v2249 = vld [vmem:[%s2128 + $0x3c0] sm:$0xff]
        %v2250 = vld [vmem:[%s2128 + $0x3c8] sm:$0xff]
        %v2251 = vld [vmem:[%s2128 + $0x3d0] sm:$0xff]
        %v2252 = vld [vmem:[%s2128 + $0x3d8] sm:$0xff]
        %v2253 = vld [vmem:[%s2128 + $0x3e0] sm:$0xff]
        %v2254 = vld [vmem:[%s2128 + $0x3e8] sm:$0xff]
        %v2255 = vld [vmem:[%s2128 + $0x3f0] sm:$0xff]
        %v2256 = vld [vmem:[%s2128 + $0x3f8] sm:$0xff]
        %v2257 = vld [vmem:[%s2128 + $0x400] sm:$0xff]
        %v2258 = vld [vmem:[%s2128 + $0x408] sm:$0xff]
        %v2259 = vld [vmem:[%s2128 + $0x410] sm:$0xff]
        %v2260 = vld [vmem:[%s2128 + $0x418] sm:$0xff]
        %v2261 = vld [vmem:[%s2128 + $0x420] sm:$0xff]
        %v2262 = vld [vmem:[%s2128 + $0x428] sm:$0xff]
        %v2263 = vld [vmem:[%s2128 + $0x430] sm:$0xff]
        %v2264 = vld [vmem:[%s2128 + $0x438] sm:$0xff]
        %v2265 = vld [vmem:[%s2128 + $0x440] sm:$0xff]
        %v2266 = vld [vmem:[%s2128 + $0x448] sm:$0xff]
        %v2267 = vld [vmem:[%s2128 + $0x450] sm:$0xff]
        %v2268 = vld [vmem:[%s2128 + $0x458] sm:$0xff]
        %v2269 = vld [vmem:[%s2128 + $0x460] sm:$0xff]
        %v2270 = vld [vmem:[%s2128 + $0x468] sm:$0xff]
        %v2271 = vld [vmem:[%s2128 + $0x470] sm:$0xff]
        %v2272 = vld [vmem:[%s2128 + $0x478] sm:$0xff]
        %v2273 = vld [vmem:[%s2128 + $0x480] sm:$0xff]
        %v2274 = vld [vmem:[%s2128 + $0x488] sm:$0xff]
        %v2275 = vld [vmem:[%s2128 + $0x490] sm:$0xff]
        %v2276 = vld [vmem:[%s2128 + $0x498] sm:$0xff]
        %v2277 = vld [vmem:[%s2128 + $0x4a0] sm:$0xff]
        %v2278 = vld [vmem:[%s2128 + $0x4a8] sm:$0xff]
        %v2279 = vld [vmem:[%s2128 + $0x4b0] sm:$0xff]
        %v2280 = vld [vmem:[%s2128 + $0x4b8] sm:$0xff]
        %v2281 = vld [vmem:[%s2128 + $0x4c0] sm:$0xff]
        %v2282 = vld [vmem:[%s2128 + $0x4c8] sm:$0xff]
        %v2283 = vld [vmem:[%s2128 + $0x4d0] sm:$0xff]
        %v2284 = vld [vmem:[%s2128 + $0x4d8] sm:$0xff]
        %v2285 = vld [vmem:[%s2128 + $0x4e0] sm:$0xff]
        %v2286 = vld [vmem:[%s2128 + $0x4e8] sm:$0xff]
        %v2287 = vld [vmem:[%s2128 + $0x4f0] sm:$0xff]
        %v2288 = vld [vmem:[%s2128 + $0x4f8] sm:$0xff]
        %v2289 = vld [vmem:[%s2128 + $0x500] sm:$0xff]
        %v2290 = vld [vmem:[%s2128 + $0x508] sm:$0xff]
        %v2291 = vld [vmem:[%s2128 + $0x510] sm:$0xff]
        %v2292 = vld [vmem:[%s2128 + $0x518] sm:$0xff]
        %v2293 = vld [vmem:[%s2128 + $0x520] sm:$0xff]
        %v2294 = vld [vmem:[%s2128 + $0x528] sm:$0xff]
        %v2295 = vld [vmem:[%s2128 + $0x530] sm:$0xff]
        %v2296 = vld [vmem:[%s2128 + $0x538] sm:$0xff]
        %v2297 = vld [vmem:[%s2128 + $0x540] sm:$0xff]
        %v2298 = vld [vmem:[%s2128 + $0x548] sm:$0xff]
        %v2299 = vld [vmem:[%s2128 + $0x550] sm:$0xff]
        %v2300 = vld [vmem:[%s2128 + $0x558] sm:$0xff]
        %v2301 = vld [vmem:[%s2128 + $0x560] sm:$0xff]
        %v2302 = vld [vmem:[%s2128 + $0x568] sm:$0xff]
        %v2303 = vld [vmem:[%s2128 + $0x570] sm:$0xff]
        %v2304 = vld [vmem:[%s2128 + $0x578] sm:$0xff]
        %v2305 = vld [vmem:[%s2128 + $0x580] sm:$0xff]
        %v2306 = vld [vmem:[%s2128 + $0x588] sm:$0xff]
        %v2307 = vld [vmem:[%s2128 + $0x590] sm:$0xff]
        %v2308 = vld [vmem:[%s2128 + $0x598] sm:$0xff]
        %v2309 = vld [vmem:[%s2128 + $0x5a0] sm:$0xff]
        %v2310 = vld [vmem:[%s2128 + $0x5a8] sm:$0xff]
        %v2311 = vld [vmem:[%s2128 + $0x5b0] sm:$0xff]
        %v2312 = vld [vmem:[%s2128 + $0x5b8] sm:$0xff]
        %v2313 = vld [vmem:[%s2128 + $0x5c0] sm:$0xff]
        %v2314 = vld [vmem:[%s2128 + $0x5c8] sm:$0xff]
        %v2315 = vld [vmem:[%s2128 + $0x5d0] sm:$0xff]
        %v2316 = vld [vmem:[%s2128 + $0x5d8] sm:$0xff]
        %v2317 = vld [vmem:[%s2128 + $0x5e0] sm:$0xff]
        %v2318 = vld [vmem:[%s2128 + $0x5e8] sm:$0xff]
        %v2319 = vld [vmem:[%s2128 + $0x5f0] sm:$0xff]
        %v2320 = vld [vmem:[%s2128 + $0x5f8] sm:$0xff]
        %v2321 = vld [vmem:[%s2128 + $0x600] sm:$0xff]
        %v2322 = vld [vmem:[%s2128 + $0x608] sm:$0xff]
        %v2323 = vld [vmem:[%s2128 + $0x610] sm:$0xff]
        %v2324 = vld [vmem:[%s2128 + $0x618] sm:$0xff]
        %v2325 = vld [vmem:[%s2128 + $0x620] sm:$0xff]
        %v2326 = vld [vmem:[%s2128 + $0x628] sm:$0xff]
        %v2327 = vld [vmem:[%s2128 + $0x630] sm:$0xff]
        %v2328 = vld [vmem:[%s2128 + $0x638] sm:$0xff]
        %v2329 = vld [vmem:[%s2128 + $0x640] sm:$0xff]
        %v2330 = vld [vmem:[%s2128 + $0x648] sm:$0xff]
        %v2331 = vld [vmem:[%s2128 + $0x650] sm:$0xff]
        %v2332 = vld [vmem:[%s2128 + $0x658] sm:$0xff]
        %v2333 = vld [vmem:[%s2128 + $0x660] sm:$0xff]
        %v2334 = vld [vmem:[%s2128 + $0x668] sm:$0xff]
        %v2335 = vld [vmem:[%s2128 + $0x670] sm:$0xff]
        %v2336 = vld [vmem:[%s2128 + $0x678] sm:$0xff]
        %v2337 = vld [vmem:[%s2128 + $0x680] sm:$0xff]
        %v2338 = vld [vmem:[%s2128 + $0x688] sm:$0xff]
        %v2339 = vld [vmem:[%s2128 + $0x690] sm:$0xff]
        %v2340 = vld [vmem:[%s2128 + $0x698] sm:$0xff]
        %v2341 = vld [vmem:[%s2128 + $0x6a0] sm:$0xff]
        %v2342 = vld [vmem:[%s2128 + $0x6a8] sm:$0xff]
        %v2343 = vld [vmem:[%s2128 + $0x6b0] sm:$0xff]
        %v2344 = vld [vmem:[%s2128 + $0x6b8] sm:$0xff]
        %v2345 = vld [vmem:[%s2128 + $0x6c0] sm:$0xff]
        %v2346 = vld [vmem:[%s2128 + $0x6c8] sm:$0xff]
        %v2347 = vld [vmem:[%s2128 + $0x6d0] sm:$0xff]
        %v2348 = vld [vmem:[%s2128 + $0x6d8] sm:$0xff]
        %v2349 = vld [vmem:[%s2128 + $0x6e0] sm:$0xff]
        %v2350 = vld [vmem:[%s2128 + $0x6e8] sm:$0xff]
        %v2351 = vld [vmem:[%s2128 + $0x6f0] sm:$0xff]
        %v2352 = vld [vmem:[%s2128 + $0x6f8] sm:$0xff]
        %v2353 = vld [vmem:[%s2128 + $0x700] sm:$0xff]
        %v2354 = vld [vmem:[%s2128 + $0x708] sm:$0xff]
        %v2355 = vld [vmem:[%s2128 + $0x710] sm:$0xff]
        %v2356 = vld [vmem:[%s2128 + $0x718] sm:$0xff]
        %v2357 = vld [vmem:[%s2128 + $0x720] sm:$0xff]
        %v2358 = vld [vmem:[%s2128 + $0x728] sm:$0xff]
        %v2359 = vld [vmem:[%s2128 + $0x730] sm:$0xff]
        %v2360 = vld [vmem:[%s2128 + $0x738] sm:$0xff]
        %v2361 = vld [vmem:[%s2128 + $0x740] sm:$0xff]
        %v2362 = vld [vmem:[%s2128 + $0x748] sm:$0xff]
        %v2363 = vld [vmem:[%s2128 + $0x750] sm:$0xff]
        %v2364 = vld [vmem:[%s2128 + $0x758] sm:$0xff]
        %v2365 = vld [vmem:[%s2128 + $0x760] sm:$0xff]
        %v2366 = vld [vmem:[%s2128 + $0x768] sm:$0xff]
        %v2367 = vld [vmem:[%s2128 + $0x770] sm:$0xff]
        %v2368 = vld [vmem:[%s2128 + $0x778] sm:$0xff]
        %v2369 = vld [vmem:[%s2128 + $0x780] sm:$0xff]
        %v2370 = vld [vmem:[%s2128 + $0x788] sm:$0xff]
        %v2371 = vld [vmem:[%s2128 + $0x790] sm:$0xff]
        %v2372 = vld [vmem:[%s2128 + $0x798] sm:$0xff]
        %v2373 = vld [vmem:[%s2128 + $0x7a0] sm:$0xff]
        %v2374 = vld [vmem:[%s2128 + $0x7a8] sm:$0xff]
        %v2375 = vld [vmem:[%s2128 + $0x7b0] sm:$0xff]
        %v2376 = vld [vmem:[%s2128 + $0x7b8] sm:$0xff]
        %v2377 = vld [vmem:[%s2128 + $0x7c0] sm:$0xff]
        %v2378 = vld [vmem:[%s2128 + $0x7c8] sm:$0xff]
        %v2379 = vld [vmem:[%s2128 + $0x7d0] sm:$0xff]
        %v2380 = vld [vmem:[%s2128 + $0x7d8] sm:$0xff]
        %v2381 = vld [vmem:[%s2128 + $0x7e0] sm:$0xff]
        %v2382 = vld [vmem:[%s2128 + $0x7e8] sm:$0xff]
        %v2383 = vld [vmem:[%s2128 + $0x7f0] sm:$0xff]
        %v2384 = vld [vmem:[%s2128 + $0x7f8] sm:$0xff]
        %v2385 = vld [vmem:[%s2128 + $0x800] sm:$0xff]
        %v2386 = vld [vmem:[%s2128 + $0x808] sm:$0xff]
        %v2387 = vld [vmem:[%s2128 + $0x810] sm:$0xff]
        %v2388 = vld [vmem:[%s2128 + $0x818] sm:$0xff]
        %v2389 = vld [vmem:[%s2128 + $0x820] sm:$0xff]
        %v2390 = vld [vmem:[%s2128 + $0x828] sm:$0xff]
        %v2391 = vld [vmem:[%s2128 + $0x830] sm:$0xff]
        %v2392 = vld [vmem:[%s2128 + $0x838] sm:$0xff]
        %v2393 = vld [vmem:[%s2128 + $0x840] sm:$0xff]
        %v2394 = vld [vmem:[%s2128 + $0x848] sm:$0xff]
        %v2395 = vld [vmem:[%s2128 + $0x850] sm:$0xff]
        %v2396 = vld [vmem:[%s2128 + $0x858] sm:$0xff]
        %v2397 = vld [vmem:[%s2128 + $0x860] sm:$0xff]
        %v2398 = vld [vmem:[%s2128 + $0x868] sm:$0xff]
        %v2399 = vld [vmem:[%s2128 + $0x870] sm:$0xff]
        %v2400 = vld [vmem:[%s2128 + $0x878] sm:$0xff]
        %v2401 = vld [vmem:[%s2128 + $0x880] sm:$0xff]
        %v2402 = vld [vmem:[%s2128 + $0x888] sm:$0xff]
        %v2403 = vld [vmem:[%s2128 + $0x890] sm:$0xff]
        %v2404 = vld [vmem:[%s2128 + $0x898] sm:$0xff]
        %v2405 = vld [vmem:[%s2128 + $0x8a0] sm:$0xff]
        %v2406 = vld [vmem:[%s2128 + $0x8a8] sm:$0xff]
        %v2407 = vld [vmem:[%s2128 + $0x8b0] sm:$0xff]
        %v2408 = vld [vmem:[%s2128 + $0x8b8] sm:$0xff]
        %v2409 = vld [vmem:[%s2128 + $0x8c0] sm:$0xff]
        %v2410 = vld [vmem:[%s2128 + $0x8c8] sm:$0xff]
        %v2411 = vld [vmem:[%s2128 + $0x8d0] sm:$0xff]
        %v2412 = vld [vmem:[%s2128 + $0x8d8] sm:$0xff]
        %v2413 = vld [vmem:[%s2128 + $0x8e0] sm:$0xff]
        %v2414 = vld [vmem:[%s2128 + $0x8e8] sm:$0xff]
        %v2415 = vld [vmem:[%s2128 + $0x8f0] sm:$0xff]
        %v2416 = vld [vmem:[%s2128 + $0x8f8] sm:$0xff]
        %v2417 = vld [vmem:[%s2128 + $0x900] sm:$0xff]
        %v2418 = vld [vmem:[%s2128 + $0x908] sm:$0xff]
        %v2419 = vld [vmem:[%s2128 + $0x910] sm:$0xff]
        %v2420 = vld [vmem:[%s2128 + $0x918] sm:$0xff]
        %v2421 = vld [vmem:[%s2128 + $0x920] sm:$0xff]
        %v2422 = vld [vmem:[%s2128 + $0x928] sm:$0xff]
        %v2423 = vld [vmem:[%s2128 + $0x930] sm:$0xff]
        %v2424 = vld [vmem:[%s2128 + $0x938] sm:$0xff]
        %v2425 = vld [vmem:[%s2128 + $0x940] sm:$0xff]
        %v2426 = vld [vmem:[%s2128 + $0x948] sm:$0xff]
        %v2427 = vld [vmem:[%s2128 + $0x950] sm:$0xff]
        %v2428 = vld [vmem:[%s2128 + $0x958] sm:$0xff]
        %v2429 = vld [vmem:[%s2128 + $0x960] sm:$0xff]
        %v2430 = vld [vmem:[%s2128 + $0x968] sm:$0xff]
        %v2431 = vld [vmem:[%s2128 + $0x970] sm:$0xff]
        %v2432 = vld [vmem:[%s2128 + $0x978] sm:$0xff]
        %v2433 = vld [vmem:[%s2128 + $0x980] sm:$0xff]
        %v2434 = vld [vmem:[%s2128 + $0x988] sm:$0xff]
        %v2435 = vld [vmem:[%s2128 + $0x990] sm:$0xff]
        %v2436 = vld [vmem:[%s2128 + $0x998] sm:$0xff]
        %v2437 = vld [vmem:[%s2128 + $0x9a0] sm:$0xff]
        %v2438 = vld [vmem:[%s2128 + $0x9a8] sm:$0xff]
        %v2439 = vld [vmem:[%s2128 + $0x9b0] sm:$0xff]
        %v2440 = vld [vmem:[%s2128 + $0x9b8] sm:$0xff]
        %v2441 = vld [vmem:[%s2128 + $0x9c0] sm:$0xff]
        %v2442 = vld [vmem:[%s2128 + $0x9c8] sm:$0xff]
        %v2443 = vld [vmem:[%s2128 + $0x9d0] sm:$0xff]
        %v2444 = vld [vmem:[%s2128 + $0x9d8] sm:$0xff]
        %v2445 = vld [vmem:[%s2128 + $0x9e0] sm:$0xff]
        %v2446 = vld [vmem:[%s2128 + $0x9e8] sm:$0xff]
        %v2447 = vld [vmem:[%s2128 + $0x9f0] sm:$0xff]
        %v2448 = vld [vmem:[%s2128 + $0x9f8] sm:$0xff]
        %2449 = vmatprep.subr.mxu0 %v2130
        %2450 = vmatpush1.msra.mxu0 %v2129
        %2451 = vmatprep.subr.mxu0 %v2132
        %2452 = vmatpush1.msra.mxu0 %v2131
        %2453 = vmatprep.subr.mxu0 %v2134
        %2454 = vmatpush1.msra.mxu0 %v2133
        %2455 = vmatprep.subr.mxu0 %v2136
        %2456 = vmatpush1.msra.mxu0 %v2135
        %2457 = vmatprep.subr.mxu0 %v2138
        %2458 = vmatpush1.msra.mxu0 %v2137
        %2459 = vmatprep.subr.mxu0 %v2140
        %2460 = vmatpush1.msra.mxu0 %v2139
        %2461 = vmatprep.subr.mxu0 %v2142
        %2462 = vmatpush1.msra.mxu0 %v2141
        %2463 = vmatprep.subr.mxu0 %v2144
        %2464 = vmatpush1.msra.mxu0 %v2143
        %2465 = vmatprep.subr.mxu0 %v2146
        %2466 = vmatpush1.msra.mxu0 %v2145
        %2467 = vmatprep.subr.mxu0 %v2148
        %2468 = vmatpush1.msra.mxu0 %v2147
        %2469 = vmatprep.subr.mxu0 %v2150
        %2470 = vmatpush1.msra.mxu0 %v2149
        %2471 = vmatprep.subr.mxu0 %v2152
        %2472 = vmatpush1.msra.mxu0 %v2151
        %2473 = vmatprep.subr.mxu0 %v2154
        %2474 = vmatpush1.msra.mxu0 %v2153
        %2475 = vmatprep.subr.mxu0 %v2156
        %2476 = vmatpush1.msra.mxu0 %v2155
        %2477 = vmatprep.subr.mxu0 %v2158
        %2478 = vmatpush1.msra.mxu0 %v2157
        %2479 = vmatprep.subr.mxu0 %v2160
        %2480 = vmatpush1.msra.mxu0 %v2159
        %2481 = vmatprep.subr.mxu0 %v2162
        %2482 = vmatpush1.msra.mxu0 %v2161
        %2483 = vmatprep.subr.mxu0 %v2164
        %2484 = vmatpush1.msra.mxu0 %v2163
        %2485 = vmatprep.subr.mxu0 %v2166
        %2486 = vmatpush1.msra.mxu0 %v2165
        %2487 = vmatprep.subr.mxu0 %v2168
        %2488 = vmatpush1.msra.mxu0 %v2167
        %2489 = vmatprep.subr.mxu0 %v2170
        %2490 = vmatpush1.msra.mxu0 %v2169
        %2491 = vmatprep.subr.mxu0 %v2172
        %2492 = vmatpush1.msra.mxu0 %v2171
        %2493 = vmatprep.subr.mxu0 %v2174
        %2494 = vmatpush1.msra.mxu0 %v2173
        %2495 = vmatprep.subr.mxu0 %v2176
        %2496 = vmatpush1.msra.mxu0 %v2175
        %2497 = vmatprep.subr.mxu0 %v2178
        %2498 = vmatpush1.msra.mxu0 %v2177
        %2499 = vmatprep.subr.mxu0 %v2180
        %2500 = vmatpush1.msra.mxu0 %v2179
        %2501 = vmatprep.subr.mxu0 %v2182
        %2502 = vmatpush1.msra.mxu0 %v2181
        %2503 = vmatprep.subr.mxu0 %v2184
        %2504 = vmatpush1.msra.mxu0 %v2183
        %2505 = vmatprep.subr.mxu0 %v2186
        %2506 = vmatpush1.msra.mxu0 %v2185
        %2507 = vmatprep.subr.mxu0 %v2188
        %2508 = vmatpush1.msra.mxu0 %v2187
        %2509 = vmatprep.subr.mxu0 %v2190
        %2510 = vmatpush1.msra.mxu0 %v2189
        %2511 = vmatprep.subr.mxu0 %v2192
        %2512 = vmatpush1.msra.mxu0 %v2191
        %2513 = vmatprep.mubr.f32.mxu0 %v1983
        %2514 = vmatmul.mubr.f32.gmra.mrb[0].mxu0 %v1982
        %v2515 = vpop.f32.mrb[0].mxu0
        %v2516 = vadd.f32 0.0, %v2515
        %v2517 = vpop.f32.mrb[0].mxu0
        %v2518 = vadd.f32 0.0, %v2517
        %2519 = vmatprep.mubr.f32.mxu0 %v1941
        %2520 = vmatmul.mubr.f32.gmra.mrb[0].mxu0 %v1939
        %v2521 = vpop.f32.mrb[0].mxu0
        %v2522 = vadd.f32 0.0, %v2521
        %v2523 = vpop.f32.mrb[0].mxu0
        %v2524 = vadd.f32 0.0, %v2523
        %2525 = vmatprep.mubr.f32.mxu0 %v1945
        %2526 = vmatmul.mubr.f32.gmra.mrb[0].mxu0 %v1943
        %v2527 = vpop.f32.mrb[0].mxu0
        %v2528 = vadd.f32 0.0, %v2527
        %v2529 = vpop.f32.mrb[0].mxu0
        %v2530 = vadd.f32 0.0, %v2529
        %2531 = vmatprep.mubr.f32.mxu0 %v1949
        %2532 = vmatmul.mubr.f32.gmra.mrb[0].mxu0 %v1947
        %v2533 = vpop.f32.mrb[0].mxu0
        %v2534 = vadd.f32 0.0, %v2533
        %v2535 = vpop.f32.mrb[0].mxu0
        %v2536 = vadd.f32 0.0, %v2535
        %2537 = vmatprep.mubr.f32.mxu0 %v1953
        %2538 = vmatmul.mubr.f32.gmra.mrb[0].mxu0 %v1951
        %v2539 = vpop.f32.mrb[0].mxu0
        %v2540 = vadd.f32 0.0, %v2539
        %v2541 = vpop.f32.mrb[0].mxu0
        %v2542 = vadd.f32 0.0, %v2541
        %2543 = vmatprep.mubr.f32.mxu0 %v1957
        %2544 = vmatmul.mubr.f32.gmra.mrb[0].mxu0 %v1955
        %v2545 = vpop.f32.mrb[0].mxu0
        %v2546 = vadd.f32 0.0, %v2545
        %v2547 = vpop.f32.mrb[0].mxu0
        %v2548 = vadd.f32 0.0, %v2547
        %2549 = vmatprep.mubr.f32.mxu0 %v1961
        %2550 = vmatmul.mubr.f32.gmra.mrb[0].mxu0 %v1959
        %v2551 = vpop.f32.mrb[0].mxu0
        %v2552 = vadd.f32 0.0, %v2551
        %v2553 = vpop.f32.mrb[0].mxu0
        %v2554 = vadd.f32 0.0, %v2553
        %2555 = vmatprep.mubr.f32.mxu0 %v1965
        %2556 = vmatmul.mubr.f32.gmra.mrb[0].mxu0 %v1963
        %v2557 = vpop.f32.mrb[0].mxu0
        %v2558 = vadd.f32 0.0, %v2557
        %v2559 = vpop.f32.mrb[0].mxu0
        %v2560 = vadd.f32 0.0, %v2559
        %2561 = vdwg.mxu0
        %2562 = vmatprep.subr.mxu0 %v2194
        %2563 = vmatpush1.msra.mxu0 %v2193
        %2564 = vmatprep.subr.mxu0 %v2196
        %2565 = vmatpush1.msra.mxu0 %v2195
        %2566 = vmatprep.subr.mxu0 %v2198
        %2567 = vmatpush1.msra.mxu0 %v2197
        %2568 = vmatprep.subr.mxu0 %v2200
        %2569 = vmatpush1.msra.mxu0 %v2199
        %2570 = vmatprep.subr.mxu0 %v2202
        %2571 = vmatpush1.msra.mxu0 %v2201
        %2572 = vmatprep.subr.mxu0 %v2204
        %2573 = vmatpush1.msra.mxu0 %v2203
        %2574 = vmatprep.subr.mxu0 %v2206
        %2575 = vmatpush1.msra.mxu0 %v2205
        %2576 = vmatprep.subr.mxu0 %v2208
        %2577 = vmatpush1.msra.mxu0 %v2207
        %2578 = vmatprep.subr.mxu0 %v2210
        %2579 = vmatpush1.msra.mxu0 %v2209
        %2580 = vmatprep.subr.mxu0 %v2212
        %2581 = vmatpush1.msra.mxu0 %v2211
        %2582 = vmatprep.subr.mxu0 %v2214
        %2583 = vmatpush1.msra.mxu0 %v2213
        %2584 = vmatprep.subr.mxu0 %v2216
        %2585 = vmatpush1.msra.mxu0 %v2215
        %2586 = vmatprep.subr.mxu0 %v2218
        %2587 = vmatpush1.msra.mxu0 %v2217
        %2588 = vmatprep.subr.mxu0 %v2220
        %2589 = vmatpush1.msra.mxu0 %v2219
        %2590 = vmatprep.subr.mxu0 %v2222
        %2591 = vmatpush1.msra.mxu0 %v2221
        %2592 = vmatprep.subr.mxu0 %v2224
        %2593 = vmatpush1.msra.mxu0 %v2223
        %2594 = vmatprep.subr.mxu0 %v2226
        %2595 = vmatpush1.msra.mxu0 %v2225
        %2596 = vmatprep.subr.mxu0 %v2228
        %2597 = vmatpush1.msra.mxu0 %v2227
        %2598 = vmatprep.subr.mxu0 %v2230
        %2599 = vmatpush1.msra.mxu0 %v2229
        %2600 = vmatprep.subr.mxu0 %v2232
        %2601 = vmatpush1.msra.mxu0 %v2231
        %2602 = vmatprep.subr.mxu0 %v2234
        %2603 = vmatpush1.msra.mxu0 %v2233
        %2604 = vmatprep.subr.mxu0 %v2236
        %2605 = vmatpush1.msra.mxu0 %v2235
        %2606 = vmatprep.subr.mxu0 %v2238
        %2607 = vmatpush1.msra.mxu0 %v2237
        %2608 = vmatprep.subr.mxu0 %v2240
        %2609 = vmatpush1.msra.mxu0 %v2239
        %2610 = vmatprep.subr.mxu0 %v2242
        %2611 = vmatpush1.msra.mxu0 %v2241
        %2612 = vmatprep.subr.mxu0 %v2244
        %2613 = vmatpush1.msra.mxu0 %v2243
        %2614 = vmatprep.subr.mxu0 %v2246
        %2615 = vmatpush1.msra.mxu0 %v2245
        %2616 = vmatprep.subr.mxu0 %v2248
        %2617 = vmatpush1.msra.mxu0 %v2247
        %2618 = vmatprep.subr.mxu0 %v2250
        %2619 = vmatpush1.msra.mxu0 %v2249
        %2620 = vmatprep.subr.mxu0 %v2252
        %2621 = vmatpush1.msra.mxu0 %v2251
        %2622 = vmatprep.subr.mxu0 %v2254
        %2623 = vmatpush1.msra.mxu0 %v2253
        %2624 = vmatprep.subr.mxu0 %v2256
        %2625 = vmatpush1.msra.mxu0 %v2255
        %2626 = vmatprep.mubr.f32.mxu0 %v2031
        %2627 = vmatmul.mubr.f32.gmra.mrb[0].mxu0 %v2030
        %v2628 = vpop.f32.mrb[0].mxu0
        %v2629 = vadd.f32 %v2516, %v2628
        %v2630 = vpop.f32.mrb[0].mxu0
        %v2631 = vadd.f32 %v2518, %v2630
        %2632 = vmatprep.mubr.f32.mxu0 %v1989
        %2633 = vmatmul.mubr.f32.gmra.mrb[0].mxu0 %v1987
        %v2634 = vpop.f32.mrb[0].mxu0
        %v2635 = vadd.f32 %v2522, %v2634
        %v2636 = vpop.f32.mrb[0].mxu0
        %v2637 = vadd.f32 %v2524, %v2636
        %2638 = vmatprep.mubr.f32.mxu0 %v1993
        %2639 = vmatmul.mubr.f32.gmra.mrb[0].mxu0 %v1991
        %v2640 = vpop.f32.mrb[0].mxu0
        %v2641 = vadd.f32 %v2528, %v2640
        %v2642 = vpop.f32.mrb[0].mxu0
        %v2643 = vadd.f32 %v2530, %v2642
        %2644 = vmatprep.mubr.f32.mxu0 %v1997
        %2645 = vmatmul.mubr.f32.gmra.mrb[0].mxu0 %v1995
        %v2646 = vpop.f32.mrb[0].mxu0
        %v2647 = vadd.f32 %v2534, %v2646
        %v2648 = vpop.f32.mrb[0].mxu0
        %v2649 = vadd.f32 %v2536, %v2648
        %2650 = vmatprep.mubr.f32.mxu0 %v2001
        %2651 = vmatmul.mubr.f32.gmra.mrb[0].mxu0 %v1999
        %v2652 = vpop.f32.mrb[0].mxu0
        %v2653 = vadd.f32 %v2540, %v2652
        %v2654 = vpop.f32.mrb[0].mxu0
        %v2655 = vadd.f32 %v2542, %v2654
        %2656 = vmatprep.mubr.f32.mxu0 %v2005
        %2657 = vmatmul.mubr.f32.gmra.mrb[0].mxu0 %v2003
        %v2658 = vpop.f32.mrb[0].mxu0
        %v2659 = vadd.f32 %v2546, %v2658
        %v2660 = vpop.f32.mrb[0].mxu0
        %v2661 = vadd.f32 %v2548, %v2660
        %2662 = vmatprep.mubr.f32.mxu0 %v2009
        %2663 = vmatmul.mubr.f32.gmra.mrb[0].mxu0 %v2007
        %v2664 = vpop.f32.mrb[0].mxu0
        %v2665 = vadd.f32 %v2552, %v2664
        %v2666 = vpop.f32.mrb[0].mxu0
        %v2667 = vadd.f32 %v2554, %v2666
        %2668 = vmatprep.mubr.f32.mxu0 %v2013
        %2669 = vmatmul.mubr.f32.gmra.mrb[0].mxu0 %v2011
        %v2670 = vpop.f32.mrb[0].mxu0
        %v2671 = vadd.f32 %v2558, %v2670
        %v2672 = vpop.f32.mrb[0].mxu0
        %v2673 = vadd.f32 %v2560, %v2672
        %2674 = vdwg.mxu0
        %2675 = vmatprep.subr.mxu0 %v2258
        %2676 = vmatpush1.msra.mxu0 %v2257
        %2677 = vmatprep.subr.mxu0 %v2260
        %2678 = vmatpush1.msra.mxu0 %v2259
        %2679 = vmatprep.subr.mxu0 %v2262
        %2680 = vmatpush1.msra.mxu0 %v2261
        %2681 = vmatprep.subr.mxu0 %v2264
        %2682 = vmatpush1.msra.mxu0 %v2263
        %2683 = vmatprep.subr.mxu0 %v2266
        %2684 = vmatpush1.msra.mxu0 %v2265
        %2685 = vmatprep.subr.mxu0 %v2268
        %2686 = vmatpush1.msra.mxu0 %v2267
        %2687 = vmatprep.subr.mxu0 %v2270
        %2688 = vmatpush1.msra.mxu0 %v2269
        %2689 = vmatprep.subr.mxu0 %v2272
        %2690 = vmatpush1.msra.mxu0 %v2271
        %2691 = vmatprep.subr.mxu0 %v2274
        %2692 = vmatpush1.msra.mxu0 %v2273
        %2693 = vmatprep.subr.mxu0 %v2276
        %2694 = vmatpush1.msra.mxu0 %v2275
        %2695 = vmatprep.subr.mxu0 %v2278
        %2696 = vmatpush1.msra.mxu0 %v2277
        %2697 = vmatprep.subr.mxu0 %v2280
        %2698 = vmatpush1.msra.mxu0 %v2279
        %2699 = vmatprep.subr.mxu0 %v2282
        %2700 = vmatpush1.msra.mxu0 %v2281
        %2701 = vmatprep.subr.mxu0 %v2284
        %2702 = vmatpush1.msra.mxu0 %v2283
        %2703 = vmatprep.subr.mxu0 %v2286
        %2704 = vmatpush1.msra.mxu0 %v2285
        %2705 = vmatprep.subr.mxu0 %v2288
        %2706 = vmatpush1.msra.mxu0 %v2287
        %2707 = vmatprep.subr.mxu0 %v2290
        %2708 = vmatpush1.msra.mxu0 %v2289
        %2709 = vmatprep.subr.mxu0 %v2292
        %2710 = vmatpush1.msra.mxu0 %v2291
        %2711 = vmatprep.subr.mxu0 %v2294
        %2712 = vmatpush1.msra.mxu0 %v2293
        %2713 = vmatprep.subr.mxu0 %v2296
        %2714 = vmatpush1.msra.mxu0 %v2295
        %2715 = vmatprep.subr.mxu0 %v2298
        %2716 = vmatpush1.msra.mxu0 %v2297
        %2717 = vmatprep.subr.mxu0 %v2300
        %2718 = vmatpush1.msra.mxu0 %v2299
        %2719 = vmatprep.subr.mxu0 %v2302
        %2720 = vmatpush1.msra.mxu0 %v2301
        %2721 = vmatprep.subr.mxu0 %v2304
        %2722 = vmatpush1.msra.mxu0 %v2303
        %2723 = vmatprep.subr.mxu0 %v2306
        %2724 = vmatpush1.msra.mxu0 %v2305
        %2725 = vmatprep.subr.mxu0 %v2308
        %2726 = vmatpush1.msra.mxu0 %v2307
        %2727 = vmatprep.subr.mxu0 %v2310
        %2728 = vmatpush1.msra.mxu0 %v2309
        %2729 = vmatprep.subr.mxu0 %v2312
        %2730 = vmatpush1.msra.mxu0 %v2311
        %2731 = vmatprep.subr.mxu0 %v2314
        %2732 = vmatpush1.msra.mxu0 %v2313
        %2733 = vmatprep.subr.mxu0 %v2316
        %2734 = vmatpush1.msra.mxu0 %v2315
        %2735 = vmatprep.subr.mxu0 %v2318
        %2736 = vmatpush1.msra.mxu0 %v2317
        %2737 = vmatprep.subr.mxu0 %v2320
        %2738 = vmatpush1.msra.mxu0 %v2319
        %2739 = vmatprep.mubr.f32.mxu0 %v1905
        %2740 = vmatmul.mubr.f32.gmra.mrb[0].mxu0 %v1904
        %v2741 = vpop.f32.mrb[0].mxu0
        %v2742 = vadd.f32 %v2629, %v2741
        %v2743 = vpop.f32.mrb[0].mxu0
        %v2744 = vadd.f32 %v2631, %v2743
        %2745 = vmatprep.mubr.f32.mxu0 %v1907
        %2746 = vmatmul.mubr.f32.gmra.mrb[0].mxu0 %v1906
        %v2747 = vpop.f32.mrb[0].mxu0
        %v2748 = vadd.f32 %v2635, %v2747
        %v2749 = vpop.f32.mrb[0].mxu0
        %v2750 = vadd.f32 %v2637, %v2749
        %2751 = vmatprep.mubr.f32.mxu0 %v1909
        %2752 = vmatmul.mubr.f32.gmra.mrb[0].mxu0 %v1908
        %v2753 = vpop.f32.mrb[0].mxu0
        %v2754 = vadd.f32 %v2641, %v2753
        %v2755 = vpop.f32.mrb[0].mxu0
        %v2756 = vadd.f32 %v2643, %v2755
        %2757 = vmatprep.mubr.f32.mxu0 %v1911
        %2758 = vmatmul.mubr.f32.gmra.mrb[0].mxu0 %v1910
        %v2759 = vpop.f32.mrb[0].mxu0
        %v2760 = vadd.f32 %v2647, %v2759
        %v2761 = vpop.f32.mrb[0].mxu0
        %v2762 = vadd.f32 %v2649, %v2761
        %2763 = vmatprep.mubr.f32.mxu0 %v1913
        %2764 = vmatmul.mubr.f32.gmra.mrb[0].mxu0 %v1912
        %v2765 = vpop.f32.mrb[0].mxu0
        %v2766 = vadd.f32 %v2653, %v2765
        %v2767 = vpop.f32.mrb[0].mxu0
        %v2768 = vadd.f32 %v2655, %v2767
        %2769 = vmatprep.mubr.f32.mxu0 %v1915
        %2770 = vmatmul.mubr.f32.gmra.mrb[0].mxu0 %v1914
        %v2771 = vpop.f32.mrb[0].mxu0
        %v2772 = vadd.f32 %v2659, %v2771
        %v2773 = vpop.f32.mrb[0].mxu0
        %v2774 = vadd.f32 %v2661, %v2773
        %2775 = vmatprep.mubr.f32.mxu0 %v1917
        %2776 = vmatmul.mubr.f32.gmra.mrb[0].mxu0 %v1916
        %v2777 = vpop.f32.mrb[0].mxu0
        %v2778 = vadd.f32 %v2665, %v2777
        %v2779 = vpop.f32.mrb[0].mxu0
        %v2780 = vadd.f32 %v2667, %v2779
        %2781 = vmatprep.mubr.f32.mxu0 %v1919
        %2782 = vmatmul.mubr.f32.gmra.mrb[0].mxu0 %v1918
        %v2783 = vpop.f32.mrb[0].mxu0
        %v2784 = vadd.f32 %v2671, %v2783
        %v2785 = vpop.f32.mrb[0].mxu0
        %v2786 = vadd.f32 %v2673, %v2785
        %2787 = vdwg.mxu0
        %2788 = vmatprep.subr.mxu0 %v2322
        %2789 = vmatpush1.msra.mxu0 %v2321
        %2790 = vmatprep.subr.mxu0 %v2324
        %2791 = vmatpush1.msra.mxu0 %v2323
        %2792 = vmatprep.subr.mxu0 %v2326
        %2793 = vmatpush1.msra.mxu0 %v2325
        %2794 = vmatprep.subr.mxu0 %v2328
        %2795 = vmatpush1.msra.mxu0 %v2327
        %2796 = vmatprep.subr.mxu0 %v2330
        %2797 = vmatpush1.msra.mxu0 %v2329
        %2798 = vmatprep.subr.mxu0 %v2332
        %2799 = vmatpush1.msra.mxu0 %v2331
        %2800 = vmatprep.subr.mxu0 %v2334
        %2801 = vmatpush1.msra.mxu0 %v2333
        %2802 = vmatprep.subr.mxu0 %v2336
        %2803 = vmatpush1.msra.mxu0 %v2335
        %2804 = vmatprep.subr.mxu0 %v2338
        %2805 = vmatpush1.msra.mxu0 %v2337
        %2806 = vmatprep.subr.mxu0 %v2340
        %2807 = vmatpush1.msra.mxu0 %v2339
        %2808 = vmatprep.subr.mxu0 %v2342
        %2809 = vmatpush1.msra.mxu0 %v2341
        %2810 = vmatprep.subr.mxu0 %v2344
        %2811 = vmatpush1.msra.mxu0 %v2343
        %2812 = vmatprep.subr.mxu0 %v2346
        %2813 = vmatpush1.msra.mxu0 %v2345
        %2814 = vmatprep.subr.mxu0 %v2348
        %2815 = vmatpush1.msra.mxu0 %v2347
        %2816 = vmatprep.subr.mxu0 %v2350
        %2817 = vmatpush1.msra.mxu0 %v2349
        %2818 = vmatprep.subr.mxu0 %v2352
        %2819 = vmatpush1.msra.mxu0 %v2351
        %2820 = vmatprep.subr.mxu0 %v2354
        %2821 = vmatpush1.msra.mxu0 %v2353
        %2822 = vmatprep.subr.mxu0 %v2356
        %2823 = vmatpush1.msra.mxu0 %v2355
        %2824 = vmatprep.subr.mxu0 %v2358
        %2825 = vmatpush1.msra.mxu0 %v2357
        %2826 = vmatprep.subr.mxu0 %v2360
        %2827 = vmatpush1.msra.mxu0 %v2359
        %2828 = vmatprep.subr.mxu0 %v2362
        %2829 = vmatpush1.msra.mxu0 %v2361
        %2830 = vmatprep.subr.mxu0 %v2364
        %2831 = vmatpush1.msra.mxu0 %v2363
        %2832 = vmatprep.subr.mxu0 %v2366
        %2833 = vmatpush1.msra.mxu0 %v2365
        %2834 = vmatprep.subr.mxu0 %v2368
        %2835 = vmatpush1.msra.mxu0 %v2367
        %2836 = vmatprep.subr.mxu0 %v2370
        %2837 = vmatpush1.msra.mxu0 %v2369
        %2838 = vmatprep.subr.mxu0 %v2372
        %2839 = vmatpush1.msra.mxu0 %v2371
        %2840 = vmatprep.subr.mxu0 %v2374
        %2841 = vmatpush1.msra.mxu0 %v2373
        %2842 = vmatprep.subr.mxu0 %v2376
        %2843 = vmatpush1.msra.mxu0 %v2375
        %2844 = vmatprep.subr.mxu0 %v2378
        %2845 = vmatpush1.msra.mxu0 %v2377
        %2846 = vmatprep.subr.mxu0 %v2380
        %2847 = vmatpush1.msra.mxu0 %v2379
        %2848 = vmatprep.subr.mxu0 %v2382
        %2849 = vmatpush1.msra.mxu0 %v2381
        %2850 = vmatprep.subr.mxu0 %v2384
        %2851 = vmatpush1.msra.mxu0 %v2383
        %2852 = vmatprep.mubr.f32.mxu0 %v2037
        %2853 = vmatmul.mubr.f32.gmra.mrb[0].mxu0 %v2034
        %v2854 = vpop.f32.mrb[0].mxu0
        %v2855 = vadd.f32 %v2742, %v2854
        %v2856 = vpop.f32.mrb[0].mxu0
        %v2857 = vadd.f32 %v2744, %v2856
        %2858 = vmatprep.mubr.f32.mxu0 %v2041
        %2859 = vmatmul.mubr.f32.gmra.mrb[0].mxu0 %v2039
        %v2860 = vpop.f32.mrb[0].mxu0
        %v2861 = vadd.f32 %v2748, %v2860
        %v2862 = vpop.f32.mrb[0].mxu0
        %v2863 = vadd.f32 %v2750, %v2862
        %2864 = vmatprep.mubr.f32.mxu0 %v2045
        %2865 = vmatmul.mubr.f32.gmra.mrb[0].mxu0 %v2043
        %v2866 = vpop.f32.mrb[0].mxu0
        %v2867 = vadd.f32 %v2754, %v2866
        %v2868 = vpop.f32.mrb[0].mxu0
        %v2869 = vadd.f32 %v2756, %v2868
        %2870 = vmatprep.mubr.f32.mxu0 %v2049
        %2871 = vmatmul.mubr.f32.gmra.mrb[0].mxu0 %v2047
        %v2872 = vpop.f32.mrb[0].mxu0
        %v2873 = vadd.f32 %v2760, %v2872
        %v2874 = vpop.f32.mrb[0].mxu0
        %v2875 = vadd.f32 %v2762, %v2874
        %2876 = vmatprep.mubr.f32.mxu0 %v2053
        %2877 = vmatmul.mubr.f32.gmra.mrb[0].mxu0 %v2051
        %v2878 = vpop.f32.mrb[0].mxu0
        %v2879 = vadd.f32 %v2766, %v2878
        %v2880 = vpop.f32.mrb[0].mxu0
        %v2881 = vadd.f32 %v2768, %v2880
        %2882 = vmatprep.mubr.f32.mxu0 %v2057
        %2883 = vmatmul.mubr.f32.gmra.mrb[0].mxu0 %v2055
        %v2884 = vpop.f32.mrb[0].mxu0
        %v2885 = vadd.f32 %v2772, %v2884
        %v2886 = vpop.f32.mrb[0].mxu0
        %v2887 = vadd.f32 %v2774, %v2886
        %2888 = vmatprep.mubr.f32.mxu0 %v2061
        %2889 = vmatmul.mubr.f32.gmra.mrb[0].mxu0 %v2059
        %v2890 = vpop.f32.mrb[0].mxu0
        %v2891 = vadd.f32 %v2778, %v2890
        %v2892 = vpop.f32.mrb[0].mxu0
        %v2893 = vadd.f32 %v2780, %v2892
        %2894 = vmatprep.mubr.f32.mxu0 %v2079
        %2895 = vmatmul.mubr.f32.gmra.mrb[0].mxu0 %v2078
        %v2896 = vpop.f32.mrb[0].mxu0
        %v2897 = vadd.f32 %v2784, %v2896
        %v2898 = vpop.f32.mrb[0].mxu0
        %v2899 = vadd.f32 %v2786, %v2898
        %2900 = vdwg.mxu0
        %2901 = vmatprep.subr.mxu0 %v2386
        %2902 = vmatpush1.msra.mxu0 %v2385
        %2903 = vmatprep.subr.mxu0 %v2388
        %2904 = vmatpush1.msra.mxu0 %v2387
        %2905 = vmatprep.subr.mxu0 %v2390
        %2906 = vmatpush1.msra.mxu0 %v2389
        %2907 = vmatprep.subr.mxu0 %v2392
        %2908 = vmatpush1.msra.mxu0 %v2391
        %2909 = vmatprep.subr.mxu0 %v2394
        %2910 = vmatpush1.msra.mxu0 %v2393
        %2911 = vmatprep.subr.mxu0 %v2396
        %2912 = vmatpush1.msra.mxu0 %v2395
        %2913 = vmatprep.subr.mxu0 %v2398
        %2914 = vmatpush1.msra.mxu0 %v2397
        %2915 = vmatprep.subr.mxu0 %v2400
        %2916 = vmatpush1.msra.mxu0 %v2399
        %2917 = vmatprep.subr.mxu0 %v2402
        %2918 = vmatpush1.msra.mxu0 %v2401
        %2919 = vmatprep.subr.mxu0 %v2404
        %2920 = vmatpush1.msra.mxu0 %v2403
        %2921 = vmatprep.subr.mxu0 %v2406
        %2922 = vmatpush1.msra.mxu0 %v2405
        %2923 = vmatprep.subr.mxu0 %v2408
        %2924 = vmatpush1.msra.mxu0 %v2407
        %2925 = vmatprep.subr.mxu0 %v2410
        %2926 = vmatpush1.msra.mxu0 %v2409
        %2927 = vmatprep.subr.mxu0 %v2412
        %2928 = vmatpush1.msra.mxu0 %v2411
        %2929 = vmatprep.subr.mxu0 %v2414
        %2930 = vmatpush1.msra.mxu0 %v2413
        %2931 = vmatprep.subr.mxu0 %v2416
        %2932 = vmatpush1.msra.mxu0 %v2415
        %2933 = vmatprep.subr.mxu0 %v2418
        %2934 = vmatpush1.msra.mxu0 %v2417
        %2935 = vmatprep.subr.mxu0 %v2420
        %2936 = vmatpush1.msra.mxu0 %v2419
        %2937 = vmatprep.subr.mxu0 %v2422
        %2938 = vmatpush1.msra.mxu0 %v2421
        %2939 = vmatprep.subr.mxu0 %v2424
        %2940 = vmatpush1.msra.mxu0 %v2423
        %2941 = vmatprep.subr.mxu0 %v2426
        %2942 = vmatpush1.msra.mxu0 %v2425
        %2943 = vmatprep.subr.mxu0 %v2428
        %2944 = vmatpush1.msra.mxu0 %v2427
        %2945 = vmatprep.subr.mxu0 %v2430
        %2946 = vmatpush1.msra.mxu0 %v2429
        %2947 = vmatprep.subr.mxu0 %v2432
        %2948 = vmatpush1.msra.mxu0 %v2431
        %2949 = vmatprep.subr.mxu0 %v2434
        %2950 = vmatpush1.msra.mxu0 %v2433
        %2951 = vmatprep.subr.mxu0 %v2436
        %2952 = vmatpush1.msra.mxu0 %v2435
        %2953 = vmatprep.subr.mxu0 %v2438
        %2954 = vmatpush1.msra.mxu0 %v2437
        %2955 = vmatprep.subr.mxu0 %v2440
        %2956 = vmatpush1.msra.mxu0 %v2439
        %2957 = vmatprep.subr.mxu0 %v2442
        %2958 = vmatpush1.msra.mxu0 %v2441
        %2959 = vmatprep.subr.mxu0 %v2444
        %2960 = vmatpush1.msra.mxu0 %v2443
        %2961 = vmatprep.subr.mxu0 %v2446
        %2962 = vmatpush1.msra.mxu0 %v2445
        %2963 = vmatprep.subr.mxu0 %v2448
        %2964 = vmatpush1.msra.mxu0 %v2447
        %2965 = vmatprep.mubr.f32.mxu0 %v2085
        %2966 = vmatmul.mubr.f32.gmra.mrb[0].mxu0 %v2082
        %v2967 = vpop.f32.mrb[0].mxu0
        %v2968 = vadd.f32 %v2855, %v2967
        %v2969 = vpop.f32.mrb[0].mxu0
        %v2970 = vadd.f32 %v2857, %v2969
        %2971 = vmatprep.mubr.f32.mxu0 %v2089
        %2972 = vmatmul.mubr.f32.gmra.mrb[0].mxu0 %v2087
        %v2973 = vpop.f32.mrb[0].mxu0
        %v2974 = vadd.f32 %v2861, %v2973
        %v2975 = vpop.f32.mrb[0].mxu0
        %v2976 = vadd.f32 %v2863, %v2975
        %2977 = vmatprep.mubr.f32.mxu0 %v2093
        %2978 = vmatmul.mubr.f32.gmra.mrb[0].mxu0 %v2091
        %v2979 = vpop.f32.mrb[0].mxu0
        %v2980 = vadd.f32 %v2867, %v2979
        %v2981 = vpop.f32.mrb[0].mxu0
        %v2982 = vadd.f32 %v2869, %v2981
        %2983 = vmatprep.mubr.f32.mxu0 %v2097
        %2984 = vmatmul.mubr.f32.gmra.mrb[0].mxu0 %v2095
        %v2985 = vpop.f32.mrb[0].mxu0
        %v2986 = vadd.f32 %v2873, %v2985
        %v2987 = vpop.f32.mrb[0].mxu0
        %v2988 = vadd.f32 %v2875, %v2987
        %2989 = vmatprep.mubr.f32.mxu0 %v2101
        %2990 = vmatmul.mubr.f32.gmra.mrb[0].mxu0 %v2099
        %v2991 = vpop.f32.mrb[0].mxu0
        %v2992 = vadd.f32 %v2879, %v2991
        %v2993 = vpop.f32.mrb[0].mxu0
        %v2994 = vadd.f32 %v2881, %v2993
        %2995 = vmatprep.mubr.f32.mxu0 %v2105
        %2996 = vmatmul.mubr.f32.gmra.mrb[0].mxu0 %v2103
        %v2997 = vpop.f32.mrb[0].mxu0
        %v2998 = vadd.f32 %v2885, %v2997
        %v2999 = vpop.f32.mrb[0].mxu0
        %v3000 = vadd.f32 %v2887, %v2999
        %3001 = vmatprep.mubr.f32.mxu0 %v2109
        %3002 = vmatmul.mubr.f32.gmra.mrb[0].mxu0 %v2107
        %v3003 = vpop.f32.mrb[0].mxu0
        %v3004 = vadd.f32 %v2891, %v3003
        %v3005 = vpop.f32.mrb[0].mxu0
        %v3006 = vadd.f32 %v2893, %v3005
        %3007 = vmatprep.mubr.f32.mxu0 %v2127
        %3008 = vmatmul.mubr.f32.gmra.mrb[0].mxu0 %v2126
        %v3009 = vpop.f32.mrb[0].mxu0
        %v3010 = vadd.f32 %v2897, %v3009
        %v3011 = vpop.f32.mrb[0].mxu0
        %v3012 = vadd.f32 %v2899, %v3011
        %3013 = vdwg.mxu0
        %s3014 = scalar_lea.vmem [#allocation8], 1
        %v3015 = vld [vmem:[%s3014] ss:$4 sm:$0x3]
        %v3017 = vlaneseq
        %v3018 = vshrl.u32 %v3017, 7
        %v3019 = vsub.s32 0, %v3018
        %v3020 = vrot.slane %v3015, %v3019
        %v3021 = vlaneseq
        %v3022 = vshrl.u32 %v3021, 7
        %v3023 = vsub.s32 1, %v3022
        %v3024 = vrot.slane %v3015, %v3023
        %v3027 = vmul.f32 %v2968, %v3020
        %v3028 = vmul.f32 %v2970, %v3024
        %v3029 = vmul.f32 %v2974, %v3020
        %v3030 = vmul.f32 %v2976, %v3024
        %v3031 = vmul.f32 %v2980, %v3020
        %v3032 = vmul.f32 %v2982, %v3024
        %v3033 = vmul.f32 %v2986, %v3020
        %v3034 = vmul.f32 %v2988, %v3024
        %v3035 = vmul.f32 %v2992, %v3020
        %v3036 = vmul.f32 %v2994, %v3024
        %v3037 = vmul.f32 %v2998, %v3020
        %v3038 = vmul.f32 %v3000, %v3024
        %v3039 = vmul.f32 %v3004, %v3020
        %v3040 = vmul.f32 %v3006, %v3024
        %v3041 = vmul.f32 %v3010, %v3020
        %v3042 = vmul.f32 %v3012, %v3024
        %s3043 = scalar_lea.vmem [#allocation9], 1
        %v3044 = vld [vmem:[%s3043] ss:$4 sm:$0x3]
        %v3046 = vlaneseq
        %v3047 = vshrl.u32 %v3046, 7
        %v3048 = vsub.s32 0, %v3047
        %v3049 = vrot.slane %v3044, %v3048
        %v3050 = vlaneseq
        %v3051 = vshrl.u32 %v3050, 7
        %v3052 = vsub.s32 1, %v3051
        %v3053 = vrot.slane %v3044, %v3052
        %v3056 = vadd.f32 %v3027, %v3049
        %v3057 = vadd.f32 %v3028, %v3053
        %v3058 = vadd.f32 %v3029, %v3049
        %v3059 = vadd.f32 %v3030, %v3053
        %v3060 = vadd.f32 %v3031, %v3049
        %v3061 = vadd.f32 %v3032, %v3053
        %v3062 = vadd.f32 %v3033, %v3049
        %v3063 = vadd.f32 %v3034, %v3053
        %v3064 = vadd.f32 %v3035, %v3049
        %v3065 = vadd.f32 %v3036, %v3053
        %v3066 = vadd.f32 %v3037, %v3049
        %v3067 = vadd.f32 %v3038, %v3053
        %v3068 = vadd.f32 %v3039, %v3049
        %v3069 = vadd.f32 %v3040, %v3053
        %v3070 = vadd.f32 %v3041, %v3049
        %v3071 = vadd.f32 %v3042, %v3053
        %v3072 = vmax.f32 %v3056, 0.0
        %v3073 = vmax.f32 %v3057, 0.0
        %v3074 = vmax.f32 %v3058, 0.0
        %v3075 = vmax.f32 %v3059, 0.0
        %v3076 = vmax.f32 %v3060, 0.0
        %v3077 = vmax.f32 %v3061, 0.0
        %v3078 = vmax.f32 %v3062, 0.0
        %v3079 = vmax.f32 %v3063, 0.0
        %v3080 = vmax.f32 %v3064, 0.0
        %v3081 = vmax.f32 %v3065, 0.0
        %v3082 = vmax.f32 %v3066, 0.0
        %v3083 = vmax.f32 %v3067, 0.0
        %v3084 = vmax.f32 %v3068, 0.0
        %v3085 = vmax.f32 %v3069, 0.0
        %v3086 = vmax.f32 %v3070, 0.0
        %v3087 = vmax.f32 %v3071, 0.0
        %v3088 = vsel %vm711, %v3072, 0.0
        %v3089 = vsel %vm711, %v3073, 0.0
        %v3090 = vsel %vm712, %v3074, 0.0
        %v3091 = vsel %vm712, %v3075, 0.0
        %v3092 = vsel %vm713, %v3076, 0.0
        %v3093 = vsel %vm713, %v3077, 0.0
        %v3094 = vsel %vm714, %v3078, 0.0
        %v3095 = vsel %vm714, %v3079, 0.0
        %v3096 = vsel %vm715, %v3080, 0.0
        %v3097 = vsel %vm715, %v3081, 0.0
        %v3098 = vsel %vm716, %v3082, 0.0
        %v3099 = vsel %vm716, %v3083, 0.0
        %v3100 = vsel %vm717, %v3084, 0.0
        %v3101 = vsel %vm717, %v3085, 0.0
        %v3102 = vsel %vm718, %v3086, 0.0
        %v3103 = vsel %vm718, %v3087, 0.0
        %v3120 = vrot.slane %v3088, 6
        %v3121 = vrot.slane %v3089, 6
        %v3122 = vrot.slane %v3090, 6
        %v3123 = vsel %vm751, %v3120, %v3122
        %v3124 = vrot.slane %v3091, 6
        %v3125 = vsel %vm751, %v3121, %v3124
        %v3126 = vrot.slane %v3092, 6
        %v3127 = vsel %vm751, %v3122, %v3126
        %v3128 = vrot.slane %v3093, 6
        %v3129 = vsel %vm751, %v3124, %v3128
        %v3130 = vrot.slane %v3094, 6
        %v3131 = vsel %vm751, %v3126, %v3130
        %v3132 = vrot.slane %v3095, 6
        %v3133 = vsel %vm751, %v3128, %v3132
        %v3134 = vrot.slane %v3096, 6
        %v3135 = vsel %vm751, %v3130, %v3134
        %v3136 = vrot.slane %v3097, 6
        %v3137 = vsel %vm751, %v3132, %v3136
        %v3138 = vrot.slane %v3098, 6
        %v3139 = vsel %vm751, %v3134, %v3138
        %v3140 = vrot.slane %v3099, 6
        %v3141 = vsel %vm751, %v3136, %v3140
        %v3142 = vrot.slane %v3100, 6
        %v3143 = vsel %vm751, %v3138, %v3142
        %v3144 = vrot.slane %v3101, 6
        %v3145 = vsel %vm751, %v3140, %v3144
        %v3146 = vrot.slane %v3102, 6
        %v3147 = vsel %vm751, %v3142, %v3146
        %v3148 = vrot.slane %v3103, 6
        %v3149 = vsel %vm751, %v3144, %v3148
        %v3166 = vsel %vm751, 0.0, %v3120
        %v3167 = vsel %vm751, 0.0, %v3121
        %v3168 = vrot.slane %v3088, 7
        %v3169 = vrot.slane %v3089, 7
        %v3170 = vrot.slane %v3090, 7
        %v3171 = vsel %vm800, %v3168, %v3170
        %v3172 = vrot.slane %v3091, 7
        %v3173 = vsel %vm800, %v3169, %v3172
        %v3174 = vrot.slane %v3092, 7
        %v3175 = vsel %vm800, %v3170, %v3174
        %v3176 = vrot.slane %v3093, 7
        %v3177 = vsel %vm800, %v3172, %v3176
        %v3178 = vrot.slane %v3094, 7
        %v3179 = vsel %vm800, %v3174, %v3178
        %v3180 = vrot.slane %v3095, 7
        %v3181 = vsel %vm800, %v3176, %v3180
        %v3182 = vrot.slane %v3096, 7
        %v3183 = vsel %vm800, %v3178, %v3182
        %v3184 = vrot.slane %v3097, 7
        %v3185 = vsel %vm800, %v3180, %v3184
        %v3186 = vrot.slane %v3098, 7
        %v3187 = vsel %vm800, %v3182, %v3186
        %v3188 = vrot.slane %v3099, 7
        %v3189 = vsel %vm800, %v3184, %v3188
        %v3190 = vrot.slane %v3100, 7
        %v3191 = vsel %vm800, %v3186, %v3190
        %v3192 = vrot.slane %v3101, 7
        %v3193 = vsel %vm800, %v3188, %v3192
        %v3194 = vrot.slane %v3102, 7
        %v3195 = vsel %vm800, %v3190, %v3194
        %v3196 = vrot.slane %v3103, 7
        %v3197 = vsel %vm800, %v3192, %v3196
        %v3214 = vsel %vm800, 0.0, %v3168
        %v3215 = vsel %vm800, 0.0, %v3169
        %v3216 = vrot.slane %v3088, 1
        %v3217 = vrot.slane %v3090, 1
        %v3218 = vsel %vm849, %v3216, %v3217
        %v3219 = vrot.slane %v3089, 1
        %v3220 = vrot.slane %v3091, 1
        %v3221 = vsel %vm849, %v3219, %v3220
        %v3222 = vrot.slane %v3092, 1
        %v3223 = vsel %vm849, %v3217, %v3222
        %v3224 = vrot.slane %v3093, 1
        %v3225 = vsel %vm849, %v3220, %v3224
        %v3226 = vrot.slane %v3094, 1
        %v3227 = vsel %vm849, %v3222, %v3226
        %v3228 = vrot.slane %v3095, 1
        %v3229 = vsel %vm849, %v3224, %v3228
        %v3230 = vrot.slane %v3096, 1
        %v3231 = vsel %vm849, %v3226, %v3230
        %v3232 = vrot.slane %v3097, 1
        %v3233 = vsel %vm849, %v3228, %v3232
        %v3234 = vrot.slane %v3098, 1
        %v3235 = vsel %vm849, %v3230, %v3234
        %v3236 = vrot.slane %v3099, 1
        %v3237 = vsel %vm849, %v3232, %v3236
        %v3238 = vrot.slane %v3100, 1
        %v3239 = vsel %vm849, %v3234, %v3238
        %v3240 = vrot.slane %v3101, 1
        %v3241 = vsel %vm849, %v3236, %v3240
        %v3242 = vrot.slane %v3102, 1
        %v3243 = vsel %vm849, %v3238, %v3242
        %v3244 = vrot.slane %v3103, 1
        %v3245 = vsel %vm849, %v3240, %v3244
        %v3262 = vsel %vm849, %v3242, 0.0
        %v3263 = vsel %vm849, %v3244, 0.0
        %v3264 = vrot.slane %v3088, 2
        %v3265 = vrot.slane %v3090, 2
        %v3266 = vsel %vm898, %v3264, %v3265
        %v3267 = vrot.slane %v3089, 2
        %v3268 = vrot.slane %v3091, 2
        %v3269 = vsel %vm898, %v3267, %v3268
        %v3270 = vrot.slane %v3092, 2
        %v3271 = vsel %vm898, %v3265, %v3270
        %v3272 = vrot.slane %v3093, 2
        %v3273 = vsel %vm898, %v3268, %v3272
        %v3274 = vrot.slane %v3094, 2
        %v3275 = vsel %vm898, %v3270, %v3274
        %v3276 = vrot.slane %v3095, 2
        %v3277 = vsel %vm898, %v3272, %v3276
        %v3278 = vrot.slane %v3096, 2
        %v3279 = vsel %vm898, %v3274, %v3278
        %v3280 = vrot.slane %v3097, 2
        %v3281 = vsel %vm898, %v3276, %v3280
        %v3282 = vrot.slane %v3098, 2
        %v3283 = vsel %vm898, %v3278, %v3282
        %v3284 = vrot.slane %v3099, 2
        %v3285 = vsel %vm898, %v3280, %v3284
        %v3286 = vrot.slane %v3100, 2
        %v3287 = vsel %vm898, %v3282, %v3286
        %v3288 = vrot.slane %v3101, 2
        %v3289 = vsel %vm898, %v3284, %v3288
        %v3290 = vrot.slane %v3102, 2
        %v3291 = vsel %vm898, %v3286, %v3290
        %v3292 = vrot.slane %v3103, 2
        %v3293 = vsel %vm898, %v3288, %v3292
        %v3310 = vsel %vm898, %v3290, 0.0
        %v3311 = vsel %vm898, %v3292, 0.0
        %s3312 = scalar_lea.vmem [#allocation6], 5120
        %v3313 = vld [vmem:[%s3312] sm:$0xff]
        %v3314 = vld [vmem:[%s3312 + $0x8] sm:$0xff]
        %v3315 = vld [vmem:[%s3312 + $0x10] sm:$0xff]
        %v3316 = vld [vmem:[%s3312 + $0x18] sm:$0xff]
        %v3317 = vld [vmem:[%s3312 + $0x20] sm:$0xff]
        %v3318 = vld [vmem:[%s3312 + $0x28] sm:$0xff]
        %v3319 = vld [vmem:[%s3312 + $0x30] sm:$0xff]
        %v3320 = vld [vmem:[%s3312 + $0x38] sm:$0xff]
        %v3321 = vld [vmem:[%s3312 + $0x40] sm:$0xff]
        %v3322 = vld [vmem:[%s3312 + $0x48] sm:$0xff]
        %v3323 = vld [vmem:[%s3312 + $0x50] sm:$0xff]
        %v3324 = vld [vmem:[%s3312 + $0x58] sm:$0xff]
        %v3325 = vld [vmem:[%s3312 + $0x60] sm:$0xff]
        %v3326 = vld [vmem:[%s3312 + $0x68] sm:$0xff]
        %v3327 = vld [vmem:[%s3312 + $0x70] sm:$0xff]
        %v3328 = vld [vmem:[%s3312 + $0x78] sm:$0xff]
        %v3329 = vld [vmem:[%s3312 + $0x80] sm:$0xff]
        %v3330 = vld [vmem:[%s3312 + $0x88] sm:$0xff]
        %v3331 = vld [vmem:[%s3312 + $0x90] sm:$0xff]
        %v3332 = vld [vmem:[%s3312 + $0x98] sm:$0xff]
        %v3333 = vld [vmem:[%s3312 + $0xa0] sm:$0xff]
        %v3334 = vld [vmem:[%s3312 + $0xa8] sm:$0xff]
        %v3335 = vld [vmem:[%s3312 + $0xb0] sm:$0xff]
        %v3336 = vld [vmem:[%s3312 + $0xb8] sm:$0xff]
        %v3337 = vld [vmem:[%s3312 + $0xc0] sm:$0xff]
        %v3338 = vld [vmem:[%s3312 + $0xc8] sm:$0xff]
        %v3339 = vld [vmem:[%s3312 + $0xd0] sm:$0xff]
        %v3340 = vld [vmem:[%s3312 + $0xd8] sm:$0xff]
        %v3341 = vld [vmem:[%s3312 + $0xe0] sm:$0xff]
        %v3342 = vld [vmem:[%s3312 + $0xe8] sm:$0xff]
        %v3343 = vld [vmem:[%s3312 + $0xf0] sm:$0xff]
        %v3344 = vld [vmem:[%s3312 + $0xf8] sm:$0xff]
        %v3345 = vld [vmem:[%s3312 + $0x100] sm:$0xff]
        %v3346 = vld [vmem:[%s3312 + $0x108] sm:$0xff]
        %v3347 = vld [vmem:[%s3312 + $0x110] sm:$0xff]
        %v3348 = vld [vmem:[%s3312 + $0x118] sm:$0xff]
        %v3349 = vld [vmem:[%s3312 + $0x120] sm:$0xff]
        %v3350 = vld [vmem:[%s3312 + $0x128] sm:$0xff]
        %v3351 = vld [vmem:[%s3312 + $0x130] sm:$0xff]
        %v3352 = vld [vmem:[%s3312 + $0x138] sm:$0xff]
        %v3353 = vld [vmem:[%s3312 + $0x140] sm:$0xff]
        %v3354 = vld [vmem:[%s3312 + $0x148] sm:$0xff]
        %v3355 = vld [vmem:[%s3312 + $0x150] sm:$0xff]
        %v3356 = vld [vmem:[%s3312 + $0x158] sm:$0xff]
        %v3357 = vld [vmem:[%s3312 + $0x160] sm:$0xff]
        %v3358 = vld [vmem:[%s3312 + $0x168] sm:$0xff]
        %v3359 = vld [vmem:[%s3312 + $0x170] sm:$0xff]
        %v3360 = vld [vmem:[%s3312 + $0x178] sm:$0xff]
        %v3361 = vld [vmem:[%s3312 + $0x180] sm:$0xff]
        %v3362 = vld [vmem:[%s3312 + $0x188] sm:$0xff]
        %v3363 = vld [vmem:[%s3312 + $0x190] sm:$0xff]
        %v3364 = vld [vmem:[%s3312 + $0x198] sm:$0xff]
        %v3365 = vld [vmem:[%s3312 + $0x1a0] sm:$0xff]
        %v3366 = vld [vmem:[%s3312 + $0x1a8] sm:$0xff]
        %v3367 = vld [vmem:[%s3312 + $0x1b0] sm:$0xff]
        %v3368 = vld [vmem:[%s3312 + $0x1b8] sm:$0xff]
        %v3369 = vld [vmem:[%s3312 + $0x1c0] sm:$0xff]
        %v3370 = vld [vmem:[%s3312 + $0x1c8] sm:$0xff]
        %v3371 = vld [vmem:[%s3312 + $0x1d0] sm:$0xff]
        %v3372 = vld [vmem:[%s3312 + $0x1d8] sm:$0xff]
        %v3373 = vld [vmem:[%s3312 + $0x1e0] sm:$0xff]
        %v3374 = vld [vmem:[%s3312 + $0x1e8] sm:$0xff]
        %v3375 = vld [vmem:[%s3312 + $0x1f0] sm:$0xff]
        %v3376 = vld [vmem:[%s3312 + $0x1f8] sm:$0xff]
        %v3377 = vld [vmem:[%s3312 + $0x200] sm:$0xff]
        %v3378 = vld [vmem:[%s3312 + $0x208] sm:$0xff]
        %v3379 = vld [vmem:[%s3312 + $0x210] sm:$0xff]
        %v3380 = vld [vmem:[%s3312 + $0x218] sm:$0xff]
        %v3381 = vld [vmem:[%s3312 + $0x220] sm:$0xff]
        %v3382 = vld [vmem:[%s3312 + $0x228] sm:$0xff]
        %v3383 = vld [vmem:[%s3312 + $0x230] sm:$0xff]
        %v3384 = vld [vmem:[%s3312 + $0x238] sm:$0xff]
        %v3385 = vld [vmem:[%s3312 + $0x240] sm:$0xff]
        %v3386 = vld [vmem:[%s3312 + $0x248] sm:$0xff]
        %v3387 = vld [vmem:[%s3312 + $0x250] sm:$0xff]
        %v3388 = vld [vmem:[%s3312 + $0x258] sm:$0xff]
        %v3389 = vld [vmem:[%s3312 + $0x260] sm:$0xff]
        %v3390 = vld [vmem:[%s3312 + $0x268] sm:$0xff]
        %v3391 = vld [vmem:[%s3312 + $0x270] sm:$0xff]
        %v3392 = vld [vmem:[%s3312 + $0x278] sm:$0xff]
        %v3393 = vld [vmem:[%s3312 + $0x280] sm:$0xff]
        %v3394 = vld [vmem:[%s3312 + $0x288] sm:$0xff]
        %v3395 = vld [vmem:[%s3312 + $0x290] sm:$0xff]
        %v3396 = vld [vmem:[%s3312 + $0x298] sm:$0xff]
        %v3397 = vld [vmem:[%s3312 + $0x2a0] sm:$0xff]
        %v3398 = vld [vmem:[%s3312 + $0x2a8] sm:$0xff]
        %v3399 = vld [vmem:[%s3312 + $0x2b0] sm:$0xff]
        %v3400 = vld [vmem:[%s3312 + $0x2b8] sm:$0xff]
        %v3401 = vld [vmem:[%s3312 + $0x2c0] sm:$0xff]
        %v3402 = vld [vmem:[%s3312 + $0x2c8] sm:$0xff]
        %v3403 = vld [vmem:[%s3312 + $0x2d0] sm:$0xff]
        %v3404 = vld [vmem:[%s3312 + $0x2d8] sm:$0xff]
        %v3405 = vld [vmem:[%s3312 + $0x2e0] sm:$0xff]
        %v3406 = vld [vmem:[%s3312 + $0x2e8] sm:$0xff]
        %v3407 = vld [vmem:[%s3312 + $0x2f0] sm:$0xff]
        %v3408 = vld [vmem:[%s3312 + $0x2f8] sm:$0xff]
        %v3409 = vld [vmem:[%s3312 + $0x300] sm:$0xff]
        %v3410 = vld [vmem:[%s3312 + $0x308] sm:$0xff]
        %v3411 = vld [vmem:[%s3312 + $0x310] sm:$0xff]
        %v3412 = vld [vmem:[%s3312 + $0x318] sm:$0xff]
        %v3413 = vld [vmem:[%s3312 + $0x320] sm:$0xff]
        %v3414 = vld [vmem:[%s3312 + $0x328] sm:$0xff]
        %v3415 = vld [vmem:[%s3312 + $0x330] sm:$0xff]
        %v3416 = vld [vmem:[%s3312 + $0x338] sm:$0xff]
        %v3417 = vld [vmem:[%s3312 + $0x340] sm:$0xff]
        %v3418 = vld [vmem:[%s3312 + $0x348] sm:$0xff]
        %v3419 = vld [vmem:[%s3312 + $0x350] sm:$0xff]
        %v3420 = vld [vmem:[%s3312 + $0x358] sm:$0xff]
        %v3421 = vld [vmem:[%s3312 + $0x360] sm:$0xff]
        %v3422 = vld [vmem:[%s3312 + $0x368] sm:$0xff]
        %v3423 = vld [vmem:[%s3312 + $0x370] sm:$0xff]
        %v3424 = vld [vmem:[%s3312 + $0x378] sm:$0xff]
        %v3425 = vld [vmem:[%s3312 + $0x380] sm:$0xff]
        %v3426 = vld [vmem:[%s3312 + $0x388] sm:$0xff]
        %v3427 = vld [vmem:[%s3312 + $0x390] sm:$0xff]
        %v3428 = vld [vmem:[%s3312 + $0x398] sm:$0xff]
        %v3429 = vld [vmem:[%s3312 + $0x3a0] sm:$0xff]
        %v3430 = vld [vmem:[%s3312 + $0x3a8] sm:$0xff]
        %v3431 = vld [vmem:[%s3312 + $0x3b0] sm:$0xff]
        %v3432 = vld [vmem:[%s3312 + $0x3b8] sm:$0xff]
        %v3433 = vld [vmem:[%s3312 + $0x3c0] sm:$0xff]
        %v3434 = vld [vmem:[%s3312 + $0x3c8] sm:$0xff]
        %v3435 = vld [vmem:[%s3312 + $0x3d0] sm:$0xff]
        %v3436 = vld [vmem:[%s3312 + $0x3d8] sm:$0xff]
        %v3437 = vld [vmem:[%s3312 + $0x3e0] sm:$0xff]
        %v3438 = vld [vmem:[%s3312 + $0x3e8] sm:$0xff]
        %v3439 = vld [vmem:[%s3312 + $0x3f0] sm:$0xff]
        %v3440 = vld [vmem:[%s3312 + $0x3f8] sm:$0xff]
        %v3441 = vld [vmem:[%s3312 + $0x400] sm:$0xff]
        %v3442 = vld [vmem:[%s3312 + $0x408] sm:$0xff]
        %v3443 = vld [vmem:[%s3312 + $0x410] sm:$0xff]
        %v3444 = vld [vmem:[%s3312 + $0x418] sm:$0xff]
        %v3445 = vld [vmem:[%s3312 + $0x420] sm:$0xff]
        %v3446 = vld [vmem:[%s3312 + $0x428] sm:$0xff]
        %v3447 = vld [vmem:[%s3312 + $0x430] sm:$0xff]
        %v3448 = vld [vmem:[%s3312 + $0x438] sm:$0xff]
        %v3449 = vld [vmem:[%s3312 + $0x440] sm:$0xff]
        %v3450 = vld [vmem:[%s3312 + $0x448] sm:$0xff]
        %v3451 = vld [vmem:[%s3312 + $0x450] sm:$0xff]
        %v3452 = vld [vmem:[%s3312 + $0x458] sm:$0xff]
        %v3453 = vld [vmem:[%s3312 + $0x460] sm:$0xff]
        %v3454 = vld [vmem:[%s3312 + $0x468] sm:$0xff]
        %v3455 = vld [vmem:[%s3312 + $0x470] sm:$0xff]
        %v3456 = vld [vmem:[%s3312 + $0x478] sm:$0xff]
        %v3457 = vld [vmem:[%s3312 + $0x480] sm:$0xff]
        %v3458 = vld [vmem:[%s3312 + $0x488] sm:$0xff]
        %v3459 = vld [vmem:[%s3312 + $0x490] sm:$0xff]
        %v3460 = vld [vmem:[%s3312 + $0x498] sm:$0xff]
        %v3461 = vld [vmem:[%s3312 + $0x4a0] sm:$0xff]
        %v3462 = vld [vmem:[%s3312 + $0x4a8] sm:$0xff]
        %v3463 = vld [vmem:[%s3312 + $0x4b0] sm:$0xff]
        %v3464 = vld [vmem:[%s3312 + $0x4b8] sm:$0xff]
        %v3465 = vld [vmem:[%s3312 + $0x4c0] sm:$0xff]
        %v3466 = vld [vmem:[%s3312 + $0x4c8] sm:$0xff]
        %v3467 = vld [vmem:[%s3312 + $0x4d0] sm:$0xff]
        %v3468 = vld [vmem:[%s3312 + $0x4d8] sm:$0xff]
        %v3469 = vld [vmem:[%s3312 + $0x4e0] sm:$0xff]
        %v3470 = vld [vmem:[%s3312 + $0x4e8] sm:$0xff]
        %v3471 = vld [vmem:[%s3312 + $0x4f0] sm:$0xff]
        %v3472 = vld [vmem:[%s3312 + $0x4f8] sm:$0xff]
        %v3473 = vld [vmem:[%s3312 + $0x500] sm:$0xff]
        %v3474 = vld [vmem:[%s3312 + $0x508] sm:$0xff]
        %v3475 = vld [vmem:[%s3312 + $0x510] sm:$0xff]
        %v3476 = vld [vmem:[%s3312 + $0x518] sm:$0xff]
        %v3477 = vld [vmem:[%s3312 + $0x520] sm:$0xff]
        %v3478 = vld [vmem:[%s3312 + $0x528] sm:$0xff]
        %v3479 = vld [vmem:[%s3312 + $0x530] sm:$0xff]
        %v3480 = vld [vmem:[%s3312 + $0x538] sm:$0xff]
        %v3481 = vld [vmem:[%s3312 + $0x540] sm:$0xff]
        %v3482 = vld [vmem:[%s3312 + $0x548] sm:$0xff]
        %v3483 = vld [vmem:[%s3312 + $0x550] sm:$0xff]
        %v3484 = vld [vmem:[%s3312 + $0x558] sm:$0xff]
        %v3485 = vld [vmem:[%s3312 + $0x560] sm:$0xff]
        %v3486 = vld [vmem:[%s3312 + $0x568] sm:$0xff]
        %v3487 = vld [vmem:[%s3312 + $0x570] sm:$0xff]
        %v3488 = vld [vmem:[%s3312 + $0x578] sm:$0xff]
        %v3489 = vld [vmem:[%s3312 + $0x580] sm:$0xff]
        %v3490 = vld [vmem:[%s3312 + $0x588] sm:$0xff]
        %v3491 = vld [vmem:[%s3312 + $0x590] sm:$0xff]
        %v3492 = vld [vmem:[%s3312 + $0x598] sm:$0xff]
        %v3493 = vld [vmem:[%s3312 + $0x5a0] sm:$0xff]
        %v3494 = vld [vmem:[%s3312 + $0x5a8] sm:$0xff]
        %v3495 = vld [vmem:[%s3312 + $0x5b0] sm:$0xff]
        %v3496 = vld [vmem:[%s3312 + $0x5b8] sm:$0xff]
        %v3497 = vld [vmem:[%s3312 + $0x5c0] sm:$0xff]
        %v3498 = vld [vmem:[%s3312 + $0x5c8] sm:$0xff]
        %v3499 = vld [vmem:[%s3312 + $0x5d0] sm:$0xff]
        %v3500 = vld [vmem:[%s3312 + $0x5d8] sm:$0xff]
        %v3501 = vld [vmem:[%s3312 + $0x5e0] sm:$0xff]
        %v3502 = vld [vmem:[%s3312 + $0x5e8] sm:$0xff]
        %v3503 = vld [vmem:[%s3312 + $0x5f0] sm:$0xff]
        %v3504 = vld [vmem:[%s3312 + $0x5f8] sm:$0xff]
        %v3505 = vld [vmem:[%s3312 + $0x600] sm:$0xff]
        %v3506 = vld [vmem:[%s3312 + $0x608] sm:$0xff]
        %v3507 = vld [vmem:[%s3312 + $0x610] sm:$0xff]
        %v3508 = vld [vmem:[%s3312 + $0x618] sm:$0xff]
        %v3509 = vld [vmem:[%s3312 + $0x620] sm:$0xff]
        %v3510 = vld [vmem:[%s3312 + $0x628] sm:$0xff]
        %v3511 = vld [vmem:[%s3312 + $0x630] sm:$0xff]
        %v3512 = vld [vmem:[%s3312 + $0x638] sm:$0xff]
        %v3513 = vld [vmem:[%s3312 + $0x640] sm:$0xff]
        %v3514 = vld [vmem:[%s3312 + $0x648] sm:$0xff]
        %v3515 = vld [vmem:[%s3312 + $0x650] sm:$0xff]
        %v3516 = vld [vmem:[%s3312 + $0x658] sm:$0xff]
        %v3517 = vld [vmem:[%s3312 + $0x660] sm:$0xff]
        %v3518 = vld [vmem:[%s3312 + $0x668] sm:$0xff]
        %v3519 = vld [vmem:[%s3312 + $0x670] sm:$0xff]
        %v3520 = vld [vmem:[%s3312 + $0x678] sm:$0xff]
        %v3521 = vld [vmem:[%s3312 + $0x680] sm:$0xff]
        %v3522 = vld [vmem:[%s3312 + $0x688] sm:$0xff]
        %v3523 = vld [vmem:[%s3312 + $0x690] sm:$0xff]
        %v3524 = vld [vmem:[%s3312 + $0x698] sm:$0xff]
        %v3525 = vld [vmem:[%s3312 + $0x6a0] sm:$0xff]
        %v3526 = vld [vmem:[%s3312 + $0x6a8] sm:$0xff]
        %v3527 = vld [vmem:[%s3312 + $0x6b0] sm:$0xff]
        %v3528 = vld [vmem:[%s3312 + $0x6b8] sm:$0xff]
        %v3529 = vld [vmem:[%s3312 + $0x6c0] sm:$0xff]
        %v3530 = vld [vmem:[%s3312 + $0x6c8] sm:$0xff]
        %v3531 = vld [vmem:[%s3312 + $0x6d0] sm:$0xff]
        %v3532 = vld [vmem:[%s3312 + $0x6d8] sm:$0xff]
        %v3533 = vld [vmem:[%s3312 + $0x6e0] sm:$0xff]
        %v3534 = vld [vmem:[%s3312 + $0x6e8] sm:$0xff]
        %v3535 = vld [vmem:[%s3312 + $0x6f0] sm:$0xff]
        %v3536 = vld [vmem:[%s3312 + $0x6f8] sm:$0xff]
        %v3537 = vld [vmem:[%s3312 + $0x700] sm:$0xff]
        %v3538 = vld [vmem:[%s3312 + $0x708] sm:$0xff]
        %v3539 = vld [vmem:[%s3312 + $0x710] sm:$0xff]
        %v3540 = vld [vmem:[%s3312 + $0x718] sm:$0xff]
        %v3541 = vld [vmem:[%s3312 + $0x720] sm:$0xff]
        %v3542 = vld [vmem:[%s3312 + $0x728] sm:$0xff]
        %v3543 = vld [vmem:[%s3312 + $0x730] sm:$0xff]
        %v3544 = vld [vmem:[%s3312 + $0x738] sm:$0xff]
        %v3545 = vld [vmem:[%s3312 + $0x740] sm:$0xff]
        %v3546 = vld [vmem:[%s3312 + $0x748] sm:$0xff]
        %v3547 = vld [vmem:[%s3312 + $0x750] sm:$0xff]
        %v3548 = vld [vmem:[%s3312 + $0x758] sm:$0xff]
        %v3549 = vld [vmem:[%s3312 + $0x760] sm:$0xff]
        %v3550 = vld [vmem:[%s3312 + $0x768] sm:$0xff]
        %v3551 = vld [vmem:[%s3312 + $0x770] sm:$0xff]
        %v3552 = vld [vmem:[%s3312 + $0x778] sm:$0xff]
        %v3553 = vld [vmem:[%s3312 + $0x780] sm:$0xff]
        %v3554 = vld [vmem:[%s3312 + $0x788] sm:$0xff]
        %v3555 = vld [vmem:[%s3312 + $0x790] sm:$0xff]
        %v3556 = vld [vmem:[%s3312 + $0x798] sm:$0xff]
        %v3557 = vld [vmem:[%s3312 + $0x7a0] sm:$0xff]
        %v3558 = vld [vmem:[%s3312 + $0x7a8] sm:$0xff]
        %v3559 = vld [vmem:[%s3312 + $0x7b0] sm:$0xff]
        %v3560 = vld [vmem:[%s3312 + $0x7b8] sm:$0xff]
        %v3561 = vld [vmem:[%s3312 + $0x7c0] sm:$0xff]
        %v3562 = vld [vmem:[%s3312 + $0x7c8] sm:$0xff]
        %v3563 = vld [vmem:[%s3312 + $0x7d0] sm:$0xff]
        %v3564 = vld [vmem:[%s3312 + $0x7d8] sm:$0xff]
        %v3565 = vld [vmem:[%s3312 + $0x7e0] sm:$0xff]
        %v3566 = vld [vmem:[%s3312 + $0x7e8] sm:$0xff]
        %v3567 = vld [vmem:[%s3312 + $0x7f0] sm:$0xff]
        %v3568 = vld [vmem:[%s3312 + $0x7f8] sm:$0xff]
        %v3569 = vld [vmem:[%s3312 + $0x800] sm:$0xff]
        %v3570 = vld [vmem:[%s3312 + $0x808] sm:$0xff]
        %v3571 = vld [vmem:[%s3312 + $0x810] sm:$0xff]
        %v3572 = vld [vmem:[%s3312 + $0x818] sm:$0xff]
        %v3573 = vld [vmem:[%s3312 + $0x820] sm:$0xff]
        %v3574 = vld [vmem:[%s3312 + $0x828] sm:$0xff]
        %v3575 = vld [vmem:[%s3312 + $0x830] sm:$0xff]
        %v3576 = vld [vmem:[%s3312 + $0x838] sm:$0xff]
        %v3577 = vld [vmem:[%s3312 + $0x840] sm:$0xff]
        %v3578 = vld [vmem:[%s3312 + $0x848] sm:$0xff]
        %v3579 = vld [vmem:[%s3312 + $0x850] sm:$0xff]
        %v3580 = vld [vmem:[%s3312 + $0x858] sm:$0xff]
        %v3581 = vld [vmem:[%s3312 + $0x860] sm:$0xff]
        %v3582 = vld [vmem:[%s3312 + $0x868] sm:$0xff]
        %v3583 = vld [vmem:[%s3312 + $0x870] sm:$0xff]
        %v3584 = vld [vmem:[%s3312 + $0x878] sm:$0xff]
        %v3585 = vld [vmem:[%s3312 + $0x880] sm:$0xff]
        %v3586 = vld [vmem:[%s3312 + $0x888] sm:$0xff]
        %v3587 = vld [vmem:[%s3312 + $0x890] sm:$0xff]
        %v3588 = vld [vmem:[%s3312 + $0x898] sm:$0xff]
        %v3589 = vld [vmem:[%s3312 + $0x8a0] sm:$0xff]
        %v3590 = vld [vmem:[%s3312 + $0x8a8] sm:$0xff]
        %v3591 = vld [vmem:[%s3312 + $0x8b0] sm:$0xff]
        %v3592 = vld [vmem:[%s3312 + $0x8b8] sm:$0xff]
        %v3593 = vld [vmem:[%s3312 + $0x8c0] sm:$0xff]
        %v3594 = vld [vmem:[%s3312 + $0x8c8] sm:$0xff]
        %v3595 = vld [vmem:[%s3312 + $0x8d0] sm:$0xff]
        %v3596 = vld [vmem:[%s3312 + $0x8d8] sm:$0xff]
        %v3597 = vld [vmem:[%s3312 + $0x8e0] sm:$0xff]
        %v3598 = vld [vmem:[%s3312 + $0x8e8] sm:$0xff]
        %v3599 = vld [vmem:[%s3312 + $0x8f0] sm:$0xff]
        %v3600 = vld [vmem:[%s3312 + $0x8f8] sm:$0xff]
        %v3601 = vld [vmem:[%s3312 + $0x900] sm:$0xff]
        %v3602 = vld [vmem:[%s3312 + $0x908] sm:$0xff]
        %v3603 = vld [vmem:[%s3312 + $0x910] sm:$0xff]
        %v3604 = vld [vmem:[%s3312 + $0x918] sm:$0xff]
        %v3605 = vld [vmem:[%s3312 + $0x920] sm:$0xff]
        %v3606 = vld [vmem:[%s3312 + $0x928] sm:$0xff]
        %v3607 = vld [vmem:[%s3312 + $0x930] sm:$0xff]
        %v3608 = vld [vmem:[%s3312 + $0x938] sm:$0xff]
        %v3609 = vld [vmem:[%s3312 + $0x940] sm:$0xff]
        %v3610 = vld [vmem:[%s3312 + $0x948] sm:$0xff]
        %v3611 = vld [vmem:[%s3312 + $0x950] sm:$0xff]
        %v3612 = vld [vmem:[%s3312 + $0x958] sm:$0xff]
        %v3613 = vld [vmem:[%s3312 + $0x960] sm:$0xff]
        %v3614 = vld [vmem:[%s3312 + $0x968] sm:$0xff]
        %v3615 = vld [vmem:[%s3312 + $0x970] sm:$0xff]
        %v3616 = vld [vmem:[%s3312 + $0x978] sm:$0xff]
        %v3617 = vld [vmem:[%s3312 + $0x980] sm:$0xff]
        %v3618 = vld [vmem:[%s3312 + $0x988] sm:$0xff]
        %v3619 = vld [vmem:[%s3312 + $0x990] sm:$0xff]
        %v3620 = vld [vmem:[%s3312 + $0x998] sm:$0xff]
        %v3621 = vld [vmem:[%s3312 + $0x9a0] sm:$0xff]
        %v3622 = vld [vmem:[%s3312 + $0x9a8] sm:$0xff]
        %v3623 = vld [vmem:[%s3312 + $0x9b0] sm:$0xff]
        %v3624 = vld [vmem:[%s3312 + $0x9b8] sm:$0xff]
        %v3625 = vld [vmem:[%s3312 + $0x9c0] sm:$0xff]
        %v3626 = vld [vmem:[%s3312 + $0x9c8] sm:$0xff]
        %v3627 = vld [vmem:[%s3312 + $0x9d0] sm:$0xff]
        %v3628 = vld [vmem:[%s3312 + $0x9d8] sm:$0xff]
        %v3629 = vld [vmem:[%s3312 + $0x9e0] sm:$0xff]
        %v3630 = vld [vmem:[%s3312 + $0x9e8] sm:$0xff]
        %v3631 = vld [vmem:[%s3312 + $0x9f0] sm:$0xff]
        %v3632 = vld [vmem:[%s3312 + $0x9f8] sm:$0xff]
        %3633 = vmatprep.subr.mxu0 %v3314
        %3634 = vmatpush1.msra.mxu0 %v3313
        %3635 = vmatprep.subr.mxu0 %v3316
        %3636 = vmatpush1.msra.mxu0 %v3315
        %3637 = vmatprep.subr.mxu0 %v3318
        %3638 = vmatpush1.msra.mxu0 %v3317
        %3639 = vmatprep.subr.mxu0 %v3320
        %3640 = vmatpush1.msra.mxu0 %v3319
        %3641 = vmatprep.subr.mxu0 %v3322
        %3642 = vmatpush1.msra.mxu0 %v3321
        %3643 = vmatprep.subr.mxu0 %v3324
        %3644 = vmatpush1.msra.mxu0 %v3323
        %3645 = vmatprep.subr.mxu0 %v3326
        %3646 = vmatpush1.msra.mxu0 %v3325
        %3647 = vmatprep.subr.mxu0 %v3328
        %3648 = vmatpush1.msra.mxu0 %v3327
        %3649 = vmatprep.subr.mxu0 %v3330
        %3650 = vmatpush1.msra.mxu0 %v3329
        %3651 = vmatprep.subr.mxu0 %v3332
        %3652 = vmatpush1.msra.mxu0 %v3331
        %3653 = vmatprep.subr.mxu0 %v3334
        %3654 = vmatpush1.msra.mxu0 %v3333
        %3655 = vmatprep.subr.mxu0 %v3336
        %3656 = vmatpush1.msra.mxu0 %v3335
        %3657 = vmatprep.subr.mxu0 %v3338
        %3658 = vmatpush1.msra.mxu0 %v3337
        %3659 = vmatprep.subr.mxu0 %v3340
        %3660 = vmatpush1.msra.mxu0 %v3339
        %3661 = vmatprep.subr.mxu0 %v3342
        %3662 = vmatpush1.msra.mxu0 %v3341
        %3663 = vmatprep.subr.mxu0 %v3344
        %3664 = vmatpush1.msra.mxu0 %v3343
        %3665 = vmatprep.subr.mxu0 %v3346
        %3666 = vmatpush1.msra.mxu0 %v3345
        %3667 = vmatprep.subr.mxu0 %v3348
        %3668 = vmatpush1.msra.mxu0 %v3347
        %3669 = vmatprep.subr.mxu0 %v3350
        %3670 = vmatpush1.msra.mxu0 %v3349
        %3671 = vmatprep.subr.mxu0 %v3352
        %3672 = vmatpush1.msra.mxu0 %v3351
        %3673 = vmatprep.subr.mxu0 %v3354
        %3674 = vmatpush1.msra.mxu0 %v3353
        %3675 = vmatprep.subr.mxu0 %v3356
        %3676 = vmatpush1.msra.mxu0 %v3355
        %3677 = vmatprep.subr.mxu0 %v3358
        %3678 = vmatpush1.msra.mxu0 %v3357
        %3679 = vmatprep.subr.mxu0 %v3360
        %3680 = vmatpush1.msra.mxu0 %v3359
        %3681 = vmatprep.subr.mxu0 %v3362
        %3682 = vmatpush1.msra.mxu0 %v3361
        %3683 = vmatprep.subr.mxu0 %v3364
        %3684 = vmatpush1.msra.mxu0 %v3363
        %3685 = vmatprep.subr.mxu0 %v3366
        %3686 = vmatpush1.msra.mxu0 %v3365
        %3687 = vmatprep.subr.mxu0 %v3368
        %3688 = vmatpush1.msra.mxu0 %v3367
        %3689 = vmatprep.subr.mxu0 %v3370
        %3690 = vmatpush1.msra.mxu0 %v3369
        %3691 = vmatprep.subr.mxu0 %v3372
        %3692 = vmatpush1.msra.mxu0 %v3371
        %3693 = vmatprep.subr.mxu0 %v3374
        %3694 = vmatpush1.msra.mxu0 %v3373
        %3695 = vmatprep.subr.mxu0 %v3376
        %3696 = vmatpush1.msra.mxu0 %v3375
        %3697 = vmatprep.mubr.f32.mxu0 %v3167
        %3698 = vmatmul.mubr.f32.gmra.mrb[0].mxu0 %v3166
        %v3699 = vpop.f32.mrb[0].mxu0
        %v3700 = vpop.f32.mrb[0].mxu0
        %3701 = vmatprep.mubr.f32.mxu0 %v3125
        %3702 = vmatmul.mubr.f32.gmra.mrb[0].mxu0 %v3123
        %v3703 = vpop.f32.mrb[0].mxu0
        %v3704 = vadd.f32 0.0, %v3703
        %v3705 = vpop.f32.mrb[0].mxu0
        %v3706 = vadd.f32 0.0, %v3705
        %3707 = vmatprep.mubr.f32.mxu0 %v3129
        %3708 = vmatmul.mubr.f32.gmra.mrb[0].mxu0 %v3127
        %v3709 = vpop.f32.mrb[0].mxu0
        %v3710 = vadd.f32 0.0, %v3709
        %v3711 = vpop.f32.mrb[0].mxu0
        %v3712 = vadd.f32 0.0, %v3711
        %3713 = vmatprep.mubr.f32.mxu0 %v3133
        %3714 = vmatmul.mubr.f32.gmra.mrb[0].mxu0 %v3131
        %v3715 = vpop.f32.mrb[0].mxu0
        %v3716 = vpop.f32.mrb[0].mxu0
        %3717 = vmatprep.mubr.f32.mxu0 %v3137
        %3718 = vmatmul.mubr.f32.gmra.mrb[0].mxu0 %v3135
        %v3719 = vpop.f32.mrb[0].mxu0
        %v3720 = vpop.f32.mrb[0].mxu0
        %3721 = vmatprep.mubr.f32.mxu0 %v3141
        %3722 = vmatmul.mubr.f32.gmra.mrb[0].mxu0 %v3139
        %v3723 = vpop.f32.mrb[0].mxu0
        %v3724 = vadd.f32 0.0, %v3723
        %v3725 = vpop.f32.mrb[0].mxu0
        %v3726 = vadd.f32 0.0, %v3725
        %3727 = vmatprep.mubr.f32.mxu0 %v3145
        %3728 = vmatmul.mubr.f32.gmra.mrb[0].mxu0 %v3143
        %v3729 = vpop.f32.mrb[0].mxu0
        %v3730 = vadd.f32 0.0, %v3729
        %v3731 = vpop.f32.mrb[0].mxu0
        %v3732 = vadd.f32 0.0, %v3731
        %3733 = vmatprep.mubr.f32.mxu0 %v3149
        %3734 = vmatmul.mubr.f32.gmra.mrb[0].mxu0 %v3147
        %v3735 = vpop.f32.mrb[0].mxu0
        %v3736 = vpop.f32.mrb[0].mxu0
        %3737 = vdwg.mxu0
        %3738 = vmatprep.subr.mxu0 %v3378
        %3739 = vmatpush1.msra.mxu0 %v3377
        %3740 = vmatprep.subr.mxu0 %v3380
        %3741 = vmatpush1.msra.mxu0 %v3379
        %3742 = vmatprep.subr.mxu0 %v3382
        %3743 = vmatpush1.msra.mxu0 %v3381
        %3744 = vmatprep.subr.mxu0 %v3384
        %3745 = vmatpush1.msra.mxu0 %v3383
        %3746 = vmatprep.subr.mxu0 %v3386
        %3747 = vmatpush1.msra.mxu0 %v3385
        %3748 = vmatprep.subr.mxu0 %v3388
        %3749 = vmatpush1.msra.mxu0 %v3387
        %3750 = vmatprep.subr.mxu0 %v3390
        %3751 = vmatpush1.msra.mxu0 %v3389
        %3752 = vmatprep.subr.mxu0 %v3392
        %3753 = vmatpush1.msra.mxu0 %v3391
        %3754 = vmatprep.subr.mxu0 %v3394
        %3755 = vmatpush1.msra.mxu0 %v3393
        %3756 = vmatprep.subr.mxu0 %v3396
        %3757 = vmatpush1.msra.mxu0 %v3395
        %3758 = vmatprep.subr.mxu0 %v3398
        %3759 = vmatpush1.msra.mxu0 %v3397
        %3760 = vmatprep.subr.mxu0 %v3400
        %3761 = vmatpush1.msra.mxu0 %v3399
        %3762 = vmatprep.subr.mxu0 %v3402
        %3763 = vmatpush1.msra.mxu0 %v3401
        %3764 = vmatprep.subr.mxu0 %v3404
        %3765 = vmatpush1.msra.mxu0 %v3403
        %3766 = vmatprep.subr.mxu0 %v3406
        %3767 = vmatpush1.msra.mxu0 %v3405
        %3768 = vmatprep.subr.mxu0 %v3408
        %3769 = vmatpush1.msra.mxu0 %v3407
        %3770 = vmatprep.subr.mxu0 %v3410
        %3771 = vmatpush1.msra.mxu0 %v3409
        %3772 = vmatprep.subr.mxu0 %v3412
        %3773 = vmatpush1.msra.mxu0 %v3411
        %3774 = vmatprep.subr.mxu0 %v3414
        %3775 = vmatpush1.msra.mxu0 %v3413
        %3776 = vmatprep.subr.mxu0 %v3416
        %3777 = vmatpush1.msra.mxu0 %v3415
        %3778 = vmatprep.subr.mxu0 %v3418
        %3779 = vmatpush1.msra.mxu0 %v3417
        %3780 = vmatprep.subr.mxu0 %v3420
        %3781 = vmatpush1.msra.mxu0 %v3419
        %3782 = vmatprep.subr.mxu0 %v3422
        %3783 = vmatpush1.msra.mxu0 %v3421
        %3784 = vmatprep.subr.mxu0 %v3424
        %3785 = vmatpush1.msra.mxu0 %v3423
        %3786 = vmatprep.subr.mxu0 %v3426
        %3787 = vmatpush1.msra.mxu0 %v3425
        %3788 = vmatprep.subr.mxu0 %v3428
        %3789 = vmatpush1.msra.mxu0 %v3427
        %3790 = vmatprep.subr.mxu0 %v3430
        %3791 = vmatpush1.msra.mxu0 %v3429
        %3792 = vmatprep.subr.mxu0 %v3432
        %3793 = vmatpush1.msra.mxu0 %v3431
        %3794 = vmatprep.subr.mxu0 %v3434
        %3795 = vmatpush1.msra.mxu0 %v3433
        %3796 = vmatprep.subr.mxu0 %v3436
        %3797 = vmatpush1.msra.mxu0 %v3435
        %3798 = vmatprep.subr.mxu0 %v3438
        %3799 = vmatpush1.msra.mxu0 %v3437
        %3800 = vmatprep.subr.mxu0 %v3440
        %3801 = vmatpush1.msra.mxu0 %v3439
        %3802 = vmatprep.mubr.f32.mxu0 %v3215
        %3803 = vmatmul.mubr.f32.gmra.mrb[0].mxu0 %v3214
        %v3804 = vpop.f32.mrb[0].mxu0
        %v3805 = vpop.f32.mrb[0].mxu0
        %3806 = vmatprep.mubr.f32.mxu0 %v3173
        %3807 = vmatmul.mubr.f32.gmra.mrb[0].mxu0 %v3171
        %v3808 = vpop.f32.mrb[0].mxu0
        %v3809 = vadd.f32 %v3704, %v3808
        %v3810 = vpop.f32.mrb[0].mxu0
        %v3811 = vadd.f32 %v3706, %v3810
        %3812 = vmatprep.mubr.f32.mxu0 %v3177
        %3813 = vmatmul.mubr.f32.gmra.mrb[0].mxu0 %v3175
        %v3814 = vpop.f32.mrb[0].mxu0
        %v3815 = vadd.f32 %v3710, %v3814
        %v3816 = vpop.f32.mrb[0].mxu0
        %v3817 = vadd.f32 %v3712, %v3816
        %3818 = vmatprep.mubr.f32.mxu0 %v3181
        %3819 = vmatmul.mubr.f32.gmra.mrb[0].mxu0 %v3179
        %v3820 = vpop.f32.mrb[0].mxu0
        %v3821 = vpop.f32.mrb[0].mxu0
        %3822 = vmatprep.mubr.f32.mxu0 %v3185
        %3823 = vmatmul.mubr.f32.gmra.mrb[0].mxu0 %v3183
        %v3824 = vpop.f32.mrb[0].mxu0
        %v3825 = vpop.f32.mrb[0].mxu0
        %3826 = vmatprep.mubr.f32.mxu0 %v3189
        %3827 = vmatmul.mubr.f32.gmra.mrb[0].mxu0 %v3187
        %v3828 = vpop.f32.mrb[0].mxu0
        %v3829 = vadd.f32 %v3724, %v3828
        %v3830 = vpop.f32.mrb[0].mxu0
        %v3831 = vadd.f32 %v3726, %v3830
        %3832 = vmatprep.mubr.f32.mxu0 %v3193
        %3833 = vmatmul.mubr.f32.gmra.mrb[0].mxu0 %v3191
        %v3834 = vpop.f32.mrb[0].mxu0
        %v3835 = vadd.f32 %v3730, %v3834
        %v3836 = vpop.f32.mrb[0].mxu0
        %v3837 = vadd.f32 %v3732, %v3836
        %3838 = vmatprep.mubr.f32.mxu0 %v3197
        %3839 = vmatmul.mubr.f32.gmra.mrb[0].mxu0 %v3195
        %v3840 = vpop.f32.mrb[0].mxu0
        %v3841 = vpop.f32.mrb[0].mxu0
        %3842 = vdwg.mxu0
        %3843 = vmatprep.subr.mxu0 %v3442
        %3844 = vmatpush1.msra.mxu0 %v3441
        %3845 = vmatprep.subr.mxu0 %v3444
        %3846 = vmatpush1.msra.mxu0 %v3443
        %3847 = vmatprep.subr.mxu0 %v3446
        %3848 = vmatpush1.msra.mxu0 %v3445
        %3849 = vmatprep.subr.mxu0 %v3448
        %3850 = vmatpush1.msra.mxu0 %v3447
        %3851 = vmatprep.subr.mxu0 %v3450
        %3852 = vmatpush1.msra.mxu0 %v3449
        %3853 = vmatprep.subr.mxu0 %v3452
        %3854 = vmatpush1.msra.mxu0 %v3451
        %3855 = vmatprep.subr.mxu0 %v3454
        %3856 = vmatpush1.msra.mxu0 %v3453
        %3857 = vmatprep.subr.mxu0 %v3456
        %3858 = vmatpush1.msra.mxu0 %v3455
        %3859 = vmatprep.subr.mxu0 %v3458
        %3860 = vmatpush1.msra.mxu0 %v3457
        %3861 = vmatprep.subr.mxu0 %v3460
        %3862 = vmatpush1.msra.mxu0 %v3459
        %3863 = vmatprep.subr.mxu0 %v3462
        %3864 = vmatpush1.msra.mxu0 %v3461
        %3865 = vmatprep.subr.mxu0 %v3464
        %3866 = vmatpush1.msra.mxu0 %v3463
        %3867 = vmatprep.subr.mxu0 %v3466
        %3868 = vmatpush1.msra.mxu0 %v3465
        %3869 = vmatprep.subr.mxu0 %v3468
        %3870 = vmatpush1.msra.mxu0 %v3467
        %3871 = vmatprep.subr.mxu0 %v3470
        %3872 = vmatpush1.msra.mxu0 %v3469
        %3873 = vmatprep.subr.mxu0 %v3472
        %3874 = vmatpush1.msra.mxu0 %v3471
        %3875 = vmatprep.subr.mxu0 %v3474
        %3876 = vmatpush1.msra.mxu0 %v3473
        %3877 = vmatprep.subr.mxu0 %v3476
        %3878 = vmatpush1.msra.mxu0 %v3475
        %3879 = vmatprep.subr.mxu0 %v3478
        %3880 = vmatpush1.msra.mxu0 %v3477
        %3881 = vmatprep.subr.mxu0 %v3480
        %3882 = vmatpush1.msra.mxu0 %v3479
        %3883 = vmatprep.subr.mxu0 %v3482
        %3884 = vmatpush1.msra.mxu0 %v3481
        %3885 = vmatprep.subr.mxu0 %v3484
        %3886 = vmatpush1.msra.mxu0 %v3483
        %3887 = vmatprep.subr.mxu0 %v3486
        %3888 = vmatpush1.msra.mxu0 %v3485
        %3889 = vmatprep.subr.mxu0 %v3488
        %3890 = vmatpush1.msra.mxu0 %v3487
        %3891 = vmatprep.subr.mxu0 %v3490
        %3892 = vmatpush1.msra.mxu0 %v3489
        %3893 = vmatprep.subr.mxu0 %v3492
        %3894 = vmatpush1.msra.mxu0 %v3491
        %3895 = vmatprep.subr.mxu0 %v3494
        %3896 = vmatpush1.msra.mxu0 %v3493
        %3897 = vmatprep.subr.mxu0 %v3496
        %3898 = vmatpush1.msra.mxu0 %v3495
        %3899 = vmatprep.subr.mxu0 %v3498
        %3900 = vmatpush1.msra.mxu0 %v3497
        %3901 = vmatprep.subr.mxu0 %v3500
        %3902 = vmatpush1.msra.mxu0 %v3499
        %3903 = vmatprep.subr.mxu0 %v3502
        %3904 = vmatpush1.msra.mxu0 %v3501
        %3905 = vmatprep.subr.mxu0 %v3504
        %3906 = vmatpush1.msra.mxu0 %v3503
        %3907 = vmatprep.mubr.f32.mxu0 %v3089
        %3908 = vmatmul.mubr.f32.gmra.mrb[0].mxu0 %v3088
        %v3909 = vpop.f32.mrb[0].mxu0
        %v3910 = vpop.f32.mrb[0].mxu0
        %3911 = vmatprep.mubr.f32.mxu0 %v3091
        %3912 = vmatmul.mubr.f32.gmra.mrb[0].mxu0 %v3090
        %v3913 = vpop.f32.mrb[0].mxu0
        %v3914 = vadd.f32 %v3809, %v3913
        %v3915 = vpop.f32.mrb[0].mxu0
        %v3916 = vadd.f32 %v3811, %v3915
        %3917 = vmatprep.mubr.f32.mxu0 %v3093
        %3918 = vmatmul.mubr.f32.gmra.mrb[0].mxu0 %v3092
        %v3919 = vpop.f32.mrb[0].mxu0
        %v3920 = vadd.f32 %v3815, %v3919
        %v3921 = vpop.f32.mrb[0].mxu0
        %v3922 = vadd.f32 %v3817, %v3921
        %3923 = vmatprep.mubr.f32.mxu0 %v3095
        %3924 = vmatmul.mubr.f32.gmra.mrb[0].mxu0 %v3094
        %v3925 = vpop.f32.mrb[0].mxu0
        %v3926 = vpop.f32.mrb[0].mxu0
        %3927 = vmatprep.mubr.f32.mxu0 %v3097
        %3928 = vmatmul.mubr.f32.gmra.mrb[0].mxu0 %v3096
        %v3929 = vpop.f32.mrb[0].mxu0
        %v3930 = vpop.f32.mrb[0].mxu0
        %3931 = vmatprep.mubr.f32.mxu0 %v3099
        %3932 = vmatmul.mubr.f32.gmra.mrb[0].mxu0 %v3098
        %v3933 = vpop.f32.mrb[0].mxu0
        %v3934 = vadd.f32 %v3829, %v3933
        %v3935 = vpop.f32.mrb[0].mxu0
        %v3936 = vadd.f32 %v3831, %v3935
        %3937 = vmatprep.mubr.f32.mxu0 %v3101
        %3938 = vmatmul.mubr.f32.gmra.mrb[0].mxu0 %v3100
        %v3939 = vpop.f32.mrb[0].mxu0
        %v3940 = vadd.f32 %v3835, %v3939
        %v3941 = vpop.f32.mrb[0].mxu0
        %v3942 = vadd.f32 %v3837, %v3941
        %3943 = vmatprep.mubr.f32.mxu0 %v3103
        %3944 = vmatmul.mubr.f32.gmra.mrb[0].mxu0 %v3102
        %v3945 = vpop.f32.mrb[0].mxu0
        %v3946 = vpop.f32.mrb[0].mxu0
        %3947 = vdwg.mxu0
        %3948 = vmatprep.subr.mxu0 %v3506
        %3949 = vmatpush1.msra.mxu0 %v3505
        %3950 = vmatprep.subr.mxu0 %v3508
        %3951 = vmatpush1.msra.mxu0 %v3507
        %3952 = vmatprep.subr.mxu0 %v3510
        %3953 = vmatpush1.msra.mxu0 %v3509
        %3954 = vmatprep.subr.mxu0 %v3512
        %3955 = vmatpush1.msra.mxu0 %v3511
        %3956 = vmatprep.subr.mxu0 %v3514
        %3957 = vmatpush1.msra.mxu0 %v3513
        %3958 = vmatprep.subr.mxu0 %v3516
        %3959 = vmatpush1.msra.mxu0 %v3515
        %3960 = vmatprep.subr.mxu0 %v3518
        %3961 = vmatpush1.msra.mxu0 %v3517
        %3962 = vmatprep.subr.mxu0 %v3520
        %3963 = vmatpush1.msra.mxu0 %v3519
        %3964 = vmatprep.subr.mxu0 %v3522
        %3965 = vmatpush1.msra.mxu0 %v3521
        %3966 = vmatprep.subr.mxu0 %v3524
        %3967 = vmatpush1.msra.mxu0 %v3523
        %3968 = vmatprep.subr.mxu0 %v3526
        %3969 = vmatpush1.msra.mxu0 %v3525
        %3970 = vmatprep.subr.mxu0 %v3528
        %3971 = vmatpush1.msra.mxu0 %v3527
        %3972 = vmatprep.subr.mxu0 %v3530
        %3973 = vmatpush1.msra.mxu0 %v3529
        %3974 = vmatprep.subr.mxu0 %v3532
        %3975 = vmatpush1.msra.mxu0 %v3531
        %3976 = vmatprep.subr.mxu0 %v3534
        %3977 = vmatpush1.msra.mxu0 %v3533
        %3978 = vmatprep.subr.mxu0 %v3536
        %3979 = vmatpush1.msra.mxu0 %v3535
        %3980 = vmatprep.subr.mxu0 %v3538
        %3981 = vmatpush1.msra.mxu0 %v3537
        %3982 = vmatprep.subr.mxu0 %v3540
        %3983 = vmatpush1.msra.mxu0 %v3539
        %3984 = vmatprep.subr.mxu0 %v3542
        %3985 = vmatpush1.msra.mxu0 %v3541
        %3986 = vmatprep.subr.mxu0 %v3544
        %3987 = vmatpush1.msra.mxu0 %v3543
        %3988 = vmatprep.subr.mxu0 %v3546
        %3989 = vmatpush1.msra.mxu0 %v3545
        %3990 = vmatprep.subr.mxu0 %v3548
        %3991 = vmatpush1.msra.mxu0 %v3547
        %3992 = vmatprep.subr.mxu0 %v3550
        %3993 = vmatpush1.msra.mxu0 %v3549
        %3994 = vmatprep.subr.mxu0 %v3552
        %3995 = vmatpush1.msra.mxu0 %v3551
        %3996 = vmatprep.subr.mxu0 %v3554
        %3997 = vmatpush1.msra.mxu0 %v3553
        %3998 = vmatprep.subr.mxu0 %v3556
        %3999 = vmatpush1.msra.mxu0 %v3555
        %4000 = vmatprep.subr.mxu0 %v3558
        %4001 = vmatpush1.msra.mxu0 %v3557
        %4002 = vmatprep.subr.mxu0 %v3560
        %4003 = vmatpush1.msra.mxu0 %v3559
        %4004 = vmatprep.subr.mxu0 %v3562
        %4005 = vmatpush1.msra.mxu0 %v3561
        %4006 = vmatprep.subr.mxu0 %v3564
        %4007 = vmatpush1.msra.mxu0 %v3563
        %4008 = vmatprep.subr.mxu0 %v3566
        %4009 = vmatpush1.msra.mxu0 %v3565
        %4010 = vmatprep.subr.mxu0 %v3568
        %4011 = vmatpush1.msra.mxu0 %v3567
        %4012 = vmatprep.mubr.f32.mxu0 %v3221
        %4013 = vmatmul.mubr.f32.gmra.mrb[0].mxu0 %v3218
        %v4014 = vpop.f32.mrb[0].mxu0
        %v4015 = vpop.f32.mrb[0].mxu0
        %4016 = vmatprep.mubr.f32.mxu0 %v3225
        %4017 = vmatmul.mubr.f32.gmra.mrb[0].mxu0 %v3223
        %v4018 = vpop.f32.mrb[0].mxu0
        %v4019 = vadd.f32 %v3914, %v4018
        %v4020 = vpop.f32.mrb[0].mxu0
        %v4021 = vadd.f32 %v3916, %v4020
        %4022 = vmatprep.mubr.f32.mxu0 %v3229
        %4023 = vmatmul.mubr.f32.gmra.mrb[0].mxu0 %v3227
        %v4024 = vpop.f32.mrb[0].mxu0
        %v4025 = vadd.f32 %v3920, %v4024
        %v4026 = vpop.f32.mrb[0].mxu0
        %v4027 = vadd.f32 %v3922, %v4026
        %4028 = vmatprep.mubr.f32.mxu0 %v3233
        %4029 = vmatmul.mubr.f32.gmra.mrb[0].mxu0 %v3231
        %v4030 = vpop.f32.mrb[0].mxu0
        %v4031 = vpop.f32.mrb[0].mxu0
        %4032 = vmatprep.mubr.f32.mxu0 %v3237
        %4033 = vmatmul.mubr.f32.gmra.mrb[0].mxu0 %v3235
        %v4034 = vpop.f32.mrb[0].mxu0
        %v4035 = vpop.f32.mrb[0].mxu0
        %4036 = vmatprep.mubr.f32.mxu0 %v3241
        %4037 = vmatmul.mubr.f32.gmra.mrb[0].mxu0 %v3239
        %v4038 = vpop.f32.mrb[0].mxu0
        %v4039 = vadd.f32 %v3934, %v4038
        %v4040 = vpop.f32.mrb[0].mxu0
        %v4041 = vadd.f32 %v3936, %v4040
        %4042 = vmatprep.mubr.f32.mxu0 %v3245
        %4043 = vmatmul.mubr.f32.gmra.mrb[0].mxu0 %v3243
        %v4044 = vpop.f32.mrb[0].mxu0
        %v4045 = vadd.f32 %v3940, %v4044
        %v4046 = vpop.f32.mrb[0].mxu0
        %v4047 = vadd.f32 %v3942, %v4046
        %4048 = vmatprep.mubr.f32.mxu0 %v3263
        %4049 = vmatmul.mubr.f32.gmra.mrb[0].mxu0 %v3262
        %v4050 = vpop.f32.mrb[0].mxu0
        %v4051 = vpop.f32.mrb[0].mxu0
        %4052 = vdwg.mxu0
        %4053 = vmatprep.subr.mxu0 %v3570
        %4054 = vmatpush1.msra.mxu0 %v3569
        %4055 = vmatprep.subr.mxu0 %v3572
        %4056 = vmatpush1.msra.mxu0 %v3571
        %4057 = vmatprep.subr.mxu0 %v3574
        %4058 = vmatpush1.msra.mxu0 %v3573
        %4059 = vmatprep.subr.mxu0 %v3576
        %4060 = vmatpush1.msra.mxu0 %v3575
        %4061 = vmatprep.subr.mxu0 %v3578
        %4062 = vmatpush1.msra.mxu0 %v3577
        %4063 = vmatprep.subr.mxu0 %v3580
        %4064 = vmatpush1.msra.mxu0 %v3579
        %4065 = vmatprep.subr.mxu0 %v3582
        %4066 = vmatpush1.msra.mxu0 %v3581
        %4067 = vmatprep.subr.mxu0 %v3584
        %4068 = vmatpush1.msra.mxu0 %v3583
        %4069 = vmatprep.subr.mxu0 %v3586
        %4070 = vmatpush1.msra.mxu0 %v3585
        %4071 = vmatprep.subr.mxu0 %v3588
        %4072 = vmatpush1.msra.mxu0 %v3587
        %4073 = vmatprep.subr.mxu0 %v3590
        %4074 = vmatpush1.msra.mxu0 %v3589
        %4075 = vmatprep.subr.mxu0 %v3592
        %4076 = vmatpush1.msra.mxu0 %v3591
        %4077 = vmatprep.subr.mxu0 %v3594
        %4078 = vmatpush1.msra.mxu0 %v3593
        %4079 = vmatprep.subr.mxu0 %v3596
        %4080 = vmatpush1.msra.mxu0 %v3595
        %4081 = vmatprep.subr.mxu0 %v3598
        %4082 = vmatpush1.msra.mxu0 %v3597
        %4083 = vmatprep.subr.mxu0 %v3600
        %4084 = vmatpush1.msra.mxu0 %v3599
        %4085 = vmatprep.subr.mxu0 %v3602
        %4086 = vmatpush1.msra.mxu0 %v3601
        %4087 = vmatprep.subr.mxu0 %v3604
        %4088 = vmatpush1.msra.mxu0 %v3603
        %4089 = vmatprep.subr.mxu0 %v3606
        %4090 = vmatpush1.msra.mxu0 %v3605
        %4091 = vmatprep.subr.mxu0 %v3608
        %4092 = vmatpush1.msra.mxu0 %v3607
        %4093 = vmatprep.subr.mxu0 %v3610
        %4094 = vmatpush1.msra.mxu0 %v3609
        %4095 = vmatprep.subr.mxu0 %v3612
        %4096 = vmatpush1.msra.mxu0 %v3611
        %4097 = vmatprep.subr.mxu0 %v3614
        %4098 = vmatpush1.msra.mxu0 %v3613
        %4099 = vmatprep.subr.mxu0 %v3616
        %4100 = vmatpush1.msra.mxu0 %v3615
        %4101 = vmatprep.subr.mxu0 %v3618
        %4102 = vmatpush1.msra.mxu0 %v3617
        %4103 = vmatprep.subr.mxu0 %v3620
        %4104 = vmatpush1.msra.mxu0 %v3619
        %4105 = vmatprep.subr.mxu0 %v3622
        %4106 = vmatpush1.msra.mxu0 %v3621
        %4107 = vmatprep.subr.mxu0 %v3624
        %4108 = vmatpush1.msra.mxu0 %v3623
        %4109 = vmatprep.subr.mxu0 %v3626
        %4110 = vmatpush1.msra.mxu0 %v3625
        %4111 = vmatprep.subr.mxu0 %v3628
        %4112 = vmatpush1.msra.mxu0 %v3627
        %4113 = vmatprep.subr.mxu0 %v3630
        %4114 = vmatpush1.msra.mxu0 %v3629
        %4115 = vmatprep.subr.mxu0 %v3632
        %4116 = vmatpush1.msra.mxu0 %v3631
        %4117 = vmatprep.mubr.f32.mxu0 %v3269
        %4118 = vmatmul.mubr.f32.gmra.mrb[0].mxu0 %v3266
        %v4119 = vpop.f32.mrb[0].mxu0
        %v4120 = vpop.f32.mrb[0].mxu0
        %4121 = vmatprep.mubr.f32.mxu0 %v3273
        %4122 = vmatmul.mubr.f32.gmra.mrb[0].mxu0 %v3271
        %v4123 = vpop.f32.mrb[0].mxu0
        %v4124 = vadd.f32 %v4019, %v4123
        %v4125 = vpop.f32.mrb[0].mxu0
        %v4126 = vadd.f32 %v4021, %v4125
        %4127 = vmatprep.mubr.f32.mxu0 %v3277
        %4128 = vmatmul.mubr.f32.gmra.mrb[0].mxu0 %v3275
        %v4129 = vpop.f32.mrb[0].mxu0
        %v4130 = vadd.f32 %v4025, %v4129
        %v4131 = vpop.f32.mrb[0].mxu0
        %v4132 = vadd.f32 %v4027, %v4131
        %4133 = vmatprep.mubr.f32.mxu0 %v3281
        %4134 = vmatmul.mubr.f32.gmra.mrb[0].mxu0 %v3279
        %v4135 = vpop.f32.mrb[0].mxu0
        %v4136 = vpop.f32.mrb[0].mxu0
        %4137 = vmatprep.mubr.f32.mxu0 %v3285
        %4138 = vmatmul.mubr.f32.gmra.mrb[0].mxu0 %v3283
        %v4139 = vpop.f32.mrb[0].mxu0
        %v4140 = vpop.f32.mrb[0].mxu0
        %4141 = vmatprep.mubr.f32.mxu0 %v3289
        %4142 = vmatmul.mubr.f32.gmra.mrb[0].mxu0 %v3287
        %v4143 = vpop.f32.mrb[0].mxu0
        %v4144 = vadd.f32 %v4039, %v4143
        %v4145 = vpop.f32.mrb[0].mxu0
        %v4146 = vadd.f32 %v4041, %v4145
        %4147 = vmatprep.mubr.f32.mxu0 %v3293
        %4148 = vmatmul.mubr.f32.gmra.mrb[0].mxu0 %v3291
        %v4149 = vpop.f32.mrb[0].mxu0
        %v4150 = vadd.f32 %v4045, %v4149
        %v4151 = vpop.f32.mrb[0].mxu0
        %v4152 = vadd.f32 %v4047, %v4151
        %4153 = vmatprep.mubr.f32.mxu0 %v3311
        %4154 = vmatmul.mubr.f32.gmra.mrb[0].mxu0 %v3310
        %v4155 = vpop.f32.mrb[0].mxu0
        %v4156 = vpop.f32.mrb[0].mxu0
        %4157 = vdwg.mxu0
        %s4158 = scalar_lea.vmem [#allocation8], 2
        %v4159 = vld [vmem:[%s4158] ss:$4 sm:$0x3]
        %v4161 = vlaneseq
        %v4162 = vshrl.u32 %v4161, 7
        %v4163 = vsub.s32 0, %v4162
        %v4164 = vrot.slane %v4159, %v4163
        %v4165 = vlaneseq
        %v4166 = vshrl.u32 %v4165, 7
        %v4167 = vsub.s32 1, %v4166
        %v4168 = vrot.slane %v4159, %v4167
        %v4171 = vmul.f32 %v4124, %v4164
        %v4172 = vmul.f32 %v4126, %v4168
        %v4173 = vmul.f32 %v4130, %v4164
        %v4174 = vmul.f32 %v4132, %v4168
        %v4175 = vmul.f32 %v4144, %v4164
        %v4176 = vmul.f32 %v4146, %v4168
        %v4177 = vmul.f32 %v4150, %v4164
        %v4178 = vmul.f32 %v4152, %v4168
        %s4179 = scalar_lea.vmem [#allocation9], 2
        %v4180 = vld [vmem:[%s4179] ss:$4 sm:$0x3]
        %v4182 = vlaneseq
        %v4183 = vshrl.u32 %v4182, 7
        %v4184 = vsub.s32 0, %v4183
        %v4185 = vrot.slane %v4180, %v4184
        %v4186 = vlaneseq
        %v4187 = vshrl.u32 %v4186, 7
        %v4188 = vsub.s32 1, %v4187
        %v4189 = vrot.slane %v4180, %v4188
        %v4192 = vadd.f32 %v4171, %v4185
        %v4193 = vadd.f32 %v4172, %v4189
        %v4194 = vadd.f32 %v4173, %v4185
        %v4195 = vadd.f32 %v4174, %v4189
        %v4196 = vadd.f32 %v4175, %v4185
        %v4197 = vadd.f32 %v4176, %v4189
        %v4198 = vadd.f32 %v4177, %v4185
        %v4199 = vadd.f32 %v4178, %v4189
        %v4200 = vmax.f32 %v4192, 0.0
        %v4201 = vmax.f32 %v4193, 0.0
        %v4202 = vmax.f32 %v4194, 0.0
        %v4203 = vmax.f32 %v4195, 0.0
        %v4204 = vmax.f32 %v4196, 0.0
        %v4205 = vmax.f32 %v4197, 0.0
        %v4206 = vmax.f32 %v4198, 0.0
        %v4207 = vmax.f32 %v4199, 0.0
        %v4208 = vsel %vm712, %v4200, 0.0
        %v4209 = vsel %vm712, %v4201, 0.0
        %v4210 = vsel %vm713, %v4202, 0.0
        %v4211 = vsel %vm713, %v4203, 0.0
        %v4212 = vsel %vm716, %v4204, 0.0
        %v4213 = vsel %vm716, %v4205, 0.0
        %v4214 = vsel %vm717, %v4206, 0.0
        %v4215 = vsel %vm717, %v4207, 0.0
        %v4216 = vld [vmem:[#allocation11] sm:$0xff]
        %v4217 = vld [vmem:[#allocation11 + $0x8] sm:$0xff]
        %v4218 = vld [vmem:[#allocation11 + $0x10] sm:$0xff]
        %v4219 = vld [vmem:[#allocation11 + $0x18] sm:$0xff]
        %v4220 = vld [vmem:[#allocation11 + $0x20] sm:$0xff]
        %v4221 = vld [vmem:[#allocation11 + $0x28] sm:$0xff]
        %v4222 = vld [vmem:[#allocation11 + $0x30] sm:$0xff]
        %v4223 = vld [vmem:[#allocation11 + $0x38] sm:$0xff]
        %v4224 = vld [vmem:[#allocation11 + $0x40] sm:$0xff]
        %v4225 = vld [vmem:[#allocation11 + $0x48] sm:$0xff]
        %v4226 = vld [vmem:[#allocation11 + $0x50] sm:$0xff]
        %v4227 = vld [vmem:[#allocation11 + $0x58] sm:$0xff]
        %v4228 = vld [vmem:[#allocation11 + $0x60] sm:$0xff]
        %v4229 = vld [vmem:[#allocation11 + $0x68] sm:$0xff]
        %v4230 = vld [vmem:[#allocation11 + $0x70] sm:$0xff]
        %v4231 = vld [vmem:[#allocation11 + $0x78] sm:$0xff]
        %v4232 = vld [vmem:[#allocation11 + $0x80] sm:$0xff]
        %v4233 = vld [vmem:[#allocation11 + $0x88] sm:$0xff]
        %v4234 = vld [vmem:[#allocation11 + $0x90] sm:$0xff]
        %v4235 = vld [vmem:[#allocation11 + $0x98] sm:$0xff]
        %v4236 = vld [vmem:[#allocation11 + $0xa0] sm:$0xff]
        %v4237 = vld [vmem:[#allocation11 + $0xa8] sm:$0xff]
        %v4238 = vld [vmem:[#allocation11 + $0xb0] sm:$0xff]
        %v4239 = vld [vmem:[#allocation11 + $0xb8] sm:$0xff]
        %v4240 = vld [vmem:[#allocation11 + $0xc0] sm:$0xff]
        %v4241 = vld [vmem:[#allocation11 + $0xc8] sm:$0xff]
        %v4242 = vld [vmem:[#allocation11 + $0xd0] sm:$0xff]
        %v4243 = vld [vmem:[#allocation11 + $0xd8] sm:$0xff]
        %v4244 = vld [vmem:[#allocation11 + $0xe0] sm:$0xff]
        %v4245 = vld [vmem:[#allocation11 + $0xe8] sm:$0xff]
        %v4246 = vld [vmem:[#allocation11 + $0xf0] sm:$0xff]
        %v4247 = vld [vmem:[#allocation11 + $0xf8] sm:$0xff]
        %v4248 = vld [vmem:[#allocation11 + $0x100] sm:$0xff]
        %v4249 = vld [vmem:[#allocation11 + $0x108] sm:$0xff]
        %v4250 = vld [vmem:[#allocation11 + $0x110] sm:$0xff]
        %v4251 = vld [vmem:[#allocation11 + $0x118] sm:$0xff]
        %v4252 = vld [vmem:[#allocation11 + $0x120] sm:$0xff]
        %v4253 = vld [vmem:[#allocation11 + $0x128] sm:$0xff]
        %v4254 = vld [vmem:[#allocation11 + $0x130] sm:$0xff]
        %v4255 = vld [vmem:[#allocation11 + $0x138] sm:$0xff]
        %v4256 = vld [vmem:[#allocation11 + $0x140] sm:$0xff]
        %v4257 = vld [vmem:[#allocation11 + $0x148] sm:$0xff]
        %v4258 = vld [vmem:[#allocation11 + $0x150] sm:$0xff]
        %v4259 = vld [vmem:[#allocation11 + $0x158] sm:$0xff]
        %v4260 = vld [vmem:[#allocation11 + $0x160] sm:$0xff]
        %v4261 = vld [vmem:[#allocation11 + $0x168] sm:$0xff]
        %v4262 = vld [vmem:[#allocation11 + $0x170] sm:$0xff]
        %v4263 = vld [vmem:[#allocation11 + $0x178] sm:$0xff]
        %v4264 = vld [vmem:[#allocation11 + $0x180] sm:$0xff]
        %v4265 = vld [vmem:[#allocation11 + $0x188] sm:$0xff]
        %v4266 = vld [vmem:[#allocation11 + $0x190] sm:$0xff]
        %v4267 = vld [vmem:[#allocation11 + $0x198] sm:$0xff]
        %v4268 = vld [vmem:[#allocation11 + $0x1a0] sm:$0xff]
        %v4269 = vld [vmem:[#allocation11 + $0x1a8] sm:$0xff]
        %v4270 = vld [vmem:[#allocation11 + $0x1b0] sm:$0xff]
        %v4271 = vld [vmem:[#allocation11 + $0x1b8] sm:$0xff]
        %v4272 = vld [vmem:[#allocation11 + $0x1c0] sm:$0xff]
        %v4273 = vld [vmem:[#allocation11 + $0x1c8] sm:$0xff]
        %v4274 = vld [vmem:[#allocation11 + $0x1d0] sm:$0xff]
        %v4275 = vld [vmem:[#allocation11 + $0x1d8] sm:$0xff]
        %v4276 = vld [vmem:[#allocation11 + $0x1e0] sm:$0xff]
        %v4277 = vld [vmem:[#allocation11 + $0x1e8] sm:$0xff]
        %v4278 = vld [vmem:[#allocation11 + $0x1f0] sm:$0xff]
        %v4279 = vld [vmem:[#allocation11 + $0x1f8] sm:$0xff]
        %v4280 = vld [vmem:[#allocation11 + $0x200] sm:$0xff]
        %v4281 = vld [vmem:[#allocation11 + $0x208] sm:$0xff]
        %v4282 = vld [vmem:[#allocation11 + $0x210] sm:$0xff]
        %v4283 = vld [vmem:[#allocation11 + $0x218] sm:$0xff]
        %v4284 = vld [vmem:[#allocation11 + $0x220] sm:$0xff]
        %v4285 = vld [vmem:[#allocation11 + $0x228] sm:$0xff]
        %v4286 = vld [vmem:[#allocation11 + $0x230] sm:$0xff]
        %v4287 = vld [vmem:[#allocation11 + $0x238] sm:$0xff]
        %v4288 = vld [vmem:[#allocation11 + $0x240] sm:$0xff]
        %v4289 = vld [vmem:[#allocation11 + $0x248] sm:$0xff]
        %v4290 = vld [vmem:[#allocation11 + $0x250] sm:$0xff]
        %v4291 = vld [vmem:[#allocation11 + $0x258] sm:$0xff]
        %v4292 = vld [vmem:[#allocation11 + $0x260] sm:$0xff]
        %v4293 = vld [vmem:[#allocation11 + $0x268] sm:$0xff]
        %v4294 = vld [vmem:[#allocation11 + $0x270] sm:$0xff]
        %v4295 = vld [vmem:[#allocation11 + $0x278] sm:$0xff]
        %v4296 = vld [vmem:[#allocation11 + $0x280] sm:$0xff]
        %v4297 = vld [vmem:[#allocation11 + $0x288] sm:$0xff]
        %v4298 = vld [vmem:[#allocation11 + $0x290] sm:$0xff]
        %v4299 = vld [vmem:[#allocation11 + $0x298] sm:$0xff]
        %v4300 = vld [vmem:[#allocation11 + $0x2a0] sm:$0xff]
        %v4301 = vld [vmem:[#allocation11 + $0x2a8] sm:$0xff]
        %v4302 = vld [vmem:[#allocation11 + $0x2b0] sm:$0xff]
        %v4303 = vld [vmem:[#allocation11 + $0x2b8] sm:$0xff]
        %v4304 = vld [vmem:[#allocation11 + $0x2c0] sm:$0xff]
        %v4305 = vld [vmem:[#allocation11 + $0x2c8] sm:$0xff]
        %v4306 = vld [vmem:[#allocation11 + $0x2d0] sm:$0xff]
        %v4307 = vld [vmem:[#allocation11 + $0x2d8] sm:$0xff]
        %v4308 = vld [vmem:[#allocation11 + $0x2e0] sm:$0xff]
        %v4309 = vld [vmem:[#allocation11 + $0x2e8] sm:$0xff]
        %v4310 = vld [vmem:[#allocation11 + $0x2f0] sm:$0xff]
        %v4311 = vld [vmem:[#allocation11 + $0x2f8] sm:$0xff]
        %v4312 = vld [vmem:[#allocation11 + $0x300] sm:$0xff]
        %v4313 = vld [vmem:[#allocation11 + $0x308] sm:$0xff]
        %v4314 = vld [vmem:[#allocation11 + $0x310] sm:$0xff]
        %v4315 = vld [vmem:[#allocation11 + $0x318] sm:$0xff]
        %v4316 = vld [vmem:[#allocation11 + $0x320] sm:$0xff]
        %v4317 = vld [vmem:[#allocation11 + $0x328] sm:$0xff]
        %v4318 = vld [vmem:[#allocation11 + $0x330] sm:$0xff]
        %v4319 = vld [vmem:[#allocation11 + $0x338] sm:$0xff]
        %v4320 = vld [vmem:[#allocation11 + $0x340] sm:$0xff]
        %v4321 = vld [vmem:[#allocation11 + $0x348] sm:$0xff]
        %v4322 = vld [vmem:[#allocation11 + $0x350] sm:$0xff]
        %v4323 = vld [vmem:[#allocation11 + $0x358] sm:$0xff]
        %v4324 = vld [vmem:[#allocation11 + $0x360] sm:$0xff]
        %v4325 = vld [vmem:[#allocation11 + $0x368] sm:$0xff]
        %v4326 = vld [vmem:[#allocation11 + $0x370] sm:$0xff]
        %v4327 = vld [vmem:[#allocation11 + $0x378] sm:$0xff]
        %v4328 = vld [vmem:[#allocation11 + $0x380] sm:$0xff]
        %v4329 = vld [vmem:[#allocation11 + $0x388] sm:$0xff]
        %v4330 = vld [vmem:[#allocation11 + $0x390] sm:$0xff]
        %v4331 = vld [vmem:[#allocation11 + $0x398] sm:$0xff]
        %v4332 = vld [vmem:[#allocation11 + $0x3a0] sm:$0xff]
        %v4333 = vld [vmem:[#allocation11 + $0x3a8] sm:$0xff]
        %v4334 = vld [vmem:[#allocation11 + $0x3b0] sm:$0xff]
        %v4335 = vld [vmem:[#allocation11 + $0x3b8] sm:$0xff]
        %v4336 = vld [vmem:[#allocation11 + $0x3c0] sm:$0xff]
        %v4337 = vld [vmem:[#allocation11 + $0x3c8] sm:$0xff]
        %v4338 = vld [vmem:[#allocation11 + $0x3d0] sm:$0xff]
        %v4339 = vld [vmem:[#allocation11 + $0x3d8] sm:$0xff]
        %v4340 = vld [vmem:[#allocation11 + $0x3e0] sm:$0xff]
        %v4341 = vld [vmem:[#allocation11 + $0x3e8] sm:$0xff]
        %v4342 = vld [vmem:[#allocation11 + $0x3f0] sm:$0xff]
        %v4343 = vld [vmem:[#allocation11 + $0x3f8] sm:$0xff]
        %v4344 = vld [vmem:[#allocation11 + $0x400] sm:$0xff]
        %v4345 = vld [vmem:[#allocation11 + $0x408] sm:$0xff]
        %v4346 = vld [vmem:[#allocation11 + $0x410] sm:$0xff]
        %v4347 = vld [vmem:[#allocation11 + $0x418] sm:$0xff]
        %v4348 = vld [vmem:[#allocation11 + $0x420] sm:$0xff]
        %v4349 = vld [vmem:[#allocation11 + $0x428] sm:$0xff]
        %v4350 = vld [vmem:[#allocation11 + $0x430] sm:$0xff]
        %v4351 = vld [vmem:[#allocation11 + $0x438] sm:$0xff]
        %v4352 = vld [vmem:[#allocation11 + $0x440] sm:$0xff]
        %v4353 = vld [vmem:[#allocation11 + $0x448] sm:$0xff]
        %v4354 = vld [vmem:[#allocation11 + $0x450] sm:$0xff]
        %v4355 = vld [vmem:[#allocation11 + $0x458] sm:$0xff]
        %v4356 = vld [vmem:[#allocation11 + $0x460] sm:$0xff]
        %v4357 = vld [vmem:[#allocation11 + $0x468] sm:$0xff]
        %v4358 = vld [vmem:[#allocation11 + $0x470] sm:$0xff]
        %v4359 = vld [vmem:[#allocation11 + $0x478] sm:$0xff]
        %v4360 = vld [vmem:[#allocation11 + $0x480] sm:$0xff]
        %v4361 = vld [vmem:[#allocation11 + $0x488] sm:$0xff]
        %v4362 = vld [vmem:[#allocation11 + $0x490] sm:$0xff]
        %v4363 = vld [vmem:[#allocation11 + $0x498] sm:$0xff]
        %v4364 = vld [vmem:[#allocation11 + $0x4a0] sm:$0xff]
        %v4365 = vld [vmem:[#allocation11 + $0x4a8] sm:$0xff]
        %v4366 = vld [vmem:[#allocation11 + $0x4b0] sm:$0xff]
        %v4367 = vld [vmem:[#allocation11 + $0x4b8] sm:$0xff]
        %v4368 = vld [vmem:[#allocation11 + $0x4c0] sm:$0xff]
        %v4369 = vld [vmem:[#allocation11 + $0x4c8] sm:$0xff]
        %v4370 = vld [vmem:[#allocation11 + $0x4d0] sm:$0xff]
        %v4371 = vld [vmem:[#allocation11 + $0x4d8] sm:$0xff]
        %v4372 = vld [vmem:[#allocation11 + $0x4e0] sm:$0xff]
        %v4373 = vld [vmem:[#allocation11 + $0x4e8] sm:$0xff]
        %v4374 = vld [vmem:[#allocation11 + $0x4f0] sm:$0xff]
        %v4375 = vld [vmem:[#allocation11 + $0x4f8] sm:$0xff]
        %v4376 = vld [vmem:[#allocation11 + $0x500] sm:$0xff]
        %v4377 = vld [vmem:[#allocation11 + $0x508] sm:$0xff]
        %v4378 = vld [vmem:[#allocation11 + $0x510] sm:$0xff]
        %v4379 = vld [vmem:[#allocation11 + $0x518] sm:$0xff]
        %v4380 = vld [vmem:[#allocation11 + $0x520] sm:$0xff]
        %v4381 = vld [vmem:[#allocation11 + $0x528] sm:$0xff]
        %v4382 = vld [vmem:[#allocation11 + $0x530] sm:$0xff]
        %v4383 = vld [vmem:[#allocation11 + $0x538] sm:$0xff]
        %v4384 = vld [vmem:[#allocation11 + $0x540] sm:$0xff]
        %v4385 = vld [vmem:[#allocation11 + $0x548] sm:$0xff]
        %v4386 = vld [vmem:[#allocation11 + $0x550] sm:$0xff]
        %v4387 = vld [vmem:[#allocation11 + $0x558] sm:$0xff]
        %v4388 = vld [vmem:[#allocation11 + $0x560] sm:$0xff]
        %v4389 = vld [vmem:[#allocation11 + $0x568] sm:$0xff]
        %v4390 = vld [vmem:[#allocation11 + $0x570] sm:$0xff]
        %v4391 = vld [vmem:[#allocation11 + $0x578] sm:$0xff]
        %v4392 = vld [vmem:[#allocation11 + $0x580] sm:$0xff]
        %v4393 = vld [vmem:[#allocation11 + $0x588] sm:$0xff]
        %v4394 = vld [vmem:[#allocation11 + $0x590] sm:$0xff]
        %v4395 = vld [vmem:[#allocation11 + $0x598] sm:$0xff]
        %v4396 = vld [vmem:[#allocation11 + $0x5a0] sm:$0xff]
        %v4397 = vld [vmem:[#allocation11 + $0x5a8] sm:$0xff]
        %v4398 = vld [vmem:[#allocation11 + $0x5b0] sm:$0xff]
        %v4399 = vld [vmem:[#allocation11 + $0x5b8] sm:$0xff]
        %v4400 = vld [vmem:[#allocation11 + $0x5c0] sm:$0xff]
        %v4401 = vld [vmem:[#allocation11 + $0x5c8] sm:$0xff]
        %v4402 = vld [vmem:[#allocation11 + $0x5d0] sm:$0xff]
        %v4403 = vld [vmem:[#allocation11 + $0x5d8] sm:$0xff]
        %v4404 = vld [vmem:[#allocation11 + $0x5e0] sm:$0xff]
        %v4405 = vld [vmem:[#allocation11 + $0x5e8] sm:$0xff]
        %v4406 = vld [vmem:[#allocation11 + $0x5f0] sm:$0xff]
        %v4407 = vld [vmem:[#allocation11 + $0x5f8] sm:$0xff]
        %v4408 = vld [vmem:[#allocation11 + $0x600] sm:$0xff]
        %v4409 = vld [vmem:[#allocation11 + $0x608] sm:$0xff]
        %v4410 = vld [vmem:[#allocation11 + $0x610] sm:$0xff]
        %v4411 = vld [vmem:[#allocation11 + $0x618] sm:$0xff]
        %v4412 = vld [vmem:[#allocation11 + $0x620] sm:$0xff]
        %v4413 = vld [vmem:[#allocation11 + $0x628] sm:$0xff]
        %v4414 = vld [vmem:[#allocation11 + $0x630] sm:$0xff]
        %v4415 = vld [vmem:[#allocation11 + $0x638] sm:$0xff]
        %v4416 = vld [vmem:[#allocation11 + $0x640] sm:$0xff]
        %v4417 = vld [vmem:[#allocation11 + $0x648] sm:$0xff]
        %v4418 = vld [vmem:[#allocation11 + $0x650] sm:$0xff]
        %v4419 = vld [vmem:[#allocation11 + $0x658] sm:$0xff]
        %v4420 = vld [vmem:[#allocation11 + $0x660] sm:$0xff]
        %v4421 = vld [vmem:[#allocation11 + $0x668] sm:$0xff]
        %v4422 = vld [vmem:[#allocation11 + $0x670] sm:$0xff]
        %v4423 = vld [vmem:[#allocation11 + $0x678] sm:$0xff]
        %v4424 = vld [vmem:[#allocation11 + $0x680] sm:$0xff]
        %v4425 = vld [vmem:[#allocation11 + $0x688] sm:$0xff]
        %v4426 = vld [vmem:[#allocation11 + $0x690] sm:$0xff]
        %v4427 = vld [vmem:[#allocation11 + $0x698] sm:$0xff]
        %v4428 = vld [vmem:[#allocation11 + $0x6a0] sm:$0xff]
        %v4429 = vld [vmem:[#allocation11 + $0x6a8] sm:$0xff]
        %v4430 = vld [vmem:[#allocation11 + $0x6b0] sm:$0xff]
        %v4431 = vld [vmem:[#allocation11 + $0x6b8] sm:$0xff]
        %v4432 = vld [vmem:[#allocation11 + $0x6c0] sm:$0xff]
        %v4433 = vld [vmem:[#allocation11 + $0x6c8] sm:$0xff]
        %v4434 = vld [vmem:[#allocation11 + $0x6d0] sm:$0xff]
        %v4435 = vld [vmem:[#allocation11 + $0x6d8] sm:$0xff]
        %v4436 = vld [vmem:[#allocation11 + $0x6e0] sm:$0xff]
        %v4437 = vld [vmem:[#allocation11 + $0x6e8] sm:$0xff]
        %v4438 = vld [vmem:[#allocation11 + $0x6f0] sm:$0xff]
        %v4439 = vld [vmem:[#allocation11 + $0x6f8] sm:$0xff]
        %v4440 = vld [vmem:[#allocation11 + $0x700] sm:$0xff]
        %v4441 = vld [vmem:[#allocation11 + $0x708] sm:$0xff]
        %v4442 = vld [vmem:[#allocation11 + $0x710] sm:$0xff]
        %v4443 = vld [vmem:[#allocation11 + $0x718] sm:$0xff]
        %v4444 = vld [vmem:[#allocation11 + $0x720] sm:$0xff]
        %v4445 = vld [vmem:[#allocation11 + $0x728] sm:$0xff]
        %v4446 = vld [vmem:[#allocation11 + $0x730] sm:$0xff]
        %v4447 = vld [vmem:[#allocation11 + $0x738] sm:$0xff]
        %v4448 = vld [vmem:[#allocation11 + $0x740] sm:$0xff]
        %v4449 = vld [vmem:[#allocation11 + $0x748] sm:$0xff]
        %v4450 = vld [vmem:[#allocation11 + $0x750] sm:$0xff]
        %v4451 = vld [vmem:[#allocation11 + $0x758] sm:$0xff]
        %v4452 = vld [vmem:[#allocation11 + $0x760] sm:$0xff]
        %v4453 = vld [vmem:[#allocation11 + $0x768] sm:$0xff]
        %v4454 = vld [vmem:[#allocation11 + $0x770] sm:$0xff]
        %v4455 = vld [vmem:[#allocation11 + $0x778] sm:$0xff]
        %v4456 = vld [vmem:[#allocation11 + $0x780] sm:$0xff]
        %v4457 = vld [vmem:[#allocation11 + $0x788] sm:$0xff]
        %v4458 = vld [vmem:[#allocation11 + $0x790] sm:$0xff]
        %v4459 = vld [vmem:[#allocation11 + $0x798] sm:$0xff]
        %v4460 = vld [vmem:[#allocation11 + $0x7a0] sm:$0xff]
        %v4461 = vld [vmem:[#allocation11 + $0x7a8] sm:$0xff]
        %v4462 = vld [vmem:[#allocation11 + $0x7b0] sm:$0xff]
        %v4463 = vld [vmem:[#allocation11 + $0x7b8] sm:$0xff]
        %v4464 = vld [vmem:[#allocation11 + $0x7c0] sm:$0xff]
        %v4465 = vld [vmem:[#allocation11 + $0x7c8] sm:$0xff]
        %v4466 = vld [vmem:[#allocation11 + $0x7d0] sm:$0xff]
        %v4467 = vld [vmem:[#allocation11 + $0x7d8] sm:$0xff]
        %v4468 = vld [vmem:[#allocation11 + $0x7e0] sm:$0xff]
        %v4469 = vld [vmem:[#allocation11 + $0x7e8] sm:$0xff]
        %v4470 = vld [vmem:[#allocation11 + $0x7f0] sm:$0xff]
        %v4471 = vld [vmem:[#allocation11 + $0x7f8] sm:$0xff]
        %v4472 = vld [vmem:[#allocation12] sm:$0xff]
        %v4474 = vlaneseq
        %v4475 = vshrl.u32 %v4474, 7
        %v4476 = vsub.s32 0, %v4475
        %v4477 = vrot.slane %v4472, %v4476
        %v4478 = vlaneseq
        %v4479 = vshrl.u32 %v4478, 7
        %v4480 = vsub.s32 1, %v4479
        %v4481 = vrot.slane %v4472, %v4480
        %v4482 = vlaneseq
        %v4483 = vshrl.u32 %v4482, 7
        %v4484 = vsub.s32 2, %v4483
        %v4485 = vrot.slane %v4472, %v4484
        %v4486 = vlaneseq
        %v4487 = vshrl.u32 %v4486, 7
        %v4488 = vsub.s32 3, %v4487
        %v4489 = vrot.slane %v4472, %v4488
        %v4490 = vlaneseq
        %v4491 = vshrl.u32 %v4490, 7
        %v4492 = vsub.s32 4, %v4491
        %v4493 = vrot.slane %v4472, %v4492
        %v4494 = vlaneseq
        %v4495 = vshrl.u32 %v4494, 7
        %v4496 = vsub.s32 5, %v4495
        %v4497 = vrot.slane %v4472, %v4496
        %v4498 = vlaneseq
        %v4499 = vshrl.u32 %v4498, 7
        %v4500 = vsub.s32 6, %v4499
        %v4501 = vrot.slane %v4472, %v4500
        %v4502 = vlaneseq
        %v4503 = vshrl.u32 %v4502, 7
        %v4504 = vsub.s32 7, %v4503
        %v4505 = vrot.slane %v4472, %v4504
        %4514 = vmatprep.subr.mxu0 %v4217
        %4515 = vmatpush1.msra.mxu0 %v4216
        %4516 = vmatprep.subr.mxu0 %v4225
        %4517 = vmatpush1.msra.mxu0 %v4224
        %4518 = vmatprep.subr.mxu0 %v4233
        %4519 = vmatpush1.msra.mxu0 %v4232
        %4520 = vmatprep.subr.mxu0 %v4241
        %4521 = vmatpush1.msra.mxu0 %v4240
        %4522 = vmatprep.subr.mxu0 %v4249
        %4523 = vmatpush1.msra.mxu0 %v4248
        %4524 = vmatprep.subr.mxu0 %v4257
        %4525 = vmatpush1.msra.mxu0 %v4256
        %4526 = vmatprep.subr.mxu0 %v4265
        %4527 = vmatpush1.msra.mxu0 %v4264
        %4528 = vmatprep.subr.mxu0 %v4273
        %4529 = vmatpush1.msra.mxu0 %v4272
        %4530 = vmatprep.subr.mxu0 %v4281
        %4531 = vmatpush1.msra.mxu0 %v4280
        %4532 = vmatprep.subr.mxu0 %v4289
        %4533 = vmatpush1.msra.mxu0 %v4288
        %4534 = vmatprep.subr.mxu0 %v4297
        %4535 = vmatpush1.msra.mxu0 %v4296
        %4536 = vmatprep.subr.mxu0 %v4305
        %4537 = vmatpush1.msra.mxu0 %v4304
        %4538 = vmatprep.subr.mxu0 %v4313
        %4539 = vmatpush1.msra.mxu0 %v4312
        %4540 = vmatprep.subr.mxu0 %v4321
        %4541 = vmatpush1.msra.mxu0 %v4320
        %4542 = vmatprep.subr.mxu0 %v4329
        %4543 = vmatpush1.msra.mxu0 %v4328
        %4544 = vmatprep.subr.mxu0 %v4337
        %4545 = vmatpush1.msra.mxu0 %v4336
        %4546 = vmatprep.subr.mxu0 %v4345
        %4547 = vmatpush1.msra.mxu0 %v4344
        %4548 = vmatprep.subr.mxu0 %v4353
        %4549 = vmatpush1.msra.mxu0 %v4352
        %4550 = vmatprep.subr.mxu0 %v4361
        %4551 = vmatpush1.msra.mxu0 %v4360
        %4552 = vmatprep.subr.mxu0 %v4369
        %4553 = vmatpush1.msra.mxu0 %v4368
        %4554 = vmatprep.subr.mxu0 %v4377
        %4555 = vmatpush1.msra.mxu0 %v4376
        %4556 = vmatprep.subr.mxu0 %v4385
        %4557 = vmatpush1.msra.mxu0 %v4384
        %4558 = vmatprep.subr.mxu0 %v4393
        %4559 = vmatpush1.msra.mxu0 %v4392
        %4560 = vmatprep.subr.mxu0 %v4401
        %4561 = vmatpush1.msra.mxu0 %v4400
        %4562 = vmatprep.subr.mxu0 %v4409
        %4563 = vmatpush1.msra.mxu0 %v4408
        %4564 = vmatprep.subr.mxu0 %v4417
        %4565 = vmatpush1.msra.mxu0 %v4416
        %4566 = vmatprep.subr.mxu0 %v4425
        %4567 = vmatpush1.msra.mxu0 %v4424
        %4568 = vmatprep.subr.mxu0 %v4433
        %4569 = vmatpush1.msra.mxu0 %v4432
        %4570 = vmatprep.subr.mxu0 %v4441
        %4571 = vmatpush1.msra.mxu0 %v4440
        %4572 = vmatprep.subr.mxu0 %v4449
        %4573 = vmatpush1.msra.mxu0 %v4448
        %4574 = vmatprep.subr.mxu0 %v4457
        %4575 = vmatpush1.msra.mxu0 %v4456
        %4576 = vmatprep.subr.mxu0 %v4465
        %4577 = vmatpush1.msra.mxu0 %v4464
        %4578 = vmatprep.mubr.f32.mxu0 %v4209
        %4579 = vmatmul.mubr.f32.gmra.mrb[0].mxu0 %v4208
        %v4580 = vpop.f32.mrb[0].mxu0
        %v4581 = vadd.f32 %v4477, %v4580
        %v4582 = vpop.f32.mrb[0].mxu0
        %v4583 = vadd.f32 %v4481, %v4582
        %4584 = vmatprep.mubr.f32.mxu0 %v4211
        %4585 = vmatmul.mubr.f32.gmra.mrb[0].mxu0 %v4210
        %v4586 = vpop.f32.mrb[0].mxu0
        %v4587 = vadd.f32 %v4477, %v4586
        %v4588 = vpop.f32.mrb[0].mxu0
        %v4589 = vadd.f32 %v4481, %v4588
        %4590 = vmatprep.mubr.f32.mxu0 %v4213
        %4591 = vmatmul.mubr.f32.gmra.mrb[0].mxu0 %v4212
        %v4592 = vpop.f32.mrb[0].mxu0
        %v4593 = vadd.f32 %v4477, %v4592
        %v4594 = vpop.f32.mrb[0].mxu0
        %v4595 = vadd.f32 %v4481, %v4594
        %4596 = vmatprep.mubr.f32.mxu0 %v4215
        %4597 = vmatmul.mubr.f32.gmra.mrb[0].mxu0 %v4214
        %v4598 = vpop.f32.mrb[0].mxu0
        %v4599 = vadd.f32 %v4477, %v4598
        %v4600 = vpop.f32.mrb[0].mxu0
        %v4601 = vadd.f32 %v4481, %v4600
        %4602 = vdwg.mxu0
        %4603 = vmatprep.subr.mxu0 %v4219
        %4604 = vmatpush1.msra.mxu0 %v4218
        %4605 = vmatprep.subr.mxu0 %v4227
        %4606 = vmatpush1.msra.mxu0 %v4226
        %4607 = vmatprep.subr.mxu0 %v4235
        %4608 = vmatpush1.msra.mxu0 %v4234
        %4609 = vmatprep.subr.mxu0 %v4243
        %4610 = vmatpush1.msra.mxu0 %v4242
        %4611 = vmatprep.subr.mxu0 %v4251
        %4612 = vmatpush1.msra.mxu0 %v4250
        %4613 = vmatprep.subr.mxu0 %v4259
        %4614 = vmatpush1.msra.mxu0 %v4258
        %4615 = vmatprep.subr.mxu0 %v4267
        %4616 = vmatpush1.msra.mxu0 %v4266
        %4617 = vmatprep.subr.mxu0 %v4275
        %4618 = vmatpush1.msra.mxu0 %v4274
        %4619 = vmatprep.subr.mxu0 %v4283
        %4620 = vmatpush1.msra.mxu0 %v4282
        %4621 = vmatprep.subr.mxu0 %v4291
        %4622 = vmatpush1.msra.mxu0 %v4290
        %4623 = vmatprep.subr.mxu0 %v4299
        %4624 = vmatpush1.msra.mxu0 %v4298
        %4625 = vmatprep.subr.mxu0 %v4307
        %4626 = vmatpush1.msra.mxu0 %v4306
        %4627 = vmatprep.subr.mxu0 %v4315
        %4628 = vmatpush1.msra.mxu0 %v4314
        %4629 = vmatprep.subr.mxu0 %v4323
        %4630 = vmatpush1.msra.mxu0 %v4322
        %4631 = vmatprep.subr.mxu0 %v4331
        %4632 = vmatpush1.msra.mxu0 %v4330
        %4633 = vmatprep.subr.mxu0 %v4339
        %4634 = vmatpush1.msra.mxu0 %v4338
        %4635 = vmatprep.subr.mxu0 %v4347
        %4636 = vmatpush1.msra.mxu0 %v4346
        %4637 = vmatprep.subr.mxu0 %v4355
        %4638 = vmatpush1.msra.mxu0 %v4354
        %4639 = vmatprep.subr.mxu0 %v4363
        %4640 = vmatpush1.msra.mxu0 %v4362
        %4641 = vmatprep.subr.mxu0 %v4371
        %4642 = vmatpush1.msra.mxu0 %v4370
        %4643 = vmatprep.subr.mxu0 %v4379
        %4644 = vmatpush1.msra.mxu0 %v4378
        %4645 = vmatprep.subr.mxu0 %v4387
        %4646 = vmatpush1.msra.mxu0 %v4386
        %4647 = vmatprep.subr.mxu0 %v4395
        %4648 = vmatpush1.msra.mxu0 %v4394
        %4649 = vmatprep.subr.mxu0 %v4403
        %4650 = vmatpush1.msra.mxu0 %v4402
        %4651 = vmatprep.subr.mxu0 %v4411
        %4652 = vmatpush1.msra.mxu0 %v4410
        %4653 = vmatprep.subr.mxu0 %v4419
        %4654 = vmatpush1.msra.mxu0 %v4418
        %4655 = vmatprep.subr.mxu0 %v4427
        %4656 = vmatpush1.msra.mxu0 %v4426
        %4657 = vmatprep.subr.mxu0 %v4435
        %4658 = vmatpush1.msra.mxu0 %v4434
        %4659 = vmatprep.subr.mxu0 %v4443
        %4660 = vmatpush1.msra.mxu0 %v4442
        %4661 = vmatprep.subr.mxu0 %v4451
        %4662 = vmatpush1.msra.mxu0 %v4450
        %4663 = vmatprep.subr.mxu0 %v4459
        %4664 = vmatpush1.msra.mxu0 %v4458
        %4665 = vmatprep.subr.mxu0 %v4467
        %4666 = vmatpush1.msra.mxu0 %v4466
        %4667 = vmatprep.mubr.f32.mxu0 %v4209
        %4668 = vmatmul.mubr.f32.gmra.mrb[0].mxu0 %v4208
        %v4669 = vpop.f32.mrb[0].mxu0
        %v4670 = vadd.f32 %v4485, %v4669
        %v4671 = vpop.f32.mrb[0].mxu0
        %v4672 = vadd.f32 %v4489, %v4671
        %4673 = vmatprep.mubr.f32.mxu0 %v4211
        %4674 = vmatmul.mubr.f32.gmra.mrb[0].mxu0 %v4210
        %v4675 = vpop.f32.mrb[0].mxu0
        %v4676 = vadd.f32 %v4485, %v4675
        %v4677 = vpop.f32.mrb[0].mxu0
        %v4678 = vadd.f32 %v4489, %v4677
        %4679 = vmatprep.mubr.f32.mxu0 %v4213
        %4680 = vmatmul.mubr.f32.gmra.mrb[0].mxu0 %v4212
        %v4681 = vpop.f32.mrb[0].mxu0
        %v4682 = vadd.f32 %v4485, %v4681
        %v4683 = vpop.f32.mrb[0].mxu0
        %v4684 = vadd.f32 %v4489, %v4683
        %4685 = vmatprep.mubr.f32.mxu0 %v4215
        %4686 = vmatmul.mubr.f32.gmra.mrb[0].mxu0 %v4214
        %v4687 = vpop.f32.mrb[0].mxu0
        %v4688 = vadd.f32 %v4485, %v4687
        %v4689 = vpop.f32.mrb[0].mxu0
        %v4690 = vadd.f32 %v4489, %v4689
        %4691 = vdwg.mxu0
        %4692 = vmatprep.subr.mxu0 %v4221
        %4693 = vmatpush1.msra.mxu0 %v4220
        %4694 = vmatprep.subr.mxu0 %v4229
        %4695 = vmatpush1.msra.mxu0 %v4228
        %4696 = vmatprep.subr.mxu0 %v4237
        %4697 = vmatpush1.msra.mxu0 %v4236
        %4698 = vmatprep.subr.mxu0 %v4245
        %4699 = vmatpush1.msra.mxu0 %v4244
        %4700 = vmatprep.subr.mxu0 %v4253
        %4701 = vmatpush1.msra.mxu0 %v4252
        %4702 = vmatprep.subr.mxu0 %v4261
        %4703 = vmatpush1.msra.mxu0 %v4260
        %4704 = vmatprep.subr.mxu0 %v4269
        %4705 = vmatpush1.msra.mxu0 %v4268
        %4706 = vmatprep.subr.mxu0 %v4277
        %4707 = vmatpush1.msra.mxu0 %v4276
        %4708 = vmatprep.subr.mxu0 %v4285
        %4709 = vmatpush1.msra.mxu0 %v4284
        %4710 = vmatprep.subr.mxu0 %v4293
        %4711 = vmatpush1.msra.mxu0 %v4292
        %4712 = vmatprep.subr.mxu0 %v4301
        %4713 = vmatpush1.msra.mxu0 %v4300
        %4714 = vmatprep.subr.mxu0 %v4309
        %4715 = vmatpush1.msra.mxu0 %v4308
        %4716 = vmatprep.subr.mxu0 %v4317
        %4717 = vmatpush1.msra.mxu0 %v4316
        %4718 = vmatprep.subr.mxu0 %v4325
        %4719 = vmatpush1.msra.mxu0 %v4324
        %4720 = vmatprep.subr.mxu0 %v4333
        %4721 = vmatpush1.msra.mxu0 %v4332
        %4722 = vmatprep.subr.mxu0 %v4341
        %4723 = vmatpush1.msra.mxu0 %v4340
        %4724 = vmatprep.subr.mxu0 %v4349
        %4725 = vmatpush1.msra.mxu0 %v4348
        %4726 = vmatprep.subr.mxu0 %v4357
        %4727 = vmatpush1.msra.mxu0 %v4356
        %4728 = vmatprep.subr.mxu0 %v4365
        %4729 = vmatpush1.msra.mxu0 %v4364
        %4730 = vmatprep.subr.mxu0 %v4373
        %4731 = vmatpush1.msra.mxu0 %v4372
        %4732 = vmatprep.subr.mxu0 %v4381
        %4733 = vmatpush1.msra.mxu0 %v4380
        %4734 = vmatprep.subr.mxu0 %v4389
        %4735 = vmatpush1.msra.mxu0 %v4388
        %4736 = vmatprep.subr.mxu0 %v4397
        %4737 = vmatpush1.msra.mxu0 %v4396
        %4738 = vmatprep.subr.mxu0 %v4405
        %4739 = vmatpush1.msra.mxu0 %v4404
        %4740 = vmatprep.subr.mxu0 %v4413
        %4741 = vmatpush1.msra.mxu0 %v4412
        %4742 = vmatprep.subr.mxu0 %v4421
        %4743 = vmatpush1.msra.mxu0 %v4420
        %4744 = vmatprep.subr.mxu0 %v4429
        %4745 = vmatpush1.msra.mxu0 %v4428
        %4746 = vmatprep.subr.mxu0 %v4437
        %4747 = vmatpush1.msra.mxu0 %v4436
        %4748 = vmatprep.subr.mxu0 %v4445
        %4749 = vmatpush1.msra.mxu0 %v4444
        %4750 = vmatprep.subr.mxu0 %v4453
        %4751 = vmatpush1.msra.mxu0 %v4452
        %4752 = vmatprep.subr.mxu0 %v4461
        %4753 = vmatpush1.msra.mxu0 %v4460
        %4754 = vmatprep.subr.mxu0 %v4469
        %4755 = vmatpush1.msra.mxu0 %v4468
        %4756 = vmatprep.mubr.f32.mxu0 %v4209
        %4757 = vmatmul.mubr.f32.gmra.mrb[0].mxu0 %v4208
        %v4758 = vpop.f32.mrb[0].mxu0
        %v4759 = vadd.f32 %v4493, %v4758
        %v4760 = vpop.f32.mrb[0].mxu0
        %v4761 = vadd.f32 %v4497, %v4760
        %4762 = vmatprep.mubr.f32.mxu0 %v4211
        %4763 = vmatmul.mubr.f32.gmra.mrb[0].mxu0 %v4210
        %v4764 = vpop.f32.mrb[0].mxu0
        %v4765 = vadd.f32 %v4493, %v4764
        %v4766 = vpop.f32.mrb[0].mxu0
        %v4767 = vadd.f32 %v4497, %v4766
        %4768 = vmatprep.mubr.f32.mxu0 %v4213
        %4769 = vmatmul.mubr.f32.gmra.mrb[0].mxu0 %v4212
        %v4770 = vpop.f32.mrb[0].mxu0
        %v4771 = vadd.f32 %v4493, %v4770
        %v4772 = vpop.f32.mrb[0].mxu0
        %v4773 = vadd.f32 %v4497, %v4772
        %4774 = vmatprep.mubr.f32.mxu0 %v4215
        %4775 = vmatmul.mubr.f32.gmra.mrb[0].mxu0 %v4214
        %v4776 = vpop.f32.mrb[0].mxu0
        %v4777 = vadd.f32 %v4493, %v4776
        %v4778 = vpop.f32.mrb[0].mxu0
        %v4779 = vadd.f32 %v4497, %v4778
        %4780 = vdwg.mxu0
        %4781 = vmatprep.subr.mxu0 %v4223
        %4782 = vmatpush1.msra.mxu0 %v4222
        %4783 = vmatprep.subr.mxu0 %v4231
        %4784 = vmatpush1.msra.mxu0 %v4230
        %4785 = vmatprep.subr.mxu0 %v4239
        %4786 = vmatpush1.msra.mxu0 %v4238
        %4787 = vmatprep.subr.mxu0 %v4247
        %4788 = vmatpush1.msra.mxu0 %v4246
        %4789 = vmatprep.subr.mxu0 %v4255
        %4790 = vmatpush1.msra.mxu0 %v4254
        %4791 = vmatprep.subr.mxu0 %v4263
        %4792 = vmatpush1.msra.mxu0 %v4262
        %4793 = vmatprep.subr.mxu0 %v4271
        %4794 = vmatpush1.msra.mxu0 %v4270
        %4795 = vmatprep.subr.mxu0 %v4279
        %4796 = vmatpush1.msra.mxu0 %v4278
        %4797 = vmatprep.subr.mxu0 %v4287
        %4798 = vmatpush1.msra.mxu0 %v4286
        %4799 = vmatprep.subr.mxu0 %v4295
        %4800 = vmatpush1.msra.mxu0 %v4294
        %4801 = vmatprep.subr.mxu0 %v4303
        %4802 = vmatpush1.msra.mxu0 %v4302
        %4803 = vmatprep.subr.mxu0 %v4311
        %4804 = vmatpush1.msra.mxu0 %v4310
        %4805 = vmatprep.subr.mxu0 %v4319
        %4806 = vmatpush1.msra.mxu0 %v4318
        %4807 = vmatprep.subr.mxu0 %v4327
        %4808 = vmatpush1.msra.mxu0 %v4326
        %4809 = vmatprep.subr.mxu0 %v4335
        %4810 = vmatpush1.msra.mxu0 %v4334
        %4811 = vmatprep.subr.mxu0 %v4343
        %4812 = vmatpush1.msra.mxu0 %v4342
        %4813 = vmatprep.subr.mxu0 %v4351
        %4814 = vmatpush1.msra.mxu0 %v4350
        %4815 = vmatprep.subr.mxu0 %v4359
        %4816 = vmatpush1.msra.mxu0 %v4358
        %4817 = vmatprep.subr.mxu0 %v4367
        %4818 = vmatpush1.msra.mxu0 %v4366
        %4819 = vmatprep.subr.mxu0 %v4375
        %4820 = vmatpush1.msra.mxu0 %v4374
        %4821 = vmatprep.subr.mxu0 %v4383
        %4822 = vmatpush1.msra.mxu0 %v4382
        %4823 = vmatprep.subr.mxu0 %v4391
        %4824 = vmatpush1.msra.mxu0 %v4390
        %4825 = vmatprep.subr.mxu0 %v4399
        %4826 = vmatpush1.msra.mxu0 %v4398
        %4827 = vmatprep.subr.mxu0 %v4407
        %4828 = vmatpush1.msra.mxu0 %v4406
        %4829 = vmatprep.subr.mxu0 %v4415
        %4830 = vmatpush1.msra.mxu0 %v4414
        %4831 = vmatprep.subr.mxu0 %v4423
        %4832 = vmatpush1.msra.mxu0 %v4422
        %4833 = vmatprep.subr.mxu0 %v4431
        %4834 = vmatpush1.msra.mxu0 %v4430
        %4835 = vmatprep.subr.mxu0 %v4439
        %4836 = vmatpush1.msra.mxu0 %v4438
        %4837 = vmatprep.subr.mxu0 %v4447
        %4838 = vmatpush1.msra.mxu0 %v4446
        %4839 = vmatprep.subr.mxu0 %v4455
        %4840 = vmatpush1.msra.mxu0 %v4454
        %4841 = vmatprep.subr.mxu0 %v4463
        %4842 = vmatpush1.msra.mxu0 %v4462
        %4843 = vmatprep.subr.mxu0 %v4471
        %4844 = vmatpush1.msra.mxu0 %v4470
        %4845 = vmatprep.mubr.f32.mxu0 %v4209
        %4846 = vmatmul.mubr.f32.gmra.mrb[0].mxu0 %v4208
        %v4847 = vpop.f32.mrb[0].mxu0
        %v4848 = vadd.f32 %v4501, %v4847
        %v4849 = vpop.f32.mrb[0].mxu0
        %v4850 = vadd.f32 %v4505, %v4849
        %4851 = vmatprep.mubr.f32.mxu0 %v4211
        %4852 = vmatmul.mubr.f32.gmra.mrb[0].mxu0 %v4210
        %v4853 = vpop.f32.mrb[0].mxu0
        %v4854 = vadd.f32 %v4501, %v4853
        %v4855 = vpop.f32.mrb[0].mxu0
        %v4856 = vadd.f32 %v4505, %v4855
        %4857 = vmatprep.mubr.f32.mxu0 %v4213
        %4858 = vmatmul.mubr.f32.gmra.mrb[0].mxu0 %v4212
        %v4859 = vpop.f32.mrb[0].mxu0
        %v4860 = vadd.f32 %v4501, %v4859
        %v4861 = vpop.f32.mrb[0].mxu0
        %v4862 = vadd.f32 %v4505, %v4861
        %4863 = vmatprep.mubr.f32.mxu0 %v4215
        %4864 = vmatmul.mubr.f32.gmra.mrb[0].mxu0 %v4214
        %v4865 = vpop.f32.mrb[0].mxu0
        %v4866 = vadd.f32 %v4501, %v4865
        %v4867 = vpop.f32.mrb[0].mxu0
        %v4868 = vadd.f32 %v4505, %v4867
        %4869 = vdwg.mxu0
        %4870 = vst [vmem:[%s333] sm:$0xff] %v4581
        %4871 = vst [vmem:[%s333 + $0x8] sm:$0xff] %v4583
        %4872 = vst [vmem:[%s333 + $0x10] sm:$0xff] %v4670
        %4873 = vst [vmem:[%s333 + $0x18] sm:$0xff] %v4672
        %4874 = vst [vmem:[%s333 + $0x20] sm:$0xff] %v4759
        %4875 = vst [vmem:[%s333 + $0x28] sm:$0xff] %v4761
        %4876 = vst [vmem:[%s333 + $0x30] sm:$0xff] %v4848
        %4877 = vst [vmem:[%s333 + $0x38] sm:$0xff] %v4850
        %4878 = vst [vmem:[%s333 + $0x40] sm:$0xff] %v4587
        %4879 = vst [vmem:[%s333 + $0x48] sm:$0xff] %v4589
        %4880 = vst [vmem:[%s333 + $0x50] sm:$0xff] %v4676
        %4881 = vst [vmem:[%s333 + $0x58] sm:$0xff] %v4678
        %4882 = vst [vmem:[%s333 + $0x60] sm:$0xff] %v4765
        %4883 = vst [vmem:[%s333 + $0x68] sm:$0xff] %v4767
        %4884 = vst [vmem:[%s333 + $0x70] sm:$0xff] %v4854
        %4885 = vst [vmem:[%s333 + $0x78] sm:$0xff] %v4856
        %4886 = vst [vmem:[%s333 + $0x80] sm:$0xff] %v4593
        %4887 = vst [vmem:[%s333 + $0x88] sm:$0xff] %v4595
        %4888 = vst [vmem:[%s333 + $0x90] sm:$0xff] %v4682
        %4889 = vst [vmem:[%s333 + $0x98] sm:$0xff] %v4684
        %4890 = vst [vmem:[%s333 + $0xa0] sm:$0xff] %v4771
        %4891 = vst [vmem:[%s333 + $0xa8] sm:$0xff] %v4773
        %4892 = vst [vmem:[%s333 + $0xb0] sm:$0xff] %v4860
        %4893 = vst [vmem:[%s333 + $0xb8] sm:$0xff] %v4862
        %4894 = vst [vmem:[%s333 + $0xc0] sm:$0xff] %v4599
        %4895 = vst [vmem:[%s333 + $0xc8] sm:$0xff] %v4601
        %4896 = vst [vmem:[%s333 + $0xd0] sm:$0xff] %v4688
        %4897 = vst [vmem:[%s333 + $0xd8] sm:$0xff] %v4690
        %4898 = vst [vmem:[%s333 + $0xe0] sm:$0xff] %v4777
        %4899 = vst [vmem:[%s333 + $0xe8] sm:$0xff] %v4779
        %4900 = vst [vmem:[%s333 + $0xf0] sm:$0xff] %v4866
        %4901 = vst [vmem:[%s333 + $0xf8] sm:$0xff] %v4868
        %s4902 = sand.u32 %s178, 1
        %s4903 = sand.u32 %s178, 1
        %s4904 = smul.addr %s4903, 256
        %s4905 = scalar_lea.vmem [#allocation14], %s4904
        // Predicated region
        $region107: #{taco2_encoder_forward.2} parent=47 // pred_check
          %p4906 = pneg %p188
        $region108: #{taco2_encoder_forward.2} parent=47 // pred_check_branch
          %4908 = sbr.rel (%p4906) target = $region110
        $region109: #{taco2_encoder_forward.2} parent=47 // pred_region
          %s4909 = smul.u32 2, %s23
          %s4910 = smul.addr %s4909, 8
          %s4911 = smul.addr %s4910, 8
          %s4912 = scalar_lea.vmem %s8, %s4911
          // Predicated region
          $region111: #{taco2_encoder_forward.2} parent=109 // pred_check
            _
          $region112: #{taco2_encoder_forward.2} parent=109 // pred_check_branch
            %4914 = sbr.rel (0) target = $region114
          $region113: #{taco2_encoder_forward.2} parent=109 // pred_region
            // Predicated region
            $region115: #{taco2_encoder_forward.2} parent=113 // pred_check
              _
            $region116: #{taco2_encoder_forward.2} parent=113 // pred_check_branch
              %4916 = sbr.rel (0) target = $region118
            $region117: #{taco2_encoder_forward.2} parent=113 // pred_region
              loop: start=0, step=1, limit=1
              $region119: #{taco2_encoder_forward.2} parent=117 // loop_pre_header
                _
              $region120: #{taco2_encoder_forward.2} parent=117 // loop_header
                %s4918 = sphi 0, %s4922
                %p4919 = scmp.ge.s32.totalorder %s4918, 1
                %s4923 = sphi %s4905, %s4905
                %s4924 = sphi %s4912, %s4912
              $region121: #{taco2_encoder_forward.2} parent=117 // loop_header_branch
                %4921 = sbr.rel (%p4919) target = $region125
              $region122: #{taco2_encoder_forward.2} parent=117 // loop_body
                %v4925 = vld [vmem:[%s4923] sm:$0xff]
                %4926 = vst [vmem:[%s4924] sm:$0xff] %v4925
                %v4927 = vld [vmem:[%s4923 + $0x8] sm:$0xff]
                %4928 = vst [vmem:[%s4924 + $0x8] sm:$0xff] %v4927
                %v4929 = vld [vmem:[%s4923 + $0x10] sm:$0xff]
                %4930 = vst [vmem:[%s4924 + $0x10] sm:$0xff] %v4929
                %v4931 = vld [vmem:[%s4923 + $0x18] sm:$0xff]
                %4932 = vst [vmem:[%s4924 + $0x18] sm:$0xff] %v4931
                %v4933 = vld [vmem:[%s4923 + $0x20] sm:$0xff]
                %4934 = vst [vmem:[%s4924 + $0x20] sm:$0xff] %v4933
                %v4935 = vld [vmem:[%s4923 + $0x28] sm:$0xff]
                %4936 = vst [vmem:[%s4924 + $0x28] sm:$0xff] %v4935
                %v4937 = vld [vmem:[%s4923 + $0x30] sm:$0xff]
                %4938 = vst [vmem:[%s4924 + $0x30] sm:$0xff] %v4937
                %v4939 = vld [vmem:[%s4923 + $0x38] sm:$0xff]
                %4940 = vst [vmem:[%s4924 + $0x38] sm:$0xff] %v4939
                %v4941 = vld [vmem:[%s4923 + $0x40] sm:$0xff]
                %4942 = vst [vmem:[%s4924 + $0x40] sm:$0xff] %v4941
                %v4943 = vld [vmem:[%s4923 + $0x48] sm:$0xff]
                %4944 = vst [vmem:[%s4924 + $0x48] sm:$0xff] %v4943
                %v4945 = vld [vmem:[%s4923 + $0x50] sm:$0xff]
                %4946 = vst [vmem:[%s4924 + $0x50] sm:$0xff] %v4945
                %v4947 = vld [vmem:[%s4923 + $0x58] sm:$0xff]
                %4948 = vst [vmem:[%s4924 + $0x58] sm:$0xff] %v4947
                %v4949 = vld [vmem:[%s4923 + $0x60] sm:$0xff]
                %4950 = vst [vmem:[%s4924 + $0x60] sm:$0xff] %v4949
                %v4951 = vld [vmem:[%s4923 + $0x68] sm:$0xff]
                %4952 = vst [vmem:[%s4924 + $0x68] sm:$0xff] %v4951
                %v4953 = vld [vmem:[%s4923 + $0x70] sm:$0xff]
                %4954 = vst [vmem:[%s4924 + $0x70] sm:$0xff] %v4953
                %v4955 = vld [vmem:[%s4923 + $0x78] sm:$0xff]
                %4956 = vst [vmem:[%s4924 + $0x78] sm:$0xff] %v4955
                %v4957 = vld [vmem:[%s4923 + $0x80] sm:$0xff]
                %4958 = vst [vmem:[%s4924 + $0x100] sm:$0xff] %v4957
                %v4959 = vld [vmem:[%s4923 + $0x88] sm:$0xff]
                %4960 = vst [vmem:[%s4924 + $0x108] sm:$0xff] %v4959
                %v4961 = vld [vmem:[%s4923 + $0x90] sm:$0xff]
                %4962 = vst [vmem:[%s4924 + $0x110] sm:$0xff] %v4961
                %v4963 = vld [vmem:[%s4923 + $0x98] sm:$0xff]
                %4964 = vst [vmem:[%s4924 + $0x118] sm:$0xff] %v4963
                %v4965 = vld [vmem:[%s4923 + $0xa0] sm:$0xff]
                %4966 = vst [vmem:[%s4924 + $0x120] sm:$0xff] %v4965
                %v4967 = vld [vmem:[%s4923 + $0xa8] sm:$0xff]
                %4968 = vst [vmem:[%s4924 + $0x128] sm:$0xff] %v4967
                %v4969 = vld [vmem:[%s4923 + $0xb0] sm:$0xff]
                %4970 = vst [vmem:[%s4924 + $0x130] sm:$0xff] %v4969
                %v4971 = vld [vmem:[%s4923 + $0xb8] sm:$0xff]
                %4972 = vst [vmem:[%s4924 + $0x138] sm:$0xff] %v4971
                %v4973 = vld [vmem:[%s4923 + $0xc0] sm:$0xff]
                %4974 = vst [vmem:[%s4924 + $0x140] sm:$0xff] %v4973
                %v4975 = vld [vmem:[%s4923 + $0xc8] sm:$0xff]
                %4976 = vst [vmem:[%s4924 + $0x148] sm:$0xff] %v4975
                %v4977 = vld [vmem:[%s4923 + $0xd0] sm:$0xff]
                %4978 = vst [vmem:[%s4924 + $0x150] sm:$0xff] %v4977
                %v4979 = vld [vmem:[%s4923 + $0xd8] sm:$0xff]
                %4980 = vst [vmem:[%s4924 + $0x158] sm:$0xff] %v4979
                %v4981 = vld [vmem:[%s4923 + $0xe0] sm:$0xff]
                %4982 = vst [vmem:[%s4924 + $0x160] sm:$0xff] %v4981
                %v4983 = vld [vmem:[%s4923 + $0xe8] sm:$0xff]
                %4984 = vst [vmem:[%s4924 + $0x168] sm:$0xff] %v4983
                %v4985 = vld [vmem:[%s4923 + $0xf0] sm:$0xff]
                %4986 = vst [vmem:[%s4924 + $0x170] sm:$0xff] %v4985
                %v4987 = vld [vmem:[%s4923 + $0xf8] sm:$0xff]
                %4988 = vst [vmem:[%s4924 + $0x178] sm:$0xff] %v4987
              $region123: #{taco2_encoder_forward.2} parent=117 // loop_footer
                %s4922 = sadd.s32 1, %s4918
              $region124: #{taco2_encoder_forward.2} parent=117 // loop_footer_branch
                %4917 = sbr.rel target = $region120
              $region125: #{taco2_encoder_forward.2} parent=117 // loop_exit
                _
            $region118: #{taco2_encoder_forward.2} parent=113 // pred_fallthru
              _
            // Predicated region
            $region126: #{taco2_encoder_forward.2} parent=113 // pred_check
              _
            $region127: #{taco2_encoder_forward.2} parent=113 // pred_check_branch
              %4990 = sbr.rel target = $region129
            $region128: #{taco2_encoder_forward.2} parent=113 // pred_region
              _
            $region129: #{taco2_encoder_forward.2} parent=113 // pred_fallthru
              _
          $region114: #{taco2_encoder_forward.2} parent=109 // pred_fallthru
            _
          %4991 = vnop
        $region110: #{taco2_encoder_forward.2} parent=47 // pred_fallthru
          _
      $region48: #{taco2_encoder_forward.2} parent=5 // pred_fallthru
        _
      %p4992 = scmp.le.s32.totalorder 2, %s18
      // Predicated region
      $region130: #{taco2_encoder_forward.2} parent=5 // pred_check
        %p4993 = pneg %p4992
      $region131: #{taco2_encoder_forward.2} parent=5 // pred_check_branch
        %4995 = sbr.rel (%p4993) target = $region133
      $region132: #{taco2_encoder_forward.2} parent=5 // pred_region
        %s4996 = ssub.s32 %s18, 2
        // Predicated region
        $region134: #{taco2_encoder_forward.2} parent=132 // pred_check
          %p4997 = pneg %p194
        $region135: #{taco2_encoder_forward.2} parent=132 // pred_check_branch
          %4999 = sbr.rel (%p4997) target = $region137
        $region136: #{taco2_encoder_forward.2} parent=132 // pred_region
          %s5000 = sand.u32 %s179, 1
          %s5001 = sand.u32 %s179, 1
          %s5002 = smul.addr %s5001, 256
          %s5003 = scalar_lea.vmem [#allocation14], %s5002
        $region137: #{taco2_encoder_forward.2} parent=132 // pred_fallthru
          _
      $region133: #{taco2_encoder_forward.2} parent=5 // pred_fallthru
        _
    $region6: #{taco2_encoder_forward.2} parent=1 // loop_footer
      %s22 = sadd.s32 1, %s18
    $region7: #{taco2_encoder_forward.2} parent=1 // loop_footer_branch
      %17 = sbr.rel target = $region3
    $region8: #{taco2_encoder_forward.2} parent=1 // loop_exit
      _
    %5004 = vsyncpa [#allocation5], 1
    %s5005 = scalar_lea.sflag [#allocation5], 1
    %5006 = vsyncpa %s5005, 1
    %5007 = vsyncpa [#allocation7], 1
    %5008 = vsyncpa [#allocation10], 1
    %5009 = vsyncpa [#allocation13], 1
  %5010 = vsyncmov [#allocation3]
  %s5011 = vpop.sfrf %5010
  %p5012 = scmp.eq.s32.totalorder %s5011, 0
  %p5013 = pneg %p5012
  %5015 = shalt.err (%p5013)

</llo_original>
